<compile_context>
chip_gen: v7x
topology: tpu7x:2x2x1
jax: 0.10.0
libtpu: 0.0.40
codegen_flags: <defaults>
</compile_context>

<pallas_src>
import math
import functools

import jax
import jax.numpy as jnp
from jax import lax
from jax.experimental import pallas as pl
from jax.experimental.pallas import tpu as pltpu


# ------------------------------ helpers ------------------------------------ #

def _layer_norm(x, g, b, eps=1e-5):
    mu = jnp.mean(x, axis=-1, keepdims=True)
    xc = x - mu
    var = jnp.mean(xc * xc, axis=-1, keepdims=True)
    return xc * lax.rsqrt(var + eps) * g + b


# rows of the packed per-layer vector slab
(_R_LN1G, _R_LN1B, _R_BQ, _R_BK, _R_BV,
 _R_BO, _R_LN2G, _R_LN2B, _R_B1, _R_B2) = range(10)
_NROWS = 10


# ------------------------------ kernel ------------------------------------- #

def make_encoder_kernel(*, heads, head_dim, D, Dh, Bt, S, depth):
    def kernel(x_ref, valid_ref, wqkv_ref, wo_ref, w1_ref, w2_ref, vecs_ref,
               o_ref, x_acc, ctx_scr):
        # Load this batch block's embeddings into the resident activation scratch.
        x_acc[...] = x_ref[...]                         # (Bt, S, D) f32
        valid = valid_ref[...]                          # (Bt, 1, S) f32 in {0,1}
        # Hoist the key-padding mask broadcast out of the layer/head loops.
        valid_b = jnp.broadcast_to(valid, (Bt, S, S))

        @pl.loop(0, depth)
        def _(l):
            x3 = x_acc[...]                             # (Bt, S, D) f32
            x2 = x3.reshape(Bt * S, D)                  # M = Bt*S rows for MXU
            vec = vecs_ref[l]                           # (NROWS, Wmax) f32

            # ---- pre-norm MHA: fused QKV matmul (bf16 operands, f32 accum) --
            # (1/sqrt(head_dim) already folded into the Q columns / bias)
            xn = _layer_norm(x2, vec[_R_LN1G:_R_LN1G + 1, :D],
                             vec[_R_LN1B:_R_LN1B + 1, :D])
            qkv = jnp.dot(xn.astype(jnp.bfloat16), wqkv_ref[l],
                          preferred_element_type=jnp.float32)     # (Bt*S, 3D)
            q = (qkv[:, :D] + vec[_R_BQ:_R_BQ + 1, :D]).reshape(Bt, S, D)
            k = (qkv[:, D:2 * D] + vec[_R_BK:_R_BK + 1, :D]).reshape(Bt, S, D)
            v = (qkv[:, 2 * D:] + vec[_R_BV:_R_BV + 1, :D]).reshape(Bt, S, D)

            for h in range(heads):                      # static head loop
                lo = h * head_dim
                qh = q[:, :, lo:lo + head_dim]
                kh = k[:, :, lo:lo + head_dim]
                vh = v[:, :, lo:lo + head_dim]
                s = lax.dot_general(qh, kh, (((2,), (2,)), ((0,), (0,))),
                                    preferred_element_type=jnp.float32)  # (Bt,S,S)
                s = s - jnp.max(s, axis=-1, keepdims=True)
                # multiplicative mask == additive -1e9 key-padding bias
                p = jnp.exp(s) * valid_b
                denom = jnp.maximum(jnp.sum(p, axis=-1, keepdims=True), 1e-30)
                p = p * pl.reciprocal(denom, approx=True)
                ctx_h = lax.dot_general(p, vh, (((2,), (1,)), ((0,), (0,))),
                                        preferred_element_type=jnp.float32)
                # write at static lane offset; single Wo matmul afterwards
                ctx_scr[:, :, lo:lo + head_dim] = ctx_h

            ctx2 = ctx_scr[...].reshape(Bt * S, D).astype(jnp.bfloat16)
            attn = jnp.dot(ctx2, wo_ref[l], preferred_element_type=jnp.float32)
            x2 = x2 + attn + vec[_R_BO:_R_BO + 1, :D]   # dropout1 == identity

            # ---- pre-norm MLP (tanh GELU -> EUP slot) ----------------------
            xn2 = _layer_norm(x2, vec[_R_LN2G:_R_LN2G + 1, :D],
                              vec[_R_LN2B:_R_LN2B + 1, :D])
            h1 = jnp.dot(xn2.astype(jnp.bfloat16), w1_ref[l],
                         preferred_element_type=jnp.float32) + vec[_R_B1:_R_B1 + 1, :Dh]
            h1 = jax.nn.gelu(h1, approximate=True)
            h2 = jnp.dot(h1.astype(jnp.bfloat16), w2_ref[l],
                         preferred_element_type=jnp.float32) + vec[_R_B2:_R_B2 + 1, :D]
            x_acc[...] = (x2 + h2).reshape(Bt, S, D)    # dropout2 == identity

        # ---- fused masked mean pooling (exact divide, once per sample) -----
        xf = x_acc[...]                                  # (Bt, S, D)
        ssum = lax.dot_general(valid, xf, (((2,), (1,)), ((0,), (0,))),
                               preferred_element_type=jnp.float32)   # (Bt,1,D)
        cnt = jnp.maximum(jnp.sum(valid, axis=2, keepdims=True), 1.0)  # (Bt,1,1)
        o_ref[...] = ssum / cnt

    return kernel


# --------------------------- pallas wrapper -------------------------------- #

def _stack_params(layers, heads, head_dim):
    """Stack per-layer params (layer axis leading), fuse QKV, pack tiny vectors."""
    scale = 1.0 / math.sqrt(head_dim)
    D = layers[0]["wq"].shape[0]
    Dh = layers[0]["w1"].shape[1]
    Wmax = max(D, Dh)

    wqkv = jnp.stack([jnp.concatenate([lp["wq"] * scale, lp["wk"], lp["wv"]],
                                      axis=1) for lp in layers], 0).astype(jnp.bfloat16)
    wo = jnp.stack([lp["wo"] for lp in layers], 0).astype(jnp.bfloat16)
    w1 = jnp.stack([lp["w1"] for lp in layers], 0).astype(jnp.bfloat16)
    w2 = jnp.stack([lp["w2"] for lp in layers], 0).astype(jnp.bfloat16)

    def row(a, width):
        a = a.reshape(1, width).astype(jnp.float32)
        pad = Wmax - width
        return jnp.pad(a, ((0, 0), (0, pad))) if pad else a

    vec_layers = []
    for lp in layers:
        rows = [row(lp["ln1_g"], D), row(lp["ln1_b"], D),
                row(lp["bq"] * scale, D), row(lp["bk"], D), row(lp["bv"], D),
                row(lp["bo"], D), row(lp["ln2_g"], D), row(lp["ln2_b"], D),
                row(lp["b1"], Dh), row(lp["b2"], D)]
        vec_layers.append(jnp.concatenate(rows, axis=0))      # (NROWS, Wmax)
    vecs = jnp.stack(vec_layers, axis=0)                      # (depth, NROWS, Wmax)
    return wqkv, wo, w1, w2, vecs


def _choose_bt(B, S, min_rows=128):
    """Batch block: prefer Bt*S >= min_rows while keeping >=2 grid blocks (v7x)."""
    divs = [d for d in range(1, B + 1) if B % d == 0]
    cand = [d for d in divs if B // d >= 2] or divs
    good = [d for d in cand if d * S >= min_rows]
    return min(good) if good else max(cand)


def mask_encoder_forward(params, x_int, *, heads, padding_value=-1, block_b=None):
    """x_int: (B, H, W) or (B, 1, H, W) int32.  Returns (B, emb_dim) f32."""
    if x_int.ndim == 4:
        x_int = x_int[:, 0]
    B, H, W = x_int.shape
    D = params["embedding"].shape[1]
    S = H * W
    depth = len(params["layers"])
    head_dim = D // heads
    Dh = params["layers"][0]["w1"].shape[1]

    # glue: embedding gather + positional embeddings (plain JAX)
    tok = jnp.maximum(x_int + 1, 0)                           # (x + 1).clamp(min=0)
    x_emb = params["embedding"][tok]                          # (B, H, W, D)
    pos = params["pos_row"][:, None, :] + params["pos_col"][None, :, :]
    x_seq = (x_emb + pos[None]).reshape(B, S, D).astype(jnp.float32)

    pad = (x_int.reshape(B, S) == padding_value)
    valid = (~pad).astype(jnp.float32).reshape(B, 1, S)

    wqkv, wo, w1, w2, vecs = _stack_params(params["layers"], heads, head_dim)

    Bt = block_b if block_b is not None else _choose_bt(B, S)
    assert B % Bt == 0, "batch block must divide B"
    kernel = make_encoder_kernel(heads=heads, head_dim=head_dim, D=D, Dh=Dh,
                                 Bt=Bt, S=S, depth=depth)

    def full_spec(a):
        nd = a.ndim
        return pl.BlockSpec(a.shape, lambda b, _n=nd: (0,) * _n)

    # explicit VMEM budget (v7x: 64 MiB physical, 32 MiB default scoped limit)
    bytes_weights = 2 * 2 * (wqkv.size + wo.size + w1.size + w2.size) + 2 * 4 * vecs.size
    bytes_blocks = 2 * 4 * (Bt * S * D + Bt * S + Bt * D)
    bytes_scratch = 2 * 4 * (Bt * S * D)
    vmem_limit = int(min(64 * 2 ** 20,
                         max(16 * 2 ** 20,
                             2 * (bytes_weights + bytes_blocks + bytes_scratch))))

    out = pl.pallas_call(
        kernel,
        out_shape=jax.ShapeDtypeStruct((B, 1, D), jnp.float32),
        grid=(B // Bt,),
        in_specs=[pl.BlockSpec((Bt, S, D), lambda b: (b, 0, 0)),
                  pl.BlockSpec((Bt, 1, S), lambda b: (b, 0, 0)),
                  full_spec(wqkv), full_spec(wo), full_spec(w1), full_spec(w2),
                  full_spec(vecs)],
        out_specs=pl.BlockSpec((Bt, 1, D), lambda b: (b, 0, 0)),
        scratch_shapes=[pltpu.VMEM((Bt, S, D), jnp.float32),   # resident activations
                        pltpu.VMEM((Bt, S, D), jnp.float32)],  # per-head ctx staging
        compiler_params=pltpu.CompilerParams(
            dimension_semantics=("parallel",),
            vmem_limit_bytes=vmem_limit),
    )(x_seq, valid, wqkv, wo, w1, w2, vecs)
    return out[:, 0, :]


# ----------------------- deterministic parameter init ---------------------- #

def init_params(key, *, vocab_size, H, W, emb_dim, depth, mlp_dim):
    D, Dh = emb_dim, 2 * mlp_dim
    ks = iter(jax.random.split(key, 4 + 16 * depth))

    def rnd(shape, scale):
        return (scale * jax.random.normal(next(ks), shape)).astype(jnp.float32)

    emb = rnd((vocab_size, D), 0.02).at[0].set(0.0)           # padding_idx=0
    params = {
        "embedding": emb,
        "pos_row": rnd((H, D), 0.02),
        "pos_col": rnd((W, D), 0.02),
        "layers": [],
    }
    for _ in range(depth):
        params["layers"].append({
            "ln1_g": jnp.ones((1, D), jnp.float32),
            "ln1_b": jnp.zeros((1, D), jnp.float32),
            "wq": rnd((D, D), 1.0 / math.sqrt(D)),
            "wk": rnd((D, D), 1.0 / math.sqrt(D)),
            "wv": rnd((D, D), 1.0 / math.sqrt(D)),
            "bq": rnd((1, D), 0.01),
            "bk": rnd((1, D), 0.01),
            "bv": rnd((1, D), 0.01),
            "wo": rnd((D, D), 1.0 / math.sqrt(D)),
            "bo": rnd((1, D), 0.01),
            "ln2_g": jnp.ones((1, D), jnp.float32),
            "ln2_b": jnp.zeros((1, D), jnp.float32),
            "w1": rnd((D, Dh), 1.0 / math.sqrt(D)),
            "b1": rnd((1, Dh), 0.01),
            "w2": rnd((Dh, D), 1.0 / math.sqrt(Dh)),
            "b2": rnd((1, D), 0.01),
        })
    return params


# --------------------------- pure-JAX reference ---------------------------- #

def _ref_block(x, neg_bias, p, heads):
    B, S, D = x.shape
    hd = D // heads
    xn = _layer_norm(x, p["ln1_g"][0], p["ln1_b"][0])
    q = (xn @ p["wq"] + p["bq"][0]).reshape(B, S, heads, hd)
    k = (xn @ p["wk"] + p["bk"][0]).reshape(B, S, heads, hd)
    v = (xn @ p["wv"] + p["bv"][0]).reshape(B, S, heads, hd)
    s = jnp.einsum("bqhd,bkhd->bhqk", q, k) / math.sqrt(hd)
    s = s + neg_bias.reshape(B, 1, 1, S)
    p_attn = jax.nn.softmax(s, axis=-1)
    ctx = jnp.einsum("bhqk,bkhd->bqhd", p_attn, v).reshape(B, S, D)
    x = x + (ctx @ p["wo"] + p["bo"][0])
    xn2 = _layer_norm(x, p["ln2_g"][0], p["ln2_b"][0])
    h1 = jax.nn.gelu(xn2 @ p["w1"] + p["b1"][0], approximate=False)
    return x + (h1 @ p["w2"] + p["b2"][0])


def ref_forward(params, x_int, *, heads, padding_value=-1):
    if x_int.ndim == 4:
        x_int = x_int[:, 0]
    B, H, W = x_int.shape
    D = params["embedding"].shape[1]
    S = H * W
    tok = jnp.maximum(x_int + 1, 0)
    x_emb = params["embedding"][tok]
    pos = params["pos_row"][:, None, :] + params["pos_col"][None, :, :]
    x_seq = (x_emb + pos[None]).reshape(B, S, D)
    pad = (x_int.reshape(B, S) == padding_value)
    neg_bias = jnp.where(pad, -1e9, 0.0).astype(jnp.float32)
    for lp in params["layers"]:
        x_seq = _ref_block(x_seq, neg_bias, lp, heads)
    valid = (~pad).astype(jnp.float32)
    ssum = jnp.einsum("bs,bsd->bd", valid, x_seq)
    cnt = jnp.maximum(valid.sum(axis=1), 1.0)[:, None]
    return ssum / cnt


# --------------------------------- main ------------------------------------ #

if __name__ == "__main__":
    # small config consistent with the module's defaults (emb_dim=64, heads=8);
    # B=4 exercises batch blocking (Bt=2 -> M=Bt*S=128) with 2 parallel blocks.
    B, H, W = 4, 8, 8
    vocab_size, emb_dim, depth, heads, mlp_dim = 6, 64, 2, 8, 32
    padding_value = -1

    key = jax.random.PRNGKey(0)
    k_param, k_data = jax.random.split(key)
    params = init_params(k_param, vocab_size=vocab_size, H=H, W=W,
                         emb_dim=emb_dim, depth=depth, mlp_dim=mlp_dim)

    # tokens in [-1, vocab_size-2]: -1 is padding, tok = x+1 in [0, vocab_size-1]
    x = jax.random.randint(k_data, (B, H, W), -1, vocab_size - 1, dtype=jnp.int32)

    fwd = functools.partial(mask_encoder_forward, heads=heads,
                            padding_value=padding_value)
    latent = jax.block_until_ready(fwd(params, x))
    assert latent.shape == (B, emb_dim)

    ref = jax.block_until_ready(
        ref_forward(params, x, heads=heads, padding_value=padding_value))
    # NOTE: bf16 matmul operands, approx softmax reciprocal and tanh-GELU give
    # ~1e-3-level deviations vs the f32/erf reference; covered by the tolerance.
    if not jnp.allclose(latent, ref, atol=5e-2, rtol=5e-2):
        err = float(jnp.max(jnp.abs(latent - ref)))
        raise AssertionError(f"Pallas output does not match reference (max abs err {err})")

    # TODO(synk): dropout layers (emb_drop / dropout1 / dropout2 / attn dropout)
    # are identity (eval mode); training-mode stochastic dropout not implemented.
    print("KERNEL_OK")
</pallas_src>

<mosaic_0001>
module attributes {stable_mosaic.version = 11 : i64} {
  func.func @kernel(%arg0: i32, %arg1: memref<2x64x64xf32, #tpu.memory_space<vmem>>, %arg2: memref<2x1x64xf32, #tpu.memory_space<vmem>>, %arg3: memref<2x64x192xbf16, #tpu.memory_space<vmem>>, %arg4: memref<2x64x64xbf16, #tpu.memory_space<vmem>>, %arg5: memref<2x64x64xbf16, #tpu.memory_space<vmem>>, %arg6: memref<2x64x64xbf16, #tpu.memory_space<vmem>>, %arg7: memref<2x10x64xf32, #tpu.memory_space<vmem>>, %arg8: memref<2x1x64xf32, #tpu.memory_space<vmem>>, %arg9: memref<2x64x64xf32, #tpu.memory_space<vmem>>, %arg10: memref<2x64x64xf32, #tpu.memory_space<vmem>>) attributes {dimension_semantics = [#tpu.dimension_semantics<parallel>], iteration_bounds = array<i64: 2>, scalar_prefetch = 0 : i64, scratch_operands = 2 : i64, tpu.core_type = #tpu.core_type<tc>, window_params = [{transform_indices = @transform_0, window_bounds = array<i64: 2, 64, 64>}, {transform_indices = @transform_1, window_bounds = array<i64: 2, 1, 64>}, {pipeline_mode = #tpu.pipeline_mode<synchronous>, transform_indices = @transform_2, window_bounds = array<i64: 2, 64, 192>}, {pipeline_mode = #tpu.pipeline_mode<synchronous>, transform_indices = @transform_3, window_bounds = array<i64: 2, 64, 64>}, {pipeline_mode = #tpu.pipeline_mode<synchronous>, transform_indices = @transform_4, window_bounds = array<i64: 2, 64, 64>}, {pipeline_mode = #tpu.pipeline_mode<synchronous>, transform_indices = @transform_5, window_bounds = array<i64: 2, 64, 64>}, {pipeline_mode = #tpu.pipeline_mode<synchronous>, transform_indices = @transform_6, window_bounds = array<i64: 2, 10, 64>}, {transform_indices = @transform_7, window_bounds = array<i64: 2, 1, 64>}]} {
    %c0 = arith.constant 0 : index
    %c0_0 = arith.constant 0 : index
    %c0_1 = arith.constant 0 : index
    %0 = vector.load %arg1[%c0, %c0_0, %c0_1] : memref<2x64x64xf32, #tpu.memory_space<vmem>>, vector<2x64x64xf32>
    %c0_2 = arith.constant 0 : index
    %c0_3 = arith.constant 0 : index
    %c0_4 = arith.constant 0 : index
    %1 = vector.load %arg9[%c0_2, %c0_3, %c0_4] : memref<2x64x64xf32, #tpu.memory_space<vmem>>, vector<2x64x64xf32>
    tpu.vector_store %arg9[%c0_2, %c0_3, %c0_4], %0 {strides = array<i32>} : memref<2x64x64xf32, #tpu.memory_space<vmem>>, vector<2x64x64xf32>,
    %c0_5 = arith.constant 0 : index
    %c0_6 = arith.constant 0 : index
    %c0_7 = arith.constant 0 : index
    %2 = vector.load %arg2[%c0_5, %c0_6, %c0_7] : memref<2x1x64xf32, #tpu.memory_space<vmem>>, vector<2x1x64xf32>
    %3 = vector.shape_cast %2 : vector<2x1x64xf32> to vector<2x1x64xf32>
    %4 = vector.broadcast %3 : vector<2x1x64xf32> to vector<2x64x64xf32>
    %c0_i32 = arith.constant 0 : i32
    %c2_i32 = arith.constant 2 : i32
    %5 = arith.addi %c0_i32, %c2_i32 : i32
    %c1_i32 = arith.constant 1 : i32
    scf.for %arg11 = %c0_i32 to %5 step %c1_i32  : i32 {
      %c1_i32_17 = arith.constant 1 : i32
      %15 = arith.muli %arg11, %c1_i32_17 : i32
      %c0_i32_18 = arith.constant 0 : i32
      %16 = arith.addi %c0_i32_18, %15 : i32
      %c0_19 = arith.constant 0 : index
      %c0_20 = arith.constant 0 : index
      %c0_21 = arith.constant 0 : index
      %17 = vector.load %arg9[%c0_19, %c0_20, %c0_21] : memref<2x64x64xf32, #tpu.memory_space<vmem>>, vector<2x64x64xf32>
      %18 = vector.shape_cast %17 : vector<2x64x64xf32> to vector<128x64xf32>
      %19 = arith.index_cast %16 : i32 to index
      %c0_22 = arith.constant 0 : index
      %c0_23 = arith.constant 0 : index
      %20 = vector.load %arg7[%19, %c0_22, %c0_23] : memref<2x10x64xf32, #tpu.memory_space<vmem>>, vector<1x10x64xf32>
      %21 = vector.shape_cast %20 : vector<1x10x64xf32> to vector<10x64xf32>
      %22 = vector.extract_strided_slice %21 {offsets = [0, 0], sizes = [1, 64], strides = [1, 1]} : vector<10x64xf32> to vector<1x64xf32>
      %23 = vector.extract_strided_slice %21 {offsets = [1, 0], sizes = [1, 64], strides = [1, 1]} : vector<10x64xf32> to vector<1x64xf32>
      %cst_24 = arith.constant dense<0.000000e+00> : vector<128xf32>
      %24 = vector.multi_reduction <add>, %18, %cst_24 [1] : vector<128x64xf32> to vector<128xf32>
      %25 = vector.shape_cast %24 : vector<128xf32> to vector<128x1xf32>
      %cst_25 = arith.constant 6.400000e+01 : f32
      %26 = vector.broadcast %cst_25 : f32 to vector<128x1xf32>
      %27 = arith.divf %25, %26 : vector<128x1xf32>
      %28 = vector.broadcast %27 : vector<128x1xf32> to vector<128x64xf32>
      %29 = arith.subf %18, %28 : vector<128x64xf32>
      %30 = arith.mulf %29, %29 : vector<128x64xf32>
      %cst_26 = arith.constant dense<0.000000e+00> : vector<128xf32>
      %31 = vector.multi_reduction <add>, %30, %cst_26 [1] : vector<128x64xf32> to vector<128xf32>
      %32 = vector.shape_cast %31 : vector<128xf32> to vector<128x1xf32>
      %cst_27 = arith.constant 6.400000e+01 : f32
      %33 = vector.broadcast %cst_27 : f32 to vector<128x1xf32>
      %34 = arith.divf %32, %33 : vector<128x1xf32>
      %cst_28 = arith.constant 9.99999974E-6 : f32
      %35 = vector.broadcast %cst_28 : f32 to vector<128x1xf32>
      %36 = arith.addf %34, %35 : vector<128x1xf32>
      %37 = math.rsqrt %36 : vector<128x1xf32>
      %38 = vector.broadcast %37 : vector<128x1xf32> to vector<128x64xf32>
      %39 = arith.mulf %29, %38 : vector<128x64xf32>
      %40 = vector.broadcast %22 : vector<1x64xf32> to vector<128x64xf32>
      %41 = arith.mulf %39, %40 : vector<128x64xf32>
      %42 = vector.broadcast %23 : vector<1x64xf32> to vector<128x64xf32>
      %43 = arith.addf %41, %42 : vector<128x64xf32>
      %44 = arith.truncf %43 : vector<128x64xf32> to vector<128x64xbf16>
      %45 = arith.index_cast %16 : i32 to index
      %c0_29 = arith.constant 0 : index
      %c0_30 = arith.constant 0 : index
      %46 = vector.load %arg3[%45, %c0_29, %c0_30] : memref<2x64x192xbf16, #tpu.memory_space<vmem>>, vector<1x64x192xbf16>
      %47 = vector.shape_cast %46 : vector<1x64x192xbf16> to vector<64x192xbf16>
      %cst_31 = arith.constant dense<0.000000e+00> : vector<128x192xf32>
      %48 = tpu.matmul %44, %47, %cst_31 {dimension_numbers = #tpu.dot_dimension_numbers<[1], [0], [0], [1], [0, 0, 1, 1], [], []>} : vector<128x64xbf16>, vector<64x192xbf16>, vector<128x192xf32> -> vector<128x192xf32>
      %49 = vector.extract_strided_slice %48 {offsets = [0, 0], sizes = [128, 64], strides = [1, 1]} : vector<128x192xf32> to vector<128x64xf32>
      %50 = vector.extract_strided_slice %21 {offsets = [2, 0], sizes = [1, 64], strides = [1, 1]} : vector<10x64xf32> to vector<1x64xf32>
      %51 = vector.broadcast %50 : vector<1x64xf32> to vector<128x64xf32>
      %52 = arith.addf %49, %51 : vector<128x64xf32>
      %53 = vector.shape_cast %52 : vector<128x64xf32> to vector<2x64x64xf32>
      %54 = vector.extract_strided_slice %48 {offsets = [0, 64], sizes = [128, 64], strides = [1, 1]} : vector<128x192xf32> to vector<128x64xf32>
      %55 = vector.extract_strided_slice %21 {offsets = [3, 0], sizes = [1, 64], strides = [1, 1]} : vector<10x64xf32> to vector<1x64xf32>
      %56 = vector.broadcast %55 : vector<1x64xf32> to vector<128x64xf32>
      %57 = arith.addf %54, %56 : vector<128x64xf32>
      %58 = vector.shape_cast %57 : vector<128x64xf32> to vector<2x64x64xf32>
      %59 = vector.extract_strided_slice %48 {offsets = [0, 128], sizes = [128, 64], strides = [1, 1]} : vector<128x192xf32> to vector<128x64xf32>
      %60 = vector.extract_strided_slice %21 {offsets = [4, 0], sizes = [1, 64], strides = [1, 1]} : vector<10x64xf32> to vector<1x64xf32>
      %61 = vector.broadcast %60 : vector<1x64xf32> to vector<128x64xf32>
      %62 = arith.addf %59, %61 : vector<128x64xf32>
      %63 = vector.shape_cast %62 : vector<128x64xf32> to vector<2x64x64xf32>
      %64 = vector.extract_strided_slice %53 {offsets = [0, 0, 0], sizes = [2, 64, 8], strides = [1, 1, 1]} : vector<2x64x64xf32> to vector<2x64x8xf32>
      %65 = vector.extract_strided_slice %58 {offsets = [0, 0, 0], sizes = [2, 64, 8], strides = [1, 1, 1]} : vector<2x64x64xf32> to vector<2x64x8xf32>
      %66 = vector.extract_strided_slice %63 {offsets = [0, 0, 0], sizes = [2, 64, 8], strides = [1, 1, 1]} : vector<2x64x64xf32> to vector<2x64x8xf32>
      %cst_32 = arith.constant dense<0.000000e+00> : vector<2x64x64xf32>
      %67 = tpu.matmul %64, %65, %cst_32 {dimension_numbers = #tpu.dot_dimension_numbers<[2], [2], [1], [1], [0, 0, 0, 1, 1, 1], [0], [0]>} : vector<2x64x8xf32>, vector<2x64x8xf32>, vector<2x64x64xf32> -> vector<2x64x64xf32>
      %cst_33 = arith.constant dense<0xFF800000> : vector<2x64xf32>
      %68 = vector.multi_reduction <maximumf>, %67, %cst_33 [2] : vector<2x64x64xf32> to vector<2x64xf32>
      %69 = vector.shape_cast %68 : vector<2x64xf32> to vector<2x64x1xf32>
      %70 = vector.broadcast %69 : vector<2x64x1xf32> to vector<2x64x64xf32>
      %71 = arith.subf %67, %70 : vector<2x64x64xf32>
      %72 = math.exp %71 : vector<2x64x64xf32>
      %73 = arith.mulf %72, %4 : vector<2x64x64xf32>
      %cst_34 = arith.constant dense<0.000000e+00> : vector<2x64xf32>
      %74 = vector.multi_reduction <add>, %73, %cst_34 [2] : vector<2x64x64xf32> to vector<2x64xf32>
      %75 = vector.shape_cast %74 : vector<2x64xf32> to vector<2x64x1xf32>
      %cst_35 = arith.constant 1.000000e-30 : f32
      %76 = vector.broadcast %cst_35 : f32 to vector<2x64x1xf32>
      %77 = arith.maximumf %75, %76 : vector<2x64x1xf32>
      %78 = tpu.reciprocal %77 {approx = true} : vector<2x64x1xf32> -> vector<2x64x1xf32>
      %79 = vector.broadcast %78 : vector<2x64x1xf32> to vector<2x64x64xf32>
      %80 = arith.mulf %73, %79 : vector<2x64x64xf32>
      %cst_36 = arith.constant dense<0.000000e+00> : vector<2x64x8xf32>
      %81 = tpu.matmul %80, %66, %cst_36 {dimension_numbers = #tpu.dot_dimension_numbers<[2], [1], [1], [2], [0, 0, 0, 1, 1, 2], [0], [0]>} : vector<2x64x64xf32>, vector<2x64x8xf32>, vector<2x64x8xf32> -> vector<2x64x8xf32>
      %c0_37 = arith.constant 0 : index
      %c0_38 = arith.constant 0 : index
      %c0_39 = arith.constant 0 : index
      %82 = vector.load %arg10[%c0_37, %c0_38, %c0_39] : memref<2x64x64xf32, #tpu.memory_space<vmem>>, vector<2x64x8xf32>
      tpu.vector_store %arg10[%c0_37, %c0_38, %c0_39], %81 {strides = array<i32>} : memref<2x64x64xf32, #tpu.memory_space<vmem>>, vector<2x64x8xf32>,
      %83 = vector.extract_strided_slice %53 {offsets = [0, 0, 8], sizes = [2, 64, 8], strides = [1, 1, 1]} : vector<2x64x64xf32> to vector<2x64x8xf32>
      %84 = vector.extract_strided_slice %58 {offsets = [0, 0, 8], sizes = [2, 64, 8], strides = [1, 1, 1]} : vector<2x64x64xf32> to vector<2x64x8xf32>
      %85 = vector.extract_strided_slice %63 {offsets = [0, 0, 8], sizes = [2, 64, 8], strides = [1, 1, 1]} : vector<2x64x64xf32> to vector<2x64x8xf32>
      %cst_40 = arith.constant dense<0.000000e+00> : vector<2x64x64xf32>
      %86 = tpu.matmul %83, %84, %cst_40 {dimension_numbers = #tpu.dot_dimension_numbers<[2], [2], [1], [1], [0, 0, 0, 1, 1, 1], [0], [0]>} : vector<2x64x8xf32>, vector<2x64x8xf32>, vector<2x64x64xf32> -> vector<2x64x64xf32>
      %cst_41 = arith.constant dense<0xFF800000> : vector<2x64xf32>
      %87 = vector.multi_reduction <maximumf>, %86, %cst_41 [2] : vector<2x64x64xf32> to vector<2x64xf32>
      %88 = vector.shape_cast %87 : vector<2x64xf32> to vector<2x64x1xf32>
      %89 = vector.broadcast %88 : vector<2x64x1xf32> to vector<2x64x64xf32>
      %90 = arith.subf %86, %89 : vector<2x64x64xf32>
      %91 = math.exp %90 : vector<2x64x64xf32>
      %92 = arith.mulf %91, %4 : vector<2x64x64xf32>
      %cst_42 = arith.constant dense<0.000000e+00> : vector<2x64xf32>
      %93 = vector.multi_reduction <add>, %92, %cst_42 [2] : vector<2x64x64xf32> to vector<2x64xf32>
      %94 = vector.shape_cast %93 : vector<2x64xf32> to vector<2x64x1xf32>
      %cst_43 = arith.constant 1.000000e-30 : f32
      %95 = vector.broadcast %cst_43 : f32 to vector<2x64x1xf32>
      %96 = arith.maximumf %94, %95 : vector<2x64x1xf32>
      %97 = tpu.reciprocal %96 {approx = true} : vector<2x64x1xf32> -> vector<2x64x1xf32>
      %98 = vector.broadcast %97 : vector<2x64x1xf32> to vector<2x64x64xf32>
      %99 = arith.mulf %92, %98 : vector<2x64x64xf32>
      %cst_44 = arith.constant dense<0.000000e+00> : vector<2x64x8xf32>
      %100 = tpu.matmul %99, %85, %cst_44 {dimension_numbers = #tpu.dot_dimension_numbers<[2], [1], [1], [2], [0, 0, 0, 1, 1, 2], [0], [0]>} : vector<2x64x64xf32>, vector<2x64x8xf32>, vector<2x64x8xf32> -> vector<2x64x8xf32>
      %c0_45 = arith.constant 0 : index
      %c0_46 = arith.constant 0 : index
      %c8 = arith.constant 8 : index
      %101 = vector.load %arg10[%c0_45, %c0_46, %c8] : memref<2x64x64xf32, #tpu.memory_space<vmem>>, vector<2x64x8xf32>
      tpu.vector_store %arg10[%c0_45, %c0_46, %c8], %100 {strides = array<i32>} : memref<2x64x64xf32, #tpu.memory_space<vmem>>, vector<2x64x8xf32>,
      %102 = vector.extract_strided_slice %53 {offsets = [0, 0, 16], sizes = [2, 64, 8], strides = [1, 1, 1]} : vector<2x64x64xf32> to vector<2x64x8xf32>
      %103 = vector.extract_strided_slice %58 {offsets = [0, 0, 16], sizes = [2, 64, 8], strides = [1, 1, 1]} : vector<2x64x64xf32> to vector<2x64x8xf32>
      %104 = vector.extract_strided_slice %63 {offsets = [0, 0, 16], sizes = [2, 64, 8], strides = [1, 1, 1]} : vector<2x64x64xf32> to vector<2x64x8xf32>
      %cst_47 = arith.constant dense<0.000000e+00> : vector<2x64x64xf32>
      %105 = tpu.matmul %102, %103, %cst_47 {dimension_numbers = #tpu.dot_dimension_numbers<[2], [2], [1], [1], [0, 0, 0, 1, 1, 1], [0], [0]>} : vector<2x64x8xf32>, vector<2x64x8xf32>, vector<2x64x64xf32> -> vector<2x64x64xf32>
      %cst_48 = arith.constant dense<0xFF800000> : vector<2x64xf32>
      %106 = vector.multi_reduction <maximumf>, %105, %cst_48 [2] : vector<2x64x64xf32> to vector<2x64xf32>
      %107 = vector.shape_cast %106 : vector<2x64xf32> to vector<2x64x1xf32>
      %108 = vector.broadcast %107 : vector<2x64x1xf32> to vector<2x64x64xf32>
      %109 = arith.subf %105, %108 : vector<2x64x64xf32>
      %110 = math.exp %109 : vector<2x64x64xf32>
      %111 = arith.mulf %110, %4 : vector<2x64x64xf32>
      %cst_49 = arith.constant dense<0.000000e+00> : vector<2x64xf32>
      %112 = vector.multi_reduction <add>, %111, %cst_49 [2] : vector<2x64x64xf32> to vector<2x64xf32>
      %113 = vector.shape_cast %112 : vector<2x64xf32> to vector<2x64x1xf32>
      %cst_50 = arith.constant 1.000000e-30 : f32
      %114 = vector.broadcast %cst_50 : f32 to vector<2x64x1xf32>
      %115 = arith.maximumf %113, %114 : vector<2x64x1xf32>
      %116 = tpu.reciprocal %115 {approx = true} : vector<2x64x1xf32> -> vector<2x64x1xf32>
      %117 = vector.broadcast %116 : vector<2x64x1xf32> to vector<2x64x64xf32>
      %118 = arith.mulf %111, %117 : vector<2x64x64xf32>
      %cst_51 = arith.constant dense<0.000000e+00> : vector<2x64x8xf32>
      %119 = tpu.matmul %118, %104, %cst_51 {dimension_numbers = #tpu.dot_dimension_numbers<[2], [1], [1], [2], [0, 0, 0, 1, 1, 2], [0], [0]>} : vector<2x64x64xf32>, vector<2x64x8xf32>, vector<2x64x8xf32> -> vector<2x64x8xf32>
      %c0_52 = arith.constant 0 : index
      %c0_53 = arith.constant 0 : index
      %c16 = arith.constant 16 : index
      %120 = vector.load %arg10[%c0_52, %c0_53, %c16] : memref<2x64x64xf32, #tpu.memory_space<vmem>>, vector<2x64x8xf32>
      tpu.vector_store %arg10[%c0_52, %c0_53, %c16], %119 {strides = array<i32>} : memref<2x64x64xf32, #tpu.memory_space<vmem>>, vector<2x64x8xf32>,
      %121 = vector.extract_strided_slice %53 {offsets = [0, 0, 24], sizes = [2, 64, 8], strides = [1, 1, 1]} : vector<2x64x64xf32> to vector<2x64x8xf32>
      %122 = vector.extract_strided_slice %58 {offsets = [0, 0, 24], sizes = [2, 64, 8], strides = [1, 1, 1]} : vector<2x64x64xf32> to vector<2x64x8xf32>
      %123 = vector.extract_strided_slice %63 {offsets = [0, 0, 24], sizes = [2, 64, 8], strides = [1, 1, 1]} : vector<2x64x64xf32> to vector<2x64x8xf32>
      %cst_54 = arith.constant dense<0.000000e+00> : vector<2x64x64xf32>
      %124 = tpu.matmul %121, %122, %cst_54 {dimension_numbers = #tpu.dot_dimension_numbers<[2], [2], [1], [1], [0, 0, 0, 1, 1, 1], [0], [0]>} : vector<2x64x8xf32>, vector<2x64x8xf32>, vector<2x64x64xf32> -> vector<2x64x64xf32>
      %cst_55 = arith.constant dense<0xFF800000> : vector<2x64xf32>
      %125 = vector.multi_reduction <maximumf>, %124, %cst_55 [2] : vector<2x64x64xf32> to vector<2x64xf32>
      %126 = vector.shape_cast %125 : vector<2x64xf32> to vector<2x64x1xf32>
      %127 = vector.broadcast %126 : vector<2x64x1xf32> to vector<2x64x64xf32>
      %128 = arith.subf %124, %127 : vector<2x64x64xf32>
      %129 = math.exp %128 : vector<2x64x64xf32>
      %130 = arith.mulf %129, %4 : vector<2x64x64xf32>
      %cst_56 = arith.constant dense<0.000000e+00> : vector<2x64xf32>
      %131 = vector.multi_reduction <add>, %130, %cst_56 [2] : vector<2x64x64xf32> to vector<2x64xf32>
      %132 = vector.shape_cast %131 : vector<2x64xf32> to vector<2x64x1xf32>
      %cst_57 = arith.constant 1.000000e-30 : f32
      %133 = vector.broadcast %cst_57 : f32 to vector<2x64x1xf32>
      %134 = arith.maximumf %132, %133 : vector<2x64x1xf32>
      %135 = tpu.reciprocal %134 {approx = true} : vector<2x64x1xf32> -> vector<2x64x1xf32>
      %136 = vector.broadcast %135 : vector<2x64x1xf32> to vector<2x64x64xf32>
      %137 = arith.mulf %130, %136 : vector<2x64x64xf32>
      %cst_58 = arith.constant dense<0.000000e+00> : vector<2x64x8xf32>
      %138 = tpu.matmul %137, %123, %cst_58 {dimension_numbers = #tpu.dot_dimension_numbers<[2], [1], [1], [2], [0, 0, 0, 1, 1, 2], [0], [0]>} : vector<2x64x64xf32>, vector<2x64x8xf32>, vector<2x64x8xf32> -> vector<2x64x8xf32>
      %c0_59 = arith.constant 0 : index
      %c0_60 = arith.constant 0 : index
      %c24 = arith.constant 24 : index
      %139 = vector.load %arg10[%c0_59, %c0_60, %c24] : memref<2x64x64xf32, #tpu.memory_space<vmem>>, vector<2x64x8xf32>
      tpu.vector_store %arg10[%c0_59, %c0_60, %c24], %138 {strides = array<i32>} : memref<2x64x64xf32, #tpu.memory_space<vmem>>, vector<2x64x8xf32>,
      %140 = vector.extract_strided_slice %53 {offsets = [0, 0, 32], sizes = [2, 64, 8], strides = [1, 1, 1]} : vector<2x64x64xf32> to vector<2x64x8xf32>
      %141 = vector.extract_strided_slice %58 {offsets = [0, 0, 32], sizes = [2, 64, 8], strides = [1, 1, 1]} : vector<2x64x64xf32> to vector<2x64x8xf32>
      %142 = vector.extract_strided_slice %63 {offsets = [0, 0, 32], sizes = [2, 64, 8], strides = [1, 1, 1]} : vector<2x64x64xf32> to vector<2x64x8xf32>
      %cst_61 = arith.constant dense<0.000000e+00> : vector<2x64x64xf32>
      %143 = tpu.matmul %140, %141, %cst_61 {dimension_numbers = #tpu.dot_dimension_numbers<[2], [2], [1], [1], [0, 0, 0, 1, 1, 1], [0], [0]>} : vector<2x64x8xf32>, vector<2x64x8xf32>, vector<2x64x64xf32> -> vector<2x64x64xf32>
      %cst_62 = arith.constant dense<0xFF800000> : vector<2x64xf32>
      %144 = vector.multi_reduction <maximumf>, %143, %cst_62 [2] : vector<2x64x64xf32> to vector<2x64xf32>
      %145 = vector.shape_cast %144 : vector<2x64xf32> to vector<2x64x1xf32>
      %146 = vector.broadcast %145 : vector<2x64x1xf32> to vector<2x64x64xf32>
      %147 = arith.subf %143, %146 : vector<2x64x64xf32>
      %148 = math.exp %147 : vector<2x64x64xf32>
      %149 = arith.mulf %148, %4 : vector<2x64x64xf32>
      %cst_63 = arith.constant dense<0.000000e+00> : vector<2x64xf32>
      %150 = vector.multi_reduction <add>, %149, %cst_63 [2] : vector<2x64x64xf32> to vector<2x64xf32>
      %151 = vector.shape_cast %150 : vector<2x64xf32> to vector<2x64x1xf32>
      %cst_64 = arith.constant 1.000000e-30 : f32
      %152 = vector.broadcast %cst_64 : f32 to vector<2x64x1xf32>
      %153 = arith.maximumf %151, %152 : vector<2x64x1xf32>
      %154 = tpu.reciprocal %153 {approx = true} : vector<2x64x1xf32> -> vector<2x64x1xf32>
      %155 = vector.broadcast %154 : vector<2x64x1xf32> to vector<2x64x64xf32>
      %156 = arith.mulf %149, %155 : vector<2x64x64xf32>
      %cst_65 = arith.constant dense<0.000000e+00> : vector<2x64x8xf32>
      %157 = tpu.matmul %156, %142, %cst_65 {dimension_numbers = #tpu.dot_dimension_numbers<[2], [1], [1], [2], [0, 0, 0, 1, 1, 2], [0], [0]>} : vector<2x64x64xf32>, vector<2x64x8xf32>, vector<2x64x8xf32> -> vector<2x64x8xf32>
      %c0_66 = arith.constant 0 : index
      %c0_67 = arith.constant 0 : index
      %c32 = arith.constant 32 : index
      %158 = vector.load %arg10[%c0_66, %c0_67, %c32] : memref<2x64x64xf32, #tpu.memory_space<vmem>>, vector<2x64x8xf32>
      tpu.vector_store %arg10[%c0_66, %c0_67, %c32], %157 {strides = array<i32>} : memref<2x64x64xf32, #tpu.memory_space<vmem>>, vector<2x64x8xf32>,
      %159 = vector.extract_strided_slice %53 {offsets = [0, 0, 40], sizes = [2, 64, 8], strides = [1, 1, 1]} : vector<2x64x64xf32> to vector<2x64x8xf32>
      %160 = vector.extract_strided_slice %58 {offsets = [0, 0, 40], sizes = [2, 64, 8], strides = [1, 1, 1]} : vector<2x64x64xf32> to vector<2x64x8xf32>
      %161 = vector.extract_strided_slice %63 {offsets = [0, 0, 40], sizes = [2, 64, 8], strides = [1, 1, 1]} : vector<2x64x64xf32> to vector<2x64x8xf32>
      %cst_68 = arith.constant dense<0.000000e+00> : vector<2x64x64xf32>
      %162 = tpu.matmul %159, %160, %cst_68 {dimension_numbers = #tpu.dot_dimension_numbers<[2], [2], [1], [1], [0, 0, 0, 1, 1, 1], [0], [0]>} : vector<2x64x8xf32>, vector<2x64x8xf32>, vector<2x64x64xf32> -> vector<2x64x64xf32>
      %cst_69 = arith.constant dense<0xFF800000> : vector<2x64xf32>
      %163 = vector.multi_reduction <maximumf>, %162, %cst_69 [2] : vector<2x64x64xf32> to vector<2x64xf32>
      %164 = vector.shape_cast %163 : vector<2x64xf32> to vector<2x64x1xf32>
      %165 = vector.broadcast %164 : vector<2x64x1xf32> to vector<2x64x64xf32>
      %166 = arith.subf %162, %165 : vector<2x64x64xf32>
      %167 = math.exp %166 : vector<2x64x64xf32>
      %168 = arith.mulf %167, %4 : vector<2x64x64xf32>
      %cst_70 = arith.constant dense<0.000000e+00> : vector<2x64xf32>
      %169 = vector.multi_reduction <add>, %168, %cst_70 [2] : vector<2x64x64xf32> to vector<2x64xf32>
      %170 = vector.shape_cast %169 : vector<2x64xf32> to vector<2x64x1xf32>
      %cst_71 = arith.constant 1.000000e-30 : f32
      %171 = vector.broadcast %cst_71 : f32 to vector<2x64x1xf32>
      %172 = arith.maximumf %170, %171 : vector<2x64x1xf32>
      %173 = tpu.reciprocal %172 {approx = true} : vector<2x64x1xf32> -> vector<2x64x1xf32>
      %174 = vector.broadcast %173 : vector<2x64x1xf32> to vector<2x64x64xf32>
      %175 = arith.mulf %168, %174 : vector<2x64x64xf32>
      %cst_72 = arith.constant dense<0.000000e+00> : vector<2x64x8xf32>
      %176 = tpu.matmul %175, %161, %cst_72 {dimension_numbers = #tpu.dot_dimension_numbers<[2], [1], [1], [2], [0, 0, 0, 1, 1, 2], [0], [0]>} : vector<2x64x64xf32>, vector<2x64x8xf32>, vector<2x64x8xf32> -> vector<2x64x8xf32>
      %c0_73 = arith.constant 0 : index
      %c0_74 = arith.constant 0 : index
      %c40 = arith.constant 40 : index
      %177 = vector.load %arg10[%c0_73, %c0_74, %c40] : memref<2x64x64xf32, #tpu.memory_space<vmem>>, vector<2x64x8xf32>
      tpu.vector_store %arg10[%c0_73, %c0_74, %c40], %176 {strides = array<i32>} : memref<2x64x64xf32, #tpu.memory_space<vmem>>, vector<2x64x8xf32>,
      %178 = vector.extract_strided_slice %53 {offsets = [0, 0, 48], sizes = [2, 64, 8], strides = [1, 1, 1]} : vector<2x64x64xf32> to vector<2x64x8xf32>
      %179 = vector.extract_strided_slice %58 {offsets = [0, 0, 48], sizes = [2, 64, 8], strides = [1, 1, 1]} : vector<2x64x64xf32> to vector<2x64x8xf32>
      %180 = vector.extract_strided_slice %63 {offsets = [0, 0, 48], sizes = [2, 64, 8], strides = [1, 1, 1]} : vector<2x64x64xf32> to vector<2x64x8xf32>
      %cst_75 = arith.constant dense<0.000000e+00> : vector<2x64x64xf32>
      %181 = tpu.matmul %178, %179, %cst_75 {dimension_numbers = #tpu.dot_dimension_numbers<[2], [2], [1], [1], [0, 0, 0, 1, 1, 1], [0], [0]>} : vector<2x64x8xf32>, vector<2x64x8xf32>, vector<2x64x64xf32> -> vector<2x64x64xf32>
      %cst_76 = arith.constant dense<0xFF800000> : vector<2x64xf32>
      %182 = vector.multi_reduction <maximumf>, %181, %cst_76 [2] : vector<2x64x64xf32> to vector<2x64xf32>
      %183 = vector.shape_cast %182 : vector<2x64xf32> to vector<2x64x1xf32>
      %184 = vector.broadcast %183 : vector<2x64x1xf32> to vector<2x64x64xf32>
      %185 = arith.subf %181, %184 : vector<2x64x64xf32>
      %186 = math.exp %185 : vector<2x64x64xf32>
      %187 = arith.mulf %186, %4 : vector<2x64x64xf32>
      %cst_77 = arith.constant dense<0.000000e+00> : vector<2x64xf32>
      %188 = vector.multi_reduction <add>, %187, %cst_77 [2] : vector<2x64x64xf32> to vector<2x64xf32>
      %189 = vector.shape_cast %188 : vector<2x64xf32> to vector<2x64x1xf32>
      %cst_78 = arith.constant 1.000000e-30 : f32
      %190 = vector.broadcast %cst_78 : f32 to vector<2x64x1xf32>
      %191 = arith.maximumf %189, %190 : vector<2x64x1xf32>
      %192 = tpu.reciprocal %191 {approx = true} : vector<2x64x1xf32> -> vector<2x64x1xf32>
      %193 = vector.broadcast %192 : vector<2x64x1xf32> to vector<2x64x64xf32>
      %194 = arith.mulf %187, %193 : vector<2x64x64xf32>
      %cst_79 = arith.constant dense<0.000000e+00> : vector<2x64x8xf32>
      %195 = tpu.matmul %194, %180, %cst_79 {dimension_numbers = #tpu.dot_dimension_numbers<[2], [1], [1], [2], [0, 0, 0, 1, 1, 2], [0], [0]>} : vector<2x64x64xf32>, vector<2x64x8xf32>, vector<2x64x8xf32> -> vector<2x64x8xf32>
      %c0_80 = arith.constant 0 : index
      %c0_81 = arith.constant 0 : index
      %c48 = arith.constant 48 : index
      %196 = vector.load %arg10[%c0_80, %c0_81, %c48] : memref<2x64x64xf32, #tpu.memory_space<vmem>>, vector<2x64x8xf32>
      tpu.vector_store %arg10[%c0_80, %c0_81, %c48], %195 {strides = array<i32>} : memref<2x64x64xf32, #tpu.memory_space<vmem>>, vector<2x64x8xf32>,
      %197 = vector.extract_strided_slice %53 {offsets = [0, 0, 56], sizes = [2, 64, 8], strides = [1, 1, 1]} : vector<2x64x64xf32> to vector<2x64x8xf32>
      %198 = vector.extract_strided_slice %58 {offsets = [0, 0, 56], sizes = [2, 64, 8], strides = [1, 1, 1]} : vector<2x64x64xf32> to vector<2x64x8xf32>
      %199 = vector.extract_strided_slice %63 {offsets = [0, 0, 56], sizes = [2, 64, 8], strides = [1, 1, 1]} : vector<2x64x64xf32> to vector<2x64x8xf32>
      %cst_82 = arith.constant dense<0.000000e+00> : vector<2x64x64xf32>
      %200 = tpu.matmul %197, %198, %cst_82 {dimension_numbers = #tpu.dot_dimension_numbers<[2], [2], [1], [1], [0, 0, 0, 1, 1, 1], [0], [0]>} : vector<2x64x8xf32>, vector<2x64x8xf32>, vector<2x64x64xf32> -> vector<2x64x64xf32>
      %cst_83 = arith.constant dense<0xFF800000> : vector<2x64xf32>
      %201 = vector.multi_reduction <maximumf>, %200, %cst_83 [2] : vector<2x64x64xf32> to vector<2x64xf32>
      %202 = vector.shape_cast %201 : vector<2x64xf32> to vector<2x64x1xf32>
      %203 = vector.broadcast %202 : vector<2x64x1xf32> to vector<2x64x64xf32>
      %204 = arith.subf %200, %203 : vector<2x64x64xf32>
      %205 = math.exp %204 : vector<2x64x64xf32>
      %206 = arith.mulf %205, %4 : vector<2x64x64xf32>
      %cst_84 = arith.constant dense<0.000000e+00> : vector<2x64xf32>
      %207 = vector.multi_reduction <add>, %206, %cst_84 [2] : vector<2x64x64xf32> to vector<2x64xf32>
      %208 = vector.shape_cast %207 : vector<2x64xf32> to vector<2x64x1xf32>
      %cst_85 = arith.constant 1.000000e-30 : f32
      %209 = vector.broadcast %cst_85 : f32 to vector<2x64x1xf32>
      %210 = arith.maximumf %208, %209 : vector<2x64x1xf32>
      %211 = tpu.reciprocal %210 {approx = true} : vector<2x64x1xf32> -> vector<2x64x1xf32>
      %212 = vector.broadcast %211 : vector<2x64x1xf32> to vector<2x64x64xf32>
      %213 = arith.mulf %206, %212 : vector<2x64x64xf32>
      %cst_86 = arith.constant dense<0.000000e+00> : vector<2x64x8xf32>
      %214 = tpu.matmul %213, %199, %cst_86 {dimension_numbers = #tpu.dot_dimension_numbers<[2], [1], [1], [2], [0, 0, 0, 1, 1, 2], [0], [0]>} : vector<2x64x64xf32>, vector<2x64x8xf32>, vector<2x64x8xf32> -> vector<2x64x8xf32>
      %c0_87 = arith.constant 0 : index
      %c0_88 = arith.constant 0 : index
      %c56 = arith.constant 56 : index
      %215 = vector.load %arg10[%c0_87, %c0_88, %c56] : memref<2x64x64xf32, #tpu.memory_space<vmem>>, vector<2x64x8xf32>
      tpu.vector_store %arg10[%c0_87, %c0_88, %c56], %214 {strides = array<i32>} : memref<2x64x64xf32, #tpu.memory_space<vmem>>, vector<2x64x8xf32>,
      %c0_89 = arith.constant 0 : index
      %c0_90 = arith.constant 0 : index
      %c0_91 = arith.constant 0 : index
      %216 = vector.load %arg10[%c0_89, %c0_90, %c0_91] : memref<2x64x64xf32, #tpu.memory_space<vmem>>, vector<2x64x64xf32>
      %217 = vector.shape_cast %216 : vector<2x64x64xf32> to vector<128x64xf32>
      %218 = arith.truncf %217 : vector<128x64xf32> to vector<128x64xbf16>
      %219 = arith.index_cast %16 : i32 to index
      %c0_92 = arith.constant 0 : index
      %c0_93 = arith.constant 0 : index
      %220 = vector.load %arg4[%219, %c0_92, %c0_93] : memref<2x64x64xbf16, #tpu.memory_space<vmem>>, vector<1x64x64xbf16>
      %221 = vector.shape_cast %220 : vector<1x64x64xbf16> to vector<64x64xbf16>
      %cst_94 = arith.constant dense<0.000000e+00> : vector<128x64xf32>
      %222 = tpu.matmul %218, %221, %cst_94 {dimension_numbers = #tpu.dot_dimension_numbers<[1], [0], [0], [1], [0, 0, 1, 1], [], []>} : vector<128x64xbf16>, vector<64x64xbf16>, vector<128x64xf32> -> vector<128x64xf32>
      %223 = arith.addf %18, %222 : vector<128x64xf32>
      %224 = vector.extract_strided_slice %21 {offsets = [5, 0], sizes = [1, 64], strides = [1, 1]} : vector<10x64xf32> to vector<1x64xf32>
      %225 = vector.broadcast %224 : vector<1x64xf32> to vector<128x64xf32>
      %226 = arith.addf %223, %225 : vector<128x64xf32>
      %227 = vector.extract_strided_slice %21 {offsets = [6, 0], sizes = [1, 64], strides = [1, 1]} : vector<10x64xf32> to vector<1x64xf32>
      %228 = vector.extract_strided_slice %21 {offsets = [7, 0], sizes = [1, 64], strides = [1, 1]} : vector<10x64xf32> to vector<1x64xf32>
      %cst_95 = arith.constant dense<0.000000e+00> : vector<128xf32>
      %229 = vector.multi_reduction <add>, %226, %cst_95 [1] : vector<128x64xf32> to vector<128xf32>
      %230 = vector.shape_cast %229 : vector<128xf32> to vector<128x1xf32>
      %cst_96 = arith.constant 6.400000e+01 : f32
      %231 = vector.broadcast %cst_96 : f32 to vector<128x1xf32>
      %232 = arith.divf %230, %231 : vector<128x1xf32>
      %233 = vector.broadcast %232 : vector<128x1xf32> to vector<128x64xf32>
      %234 = arith.subf %226, %233 : vector<128x64xf32>
      %235 = arith.mulf %234, %234 : vector<128x64xf32>
      %cst_97 = arith.constant dense<0.000000e+00> : vector<128xf32>
      %236 = vector.multi_reduction <add>, %235, %cst_97 [1] : vector<128x64xf32> to vector<128xf32>
      %237 = vector.shape_cast %236 : vector<128xf32> to vector<128x1xf32>
      %cst_98 = arith.constant 6.400000e+01 : f32
      %238 = vector.broadcast %cst_98 : f32 to vector<128x1xf32>
      %239 = arith.divf %237, %238 : vector<128x1xf32>
      %cst_99 = arith.constant 9.99999974E-6 : f32
      %240 = vector.broadcast %cst_99 : f32 to vector<128x1xf32>
      %241 = arith.addf %239, %240 : vector<128x1xf32>
      %242 = math.rsqrt %241 : vector<128x1xf32>
      %243 = vector.broadcast %242 : vector<128x1xf32> to vector<128x64xf32>
      %244 = arith.mulf %234, %243 : vector<128x64xf32>
      %245 = vector.broadcast %227 : vector<1x64xf32> to vector<128x64xf32>
      %246 = arith.mulf %244, %245 : vector<128x64xf32>
      %247 = vector.broadcast %228 : vector<1x64xf32> to vector<128x64xf32>
      %248 = arith.addf %246, %247 : vector<128x64xf32>
      %249 = arith.truncf %248 : vector<128x64xf32> to vector<128x64xbf16>
      %250 = arith.index_cast %16 : i32 to index
      %c0_100 = arith.constant 0 : index
      %c0_101 = arith.constant 0 : index
      %251 = vector.load %arg5[%250, %c0_100, %c0_101] : memref<2x64x64xbf16, #tpu.memory_space<vmem>>, vector<1x64x64xbf16>
      %252 = vector.shape_cast %251 : vector<1x64x64xbf16> to vector<64x64xbf16>
      %cst_102 = arith.constant dense<0.000000e+00> : vector<128x64xf32>
      %253 = tpu.matmul %249, %252, %cst_102 {dimension_numbers = #tpu.dot_dimension_numbers<[1], [0], [0], [1], [0, 0, 1, 1], [], []>} : vector<128x64xbf16>, vector<64x64xbf16>, vector<128x64xf32> -> vector<128x64xf32>
      %254 = vector.extract_strided_slice %21 {offsets = [8, 0], sizes = [1, 64], strides = [1, 1]} : vector<10x64xf32> to vector<1x64xf32>
      %255 = vector.broadcast %254 : vector<1x64xf32> to vector<128x64xf32>
      %256 = arith.addf %253, %255 : vector<128x64xf32>
      %257 = arith.mulf %256, %256 : vector<128x64xf32>
      %258 = arith.mulf %256, %257 : vector<128x64xf32>
      %cst_103 = arith.constant 4.471500e-02 : f32
      %259 = vector.broadcast %cst_103 : f32 to vector<128x64xf32>
      %260 = arith.mulf %259, %258 : vector<128x64xf32>
      %261 = arith.addf %256, %260 : vector<128x64xf32>
      %cst_104 = arith.constant 0.797884583 : f32
      %262 = vector.broadcast %cst_104 : f32 to vector<128x64xf32>
      %263 = arith.mulf %262, %261 : vector<128x64xf32>
      %264 = math.tanh %263 : vector<128x64xf32>
      %cst_105 = arith.constant 1.000000e+00 : f32
      %265 = vector.broadcast %cst_105 : f32 to vector<128x64xf32>
      %266 = arith.addf %265, %264 : vector<128x64xf32>
      %cst_106 = arith.constant 5.000000e-01 : f32
      %267 = vector.broadcast %cst_106 : f32 to vector<128x64xf32>
      %268 = arith.mulf %267, %266 : vector<128x64xf32>
      %269 = arith.mulf %256, %268 : vector<128x64xf32>
      %270 = arith.truncf %269 : vector<128x64xf32> to vector<128x64xbf16>
      %271 = arith.index_cast %16 : i32 to index
      %c0_107 = arith.constant 0 : index
      %c0_108 = arith.constant 0 : index
      %272 = vector.load %arg6[%271, %c0_107, %c0_108] : memref<2x64x64xbf16, #tpu.memory_space<vmem>>, vector<1x64x64xbf16>
      %273 = vector.shape_cast %272 : vector<1x64x64xbf16> to vector<64x64xbf16>
      %cst_109 = arith.constant dense<0.000000e+00> : vector<128x64xf32>
      %274 = tpu.matmul %270, %273, %cst_109 {dimension_numbers = #tpu.dot_dimension_numbers<[1], [0], [0], [1], [0, 0, 1, 1], [], []>} : vector<128x64xbf16>, vector<64x64xbf16>, vector<128x64xf32> -> vector<128x64xf32>
      %275 = vector.extract_strided_slice %21 {offsets = [9, 0], sizes = [1, 64], strides = [1, 1]} : vector<10x64xf32> to vector<1x64xf32>
      %276 = vector.broadcast %275 : vector<1x64xf32> to vector<128x64xf32>
      %277 = arith.addf %274, %276 : vector<128x64xf32>
      %278 = arith.addf %226, %277 : vector<128x64xf32>
      %279 = vector.shape_cast %278 : vector<128x64xf32> to vector<2x64x64xf32>
      %c0_110 = arith.constant 0 : index
      %c0_111 = arith.constant 0 : index
      %c0_112 = arith.constant 0 : index
      %280 = vector.load %arg9[%c0_110, %c0_111, %c0_112] : memref<2x64x64xf32, #tpu.memory_space<vmem>>, vector<2x64x64xf32>
      tpu.vector_store %arg9[%c0_110, %c0_111, %c0_112], %279 {strides = array<i32>} : memref<2x64x64xf32, #tpu.memory_space<vmem>>, vector<2x64x64xf32>,
    }
    %c2_i32_8 = arith.constant 2 : i32
    %c0_9 = arith.constant 0 : index
    %c0_10 = arith.constant 0 : index
    %c0_11 = arith.constant 0 : index
    %6 = vector.load %arg9[%c0_9, %c0_10, %c0_11] : memref<2x64x64xf32, #tpu.memory_space<vmem>>, vector<2x64x64xf32>
    %cst = arith.constant dense<0.000000e+00> : vector<2x1x64xf32>
    %7 = tpu.matmul %2, %6, %cst {dimension_numbers = #tpu.dot_dimension_numbers<[2], [1], [1], [2], [0, 0, 0, 1, 1, 2], [0], [0]>} : vector<2x1x64xf32>, vector<2x64x64xf32>, vector<2x1x64xf32> -> vector<2x1x64xf32>
    %cst_12 = arith.constant dense<0.000000e+00> : vector<2x1xf32>
    %8 = vector.multi_reduction <add>, %2, %cst_12 [2] : vector<2x1x64xf32> to vector<2x1xf32>
    %9 = vector.shape_cast %8 : vector<2x1xf32> to vector<2x1x1xf32>
    %cst_13 = arith.constant 1.000000e+00 : f32
    %10 = vector.broadcast %cst_13 : f32 to vector<2x1x1xf32>
    %11 = arith.maximumf %9, %10 : vector<2x1x1xf32>
    %12 = vector.broadcast %11 : vector<2x1x1xf32> to vector<2x1x64xf32>
    %13 = arith.divf %7, %12 : vector<2x1x64xf32>
    %c0_14 = arith.constant 0 : index
    %c0_15 = arith.constant 0 : index
    %c0_16 = arith.constant 0 : index
    %14 = vector.load %arg8[%c0_14, %c0_15, %c0_16] : memref<2x1x64xf32, #tpu.memory_space<vmem>>, vector<2x1x64xf32>
    tpu.vector_store %arg8[%c0_14, %c0_15, %c0_16], %13 {strides = array<i32>} : memref<2x1x64xf32, #tpu.memory_space<vmem>>, vector<2x1x64xf32>,
    return
  }
  func.func @transform_0(%arg0: i32) -> (i32, i32, i32) {
    %c0_i32 = arith.constant 0 : i32
    %c0_i32_0 = arith.constant 0 : i32
    %c0_i32_1 = arith.constant 0 : i32
    return %arg0, %c0_i32, %c0_i32_0 : i32, i32, i32
  }
  func.func @transform_1(%arg0: i32) -> (i32, i32, i32) {
    %c0_i32 = arith.constant 0 : i32
    %c0_i32_0 = arith.constant 0 : i32
    %c0_i32_1 = arith.constant 0 : i32
    return %arg0, %c0_i32, %c0_i32_0 : i32, i32, i32
  }
  func.func @transform_2(%arg0: i32) -> (i32, i32, i32) {
    %c0_i32 = arith.constant 0 : i32
    %c0_i32_0 = arith.constant 0 : i32
    %c0_i32_1 = arith.constant 0 : i32
    %c0_i32_2 = arith.constant 0 : i32
    return %c0_i32, %c0_i32_0, %c0_i32_1 : i32, i32, i32
  }
  func.func @transform_3(%arg0: i32) -> (i32, i32, i32) {
    %c0_i32 = arith.constant 0 : i32
    %c0_i32_0 = arith.constant 0 : i32
    %c0_i32_1 = arith.constant 0 : i32
    %c0_i32_2 = arith.constant 0 : i32
    return %c0_i32, %c0_i32_0, %c0_i32_1 : i32, i32, i32
  }
  func.func @transform_4(%arg0: i32) -> (i32, i32, i32) {
    %c0_i32 = arith.constant 0 : i32
    %c0_i32_0 = arith.constant 0 : i32
    %c0_i32_1 = arith.constant 0 : i32
    %c0_i32_2 = arith.constant 0 : i32
    return %c0_i32, %c0_i32_0, %c0_i32_1 : i32, i32, i32
  }
  func.func @transform_5(%arg0: i32) -> (i32, i32, i32) {
    %c0_i32 = arith.constant 0 : i32
    %c0_i32_0 = arith.constant 0 : i32
    %c0_i32_1 = arith.constant 0 : i32
    %c0_i32_2 = arith.constant 0 : i32
    return %c0_i32, %c0_i32_0, %c0_i32_1 : i32, i32, i32
  }
  func.func @transform_6(%arg0: i32) -> (i32, i32, i32) {
    %c0_i32 = arith.constant 0 : i32
    %c0_i32_0 = arith.constant 0 : i32
    %c0_i32_1 = arith.constant 0 : i32
    %c0_i32_2 = arith.constant 0 : i32
    return %c0_i32, %c0_i32_0, %c0_i32_1 : i32, i32, i32
  }
  func.func @transform_7(%arg0: i32) -> (i32, i32, i32) {
    %c0_i32 = arith.constant 0 : i32
    %c0_i32_0 = arith.constant 0 : i32
    %c0_i32_1 = arith.constant 0 : i32
    return %arg0, %c0_i32, %c0_i32_0 : i32, i32, i32
  }
}

</mosaic_0001>

<llo_original>
// kernel: tpu_custom_call.1
$region0: #{tpu_custom_call.1}
  #allocation0 [shape = 'u32[]', space=smem, size = 0x4, offset = 0x4, fixed_abs, tag = 'smem constant byte address 0x4 - core index']
  #allocation1 [shape = 'u32[144,128]{1,0:T(1,128)}', space=vmem, size = 0x12000, scoped, tag = 'internal scratch']
  #allocation2 [shape = 'f32[2,64,64]{2,1,0:T(8,128)}', space=vmem, size = 0x10000, scoped, tag = 'scratch operand']
  #allocation3 [shape = 'f32[2,64,64]{2,1,0:T(8,128)}', space=vmem, size = 0x10000, scoped, tag = 'scratch operand']
  %s0 = inlined_call_operand.hbm [shape: f32[4,64,64], index: 0, kind: input, shape index: {}]
  %s1 = inlined_call_operand.hbm [shape: f32[4,1,64], index: 1, kind: input, shape index: {}]
  %s2 = inlined_call_operand.hbm [shape: bf16[2,64,192], index: 2, kind: input, shape index: {}]
  %s3 = inlined_call_operand.hbm [shape: bf16[2,64,64], index: 3, kind: input, shape index: {}]
  %s4 = inlined_call_operand.vmem [shape: bf16[2,64,64], index: 4, kind: input, shape index: {}]
  %s5 = inlined_call_operand.hbm [shape: bf16[2,64,64], index: 5, kind: input, shape index: {}]
  %s6 = inlined_call_operand.vmem [shape: f32[2,10,64], index: 6, kind: input, shape index: {}]
  %s7 = inlined_call_operand.hbm [shape: f32[4,1,64], index: 7, kind: output, shape index: {}]
  %s8 = sld [smem:[#allocation0]]
  $region88: #{tpu_custom_call.1} parent=0
    _
  %s10 = ssub.s32 1, %s8
  %s11 = scalar_select 0, %s10, %s8
  $region1: #{tpu_custom_call.1} parent=0
    #allocation4 [shape = 'u8[131072]{0}', space=vmem, size = 0x20000, scoped, tag = 'input window, operand 0']
    #allocation5 [shape = 's32[2]{0}', space=sflag, size = 0x8, scoped, tag = 'scoped memory for tpu_custom_call.1']
    #allocation6 [shape = 's32[2]{0}', space=sflag, size = 0x8, scoped, tag = 'scoped memory for tpu_custom_call.1']
    #allocation7 [shape = 'u8[2048]{0}', space=vmem, size = 0x800, scoped, tag = 'input window, operand 1']
    #allocation8 [shape = 's32[2]{0}', space=sflag, size = 0x8, scoped, tag = 'scoped memory for tpu_custom_call.1']
    #allocation9 [shape = 'u8[65536]{0}', space=vmem, size = 0x10000, scoped, tag = 'input window, operand 2, single buffered']
    #allocation10 [shape = 'u8[32768]{0}', space=vmem, size = 0x8000, scoped, tag = 'input window, operand 3, single buffered']
    #allocation11 [shape = 's32[1]{0}', space=sflag, size = 0x4, scoped, tag = 'scoped memory for tpu_custom_call.1']
    #allocation12 [shape = 'u8[32768]{0}', space=vmem, size = 0x8000, scoped, tag = 'input window, operand 5, single buffered']
    #allocation13 [shape = 'u8[2048]{0}', space=vmem, size = 0x800, scoped, tag = 'output window, operand 0']
    %12 = vsyncpa [#allocation5], 0
    %s13 = scalar_lea.sflag [#allocation5], 1
    %14 = vsyncpa %s13, 0
    %15 = vsyncpa [#allocation8], 0
    %s16 = scalar_lea.sflag [#allocation8], 1
    %17 = vsyncpa %s16, 0
    %18 = vsyncpa [#allocation11], 0
    %19 = vsyncpa [#allocation6], 0
    %s20 = scalar_lea.sflag [#allocation6], 1
    %21 = vsyncpa %s20, 0
    loop: start=0, step=1, limit=4
    $region2: #{tpu_custom_call.1} parent=1 // loop_pre_header
      _
    $region3: #{tpu_custom_call.1} parent=1 // loop_header
      %s23 = sphi 0, %s27
      %p24 = scmp.ge.s32.totalorder %s23, 4
      %s33 = sphi 0, %s35
      %s36 = sphi 0, %s33
      %s37 = sphi 0, %s36
      %s53 = sphi 0, %s37
      %s59 = sphi 0, %s61
      %s62 = sphi 0, %s59
      %s63 = sphi 0, %s62
      %s79 = sphi 0, %s63
      %s83 = sphi 0, %s83
      %s85 = sphi 0, %s83
      %s86 = sphi 0, %s85
      %s100 = sphi 0, %s86
      %s104 = sphi 0, %s104
      %s106 = sphi 0, %s104
      %s107 = sphi 0, %s106
      %s121 = sphi 0, %s107
      %s125 = sphi 0, %s125
      %s127 = sphi 0, %s125
      %s128 = sphi 0, %s127
      %s142 = sphi 0, %s128
      %s146 = sphi 0, %s146
      %s148 = sphi 0, %s146
      %s149 = sphi 0, %s148
      %s163 = sphi 0, %s149
      %s167 = sphi 0, %s167
      %s169 = sphi 0, %s167
      %s170 = sphi 0, %s169
      %s184 = sphi 0, %s170
      %s190 = sphi 0, %s192
      %s193 = sphi 0, %s190
      %s194 = sphi 0, %s193
      %s210 = sphi 0, %s194
    $region4: #{tpu_custom_call.1} parent=1 // loop_header_branch
      %26 = sbr.rel (%p24) target = $region8
    $region5: #{tpu_custom_call.1} parent=1 // loop_body
      %s28 = ssub.s32 %s23, 1
      %s29 = ssub.s32 %s23, 2
      %s30 = sadd.s32 %s23, 1
      %s31 = ssub.s32 %s23, %s30
      %p32 = scmp.eq.s32.totalorder %s31, 0
      %s34 = sadd.s32 %s33, 1
      %s35 = scalar_select %p32, %s33, %s34
      %p38 = pneg %p32
      %p39 = scmp.eq.s32.totalorder %s23, 1
      %p40 = por %p38, %p39
      %p41 = scmp.ne.s32.totalorder %s33, %s36
      %p42 = scmp.eq.s32.totalorder %s23, 0
      %p43 = por %p41, %p42
      %p44 = scmp.ne.s32.totalorder %s33, %s36
      %p45 = scmp.eq.s32.totalorder %s28, 1
      %p46 = por %p44, %p45
      %p47 = scmp.ne.s32.totalorder %s36, %s37
      %p48 = scmp.eq.s32.totalorder %s28, 0
      %p49 = por %p47, %p48
      %p50 = scmp.ne.s32.totalorder %s36, %s37
      %p51 = scmp.eq.s32.totalorder %s29, 1
      %p52 = por %p50, %p51
      %p54 = scmp.ne.s32.totalorder %s37, %s53
      %p55 = scmp.eq.s32.totalorder %s29, 0
      %p56 = por %p54, %p55
      %s57 = ssub.s32 %s23, %s30
      %p58 = scmp.eq.s32.totalorder %s57, 0
      %s60 = sadd.s32 %s59, 1
      %s61 = scalar_select %p58, %s59, %s60
      %p64 = pneg %p58
      %p65 = scmp.eq.s32.totalorder %s23, 1
      %p66 = por %p64, %p65
      %p67 = scmp.ne.s32.totalorder %s59, %s62
      %p68 = scmp.eq.s32.totalorder %s23, 0
      %p69 = por %p67, %p68
      %p70 = scmp.ne.s32.totalorder %s59, %s62
      %p71 = scmp.eq.s32.totalorder %s28, 1
      %p72 = por %p70, %p71
      %p73 = scmp.ne.s32.totalorder %s62, %s63
      %p74 = scmp.eq.s32.totalorder %s28, 0
      %p75 = por %p73, %p74
      %p76 = scmp.ne.s32.totalorder %s62, %s63
      %p77 = scmp.eq.s32.totalorder %s29, 1
      %p78 = por %p76, %p77
      %p80 = scmp.ne.s32.totalorder %s63, %s79
      %p81 = scmp.eq.s32.totalorder %s29, 0
      %p82 = por %p80, %p81
      %s84 = sadd.s32 %s83, 1
      %p87 = scmp.eq.s32.totalorder %s23, 1
      %p88 = scmp.ne.s32.totalorder %s83, %s85
      %p89 = scmp.eq.s32.totalorder %s23, 0
      %p90 = por %p88, %p89
      %p91 = scmp.ne.s32.totalorder %s83, %s85
      %p92 = scmp.eq.s32.totalorder %s28, 1
      %p93 = por %p91, %p92
      %p94 = scmp.ne.s32.totalorder %s85, %s86
      %p95 = scmp.eq.s32.totalorder %s28, 0
      %p96 = por %p94, %p95
      %p97 = scmp.ne.s32.totalorder %s85, %s86
      %p98 = scmp.eq.s32.totalorder %s29, 1
      %p99 = por %p97, %p98
      %p101 = scmp.ne.s32.totalorder %s86, %s100
      %p102 = scmp.eq.s32.totalorder %s29, 0
      %p103 = por %p101, %p102
      %s105 = sadd.s32 %s104, 1
      %p108 = scmp.eq.s32.totalorder %s23, 1
      %p109 = scmp.ne.s32.totalorder %s104, %s106
      %p110 = scmp.eq.s32.totalorder %s23, 0
      %p111 = por %p109, %p110
      %p112 = scmp.ne.s32.totalorder %s104, %s106
      %p113 = scmp.eq.s32.totalorder %s28, 1
      %p114 = por %p112, %p113
      %p115 = scmp.ne.s32.totalorder %s106, %s107
      %p116 = scmp.eq.s32.totalorder %s28, 0
      %p117 = por %p115, %p116
      %p118 = scmp.ne.s32.totalorder %s106, %s107
      %p119 = scmp.eq.s32.totalorder %s29, 1
      %p120 = por %p118, %p119
      %p122 = scmp.ne.s32.totalorder %s107, %s121
      %p123 = scmp.eq.s32.totalorder %s29, 0
      %p124 = por %p122, %p123
      %s126 = sadd.s32 %s125, 1
      %p129 = scmp.eq.s32.totalorder %s23, 1
      %p130 = scmp.ne.s32.totalorder %s125, %s127
      %p131 = scmp.eq.s32.totalorder %s23, 0
      %p132 = por %p130, %p131
      %p133 = scmp.ne.s32.totalorder %s125, %s127
      %p134 = scmp.eq.s32.totalorder %s28, 1
      %p135 = por %p133, %p134
      %p136 = scmp.ne.s32.totalorder %s127, %s128
      %p137 = scmp.eq.s32.totalorder %s28, 0
      %p138 = por %p136, %p137
      %p139 = scmp.ne.s32.totalorder %s127, %s128
      %p140 = scmp.eq.s32.totalorder %s29, 1
      %p141 = por %p139, %p140
      %p143 = scmp.ne.s32.totalorder %s128, %s142
      %p144 = scmp.eq.s32.totalorder %s29, 0
      %p145 = por %p143, %p144
      %s147 = sadd.s32 %s146, 1
      %p150 = scmp.eq.s32.totalorder %s23, 1
      %p151 = scmp.ne.s32.totalorder %s146, %s148
      %p152 = scmp.eq.s32.totalorder %s23, 0
      %p153 = por %p151, %p152
      %p154 = scmp.ne.s32.totalorder %s146, %s148
      %p155 = scmp.eq.s32.totalorder %s28, 1
      %p156 = por %p154, %p155
      %p157 = scmp.ne.s32.totalorder %s148, %s149
      %p158 = scmp.eq.s32.totalorder %s28, 0
      %p159 = por %p157, %p158
      %p160 = scmp.ne.s32.totalorder %s148, %s149
      %p161 = scmp.eq.s32.totalorder %s29, 1
      %p162 = por %p160, %p161
      %p164 = scmp.ne.s32.totalorder %s149, %s163
      %p165 = scmp.eq.s32.totalorder %s29, 0
      %p166 = por %p164, %p165
      %s168 = sadd.s32 %s167, 1
      %p171 = scmp.eq.s32.totalorder %s23, 1
      %p172 = scmp.ne.s32.totalorder %s167, %s169
      %p173 = scmp.eq.s32.totalorder %s23, 0
      %p174 = por %p172, %p173
      %p175 = scmp.ne.s32.totalorder %s167, %s169
      %p176 = scmp.eq.s32.totalorder %s28, 1
      %p177 = por %p175, %p176
      %p178 = scmp.ne.s32.totalorder %s169, %s170
      %p179 = scmp.eq.s32.totalorder %s28, 0
      %p180 = por %p178, %p179
      %p181 = scmp.ne.s32.totalorder %s169, %s170
      %p182 = scmp.eq.s32.totalorder %s29, 1
      %p183 = por %p181, %p182
      %p185 = scmp.ne.s32.totalorder %s170, %s184
      %p186 = scmp.eq.s32.totalorder %s29, 0
      %p187 = por %p185, %p186
      %s188 = ssub.s32 %s23, %s30
      %p189 = scmp.eq.s32.totalorder %s188, 0
      %s191 = sadd.s32 %s190, 1
      %s192 = scalar_select %p189, %s190, %s191
      %p195 = pneg %p189
      %p196 = scmp.eq.s32.totalorder %s23, 1
      %p197 = por %p195, %p196
      %p198 = scmp.ne.s32.totalorder %s190, %s193
      %p199 = scmp.eq.s32.totalorder %s23, 0
      %p200 = por %p198, %p199
      %p201 = scmp.ne.s32.totalorder %s190, %s193
      %p202 = scmp.eq.s32.totalorder %s28, 1
      %p203 = por %p201, %p202
      %p204 = scmp.ne.s32.totalorder %s193, %s194
      %p205 = scmp.eq.s32.totalorder %s28, 0
      %p206 = por %p204, %p205
      %p207 = scmp.ne.s32.totalorder %s193, %s194
      %p208 = scmp.eq.s32.totalorder %s29, 1
      %p209 = por %p207, %p208
      %p211 = scmp.ne.s32.totalorder %s194, %s210
      %p212 = scmp.eq.s32.totalorder %s29, 0
      %p213 = por %p211, %p212
      %p214 = scmp.le.s32.totalorder 1, %s23
      %p215 = scmp.lt.s32.totalorder %s23, 3
      %p216 = pnand %p214, %p215
      %p217 = pneg %p216
      // Predicated region
      $region9: #{tpu_custom_call.1} parent=5 // pred_check
        _
      $region10: #{tpu_custom_call.1} parent=5 // pred_check_branch
        %219 = sbr.rel (%p216) target = $region12
      $region11: #{tpu_custom_call.1} parent=5 // pred_region
        %s220 = ssub.s32 %s23, 1
        // Predicated region
        $region13: #{tpu_custom_call.1} parent=11 // pred_check
          %p221 = pneg %p96
        $region14: #{tpu_custom_call.1} parent=11 // pred_check_branch
          %223 = sbr.rel (%p221) target = $region16
        $region15: #{tpu_custom_call.1} parent=11 // pred_region
          %s225 = ssub.s32 2048, 2048
          %226 = vsyncadd [#allocation8], %s225
          %s227 = sshll.u32 [#allocation9], 4
          %s228 = int_to_ptr.vmem [resolvable:$true] %s227
          %233 = dma.hbm_to_vmem [thread:$0]  %s2, 2048, %s228, [#allocation8], 128, 128, 8
        $region16: #{tpu_custom_call.1} parent=11 // pred_fallthru
          _
        // Predicated region
        $region17: #{tpu_custom_call.1} parent=11 // pred_check
          %p234 = pneg %p117
        $region18: #{tpu_custom_call.1} parent=11 // pred_check_branch
          %236 = sbr.rel (%p234) target = $region20
        $region19: #{tpu_custom_call.1} parent=11 // pred_region
          %s238 = ssub.s32 1024, 1024
          %239 = vsyncadd [#allocation11], %s238
          %s240 = sshll.u32 [#allocation10], 4
          %s241 = int_to_ptr.vmem [resolvable:$true] %s240
          %246 = dma.hbm_to_vmem [thread:$0]  %s3, 1024, %s241, [#allocation11], 64, 64, 4
        $region20: #{tpu_custom_call.1} parent=11 // pred_fallthru
          _
        // Predicated region
        $region21: #{tpu_custom_call.1} parent=11 // pred_check
          %p247 = pneg %p138
        $region22: #{tpu_custom_call.1} parent=11 // pred_check_branch
          %249 = sbr.rel (%p247) target = $region24
        $region23: #{tpu_custom_call.1} parent=11 // pred_region
          _
        $region24: #{tpu_custom_call.1} parent=11 // pred_fallthru
          _
        // Predicated region
        $region25: #{tpu_custom_call.1} parent=11 // pred_check
          %p250 = pneg %p159
        $region26: #{tpu_custom_call.1} parent=11 // pred_check_branch
          %252 = sbr.rel (%p250) target = $region28
        $region27: #{tpu_custom_call.1} parent=11 // pred_region
          %s254 = ssub.s32 1024, 1024
          %255 = vsyncadd [#allocation11], %s254
          %s256 = sshll.u32 [#allocation12], 4
          %s257 = int_to_ptr.vmem [resolvable:$true] %s256
          %262 = dma.hbm_to_vmem [thread:$0]  %s5, 1024, %s257, [#allocation11], 64, 64, 4
        $region28: #{tpu_custom_call.1} parent=11 // pred_fallthru
          _
        // Predicated region
        $region29: #{tpu_custom_call.1} parent=11 // pred_check
          %p263 = pneg %p180
        $region30: #{tpu_custom_call.1} parent=11 // pred_check_branch
          %265 = sbr.rel (%p263) target = $region32
        $region31: #{tpu_custom_call.1} parent=11 // pred_region
          _
        $region32: #{tpu_custom_call.1} parent=11 // pred_fallthru
          _
      $region12: #{tpu_custom_call.1} parent=5 // pred_fallthru
        _
      %p266 = scmp.lt.s32.totalorder %s23, 2
      // Predicated region
      $region33: #{tpu_custom_call.1} parent=5 // pred_check
        %p267 = pneg %p266
      $region34: #{tpu_custom_call.1} parent=5 // pred_check_branch
        %269 = sbr.rel (%p267) target = $region36
      $region35: #{tpu_custom_call.1} parent=5 // pred_region
        // Predicated region
        $region37: #{tpu_custom_call.1} parent=35 // pred_check
          %p270 = pneg %p43
        $region38: #{tpu_custom_call.1} parent=35 // pred_check_branch
          %272 = sbr.rel (%p270) target = $region40
        $region39: #{tpu_custom_call.1} parent=35 // pred_region
          %s273 = sand.u32 %s33, 1
          %s274 = scalar_lea.sflag [#allocation5], %s273
          %s275 = sand.u32 %s33, 1
          %s276 = smul.addr %s275, 128
          %s277 = scalar_lea.vmem [#allocation4], %s276
          %s278 = smul.u32 2, %s23
          %s280 = ssub.s32 2048, 2048
          %281 = vsyncadd %s274, %s280
          %s282 = smul.addr %s278, 8
          %s283 = smul.addr %s282, 128
          %s284 = scalar_lea.hbm %s0, %s283
          %s285 = sshll.u32 %s277, 4
          %s286 = int_to_ptr.vmem [resolvable:$true] %s285
          %291 = dma.hbm_to_vmem [thread:$0]  %s284, 2048, %s286, %s274, 128, 128, 8
        $region40: #{tpu_custom_call.1} parent=35 // pred_fallthru
          _
        // Predicated region
        $region41: #{tpu_custom_call.1} parent=35 // pred_check
          %p292 = pneg %p69
        $region42: #{tpu_custom_call.1} parent=35 // pred_check_branch
          %294 = sbr.rel (%p292) target = $region44
        $region43: #{tpu_custom_call.1} parent=35 // pred_region
          %s295 = sand.u32 %s23, 1
          %s296 = scalar_lea.sflag [#allocation8], %s295
          %s297 = sand.u32 %s59, 1
          %s298 = smul.addr %s297, 2
          %s299 = scalar_lea.vmem [#allocation7], %s298
          %s300 = smul.u32 2, %s23
          %s302 = ssub.s32 32, 32
          %303 = vsyncadd %s296, %s302
          %s304 = smul.addr %s300, 16
          %s305 = scalar_lea.hbm %s1, %s304
          %s306 = sshll.u32 %s299, 4
          %s307 = int_to_ptr.vmem [resolvable:$true] %s306
          %312 = dma.hbm_to_vmem [thread:$0]  %s305, 32, %s307, %s296, 16, 16, 1
        $region44: #{tpu_custom_call.1} parent=35 // pred_fallthru
          _
      $region36: #{tpu_custom_call.1} parent=5 // pred_fallthru
        _
      %p313 = scmp.le.s32.totalorder 1, %s23
      %p314 = scmp.lt.s32.totalorder %s23, 3
      %p315 = pnand %p313, %p314
      %p316 = pneg %p315
      // Predicated region
      $region45: #{tpu_custom_call.1} parent=5 // pred_check
        _
      $region46: #{tpu_custom_call.1} parent=5 // pred_check_branch
        %318 = sbr.rel (%p315) target = $region48
      $region47: #{tpu_custom_call.1} parent=5 // pred_region
        %s319 = ssub.s32 %s23, 1
        %s320 = sand.u32 %s36, 1
        %s321 = scalar_lea.sflag [#allocation5], %s320
        %s322 = sand.u32 %s36, 1
        %s323 = smul.addr %s322, 128
        %s324 = scalar_lea.vmem [#allocation4], %s323
        // Predicated region
        $region49: #{tpu_custom_call.1} parent=47 // pred_check
          %p325 = pneg %p49
        $region50: #{tpu_custom_call.1} parent=47 // pred_check_branch
          %327 = sbr.rel (%p325) target = $region52
        $region51: #{tpu_custom_call.1} parent=47 // pred_region
          %328 = dma.done %s321, 2048
        $region52: #{tpu_custom_call.1} parent=47 // pred_fallthru
          _
        %s329 = sand.u32 %s28, 1
        %s330 = scalar_lea.sflag [#allocation8], %s329
        %s331 = sand.u32 %s62, 1
        %s332 = smul.addr %s331, 2
        %s333 = scalar_lea.vmem [#allocation7], %s332
        // Predicated region
        $region53: #{tpu_custom_call.1} parent=47 // pred_check
          %p334 = pneg %p75
        $region54: #{tpu_custom_call.1} parent=47 // pred_check_branch
          %336 = sbr.rel (%p334) target = $region56
        $region55: #{tpu_custom_call.1} parent=47 // pred_region
          %337 = dma.done %s330, 32
        $region56: #{tpu_custom_call.1} parent=47 // pred_fallthru
          _
        // Predicated region
        $region57: #{tpu_custom_call.1} parent=47 // pred_check
          %p338 = pneg %p96
        $region58: #{tpu_custom_call.1} parent=47 // pred_check_branch
          %340 = sbr.rel (%p338) target = $region60
        $region59: #{tpu_custom_call.1} parent=47 // pred_region
          %341 = dma.done [#allocation8], 2048
        $region60: #{tpu_custom_call.1} parent=47 // pred_fallthru
          _
        // Predicated region
        $region61: #{tpu_custom_call.1} parent=47 // pred_check
          %p342 = pneg %p117
        $region62: #{tpu_custom_call.1} parent=47 // pred_check_branch
          %344 = sbr.rel (%p342) target = $region64
        $region63: #{tpu_custom_call.1} parent=47 // pred_region
          %345 = dma.done [#allocation11], 1024
        $region64: #{tpu_custom_call.1} parent=47 // pred_fallthru
          _
        // Predicated region
        $region65: #{tpu_custom_call.1} parent=47 // pred_check
          %p346 = pneg %p159
        $region66: #{tpu_custom_call.1} parent=47 // pred_check_branch
          %348 = sbr.rel (%p346) target = $region68
        $region67: #{tpu_custom_call.1} parent=47 // pred_region
          %349 = dma.done [#allocation11], 1024
        $region68: #{tpu_custom_call.1} parent=47 // pred_fallthru
          _
        %s350 = sand.u32 %s36, 1
        %s351 = scalar_lea.sflag [#allocation5], %s350
        %s352 = sand.u32 %s36, 1
        %s353 = smul.addr %s352, 128
        %s354 = scalar_lea.vmem [#allocation4], %s353
        %p355 = pneg %p49
        %p356 = pneg %p46
        %s357 = sand.u32 %s28, 1
        %s358 = scalar_lea.sflag [#allocation8], %s357
        %s359 = sand.u32 %s62, 1
        %s360 = smul.addr %s359, 2
        %s361 = scalar_lea.vmem [#allocation7], %s360
        %p362 = pneg %p75
        %p363 = pneg %p72
        %p364 = pneg %p96
        %p365 = pneg %p93
        %p366 = pneg %p117
        %p367 = pneg %p114
        %p368 = pneg %p138
        %p369 = pneg %p135
        %p370 = pneg %p159
        %p371 = pneg %p156
        %p372 = pneg %p180
        %p373 = pneg %p177
        %p374 = pneg %p206
        %p375 = pneg %p203
        %s376 = sand.u32 %s193, 1
        %s377 = scalar_lea.sflag [#allocation6], %s376
        %s378 = sand.u32 %s193, 1
        %s379 = smul.addr %s378, 2
        %s380 = scalar_lea.vmem [#allocation13], %s379
        %s381 = smul.u32 2, %s28
        %s382 = smul.u32 2, %s28
        %s383 = smul.u32 2, %s28
        %v385 = vld [vmem:[%s324] sm:$0xff]
        %v386 = vld [vmem:[%s324 + $0x8] sm:$0xff]
        %v387 = vld [vmem:[%s324 + $0x10] sm:$0xff]
        %v388 = vld [vmem:[%s324 + $0x18] sm:$0xff]
        %v389 = vld [vmem:[%s324 + $0x20] sm:$0xff]
        %v390 = vld [vmem:[%s324 + $0x28] sm:$0xff]
        %v391 = vld [vmem:[%s324 + $0x30] sm:$0xff]
        %v392 = vld [vmem:[%s324 + $0x38] sm:$0xff]
        %v393 = vld [vmem:[%s324 + $0x40] sm:$0xff]
        %v394 = vld [vmem:[%s324 + $0x48] sm:$0xff]
        %v395 = vld [vmem:[%s324 + $0x50] sm:$0xff]
        %v396 = vld [vmem:[%s324 + $0x58] sm:$0xff]
        %v397 = vld [vmem:[%s324 + $0x60] sm:$0xff]
        %v398 = vld [vmem:[%s324 + $0x68] sm:$0xff]
        %v399 = vld [vmem:[%s324 + $0x70] sm:$0xff]
        %v400 = vld [vmem:[%s324 + $0x78] sm:$0xff]
        %vm401 = vcmask 523264
        %402 = vst.msk [vmem:[#allocation2] sm:$0xff] %vm401, %v385
        %403 = vst.msk [vmem:[#allocation2 + $0x8] sm:$0xff] %vm401, %v386
        %404 = vst.msk [vmem:[#allocation2 + $0x10] sm:$0xff] %vm401, %v387
        %405 = vst.msk [vmem:[#allocation2 + $0x18] sm:$0xff] %vm401, %v388
        %406 = vst.msk [vmem:[#allocation2 + $0x20] sm:$0xff] %vm401, %v389
        %407 = vst.msk [vmem:[#allocation2 + $0x28] sm:$0xff] %vm401, %v390
        %408 = vst.msk [vmem:[#allocation2 + $0x30] sm:$0xff] %vm401, %v391
        %409 = vst.msk [vmem:[#allocation2 + $0x38] sm:$0xff] %vm401, %v392
        %410 = vst.msk [vmem:[#allocation2 + $0x40] sm:$0xff] %vm401, %v393
        %411 = vst.msk [vmem:[#allocation2 + $0x48] sm:$0xff] %vm401, %v394
        %412 = vst.msk [vmem:[#allocation2 + $0x50] sm:$0xff] %vm401, %v395
        %413 = vst.msk [vmem:[#allocation2 + $0x58] sm:$0xff] %vm401, %v396
        %414 = vst.msk [vmem:[#allocation2 + $0x60] sm:$0xff] %vm401, %v397
        %415 = vst.msk [vmem:[#allocation2 + $0x68] sm:$0xff] %vm401, %v398
        %416 = vst.msk [vmem:[#allocation2 + $0x70] sm:$0xff] %vm401, %v399
        %417 = vst.msk [vmem:[#allocation2 + $0x78] sm:$0xff] %vm401, %v400
        %v418 = vld [vmem:[%s333] sm:$0x1]
        %v419 = vld [vmem:[%s333 + $0x1] sm:$0x1]
        %v422 = vlaneseq
        %v423 = vshrl.u32 %v422, 7
        %v424 = vsub.s32 0, %v423
        %v425 = vrot.slane %v418, %v424
        %v426 = vlaneseq
        %v427 = vshrl.u32 %v426, 7
        %v428 = vsub.s32 0, %v427
        %v429 = vrot.slane %v419, %v428
        loop: start=0, step=1, limit=2
        $region69: #{tpu_custom_call.1} parent=47 // loop_pre_header
          _
        $region70: #{tpu_custom_call.1} parent=47 // loop_header
          %s433 = sphi 0, %s437
          %p434 = scmp.ge.s32.totalorder %s433, 2
        $region71: #{tpu_custom_call.1} parent=47 // loop_header_branch
          %436 = sbr.rel (%p434) target = $region75
        $region72: #{tpu_custom_call.1} parent=47 // loop_body
          %v438 = vld [vmem:[#allocation2] sm:$0xff]
          %v439 = vld [vmem:[#allocation2 + $0x8] sm:$0xff]
          %v440 = vld [vmem:[#allocation2 + $0x10] sm:$0xff]
          %v441 = vld [vmem:[#allocation2 + $0x18] sm:$0xff]
          %v442 = vld [vmem:[#allocation2 + $0x20] sm:$0xff]
          %v443 = vld [vmem:[#allocation2 + $0x28] sm:$0xff]
          %v444 = vld [vmem:[#allocation2 + $0x30] sm:$0xff]
          %v445 = vld [vmem:[#allocation2 + $0x38] sm:$0xff]
          %v446 = vld [vmem:[#allocation2 + $0x40] sm:$0xff]
          %v447 = vld [vmem:[#allocation2 + $0x48] sm:$0xff]
          %v448 = vld [vmem:[#allocation2 + $0x50] sm:$0xff]
          %v449 = vld [vmem:[#allocation2 + $0x58] sm:$0xff]
          %v450 = vld [vmem:[#allocation2 + $0x60] sm:$0xff]
          %v451 = vld [vmem:[#allocation2 + $0x68] sm:$0xff]
          %v452 = vld [vmem:[#allocation2 + $0x70] sm:$0xff]
          %v453 = vld [vmem:[#allocation2 + $0x78] sm:$0xff]
          %s454 = smul.u32 %s433, 16
          %s455 = scalar_lea.vmem %s6, %s454
          %v456 = vld [vmem:[%s455] sm:$0xff]
          %v457 = vld [vmem:[%s455 + $0x8] sm:$0x3]
          %v458 = vsel %vm401, %v438, 0.0
          %459 = vadd.xlane.f32.xlu0 %v458
          %v460 = vpop.xlane.xlu0 %459
          %v461 = vsel %vm401, %v439, 0.0
          %462 = vadd.xlane.f32.xlu0 %v461
          %v463 = vpop.xlane.xlu0 %462
          %v464 = vsel %vm401, %v440, 0.0
          %465 = vadd.xlane.f32.xlu0 %v464
          %v466 = vpop.xlane.xlu0 %465
          %v467 = vsel %vm401, %v441, 0.0
          %468 = vadd.xlane.f32.xlu0 %v467
          %v469 = vpop.xlane.xlu0 %468
          %v470 = vsel %vm401, %v442, 0.0
          %471 = vadd.xlane.f32.xlu0 %v470
          %v472 = vpop.xlane.xlu0 %471
          %v473 = vsel %vm401, %v443, 0.0
          %474 = vadd.xlane.f32.xlu0 %v473
          %v475 = vpop.xlane.xlu0 %474
          %v476 = vsel %vm401, %v444, 0.0
          %477 = vadd.xlane.f32.xlu0 %v476
          %v478 = vpop.xlane.xlu0 %477
          %v479 = vsel %vm401, %v445, 0.0
          %480 = vadd.xlane.f32.xlu0 %v479
          %v481 = vpop.xlane.xlu0 %480
          %v482 = vsel %vm401, %v446, 0.0
          %483 = vadd.xlane.f32.xlu0 %v482
          %v484 = vpop.xlane.xlu0 %483
          %v485 = vsel %vm401, %v447, 0.0
          %486 = vadd.xlane.f32.xlu0 %v485
          %v487 = vpop.xlane.xlu0 %486
          %v488 = vsel %vm401, %v448, 0.0
          %489 = vadd.xlane.f32.xlu0 %v488
          %v490 = vpop.xlane.xlu0 %489
          %v491 = vsel %vm401, %v449, 0.0
          %492 = vadd.xlane.f32.xlu0 %v491
          %v493 = vpop.xlane.xlu0 %492
          %v494 = vsel %vm401, %v450, 0.0
          %495 = vadd.xlane.f32.xlu0 %v494
          %v496 = vpop.xlane.xlu0 %495
          %v497 = vsel %vm401, %v451, 0.0
          %498 = vadd.xlane.f32.xlu0 %v497
          %v499 = vpop.xlane.xlu0 %498
          %v500 = vsel %vm401, %v452, 0.0
          %501 = vadd.xlane.f32.xlu0 %v500
          %v502 = vpop.xlane.xlu0 %501
          %v503 = vsel %vm401, %v453, 0.0
          %504 = vadd.xlane.f32.xlu0 %v503
          %v505 = vpop.xlane.xlu0 %504
          %v506 = vrcp.pop 64.0
          %v507 = vmul.f32 %v460, %v506
          %v508 = vmul.f32 %v463, %v506
          %v509 = vmul.f32 %v466, %v506
          %v510 = vmul.f32 %v469, %v506
          %v511 = vmul.f32 %v472, %v506
          %v512 = vmul.f32 %v475, %v506
          %v513 = vmul.f32 %v478, %v506
          %v514 = vmul.f32 %v481, %v506
          %v515 = vmul.f32 %v484, %v506
          %v516 = vmul.f32 %v487, %v506
          %v517 = vmul.f32 %v490, %v506
          %v518 = vmul.f32 %v493, %v506
          %v519 = vmul.f32 %v496, %v506
          %v520 = vmul.f32 %v499, %v506
          %v521 = vmul.f32 %v502, %v506
          %v522 = vmul.f32 %v505, %v506
          %v523 = vsub.f32 %v438, %v507
          %v524 = vsub.f32 %v439, %v508
          %v525 = vsub.f32 %v440, %v509
          %v526 = vsub.f32 %v441, %v510
          %v527 = vsub.f32 %v442, %v511
          %v528 = vsub.f32 %v443, %v512
          %v529 = vsub.f32 %v444, %v513
          %v530 = vsub.f32 %v445, %v514
          %v531 = vsub.f32 %v446, %v515
          %v532 = vsub.f32 %v447, %v516
          %v533 = vsub.f32 %v448, %v517
          %v534 = vsub.f32 %v449, %v518
          %v535 = vsub.f32 %v450, %v519
          %v536 = vsub.f32 %v451, %v520
          %v537 = vsub.f32 %v452, %v521
          %v538 = vsub.f32 %v453, %v522
          %v539 = vmul.f32 %v523, %v523
          %v540 = vmul.f32 %v524, %v524
          %v541 = vmul.f32 %v525, %v525
          %v542 = vmul.f32 %v526, %v526
          %v543 = vmul.f32 %v527, %v527
          %v544 = vmul.f32 %v528, %v528
          %v545 = vmul.f32 %v529, %v529
          %v546 = vmul.f32 %v530, %v530
          %v547 = vmul.f32 %v531, %v531
          %v548 = vmul.f32 %v532, %v532
          %v549 = vmul.f32 %v533, %v533
          %v550 = vmul.f32 %v534, %v534
          %v551 = vmul.f32 %v535, %v535
          %v552 = vmul.f32 %v536, %v536
          %v553 = vmul.f32 %v537, %v537
          %v554 = vmul.f32 %v538, %v538
          %v555 = vsel %vm401, %v539, 0.0
          %556 = vadd.xlane.f32.xlu0 %v555
          %v557 = vpop.xlane.xlu0 %556
          %v558 = vsel %vm401, %v540, 0.0
          %559 = vadd.xlane.f32.xlu0 %v558
          %v560 = vpop.xlane.xlu0 %559
          %v561 = vsel %vm401, %v541, 0.0
          %562 = vadd.xlane.f32.xlu0 %v561
          %v563 = vpop.xlane.xlu0 %562
          %v564 = vsel %vm401, %v542, 0.0
          %565 = vadd.xlane.f32.xlu0 %v564
          %v566 = vpop.xlane.xlu0 %565
          %v567 = vsel %vm401, %v543, 0.0
          %568 = vadd.xlane.f32.xlu0 %v567
          %v569 = vpop.xlane.xlu0 %568
          %v570 = vsel %vm401, %v544, 0.0
          %571 = vadd.xlane.f32.xlu0 %v570
          %v572 = vpop.xlane.xlu0 %571
          %v573 = vsel %vm401, %v545, 0.0
          %574 = vadd.xlane.f32.xlu0 %v573
          %v575 = vpop.xlane.xlu0 %574
          %v576 = vsel %vm401, %v546, 0.0
          %577 = vadd.xlane.f32.xlu0 %v576
          %v578 = vpop.xlane.xlu0 %577
          %v579 = vsel %vm401, %v547, 0.0
          %580 = vadd.xlane.f32.xlu0 %v579
          %v581 = vpop.xlane.xlu0 %580
          %v582 = vsel %vm401, %v548, 0.0
          %583 = vadd.xlane.f32.xlu0 %v582
          %v584 = vpop.xlane.xlu0 %583
          %v585 = vsel %vm401, %v549, 0.0
          %586 = vadd.xlane.f32.xlu0 %v585
          %v587 = vpop.xlane.xlu0 %586
          %v588 = vsel %vm401, %v550, 0.0
          %589 = vadd.xlane.f32.xlu0 %v588
          %v590 = vpop.xlane.xlu0 %589
          %v591 = vsel %vm401, %v551, 0.0
          %592 = vadd.xlane.f32.xlu0 %v591
          %v593 = vpop.xlane.xlu0 %592
          %v594 = vsel %vm401, %v552, 0.0
          %595 = vadd.xlane.f32.xlu0 %v594
          %v596 = vpop.xlane.xlu0 %595
          %v597 = vsel %vm401, %v553, 0.0
          %598 = vadd.xlane.f32.xlu0 %v597
          %v599 = vpop.xlane.xlu0 %598
          %v600 = vsel %vm401, %v554, 0.0
          %601 = vadd.xlane.f32.xlu0 %v600
          %v602 = vpop.xlane.xlu0 %601
          %v603 = vmul.f32 %v557, %v506
          %v604 = vmul.f32 %v560, %v506
          %v605 = vmul.f32 %v563, %v506
          %v606 = vmul.f32 %v566, %v506
          %v607 = vmul.f32 %v569, %v506
          %v608 = vmul.f32 %v572, %v506
          %v609 = vmul.f32 %v575, %v506
          %v610 = vmul.f32 %v578, %v506
          %v611 = vmul.f32 %v581, %v506
          %v612 = vmul.f32 %v584, %v506
          %v613 = vmul.f32 %v587, %v506
          %v614 = vmul.f32 %v590, %v506
          %v615 = vmul.f32 %v593, %v506
          %v616 = vmul.f32 %v596, %v506
          %v617 = vmul.f32 %v599, %v506
          %v618 = vmul.f32 %v602, %v506
          %v619 = vadd.f32 %v603, 1e-05
          %v620 = vadd.f32 %v604, 1e-05
          %v621 = vadd.f32 %v605, 1e-05
          %v622 = vadd.f32 %v606, 1e-05
          %v623 = vadd.f32 %v607, 1e-05
          %v624 = vadd.f32 %v608, 1e-05
          %v625 = vadd.f32 %v609, 1e-05
          %v626 = vadd.f32 %v610, 1e-05
          %v627 = vadd.f32 %v611, 1e-05
          %v628 = vadd.f32 %v612, 1e-05
          %v629 = vadd.f32 %v613, 1e-05
          %v630 = vadd.f32 %v614, 1e-05
          %v631 = vadd.f32 %v615, 1e-05
          %v632 = vadd.f32 %v616, 1e-05
          %v633 = vadd.f32 %v617, 1e-05
          %v634 = vadd.f32 %v618, 1e-05
          %v635 = vrsqrt.pop %v619
          %v636 = vrsqrt.pop %v620
          %v637 = vrsqrt.pop %v621
          %v638 = vrsqrt.pop %v622
          %v639 = vrsqrt.pop %v623
          %v640 = vrsqrt.pop %v624
          %v641 = vrsqrt.pop %v625
          %v642 = vrsqrt.pop %v626
          %v643 = vrsqrt.pop %v627
          %v644 = vrsqrt.pop %v628
          %v645 = vrsqrt.pop %v629
          %v646 = vrsqrt.pop %v630
          %v647 = vrsqrt.pop %v631
          %v648 = vrsqrt.pop %v632
          %v649 = vrsqrt.pop %v633
          %v650 = vrsqrt.pop %v634
          %v651 = vmul.f32 %v523, %v635
          %v652 = vmul.f32 %v524, %v636
          %v653 = vmul.f32 %v525, %v637
          %v654 = vmul.f32 %v526, %v638
          %v655 = vmul.f32 %v527, %v639
          %v656 = vmul.f32 %v528, %v640
          %v657 = vmul.f32 %v529, %v641
          %v658 = vmul.f32 %v530, %v642
          %v659 = vmul.f32 %v531, %v643
          %v660 = vmul.f32 %v532, %v644
          %v661 = vmul.f32 %v533, %v645
          %v662 = vmul.f32 %v534, %v646
          %v663 = vmul.f32 %v535, %v647
          %v664 = vmul.f32 %v536, %v648
          %v665 = vmul.f32 %v537, %v649
          %v666 = vmul.f32 %v538, %v650
          %v667 = vlaneseq
          %v668 = vshrl.u32 %v667, 7
          %v669 = vsub.s32 0, %v668
          %v670 = vrot.slane %v456, %v669
          %v671 = vmul.f32 %v651, %v670
          %v672 = vmul.f32 %v652, %v670
          %v673 = vmul.f32 %v653, %v670
          %v674 = vmul.f32 %v654, %v670
          %v675 = vmul.f32 %v655, %v670
          %v676 = vmul.f32 %v656, %v670
          %v677 = vmul.f32 %v657, %v670
          %v678 = vmul.f32 %v658, %v670
          %v679 = vmul.f32 %v659, %v670
          %v680 = vmul.f32 %v660, %v670
          %v681 = vmul.f32 %v661, %v670
          %v682 = vmul.f32 %v662, %v670
          %v683 = vmul.f32 %v663, %v670
          %v684 = vmul.f32 %v664, %v670
          %v685 = vmul.f32 %v665, %v670
          %v686 = vmul.f32 %v666, %v670
          %v687 = vlaneseq
          %v688 = vshrl.u32 %v687, 7
          %v689 = vsub.s32 1, %v688
          %v690 = vrot.slane %v456, %v689
          %v691 = vadd.f32 %v671, %v690
          %v692 = vadd.f32 %v672, %v690
          %v693 = vadd.f32 %v673, %v690
          %v694 = vadd.f32 %v674, %v690
          %v695 = vadd.f32 %v675, %v690
          %v696 = vadd.f32 %v676, %v690
          %v697 = vadd.f32 %v677, %v690
          %v698 = vadd.f32 %v678, %v690
          %v699 = vadd.f32 %v679, %v690
          %v700 = vadd.f32 %v680, %v690
          %v701 = vadd.f32 %v681, %v690
          %v702 = vadd.f32 %v682, %v690
          %v703 = vadd.f32 %v683, %v690
          %v704 = vadd.f32 %v684, %v690
          %v705 = vadd.f32 %v685, %v690
          %v706 = vadd.f32 %v686, %v690
          %v707 = vpack.c.bf16 %v692, %v691
          %v708 = vpack.c.bf16 %v694, %v693
          %v709 = vpack.c.bf16 %v696, %v695
          %v710 = vpack.c.bf16 %v698, %v697
          %v711 = vpack.c.bf16 %v700, %v699
          %v712 = vpack.c.bf16 %v702, %v701
          %v713 = vpack.c.bf16 %v704, %v703
          %v714 = vpack.c.bf16 %v706, %v705
          %s715 = smul.addr %s454, 4
          %s716 = scalar_lea.vmem [#allocation9], %s715
          %v717 = vld [vmem:[%s716] sm:$0xff]
          %v718 = vld [vmem:[%s716 + $0x8] sm:$0xff]
          %v719 = vld [vmem:[%s716 + $0x10] sm:$0xff]
          %v720 = vld [vmem:[%s716 + $0x18] sm:$0xff]
          %v721 = vld [vmem:[%s716 + $0x20] sm:$0xff]
          %v722 = vld [vmem:[%s716 + $0x28] sm:$0xff]
          %v723 = vld [vmem:[%s716 + $0x30] sm:$0xff]
          %v724 = vld [vmem:[%s716 + $0x38] sm:$0xff]
          %v733 = vunpack.c.l.b16 %v717
          %v734 = vunpack.c.h.b16 %v717
          %v735 = vunpack.c.l.b16 %v718
          %v736 = vunpack.c.h.b16 %v718
          %v737 = vunpack.c.l.b16 %v719
          %v738 = vunpack.c.h.b16 %v719
          %v739 = vunpack.c.l.b16 %v720
          %v740 = vunpack.c.h.b16 %v720
          %v741 = vunpack.c.l.b16 %v721
          %v742 = vunpack.c.h.b16 %v721
          %v743 = vunpack.c.l.b16 %v722
          %v744 = vunpack.c.h.b16 %v722
          %v745 = vunpack.c.l.b16 %v723
          %v746 = vunpack.c.h.b16 %v723
          %v747 = vunpack.c.l.b16 %v724
          %v748 = vunpack.c.h.b16 %v724
          %v749 = vpack.c.b16 %v735, %v733
          %v750 = vpack.c.b16 %v736, %v734
          %v751 = vpack.c.b16 %v739, %v737
          %v752 = vpack.c.b16 %v740, %v738
          %v753 = vpack.c.b16 %v743, %v741
          %v754 = vpack.c.b16 %v744, %v742
          %v755 = vpack.c.b16 %v747, %v745
          %v756 = vpack.c.b16 %v748, %v746
          %v766 = vsel %vm401, %v707, 0
          %v769 = vsel %vm401, %v708, 0
          %v772 = vsel %vm401, %v709, 0
          %v775 = vsel %vm401, %v710, 0
          %v778 = vsel %vm401, %v711, 0
          %v781 = vsel %vm401, %v712, 0
          %v784 = vsel %vm401, %v713, 0
          %v787 = vsel %vm401, %v714, 0
          %789 = vmatprep.subr.bf16.mxu0 %v750
          %790 = vmatpush1.bf16.msra.mxu0 %v749
          %791 = vmatprep.subr.bf16.mxu0 %v752
          %792 = vmatpush1.bf16.msra.mxu0 %v751
          %793 = vmatprep.subr.bf16.mxu0 %v754
          %794 = vmatpush1.bf16.msra.mxu0 %v753
          %795 = vmatprep.subr.bf16.mxu0 %v756
          %796 = vmatpush1.bf16.msra.mxu0 %v755
          %797 = vmatprep.subr.bf16.mxu0 0
          %798 = vmatpush1.bf16.msra.mxu0 0
          %799 = vmatprep.subr.bf16.mxu0 0
          %800 = vmatpush1.bf16.msra.mxu0 0
          %801 = vmatprep.subr.bf16.mxu0 0
          %802 = vmatpush1.bf16.msra.mxu0 0
          %803 = vmatprep.subr.bf16.mxu0 0
          %804 = vmatpush1.bf16.msra.mxu0 0
          %805 = vmatprep.subr.bf16.mxu0 0
          %806 = vmatpush1.bf16.msra.mxu0 0
          %807 = vmatprep.subr.bf16.mxu0 0
          %808 = vmatpush1.bf16.msra.mxu0 0
          %809 = vmatprep.subr.bf16.mxu0 0
          %810 = vmatpush1.bf16.msra.mxu0 0
          %811 = vmatprep.subr.bf16.mxu0 0
          %812 = vmatpush1.bf16.msra.mxu0 0
          %813 = vmatprep.subr.bf16.mxu0 0
          %814 = vmatpush1.bf16.msra.mxu0 0
          %815 = vmatprep.subr.bf16.mxu0 0
          %816 = vmatpush1.bf16.msra.mxu0 0
          %817 = vmatprep.subr.bf16.mxu0 0
          %818 = vmatpush1.bf16.msra.mxu0 0
          %819 = vmatprep.subr.bf16.mxu0 0
          %820 = vmatpush1.bf16.msra.mxu0 0
          %821 = vmatprep.mubr.bf16.mxu0 0
          %822 = vmatmul.mubr.bf16.gmra.mrb[0].mxu0 %v766
          %v823 = vpop.f32.mrb[0].mxu0
          %v824 = vadd.f32 0.0, %v823
          %v825 = vpop.f32.mrb[0].mxu0
          %v826 = vadd.f32 0.0, %v825
          %v827 = vpop.f32.mrb[0].mxu0
          %v828 = vadd.f32 0.0, %v827
          %v829 = vpop.f32.mrb[0].mxu0
          %v830 = vadd.f32 0.0, %v829
          %831 = vmatprep.mubr.bf16.mxu0 0
          %832 = vmatmul.mubr.bf16.gmra.mrb[0].mxu0 %v769
          %v833 = vpop.f32.mrb[0].mxu0
          %v834 = vadd.f32 0.0, %v833
          %v835 = vpop.f32.mrb[0].mxu0
          %v836 = vadd.f32 0.0, %v835
          %v837 = vpop.f32.mrb[0].mxu0
          %v838 = vadd.f32 0.0, %v837
          %v839 = vpop.f32.mrb[0].mxu0
          %v840 = vadd.f32 0.0, %v839
          %841 = vmatprep.mubr.bf16.mxu0 0
          %842 = vmatmul.mubr.bf16.gmra.mrb[0].mxu0 %v772
          %v843 = vpop.f32.mrb[0].mxu0
          %v844 = vadd.f32 0.0, %v843
          %v845 = vpop.f32.mrb[0].mxu0
          %v846 = vadd.f32 0.0, %v845
          %v847 = vpop.f32.mrb[0].mxu0
          %v848 = vadd.f32 0.0, %v847
          %v849 = vpop.f32.mrb[0].mxu0
          %v850 = vadd.f32 0.0, %v849
          %851 = vmatprep.mubr.bf16.mxu0 0
          %852 = vmatmul.mubr.bf16.gmra.mrb[0].mxu0 %v775
          %v853 = vpop.f32.mrb[0].mxu0
          %v854 = vadd.f32 0.0, %v853
          %v855 = vpop.f32.mrb[0].mxu0
          %v856 = vadd.f32 0.0, %v855
          %v857 = vpop.f32.mrb[0].mxu0
          %v858 = vadd.f32 0.0, %v857
          %v859 = vpop.f32.mrb[0].mxu0
          %v860 = vadd.f32 0.0, %v859
          %861 = vmatprep.mubr.bf16.mxu0 0
          %862 = vmatmul.mubr.bf16.gmra.mrb[0].mxu0 %v778
          %v863 = vpop.f32.mrb[0].mxu0
          %v864 = vadd.f32 0.0, %v863
          %v865 = vpop.f32.mrb[0].mxu0
          %v866 = vadd.f32 0.0, %v865
          %v867 = vpop.f32.mrb[0].mxu0
          %v868 = vadd.f32 0.0, %v867
          %v869 = vpop.f32.mrb[0].mxu0
          %v870 = vadd.f32 0.0, %v869
          %871 = vmatprep.mubr.bf16.mxu0 0
          %872 = vmatmul.mubr.bf16.gmra.mrb[0].mxu0 %v781
          %v873 = vpop.f32.mrb[0].mxu0
          %v874 = vadd.f32 0.0, %v873
          %v875 = vpop.f32.mrb[0].mxu0
          %v876 = vadd.f32 0.0, %v875
          %v877 = vpop.f32.mrb[0].mxu0
          %v878 = vadd.f32 0.0, %v877
          %v879 = vpop.f32.mrb[0].mxu0
          %v880 = vadd.f32 0.0, %v879
          %881 = vmatprep.mubr.bf16.mxu0 0
          %882 = vmatmul.mubr.bf16.gmra.mrb[0].mxu0 %v784
          %v883 = vpop.f32.mrb[0].mxu0
          %v884 = vadd.f32 0.0, %v883
          %v885 = vpop.f32.mrb[0].mxu0
          %v886 = vadd.f32 0.0, %v885
          %v887 = vpop.f32.mrb[0].mxu0
          %v888 = vadd.f32 0.0, %v887
          %v889 = vpop.f32.mrb[0].mxu0
          %v890 = vadd.f32 0.0, %v889
          %891 = vmatprep.mubr.bf16.mxu0 0
          %892 = vmatmul.mubr.bf16.gmra.mrb[0].mxu0 %v787
          %v893 = vpop.f32.mrb[0].mxu0
          %v894 = vadd.f32 0.0, %v893
          %v895 = vpop.f32.mrb[0].mxu0
          %v896 = vadd.f32 0.0, %v895
          %v897 = vpop.f32.mrb[0].mxu0
          %v898 = vadd.f32 0.0, %v897
          %v899 = vpop.f32.mrb[0].mxu0
          %v900 = vadd.f32 0.0, %v899
          %901 = vdwg.mxu0
          %v902 = vlaneseq
          %v903 = vshrl.u32 %v902, 7
          %v904 = vsub.s32 2, %v903
          %v905 = vrot.slane %v456, %v904
          %v906 = vadd.f32 %v824, %v905
          %v907 = vadd.f32 %v828, %v905
          %v908 = vadd.f32 %v834, %v905
          %v909 = vadd.f32 %v838, %v905
          %v910 = vadd.f32 %v844, %v905
          %v911 = vadd.f32 %v848, %v905
          %v912 = vadd.f32 %v854, %v905
          %v913 = vadd.f32 %v858, %v905
          %v914 = vadd.f32 %v864, %v905
          %v915 = vadd.f32 %v868, %v905
          %v916 = vadd.f32 %v874, %v905
          %v917 = vadd.f32 %v878, %v905
          %v918 = vadd.f32 %v884, %v905
          %v919 = vadd.f32 %v888, %v905
          %v920 = vadd.f32 %v894, %v905
          %v921 = vadd.f32 %v898, %v905
          %v922 = vlaneseq
          %v923 = vshrl.u32 %v922, 7
          %v924 = vsub.s32 3, %v923
          %v925 = vrot.slane %v456, %v924
          %927 = vrot.lane.b32.xlu0 %v925, 64
          %v928 = vpop.permute.xlu0 %927
          %v930 = vadd.f32 %v824, %v928
          %v931 = vadd.f32 %v828, %v928
          %v932 = vadd.f32 %v834, %v928
          %v933 = vadd.f32 %v838, %v928
          %v934 = vadd.f32 %v844, %v928
          %v935 = vadd.f32 %v848, %v928
          %v936 = vadd.f32 %v854, %v928
          %v937 = vadd.f32 %v858, %v928
          %v938 = vadd.f32 %v864, %v928
          %v939 = vadd.f32 %v868, %v928
          %v940 = vadd.f32 %v874, %v928
          %v941 = vadd.f32 %v878, %v928
          %v942 = vadd.f32 %v884, %v928
          %v943 = vadd.f32 %v888, %v928
          %v944 = vadd.f32 %v894, %v928
          %v945 = vadd.f32 %v898, %v928
          %v946 = vlaneseq
          %v947 = vshrl.u32 %v946, 7
          %v948 = vsub.s32 4, %v947
          %v949 = vrot.slane %v456, %v948
          %v950 = vadd.f32 %v826, %v949
          %v951 = vadd.f32 %v830, %v949
          %v952 = vadd.f32 %v836, %v949
          %v953 = vadd.f32 %v840, %v949
          %v954 = vadd.f32 %v846, %v949
          %v955 = vadd.f32 %v850, %v949
          %v956 = vadd.f32 %v856, %v949
          %v957 = vadd.f32 %v860, %v949
          %v958 = vadd.f32 %v866, %v949
          %v959 = vadd.f32 %v870, %v949
          %v960 = vadd.f32 %v876, %v949
          %v961 = vadd.f32 %v880, %v949
          %v962 = vadd.f32 %v886, %v949
          %v963 = vadd.f32 %v890, %v949
          %v964 = vadd.f32 %v896, %v949
          %v965 = vadd.f32 %v900, %v949
          %974 = vrot.lane.b32.xlu0 %v930, 64
          %v975 = vpop.permute.xlu0 %974
          %976 = vrot.lane.b32.xlu0 %v931, 64
          %v977 = vpop.permute.xlu0 %976
          %978 = vrot.lane.b32.xlu0 %v932, 64
          %v979 = vpop.permute.xlu0 %978
          %980 = vrot.lane.b32.xlu0 %v933, 64
          %v981 = vpop.permute.xlu0 %980
          %982 = vrot.lane.b32.xlu0 %v934, 64
          %v983 = vpop.permute.xlu0 %982
          %984 = vrot.lane.b32.xlu0 %v935, 64
          %v985 = vpop.permute.xlu0 %984
          %986 = vrot.lane.b32.xlu0 %v936, 64
          %v987 = vpop.permute.xlu0 %986
          %988 = vrot.lane.b32.xlu0 %v937, 64
          %v989 = vpop.permute.xlu0 %988
          %vm990 = vcmask 64512
          %v992 = vsel %vm990, %v906, 0
          %v995 = vsel %vm990, %v907, 0
          %v998 = vsel %vm990, %v908, 0
          %v1001 = vsel %vm990, %v909, 0
          %v1004 = vsel %vm990, %v910, 0
          %v1007 = vsel %vm990, %v911, 0
          %v1010 = vsel %vm990, %v912, 0
          %v1013 = vsel %vm990, %v913, 0
          %v1015 = vsel %vm990, %v975, 0
          %v1017 = vsel %vm990, %v977, 0
          %v1019 = vsel %vm990, %v979, 0
          %v1021 = vsel %vm990, %v981, 0
          %v1023 = vsel %vm990, %v983, 0
          %v1025 = vsel %vm990, %v985, 0
          %v1027 = vsel %vm990, %v987, 0
          %v1029 = vsel %vm990, %v989, 0
          %1031 = vmatprep.subr.mxu0 0.0
          %1032 = vmatpush1.xpose.msra.mxu0 %v1015
          %1033 = vmatprep.subr.mxu0 0.0
          %1034 = vmatpush1.xpose.msra.mxu0 %v1017
          %1035 = vmatprep.subr.mxu0 0.0
          %1036 = vmatpush1.xpose.msra.mxu0 %v1019
          %1037 = vmatprep.subr.mxu0 0.0
          %1038 = vmatpush1.xpose.msra.mxu0 %v1021
          %1039 = vmatprep.subr.mxu0 0.0
          %1040 = vmatpush1.xpose.msra.mxu0 %v1023
          %1041 = vmatprep.subr.mxu0 0.0
          %1042 = vmatpush1.xpose.msra.mxu0 %v1025
          %1043 = vmatprep.subr.mxu0 0.0
          %1044 = vmatpush1.xpose.msra.mxu0 %v1027
          %1045 = vmatprep.subr.mxu0 0.0
          %1046 = vmatpush1.xpose.msra.mxu0 %v1029
          %1047 = vmatprep.subr.mxu0 0.0
          %1048 = vmatpush1.xpose.msra.mxu0 0.0
          %1049 = vmatprep.subr.mxu0 0.0
          %1050 = vmatpush1.xpose.msra.mxu0 0.0
          %1051 = vmatprep.subr.mxu0 0.0
          %1052 = vmatpush1.xpose.msra.mxu0 0.0
          %1053 = vmatprep.subr.mxu0 0.0
          %1054 = vmatpush1.xpose.msra.mxu0 0.0
          %1055 = vmatprep.subr.mxu0 0.0
          %1056 = vmatpush1.xpose.msra.mxu0 0.0
          %1057 = vmatprep.subr.mxu0 0.0
          %1058 = vmatpush1.xpose.msra.mxu0 0.0
          %1059 = vmatprep.subr.mxu0 0.0
          %1060 = vmatpush1.xpose.msra.mxu0 0.0
          %1061 = vmatprep.subr.mxu0 0.0
          %1062 = vmatpush1.xpose.msra.mxu0 0.0
          %1063 = vmatprep.subr.mxu0 0.0
          %1064 = vmatpush1.xpose.msra.mxu0 0.0
          %1065 = vmatprep.subr.mxu0 0.0
          %1066 = vmatpush1.xpose.msra.mxu0 0.0
          %1067 = vmatprep.subr.mxu0 0.0
          %1068 = vmatpush1.xpose.msra.mxu0 0.0
          %1069 = vmatprep.subr.mxu0 0.0
          %1070 = vmatpush1.xpose.msra.mxu0 0.0
          %1071 = vmatprep.subr.mxu0 0.0
          %1072 = vmatpush1.xpose.msra.mxu0 0.0
          %1073 = vmatprep.subr.mxu0 0.0
          %1074 = vmatpush1.xpose.msra.mxu0 0.0
          %1075 = vmatprep.subr.mxu0 0.0
          %1076 = vmatpush1.xpose.msra.mxu0 0.0
          %1077 = vmatprep.subr.mxu0 0.0
          %1078 = vmatpush1.xpose.msra.mxu0 0.0
          %1079 = vmatprep.subr.mxu0 0.0
          %1080 = vmatpush1.xpose.msra.mxu0 0.0
          %1081 = vmatprep.subr.mxu0 0.0
          %1082 = vmatpush1.xpose.msra.mxu0 0.0
          %1083 = vmatprep.subr.mxu0 0.0
          %1084 = vmatpush1.xpose.msra.mxu0 0.0
          %1085 = vmatprep.subr.mxu0 0.0
          %1086 = vmatpush1.xpose.msra.mxu0 0.0
          %1087 = vmatprep.subr.mxu0 0.0
          %1088 = vmatpush1.xpose.msra.mxu0 0.0
          %1089 = vmatprep.subr.mxu0 0.0
          %1090 = vmatpush1.xpose.msra.mxu0 0.0
          %1091 = vmatprep.subr.mxu0 0.0
          %1092 = vmatpush1.xpose.msra.mxu0 0.0
          %1093 = vmatprep.subr.mxu0 0.0
          %1094 = vmatpush1.xpose.msra.mxu0 0.0
          %1095 = vmatprep.mubr.f32.mxu0 0.0
          %1096 = vmatmul.mubr.f32.gmra.mrb[0].mxu0 %v992
          %v1097 = vpop.f32.mrb[0].mxu0
          %v1098 = vadd.f32 0.0, %v1097
          %v1099 = vpop.f32.mrb[0].mxu0
          %1100 = vmatprep.mubr.f32.mxu0 0.0
          %1101 = vmatmul.mubr.f32.gmra.mrb[0].mxu0 %v995
          %v1102 = vpop.f32.mrb[0].mxu0
          %v1103 = vadd.f32 0.0, %v1102
          %v1104 = vpop.f32.mrb[0].mxu0
          %1105 = vmatprep.mubr.f32.mxu0 0.0
          %1106 = vmatmul.mubr.f32.gmra.mrb[0].mxu0 %v998
          %v1107 = vpop.f32.mrb[0].mxu0
          %v1108 = vadd.f32 0.0, %v1107
          %v1109 = vpop.f32.mrb[0].mxu0
          %1110 = vmatprep.mubr.f32.mxu0 0.0
          %1111 = vmatmul.mubr.f32.gmra.mrb[0].mxu0 %v1001
          %v1112 = vpop.f32.mrb[0].mxu0
          %v1113 = vadd.f32 0.0, %v1112
          %v1114 = vpop.f32.mrb[0].mxu0
          %1115 = vmatprep.mubr.f32.mxu0 0.0
          %1116 = vmatmul.mubr.f32.gmra.mrb[0].mxu0 %v1004
          %v1117 = vpop.f32.mrb[0].mxu0
          %v1118 = vadd.f32 0.0, %v1117
          %v1119 = vpop.f32.mrb[0].mxu0
          %1120 = vmatprep.mubr.f32.mxu0 0.0
          %1121 = vmatmul.mubr.f32.gmra.mrb[0].mxu0 %v1007
          %v1122 = vpop.f32.mrb[0].mxu0
          %v1123 = vadd.f32 0.0, %v1122
          %v1124 = vpop.f32.mrb[0].mxu0
          %1125 = vmatprep.mubr.f32.mxu0 0.0
          %1126 = vmatmul.mubr.f32.gmra.mrb[0].mxu0 %v1010
          %v1127 = vpop.f32.mrb[0].mxu0
          %v1128 = vadd.f32 0.0, %v1127
          %v1129 = vpop.f32.mrb[0].mxu0
          %1130 = vmatprep.mubr.f32.mxu0 0.0
          %1131 = vmatmul.mubr.f32.gmra.mrb[0].mxu0 %v1013
          %v1132 = vpop.f32.mrb[0].mxu0
          %v1133 = vadd.f32 0.0, %v1132
          %v1134 = vpop.f32.mrb[0].mxu0
          %1135 = vdwg.mxu0
          %1144 = vrot.lane.b32.xlu0 %v938, 64
          %v1145 = vpop.permute.xlu0 %1144
          %1146 = vrot.lane.b32.xlu0 %v939, 64
          %v1147 = vpop.permute.xlu0 %1146
          %1148 = vrot.lane.b32.xlu0 %v940, 64
          %v1149 = vpop.permute.xlu0 %1148
          %1150 = vrot.lane.b32.xlu0 %v941, 64
          %v1151 = vpop.permute.xlu0 %1150
          %1152 = vrot.lane.b32.xlu0 %v942, 64
          %v1153 = vpop.permute.xlu0 %1152
          %1154 = vrot.lane.b32.xlu0 %v943, 64
          %v1155 = vpop.permute.xlu0 %1154
          %1156 = vrot.lane.b32.xlu0 %v944, 64
          %v1157 = vpop.permute.xlu0 %1156
          %1158 = vrot.lane.b32.xlu0 %v945, 64
          %v1159 = vpop.permute.xlu0 %1158
          %v1161 = vsel %vm990, %v914, 0
          %v1164 = vsel %vm990, %v915, 0
          %v1167 = vsel %vm990, %v916, 0
          %v1170 = vsel %vm990, %v917, 0
          %v1173 = vsel %vm990, %v918, 0
          %v1176 = vsel %vm990, %v919, 0
          %v1179 = vsel %vm990, %v920, 0
          %v1182 = vsel %vm990, %v921, 0
          %v1184 = vsel %vm990, %v1145, 0
          %v1186 = vsel %vm990, %v1147, 0
          %v1188 = vsel %vm990, %v1149, 0
          %v1190 = vsel %vm990, %v1151, 0
          %v1192 = vsel %vm990, %v1153, 0
          %v1194 = vsel %vm990, %v1155, 0
          %v1196 = vsel %vm990, %v1157, 0
          %v1198 = vsel %vm990, %v1159, 0
          %1200 = vmatprep.subr.mxu0 0.0
          %1201 = vmatpush1.xpose.msra.mxu0 %v1184
          %1202 = vmatprep.subr.mxu0 0.0
          %1203 = vmatpush1.xpose.msra.mxu0 %v1186
          %1204 = vmatprep.subr.mxu0 0.0
          %1205 = vmatpush1.xpose.msra.mxu0 %v1188
          %1206 = vmatprep.subr.mxu0 0.0
          %1207 = vmatpush1.xpose.msra.mxu0 %v1190
          %1208 = vmatprep.subr.mxu0 0.0
          %1209 = vmatpush1.xpose.msra.mxu0 %v1192
          %1210 = vmatprep.subr.mxu0 0.0
          %1211 = vmatpush1.xpose.msra.mxu0 %v1194
          %1212 = vmatprep.subr.mxu0 0.0
          %1213 = vmatpush1.xpose.msra.mxu0 %v1196
          %1214 = vmatprep.subr.mxu0 0.0
          %1215 = vmatpush1.xpose.msra.mxu0 %v1198
          %1216 = vmatprep.subr.mxu0 0.0
          %1217 = vmatpush1.xpose.msra.mxu0 0.0
          %1218 = vmatprep.subr.mxu0 0.0
          %1219 = vmatpush1.xpose.msra.mxu0 0.0
          %1220 = vmatprep.subr.mxu0 0.0
          %1221 = vmatpush1.xpose.msra.mxu0 0.0
          %1222 = vmatprep.subr.mxu0 0.0
          %1223 = vmatpush1.xpose.msra.mxu0 0.0
          %1224 = vmatprep.subr.mxu0 0.0
          %1225 = vmatpush1.xpose.msra.mxu0 0.0
          %1226 = vmatprep.subr.mxu0 0.0
          %1227 = vmatpush1.xpose.msra.mxu0 0.0
          %1228 = vmatprep.subr.mxu0 0.0
          %1229 = vmatpush1.xpose.msra.mxu0 0.0
          %1230 = vmatprep.subr.mxu0 0.0
          %1231 = vmatpush1.xpose.msra.mxu0 0.0
          %1232 = vmatprep.subr.mxu0 0.0
          %1233 = vmatpush1.xpose.msra.mxu0 0.0
          %1234 = vmatprep.subr.mxu0 0.0
          %1235 = vmatpush1.xpose.msra.mxu0 0.0
          %1236 = vmatprep.subr.mxu0 0.0
          %1237 = vmatpush1.xpose.msra.mxu0 0.0
          %1238 = vmatprep.subr.mxu0 0.0
          %1239 = vmatpush1.xpose.msra.mxu0 0.0
          %1240 = vmatprep.subr.mxu0 0.0
          %1241 = vmatpush1.xpose.msra.mxu0 0.0
          %1242 = vmatprep.subr.mxu0 0.0
          %1243 = vmatpush1.xpose.msra.mxu0 0.0
          %1244 = vmatprep.subr.mxu0 0.0
          %1245 = vmatpush1.xpose.msra.mxu0 0.0
          %1246 = vmatprep.subr.mxu0 0.0
          %1247 = vmatpush1.xpose.msra.mxu0 0.0
          %1248 = vmatprep.subr.mxu0 0.0
          %1249 = vmatpush1.xpose.msra.mxu0 0.0
          %1250 = vmatprep.subr.mxu0 0.0
          %1251 = vmatpush1.xpose.msra.mxu0 0.0
          %1252 = vmatprep.subr.mxu0 0.0
          %1253 = vmatpush1.xpose.msra.mxu0 0.0
          %1254 = vmatprep.subr.mxu0 0.0
          %1255 = vmatpush1.xpose.msra.mxu0 0.0
          %1256 = vmatprep.subr.mxu0 0.0
          %1257 = vmatpush1.xpose.msra.mxu0 0.0
          %1258 = vmatprep.subr.mxu0 0.0
          %1259 = vmatpush1.xpose.msra.mxu0 0.0
          %1260 = vmatprep.subr.mxu0 0.0
          %1261 = vmatpush1.xpose.msra.mxu0 0.0
          %1262 = vmatprep.subr.mxu0 0.0
          %1263 = vmatpush1.xpose.msra.mxu0 0.0
          %1264 = vmatprep.mubr.f32.mxu0 0.0
          %1265 = vmatmul.mubr.f32.gmra.mrb[0].mxu0 %v1161
          %v1266 = vpop.f32.mrb[0].mxu0
          %v1267 = vadd.f32 0.0, %v1266
          %v1268 = vpop.f32.mrb[0].mxu0
          %1269 = vmatprep.mubr.f32.mxu0 0.0
          %1270 = vmatmul.mubr.f32.gmra.mrb[0].mxu0 %v1164
          %v1271 = vpop.f32.mrb[0].mxu0
          %v1272 = vadd.f32 0.0, %v1271
          %v1273 = vpop.f32.mrb[0].mxu0
          %1274 = vmatprep.mubr.f32.mxu0 0.0
          %1275 = vmatmul.mubr.f32.gmra.mrb[0].mxu0 %v1167
          %v1276 = vpop.f32.mrb[0].mxu0
          %v1277 = vadd.f32 0.0, %v1276
          %v1278 = vpop.f32.mrb[0].mxu0
          %1279 = vmatprep.mubr.f32.mxu0 0.0
          %1280 = vmatmul.mubr.f32.gmra.mrb[0].mxu0 %v1170
          %v1281 = vpop.f32.mrb[0].mxu0
          %v1282 = vadd.f32 0.0, %v1281
          %v1283 = vpop.f32.mrb[0].mxu0
          %1284 = vmatprep.mubr.f32.mxu0 0.0
          %1285 = vmatmul.mubr.f32.gmra.mrb[0].mxu0 %v1173
          %v1286 = vpop.f32.mrb[0].mxu0
          %v1287 = vadd.f32 0.0, %v1286
          %v1288 = vpop.f32.mrb[0].mxu0
          %1289 = vmatprep.mubr.f32.mxu0 0.0
          %1290 = vmatmul.mubr.f32.gmra.mrb[0].mxu0 %v1176
          %v1291 = vpop.f32.mrb[0].mxu0
          %v1292 = vadd.f32 0.0, %v1291
          %v1293 = vpop.f32.mrb[0].mxu0
          %1294 = vmatprep.mubr.f32.mxu0 0.0
          %1295 = vmatmul.mubr.f32.gmra.mrb[0].mxu0 %v1179
          %v1296 = vpop.f32.mrb[0].mxu0
          %v1297 = vadd.f32 0.0, %v1296
          %v1298 = vpop.f32.mrb[0].mxu0
          %1299 = vmatprep.mubr.f32.mxu0 0.0
          %1300 = vmatmul.mubr.f32.gmra.mrb[0].mxu0 %v1182
          %v1301 = vpop.f32.mrb[0].mxu0
          %v1302 = vadd.f32 0.0, %v1301
          %v1303 = vpop.f32.mrb[0].mxu0
          %1304 = vdwg.mxu0
          %v1305 = vsel %vm401, %v1098, -inf
          %1306 = vmax.xlane.f32.xlu0 %v1305
          %v1307 = vpop.xlane.xlu0 %1306
          %v1308 = vsel %vm401, %v1103, -inf
          %1309 = vmax.xlane.f32.xlu0 %v1308
          %v1310 = vpop.xlane.xlu0 %1309
          %v1311 = vsel %vm401, %v1108, -inf
          %1312 = vmax.xlane.f32.xlu0 %v1311
          %v1313 = vpop.xlane.xlu0 %1312
          %v1314 = vsel %vm401, %v1113, -inf
          %1315 = vmax.xlane.f32.xlu0 %v1314
          %v1316 = vpop.xlane.xlu0 %1315
          %v1317 = vsel %vm401, %v1118, -inf
          %1318 = vmax.xlane.f32.xlu0 %v1317
          %v1319 = vpop.xlane.xlu0 %1318
          %v1320 = vsel %vm401, %v1123, -inf
          %1321 = vmax.xlane.f32.xlu0 %v1320
          %v1322 = vpop.xlane.xlu0 %1321
          %v1323 = vsel %vm401, %v1128, -inf
          %1324 = vmax.xlane.f32.xlu0 %v1323
          %v1325 = vpop.xlane.xlu0 %1324
          %v1326 = vsel %vm401, %v1133, -inf
          %1327 = vmax.xlane.f32.xlu0 %v1326
          %v1328 = vpop.xlane.xlu0 %1327
          %v1329 = vsel %vm401, %v1267, -inf
          %1330 = vmax.xlane.f32.xlu0 %v1329
          %v1331 = vpop.xlane.xlu0 %1330
          %v1332 = vsel %vm401, %v1272, -inf
          %1333 = vmax.xlane.f32.xlu0 %v1332
          %v1334 = vpop.xlane.xlu0 %1333
          %v1335 = vsel %vm401, %v1277, -inf
          %1336 = vmax.xlane.f32.xlu0 %v1335
          %v1337 = vpop.xlane.xlu0 %1336
          %v1338 = vsel %vm401, %v1282, -inf
          %1339 = vmax.xlane.f32.xlu0 %v1338
          %v1340 = vpop.xlane.xlu0 %1339
          %v1341 = vsel %vm401, %v1287, -inf
          %1342 = vmax.xlane.f32.xlu0 %v1341
          %v1343 = vpop.xlane.xlu0 %1342
          %v1344 = vsel %vm401, %v1292, -inf
          %1345 = vmax.xlane.f32.xlu0 %v1344
          %v1346 = vpop.xlane.xlu0 %1345
          %v1347 = vsel %vm401, %v1297, -inf
          %1348 = vmax.xlane.f32.xlu0 %v1347
          %v1349 = vpop.xlane.xlu0 %1348
          %v1350 = vsel %vm401, %v1302, -inf
          %1351 = vmax.xlane.f32.xlu0 %v1350
          %v1352 = vpop.xlane.xlu0 %1351
          %v1353 = vsub.f32 %v1098, %v1307
          %v1354 = vsub.f32 %v1103, %v1310
          %v1355 = vsub.f32 %v1108, %v1313
          %v1356 = vsub.f32 %v1113, %v1316
          %v1357 = vsub.f32 %v1118, %v1319
          %v1358 = vsub.f32 %v1123, %v1322
          %v1359 = vsub.f32 %v1128, %v1325
          %v1360 = vsub.f32 %v1133, %v1328
          %v1361 = vsub.f32 %v1267, %v1331
          %v1362 = vsub.f32 %v1272, %v1334
          %v1363 = vsub.f32 %v1277, %v1337
          %v1364 = vsub.f32 %v1282, %v1340
          %v1365 = vsub.f32 %v1287, %v1343
          %v1366 = vsub.f32 %v1292, %v1346
          %v1367 = vsub.f32 %v1297, %v1349
          %v1368 = vsub.f32 %v1302, %v1352
          %v1369 = vmul.f32 %v1353, 1.442695
          %v1370 = vpow.pop %v1369
          %v1371 = vmul.f32 %v1354, 1.442695
          %v1372 = vpow.pop %v1371
          %v1373 = vmul.f32 %v1355, 1.442695
          %v1374 = vpow.pop %v1373
          %v1375 = vmul.f32 %v1356, 1.442695
          %v1376 = vpow.pop %v1375
          %v1377 = vmul.f32 %v1357, 1.442695
          %v1378 = vpow.pop %v1377
          %v1379 = vmul.f32 %v1358, 1.442695
          %v1380 = vpow.pop %v1379
          %v1381 = vmul.f32 %v1359, 1.442695
          %v1382 = vpow.pop %v1381
          %v1383 = vmul.f32 %v1360, 1.442695
          %v1384 = vpow.pop %v1383
          %v1385 = vmul.f32 %v1361, 1.442695
          %v1386 = vpow.pop %v1385
          %v1387 = vmul.f32 %v1362, 1.442695
          %v1388 = vpow.pop %v1387
          %v1389 = vmul.f32 %v1363, 1.442695
          %v1390 = vpow.pop %v1389
          %v1391 = vmul.f32 %v1364, 1.442695
          %v1392 = vpow.pop %v1391
          %v1393 = vmul.f32 %v1365, 1.442695
          %v1394 = vpow.pop %v1393
          %v1395 = vmul.f32 %v1366, 1.442695
          %v1396 = vpow.pop %v1395
          %v1397 = vmul.f32 %v1367, 1.442695
          %v1398 = vpow.pop %v1397
          %v1399 = vmul.f32 %v1368, 1.442695
          %v1400 = vpow.pop %v1399
          %v1401 = vmul.f32 %v1370, %v425
          %v1402 = vmul.f32 %v1372, %v425
          %v1403 = vmul.f32 %v1374, %v425
          %v1404 = vmul.f32 %v1376, %v425
          %v1405 = vmul.f32 %v1378, %v425
          %v1406 = vmul.f32 %v1380, %v425
          %v1407 = vmul.f32 %v1382, %v425
          %v1408 = vmul.f32 %v1384, %v425
          %v1409 = vmul.f32 %v1386, %v429
          %v1410 = vmul.f32 %v1388, %v429
          %v1411 = vmul.f32 %v1390, %v429
          %v1412 = vmul.f32 %v1392, %v429
          %v1413 = vmul.f32 %v1394, %v429
          %v1414 = vmul.f32 %v1396, %v429
          %v1415 = vmul.f32 %v1398, %v429
          %v1416 = vmul.f32 %v1400, %v429
          %v1417 = vsel %vm401, %v1401, 0.0
          %1418 = vadd.xlane.f32.xlu0 %v1417
          %v1419 = vpop.xlane.xlu0 %1418
          %v1420 = vsel %vm401, %v1402, 0.0
          %1421 = vadd.xlane.f32.xlu0 %v1420
          %v1422 = vpop.xlane.xlu0 %1421
          %v1423 = vsel %vm401, %v1403, 0.0
          %1424 = vadd.xlane.f32.xlu0 %v1423
          %v1425 = vpop.xlane.xlu0 %1424
          %v1426 = vsel %vm401, %v1404, 0.0
          %1427 = vadd.xlane.f32.xlu0 %v1426
          %v1428 = vpop.xlane.xlu0 %1427
          %v1429 = vsel %vm401, %v1405, 0.0
          %1430 = vadd.xlane.f32.xlu0 %v1429
          %v1431 = vpop.xlane.xlu0 %1430
          %v1432 = vsel %vm401, %v1406, 0.0
          %1433 = vadd.xlane.f32.xlu0 %v1432
          %v1434 = vpop.xlane.xlu0 %1433
          %v1435 = vsel %vm401, %v1407, 0.0
          %1436 = vadd.xlane.f32.xlu0 %v1435
          %v1437 = vpop.xlane.xlu0 %1436
          %v1438 = vsel %vm401, %v1408, 0.0
          %1439 = vadd.xlane.f32.xlu0 %v1438
          %v1440 = vpop.xlane.xlu0 %1439
          %v1441 = vsel %vm401, %v1409, 0.0
          %1442 = vadd.xlane.f32.xlu0 %v1441
          %v1443 = vpop.xlane.xlu0 %1442
          %v1444 = vsel %vm401, %v1410, 0.0
          %1445 = vadd.xlane.f32.xlu0 %v1444
          %v1446 = vpop.xlane.xlu0 %1445
          %v1447 = vsel %vm401, %v1411, 0.0
          %1448 = vadd.xlane.f32.xlu0 %v1447
          %v1449 = vpop.xlane.xlu0 %1448
          %v1450 = vsel %vm401, %v1412, 0.0
          %1451 = vadd.xlane.f32.xlu0 %v1450
          %v1452 = vpop.xlane.xlu0 %1451
          %v1453 = vsel %vm401, %v1413, 0.0
          %1454 = vadd.xlane.f32.xlu0 %v1453
          %v1455 = vpop.xlane.xlu0 %1454
          %v1456 = vsel %vm401, %v1414, 0.0
          %1457 = vadd.xlane.f32.xlu0 %v1456
          %v1458 = vpop.xlane.xlu0 %1457
          %v1459 = vsel %vm401, %v1415, 0.0
          %1460 = vadd.xlane.f32.xlu0 %v1459
          %v1461 = vpop.xlane.xlu0 %1460
          %v1462 = vsel %vm401, %v1416, 0.0
          %1463 = vadd.xlane.f32.xlu0 %v1462
          %v1464 = vpop.xlane.xlu0 %1463
          %v1465 = vmax.f32 %v1419, 1e-30
          %v1466 = vmax.f32 %v1422, 1e-30
          %v1467 = vmax.f32 %v1425, 1e-30
          %v1468 = vmax.f32 %v1428, 1e-30
          %v1469 = vmax.f32 %v1431, 1e-30
          %v1470 = vmax.f32 %v1434, 1e-30
          %v1471 = vmax.f32 %v1437, 1e-30
          %v1472 = vmax.f32 %v1440, 1e-30
          %v1473 = vmax.f32 %v1443, 1e-30
          %v1474 = vmax.f32 %v1446, 1e-30
          %v1475 = vmax.f32 %v1449, 1e-30
          %v1476 = vmax.f32 %v1452, 1e-30
          %v1477 = vmax.f32 %v1455, 1e-30
          %v1478 = vmax.f32 %v1458, 1e-30
          %v1479 = vmax.f32 %v1461, 1e-30
          %v1480 = vmax.f32 %v1464, 1e-30
          %v1481 = vrcp.pop %v1465
          %v1482 = vrcp.pop %v1466
          %v1483 = vrcp.pop %v1467
          %v1484 = vrcp.pop %v1468
          %v1485 = vrcp.pop %v1469
          %v1486 = vrcp.pop %v1470
          %v1487 = vrcp.pop %v1471
          %v1488 = vrcp.pop %v1472
          %v1489 = vrcp.pop %v1473
          %v1490 = vrcp.pop %v1474
          %v1491 = vrcp.pop %v1475
          %v1492 = vrcp.pop %v1476
          %v1493 = vrcp.pop %v1477
          %v1494 = vrcp.pop %v1478
          %v1495 = vrcp.pop %v1479
          %v1496 = vrcp.pop %v1480
          %v1497 = vmul.f32 %v1401, %v1481
          %v1498 = vmul.f32 %v1402, %v1482
          %v1499 = vmul.f32 %v1403, %v1483
          %v1500 = vmul.f32 %v1404, %v1484
          %v1501 = vmul.f32 %v1405, %v1485
          %v1502 = vmul.f32 %v1406, %v1486
          %v1503 = vmul.f32 %v1407, %v1487
          %v1504 = vmul.f32 %v1408, %v1488
          %v1505 = vmul.f32 %v1409, %v1489
          %v1506 = vmul.f32 %v1410, %v1490
          %v1507 = vmul.f32 %v1411, %v1491
          %v1508 = vmul.f32 %v1412, %v1492
          %v1509 = vmul.f32 %v1413, %v1493
          %v1510 = vmul.f32 %v1414, %v1494
          %v1511 = vmul.f32 %v1415, %v1495
          %v1512 = vmul.f32 %v1416, %v1496
          %v1514 = vsel %vm401, %v1497, 0
          %v1517 = vsel %vm401, %v1498, 0
          %v1520 = vsel %vm401, %v1499, 0
          %v1523 = vsel %vm401, %v1500, 0
          %v1526 = vsel %vm401, %v1501, 0
          %v1529 = vsel %vm401, %v1502, 0
          %v1532 = vsel %vm401, %v1503, 0
          %v1535 = vsel %vm401, %v1504, 0
          %1537 = vmatprep.subr.mxu0 0.0
          %1538 = vmatpush1.msra.mxu0 %v950
          %1539 = vmatprep.subr.mxu0 0.0
          %1540 = vmatpush1.msra.mxu0 %v951
          %1541 = vmatprep.subr.mxu0 0.0
          %1542 = vmatpush1.msra.mxu0 %v952
          %1543 = vmatprep.subr.mxu0 0.0
          %1544 = vmatpush1.msra.mxu0 %v953
          %1545 = vmatprep.subr.mxu0 0.0
          %1546 = vmatpush1.msra.mxu0 %v954
          %1547 = vmatprep.subr.mxu0 0.0
          %1548 = vmatpush1.msra.mxu0 %v955
          %1549 = vmatprep.subr.mxu0 0.0
          %1550 = vmatpush1.msra.mxu0 %v956
          %1551 = vmatprep.subr.mxu0 0.0
          %1552 = vmatpush1.msra.mxu0 %v957
          %1553 = vmatprep.subr.mxu0 0.0
          %1554 = vmatpush1.msra.mxu0 0.0
          %1555 = vmatprep.subr.mxu0 0.0
          %1556 = vmatpush1.msra.mxu0 0.0
          %1557 = vmatprep.subr.mxu0 0.0
          %1558 = vmatpush1.msra.mxu0 0.0
          %1559 = vmatprep.subr.mxu0 0.0
          %1560 = vmatpush1.msra.mxu0 0.0
          %1561 = vmatprep.subr.mxu0 0.0
          %1562 = vmatpush1.msra.mxu0 0.0
          %1563 = vmatprep.subr.mxu0 0.0
          %1564 = vmatpush1.msra.mxu0 0.0
          %1565 = vmatprep.subr.mxu0 0.0
          %1566 = vmatpush1.msra.mxu0 0.0
          %1567 = vmatprep.subr.mxu0 0.0
          %1568 = vmatpush1.msra.mxu0 0.0
          %1569 = vmatprep.subr.mxu0 0.0
          %1570 = vmatpush1.msra.mxu0 0.0
          %1571 = vmatprep.subr.mxu0 0.0
          %1572 = vmatpush1.msra.mxu0 0.0
          %1573 = vmatprep.subr.mxu0 0.0
          %1574 = vmatpush1.msra.mxu0 0.0
          %1575 = vmatprep.subr.mxu0 0.0
          %1576 = vmatpush1.msra.mxu0 0.0
          %1577 = vmatprep.subr.mxu0 0.0
          %1578 = vmatpush1.msra.mxu0 0.0
          %1579 = vmatprep.subr.mxu0 0.0
          %1580 = vmatpush1.msra.mxu0 0.0
          %1581 = vmatprep.subr.mxu0 0.0
          %1582 = vmatpush1.msra.mxu0 0.0
          %1583 = vmatprep.subr.mxu0 0.0
          %1584 = vmatpush1.msra.mxu0 0.0
          %1585 = vmatprep.subr.mxu0 0.0
          %1586 = vmatpush1.msra.mxu0 0.0
          %1587 = vmatprep.subr.mxu0 0.0
          %1588 = vmatpush1.msra.mxu0 0.0
          %1589 = vmatprep.subr.mxu0 0.0
          %1590 = vmatpush1.msra.mxu0 0.0
          %1591 = vmatprep.subr.mxu0 0.0
          %1592 = vmatpush1.msra.mxu0 0.0
          %1593 = vmatprep.subr.mxu0 0.0
          %1594 = vmatpush1.msra.mxu0 0.0
          %1595 = vmatprep.subr.mxu0 0.0
          %1596 = vmatpush1.msra.mxu0 0.0
          %1597 = vmatprep.subr.mxu0 0.0
          %1598 = vmatpush1.msra.mxu0 0.0
          %1599 = vmatprep.subr.mxu0 0.0
          %1600 = vmatpush1.msra.mxu0 0.0
          %1601 = vmatprep.mubr.f32.mxu0 0.0
          %1602 = vmatmul.mubr.f32.gmra.mrb[0].mxu0 %v1514
          %v1603 = vpop.f32.mrb[0].mxu0
          %v1604 = vadd.f32 0.0, %v1603
          %v1605 = vpop.f32.mrb[0].mxu0
          %1606 = vmatprep.mubr.f32.mxu0 0.0
          %1607 = vmatmul.mubr.f32.gmra.mrb[0].mxu0 %v1517
          %v1608 = vpop.f32.mrb[0].mxu0
          %v1609 = vadd.f32 0.0, %v1608
          %v1610 = vpop.f32.mrb[0].mxu0
          %1611 = vmatprep.mubr.f32.mxu0 0.0
          %1612 = vmatmul.mubr.f32.gmra.mrb[0].mxu0 %v1520
          %v1613 = vpop.f32.mrb[0].mxu0
          %v1614 = vadd.f32 0.0, %v1613
          %v1615 = vpop.f32.mrb[0].mxu0
          %1616 = vmatprep.mubr.f32.mxu0 0.0
          %1617 = vmatmul.mubr.f32.gmra.mrb[0].mxu0 %v1523
          %v1618 = vpop.f32.mrb[0].mxu0
          %v1619 = vadd.f32 0.0, %v1618
          %v1620 = vpop.f32.mrb[0].mxu0
          %1621 = vmatprep.mubr.f32.mxu0 0.0
          %1622 = vmatmul.mubr.f32.gmra.mrb[0].mxu0 %v1526
          %v1623 = vpop.f32.mrb[0].mxu0
          %v1624 = vadd.f32 0.0, %v1623
          %v1625 = vpop.f32.mrb[0].mxu0
          %1626 = vmatprep.mubr.f32.mxu0 0.0
          %1627 = vmatmul.mubr.f32.gmra.mrb[0].mxu0 %v1529
          %v1628 = vpop.f32.mrb[0].mxu0
          %v1629 = vadd.f32 0.0, %v1628
          %v1630 = vpop.f32.mrb[0].mxu0
          %1631 = vmatprep.mubr.f32.mxu0 0.0
          %1632 = vmatmul.mubr.f32.gmra.mrb[0].mxu0 %v1532
          %v1633 = vpop.f32.mrb[0].mxu0
          %v1634 = vadd.f32 0.0, %v1633
          %v1635 = vpop.f32.mrb[0].mxu0
          %1636 = vmatprep.mubr.f32.mxu0 0.0
          %1637 = vmatmul.mubr.f32.gmra.mrb[0].mxu0 %v1535
          %v1638 = vpop.f32.mrb[0].mxu0
          %v1639 = vadd.f32 0.0, %v1638
          %v1640 = vpop.f32.mrb[0].mxu0
          %1641 = vdwg.mxu0
          %v1643 = vsel %vm401, %v1505, 0
          %v1646 = vsel %vm401, %v1506, 0
          %v1649 = vsel %vm401, %v1507, 0
          %v1652 = vsel %vm401, %v1508, 0
          %v1655 = vsel %vm401, %v1509, 0
          %v1658 = vsel %vm401, %v1510, 0
          %v1661 = vsel %vm401, %v1511, 0
          %v1664 = vsel %vm401, %v1512, 0
          %1666 = vmatprep.subr.mxu0 0.0
          %1667 = vmatpush1.msra.mxu0 %v958
          %1668 = vmatprep.subr.mxu0 0.0
          %1669 = vmatpush1.msra.mxu0 %v959
          %1670 = vmatprep.subr.mxu0 0.0
          %1671 = vmatpush1.msra.mxu0 %v960
          %1672 = vmatprep.subr.mxu0 0.0
          %1673 = vmatpush1.msra.mxu0 %v961
          %1674 = vmatprep.subr.mxu0 0.0
          %1675 = vmatpush1.msra.mxu0 %v962
          %1676 = vmatprep.subr.mxu0 0.0
          %1677 = vmatpush1.msra.mxu0 %v963
          %1678 = vmatprep.subr.mxu0 0.0
          %1679 = vmatpush1.msra.mxu0 %v964
          %1680 = vmatprep.subr.mxu0 0.0
          %1681 = vmatpush1.msra.mxu0 %v965
          %1682 = vmatprep.subr.mxu0 0.0
          %1683 = vmatpush1.msra.mxu0 0.0
          %1684 = vmatprep.subr.mxu0 0.0
          %1685 = vmatpush1.msra.mxu0 0.0
          %1686 = vmatprep.subr.mxu0 0.0
          %1687 = vmatpush1.msra.mxu0 0.0
          %1688 = vmatprep.subr.mxu0 0.0
          %1689 = vmatpush1.msra.mxu0 0.0
          %1690 = vmatprep.subr.mxu0 0.0
          %1691 = vmatpush1.msra.mxu0 0.0
          %1692 = vmatprep.subr.mxu0 0.0
          %1693 = vmatpush1.msra.mxu0 0.0
          %1694 = vmatprep.subr.mxu0 0.0
          %1695 = vmatpush1.msra.mxu0 0.0
          %1696 = vmatprep.subr.mxu0 0.0
          %1697 = vmatpush1.msra.mxu0 0.0
          %1698 = vmatprep.subr.mxu0 0.0
          %1699 = vmatpush1.msra.mxu0 0.0
          %1700 = vmatprep.subr.mxu0 0.0
          %1701 = vmatpush1.msra.mxu0 0.0
          %1702 = vmatprep.subr.mxu0 0.0
          %1703 = vmatpush1.msra.mxu0 0.0
          %1704 = vmatprep.subr.mxu0 0.0
          %1705 = vmatpush1.msra.mxu0 0.0
          %1706 = vmatprep.subr.mxu0 0.0
          %1707 = vmatpush1.msra.mxu0 0.0
          %1708 = vmatprep.subr.mxu0 0.0
          %1709 = vmatpush1.msra.mxu0 0.0
          %1710 = vmatprep.subr.mxu0 0.0
          %1711 = vmatpush1.msra.mxu0 0.0
          %1712 = vmatprep.subr.mxu0 0.0
          %1713 = vmatpush1.msra.mxu0 0.0
          %1714 = vmatprep.subr.mxu0 0.0
          %1715 = vmatpush1.msra.mxu0 0.0
          %1716 = vmatprep.subr.mxu0 0.0
          %1717 = vmatpush1.msra.mxu0 0.0
          %1718 = vmatprep.subr.mxu0 0.0
          %1719 = vmatpush1.msra.mxu0 0.0
          %1720 = vmatprep.subr.mxu0 0.0
          %1721 = vmatpush1.msra.mxu0 0.0
          %1722 = vmatprep.subr.mxu0 0.0
          %1723 = vmatpush1.msra.mxu0 0.0
          %1724 = vmatprep.subr.mxu0 0.0
          %1725 = vmatpush1.msra.mxu0 0.0
          %1726 = vmatprep.subr.mxu0 0.0
          %1727 = vmatpush1.msra.mxu0 0.0
          %1728 = vmatprep.subr.mxu0 0.0
          %1729 = vmatpush1.msra.mxu0 0.0
          %1730 = vmatprep.mubr.f32.mxu0 0.0
          %1731 = vmatmul.mubr.f32.gmra.mrb[0].mxu0 %v1643
          %v1732 = vpop.f32.mrb[0].mxu0
          %v1733 = vadd.f32 0.0, %v1732
          %v1734 = vpop.f32.mrb[0].mxu0
          %1735 = vmatprep.mubr.f32.mxu0 0.0
          %1736 = vmatmul.mubr.f32.gmra.mrb[0].mxu0 %v1646
          %v1737 = vpop.f32.mrb[0].mxu0
          %v1738 = vadd.f32 0.0, %v1737
          %v1739 = vpop.f32.mrb[0].mxu0
          %1740 = vmatprep.mubr.f32.mxu0 0.0
          %1741 = vmatmul.mubr.f32.gmra.mrb[0].mxu0 %v1649
          %v1742 = vpop.f32.mrb[0].mxu0
          %v1743 = vadd.f32 0.0, %v1742
          %v1744 = vpop.f32.mrb[0].mxu0
          %1745 = vmatprep.mubr.f32.mxu0 0.0
          %1746 = vmatmul.mubr.f32.gmra.mrb[0].mxu0 %v1652
          %v1747 = vpop.f32.mrb[0].mxu0
          %v1748 = vadd.f32 0.0, %v1747
          %v1749 = vpop.f32.mrb[0].mxu0
          %1750 = vmatprep.mubr.f32.mxu0 0.0
          %1751 = vmatmul.mubr.f32.gmra.mrb[0].mxu0 %v1655
          %v1752 = vpop.f32.mrb[0].mxu0
          %v1753 = vadd.f32 0.0, %v1752
          %v1754 = vpop.f32.mrb[0].mxu0
          %1755 = vmatprep.mubr.f32.mxu0 0.0
          %1756 = vmatmul.mubr.f32.gmra.mrb[0].mxu0 %v1658
          %v1757 = vpop.f32.mrb[0].mxu0
          %v1758 = vadd.f32 0.0, %v1757
          %v1759 = vpop.f32.mrb[0].mxu0
          %1760 = vmatprep.mubr.f32.mxu0 0.0
          %1761 = vmatmul.mubr.f32.gmra.mrb[0].mxu0 %v1661
          %v1762 = vpop.f32.mrb[0].mxu0
          %v1763 = vadd.f32 0.0, %v1762
          %v1764 = vpop.f32.mrb[0].mxu0
          %1765 = vmatprep.mubr.f32.mxu0 0.0
          %1766 = vmatmul.mubr.f32.gmra.mrb[0].mxu0 %v1664
          %v1767 = vpop.f32.mrb[0].mxu0
          %v1768 = vadd.f32 0.0, %v1767
          %v1769 = vpop.f32.mrb[0].mxu0
          %1770 = vdwg.mxu0
          %1771 = vst.msk [vmem:[#allocation3] sm:$0xff] %vm990, %v1604
          %1772 = vst.msk [vmem:[#allocation3 + $0x8] sm:$0xff] %vm990, %v1609
          %1773 = vst.msk [vmem:[#allocation3 + $0x10] sm:$0xff] %vm990, %v1614
          %1774 = vst.msk [vmem:[#allocation3 + $0x18] sm:$0xff] %vm990, %v1619
          %1775 = vst.msk [vmem:[#allocation3 + $0x20] sm:$0xff] %vm990, %v1624
          %1776 = vst.msk [vmem:[#allocation3 + $0x28] sm:$0xff] %vm990, %v1629
          %1777 = vst.msk [vmem:[#allocation3 + $0x30] sm:$0xff] %vm990, %v1634
          %1778 = vst.msk [vmem:[#allocation3 + $0x38] sm:$0xff] %vm990, %v1639
          %1779 = vst.msk [vmem:[#allocation3 + $0x40] sm:$0xff] %vm990, %v1733
          %1780 = vst.msk [vmem:[#allocation3 + $0x48] sm:$0xff] %vm990, %v1738
          %1781 = vst.msk [vmem:[#allocation3 + $0x50] sm:$0xff] %vm990, %v1743
          %1782 = vst.msk [vmem:[#allocation3 + $0x58] sm:$0xff] %vm990, %v1748
          %1783 = vst.msk [vmem:[#allocation3 + $0x60] sm:$0xff] %vm990, %v1753
          %1784 = vst.msk [vmem:[#allocation3 + $0x68] sm:$0xff] %vm990, %v1758
          %1785 = vst.msk [vmem:[#allocation3 + $0x70] sm:$0xff] %vm990, %v1763
          %1786 = vst.msk [vmem:[#allocation3 + $0x78] sm:$0xff] %vm990, %v1768
          %1787 = vrot.lane.b32.xlu0 %v906, 120
          %v1788 = vpop.permute.xlu0 %1787
          %1789 = vrot.lane.b32.xlu0 %v907, 120
          %v1790 = vpop.permute.xlu0 %1789
          %1791 = vrot.lane.b32.xlu0 %v908, 120
          %v1792 = vpop.permute.xlu0 %1791
          %1793 = vrot.lane.b32.xlu0 %v909, 120
          %v1794 = vpop.permute.xlu0 %1793
          %1795 = vrot.lane.b32.xlu0 %v910, 120
          %v1796 = vpop.permute.xlu0 %1795
          %1797 = vrot.lane.b32.xlu0 %v911, 120
          %v1798 = vpop.permute.xlu0 %1797
          %1799 = vrot.lane.b32.xlu0 %v912, 120
          %v1800 = vpop.permute.xlu0 %1799
          %1801 = vrot.lane.b32.xlu0 %v913, 120
          %v1802 = vpop.permute.xlu0 %1801
          %1803 = vrot.lane.b32.xlu0 %v930, 56
          %v1804 = vpop.permute.xlu0 %1803
          %1805 = vrot.lane.b32.xlu0 %v931, 56
          %v1806 = vpop.permute.xlu0 %1805
          %1807 = vrot.lane.b32.xlu0 %v932, 56
          %v1808 = vpop.permute.xlu0 %1807
          %1809 = vrot.lane.b32.xlu0 %v933, 56
          %v1810 = vpop.permute.xlu0 %1809
          %1811 = vrot.lane.b32.xlu0 %v934, 56
          %v1812 = vpop.permute.xlu0 %1811
          %1813 = vrot.lane.b32.xlu0 %v935, 56
          %v1814 = vpop.permute.xlu0 %1813
          %1815 = vrot.lane.b32.xlu0 %v936, 56
          %v1816 = vpop.permute.xlu0 %1815
          %1817 = vrot.lane.b32.xlu0 %v937, 56
          %v1818 = vpop.permute.xlu0 %1817
          %v1819 = vsel %vm990, %v1788, 0
          %v1821 = vsel %vm990, %v1790, 0
          %v1823 = vsel %vm990, %v1792, 0
          %v1825 = vsel %vm990, %v1794, 0
          %v1827 = vsel %vm990, %v1796, 0
          %v1829 = vsel %vm990, %v1798, 0
          %v1831 = vsel %vm990, %v1800, 0
          %v1833 = vsel %vm990, %v1802, 0
          %v1835 = vsel %vm990, %v1804, 0
          %v1837 = vsel %vm990, %v1806, 0
          %v1839 = vsel %vm990, %v1808, 0
          %v1841 = vsel %vm990, %v1810, 0
          %v1843 = vsel %vm990, %v1812, 0
          %v1845 = vsel %vm990, %v1814, 0
          %v1847 = vsel %vm990, %v1816, 0
          %v1849 = vsel %vm990, %v1818, 0
          %1851 = vmatprep.subr.mxu0 0.0
          %1852 = vmatpush1.xpose.msra.mxu0 %v1835
          %1853 = vmatprep.subr.mxu0 0.0
          %1854 = vmatpush1.xpose.msra.mxu0 %v1837
          %1855 = vmatprep.subr.mxu0 0.0
          %1856 = vmatpush1.xpose.msra.mxu0 %v1839
          %1857 = vmatprep.subr.mxu0 0.0
          %1858 = vmatpush1.xpose.msra.mxu0 %v1841
          %1859 = vmatprep.subr.mxu0 0.0
          %1860 = vmatpush1.xpose.msra.mxu0 %v1843
          %1861 = vmatprep.subr.mxu0 0.0
          %1862 = vmatpush1.xpose.msra.mxu0 %v1845
          %1863 = vmatprep.subr.mxu0 0.0
          %1864 = vmatpush1.xpose.msra.mxu0 %v1847
          %1865 = vmatprep.subr.mxu0 0.0
          %1866 = vmatpush1.xpose.msra.mxu0 %v1849
          %1867 = vmatprep.subr.mxu0 0.0
          %1868 = vmatpush1.xpose.msra.mxu0 0.0
          %1869 = vmatprep.subr.mxu0 0.0
          %1870 = vmatpush1.xpose.msra.mxu0 0.0
          %1871 = vmatprep.subr.mxu0 0.0
          %1872 = vmatpush1.xpose.msra.mxu0 0.0
          %1873 = vmatprep.subr.mxu0 0.0
          %1874 = vmatpush1.xpose.msra.mxu0 0.0
          %1875 = vmatprep.subr.mxu0 0.0
          %1876 = vmatpush1.xpose.msra.mxu0 0.0
          %1877 = vmatprep.subr.mxu0 0.0
          %1878 = vmatpush1.xpose.msra.mxu0 0.0
          %1879 = vmatprep.subr.mxu0 0.0
          %1880 = vmatpush1.xpose.msra.mxu0 0.0
          %1881 = vmatprep.subr.mxu0 0.0
          %1882 = vmatpush1.xpose.msra.mxu0 0.0
          %1883 = vmatprep.subr.mxu0 0.0
          %1884 = vmatpush1.xpose.msra.mxu0 0.0
          %1885 = vmatprep.subr.mxu0 0.0
          %1886 = vmatpush1.xpose.msra.mxu0 0.0
          %1887 = vmatprep.subr.mxu0 0.0
          %1888 = vmatpush1.xpose.msra.mxu0 0.0
          %1889 = vmatprep.subr.mxu0 0.0
          %1890 = vmatpush1.xpose.msra.mxu0 0.0
          %1891 = vmatprep.subr.mxu0 0.0
          %1892 = vmatpush1.xpose.msra.mxu0 0.0
          %1893 = vmatprep.subr.mxu0 0.0
          %1894 = vmatpush1.xpose.msra.mxu0 0.0
          %1895 = vmatprep.subr.mxu0 0.0
          %1896 = vmatpush1.xpose.msra.mxu0 0.0
          %1897 = vmatprep.subr.mxu0 0.0
          %1898 = vmatpush1.xpose.msra.mxu0 0.0
          %1899 = vmatprep.subr.mxu0 0.0
          %1900 = vmatpush1.xpose.msra.mxu0 0.0
          %1901 = vmatprep.subr.mxu0 0.0
          %1902 = vmatpush1.xpose.msra.mxu0 0.0
          %1903 = vmatprep.subr.mxu0 0.0
          %1904 = vmatpush1.xpose.msra.mxu0 0.0
          %1905 = vmatprep.subr.mxu0 0.0
          %1906 = vmatpush1.xpose.msra.mxu0 0.0
          %1907 = vmatprep.subr.mxu0 0.0
          %1908 = vmatpush1.xpose.msra.mxu0 0.0
          %1909 = vmatprep.subr.mxu0 0.0
          %1910 = vmatpush1.xpose.msra.mxu0 0.0
          %1911 = vmatprep.subr.mxu0 0.0
          %1912 = vmatpush1.xpose.msra.mxu0 0.0
          %1913 = vmatprep.subr.mxu0 0.0
          %1914 = vmatpush1.xpose.msra.mxu0 0.0
          %1915 = vmatprep.mubr.f32.mxu0 0.0
          %1916 = vmatmul.mubr.f32.gmra.mrb[0].mxu0 %v1819
          %v1917 = vpop.f32.mrb[0].mxu0
          %v1918 = vadd.f32 0.0, %v1917
          %v1919 = vpop.f32.mrb[0].mxu0
          %1920 = vmatprep.mubr.f32.mxu0 0.0
          %1921 = vmatmul.mubr.f32.gmra.mrb[0].mxu0 %v1821
          %v1922 = vpop.f32.mrb[0].mxu0
          %v1923 = vadd.f32 0.0, %v1922
          %v1924 = vpop.f32.mrb[0].mxu0
          %1925 = vmatprep.mubr.f32.mxu0 0.0
          %1926 = vmatmul.mubr.f32.gmra.mrb[0].mxu0 %v1823
          %v1927 = vpop.f32.mrb[0].mxu0
          %v1928 = vadd.f32 0.0, %v1927
          %v1929 = vpop.f32.mrb[0].mxu0
          %1930 = vmatprep.mubr.f32.mxu0 0.0
          %1931 = vmatmul.mubr.f32.gmra.mrb[0].mxu0 %v1825
          %v1932 = vpop.f32.mrb[0].mxu0
          %v1933 = vadd.f32 0.0, %v1932
          %v1934 = vpop.f32.mrb[0].mxu0
          %1935 = vmatprep.mubr.f32.mxu0 0.0
          %1936 = vmatmul.mubr.f32.gmra.mrb[0].mxu0 %v1827
          %v1937 = vpop.f32.mrb[0].mxu0
          %v1938 = vadd.f32 0.0, %v1937
          %v1939 = vpop.f32.mrb[0].mxu0
          %1940 = vmatprep.mubr.f32.mxu0 0.0
          %1941 = vmatmul.mubr.f32.gmra.mrb[0].mxu0 %v1829
          %v1942 = vpop.f32.mrb[0].mxu0
          %v1943 = vadd.f32 0.0, %v1942
          %v1944 = vpop.f32.mrb[0].mxu0
          %1945 = vmatprep.mubr.f32.mxu0 0.0
          %1946 = vmatmul.mubr.f32.gmra.mrb[0].mxu0 %v1831
          %v1947 = vpop.f32.mrb[0].mxu0
          %v1948 = vadd.f32 0.0, %v1947
          %v1949 = vpop.f32.mrb[0].mxu0
          %1950 = vmatprep.mubr.f32.mxu0 0.0
          %1951 = vmatmul.mubr.f32.gmra.mrb[0].mxu0 %v1833
          %v1952 = vpop.f32.mrb[0].mxu0
          %v1953 = vadd.f32 0.0, %v1952
          %v1954 = vpop.f32.mrb[0].mxu0
          %1955 = vdwg.mxu0
          %1956 = vrot.lane.b32.xlu0 %v914, 120
          %v1957 = vpop.permute.xlu0 %1956
          %1958 = vrot.lane.b32.xlu0 %v915, 120
          %v1959 = vpop.permute.xlu0 %1958
          %1960 = vrot.lane.b32.xlu0 %v916, 120
          %v1961 = vpop.permute.xlu0 %1960
          %1962 = vrot.lane.b32.xlu0 %v917, 120
          %v1963 = vpop.permute.xlu0 %1962
          %1964 = vrot.lane.b32.xlu0 %v918, 120
          %v1965 = vpop.permute.xlu0 %1964
          %1966 = vrot.lane.b32.xlu0 %v919, 120
          %v1967 = vpop.permute.xlu0 %1966
          %1968 = vrot.lane.b32.xlu0 %v920, 120
          %v1969 = vpop.permute.xlu0 %1968
          %1970 = vrot.lane.b32.xlu0 %v921, 120
          %v1971 = vpop.permute.xlu0 %1970
          %1972 = vrot.lane.b32.xlu0 %v938, 56
          %v1973 = vpop.permute.xlu0 %1972
          %1974 = vrot.lane.b32.xlu0 %v939, 56
          %v1975 = vpop.permute.xlu0 %1974
          %1976 = vrot.lane.b32.xlu0 %v940, 56
          %v1977 = vpop.permute.xlu0 %1976
          %1978 = vrot.lane.b32.xlu0 %v941, 56
          %v1979 = vpop.permute.xlu0 %1978
          %1980 = vrot.lane.b32.xlu0 %v942, 56
          %v1981 = vpop.permute.xlu0 %1980
          %1982 = vrot.lane.b32.xlu0 %v943, 56
          %v1983 = vpop.permute.xlu0 %1982
          %1984 = vrot.lane.b32.xlu0 %v944, 56
          %v1985 = vpop.permute.xlu0 %1984
          %1986 = vrot.lane.b32.xlu0 %v945, 56
          %v1987 = vpop.permute.xlu0 %1986
          %v1988 = vsel %vm990, %v1957, 0
          %v1990 = vsel %vm990, %v1959, 0
          %v1992 = vsel %vm990, %v1961, 0
          %v1994 = vsel %vm990, %v1963, 0
          %v1996 = vsel %vm990, %v1965, 0
          %v1998 = vsel %vm990, %v1967, 0
          %v2000 = vsel %vm990, %v1969, 0
          %v2002 = vsel %vm990, %v1971, 0
          %v2004 = vsel %vm990, %v1973, 0
          %v2006 = vsel %vm990, %v1975, 0
          %v2008 = vsel %vm990, %v1977, 0
          %v2010 = vsel %vm990, %v1979, 0
          %v2012 = vsel %vm990, %v1981, 0
          %v2014 = vsel %vm990, %v1983, 0
          %v2016 = vsel %vm990, %v1985, 0
          %v2018 = vsel %vm990, %v1987, 0
          %2020 = vmatprep.subr.mxu0 0.0
          %2021 = vmatpush1.xpose.msra.mxu0 %v2004
          %2022 = vmatprep.subr.mxu0 0.0
          %2023 = vmatpush1.xpose.msra.mxu0 %v2006
          %2024 = vmatprep.subr.mxu0 0.0
          %2025 = vmatpush1.xpose.msra.mxu0 %v2008
          %2026 = vmatprep.subr.mxu0 0.0
          %2027 = vmatpush1.xpose.msra.mxu0 %v2010
          %2028 = vmatprep.subr.mxu0 0.0
          %2029 = vmatpush1.xpose.msra.mxu0 %v2012
          %2030 = vmatprep.subr.mxu0 0.0
          %2031 = vmatpush1.xpose.msra.mxu0 %v2014
          %2032 = vmatprep.subr.mxu0 0.0
          %2033 = vmatpush1.xpose.msra.mxu0 %v2016
          %2034 = vmatprep.subr.mxu0 0.0
          %2035 = vmatpush1.xpose.msra.mxu0 %v2018
          %2036 = vmatprep.subr.mxu0 0.0
          %2037 = vmatpush1.xpose.msra.mxu0 0.0
          %2038 = vmatprep.subr.mxu0 0.0
          %2039 = vmatpush1.xpose.msra.mxu0 0.0
          %2040 = vmatprep.subr.mxu0 0.0
          %2041 = vmatpush1.xpose.msra.mxu0 0.0
          %2042 = vmatprep.subr.mxu0 0.0
          %2043 = vmatpush1.xpose.msra.mxu0 0.0
          %2044 = vmatprep.subr.mxu0 0.0
          %2045 = vmatpush1.xpose.msra.mxu0 0.0
          %2046 = vmatprep.subr.mxu0 0.0
          %2047 = vmatpush1.xpose.msra.mxu0 0.0
          %2048 = vmatprep.subr.mxu0 0.0
          %2049 = vmatpush1.xpose.msra.mxu0 0.0
          %2050 = vmatprep.subr.mxu0 0.0
          %2051 = vmatpush1.xpose.msra.mxu0 0.0
          %2052 = vmatprep.subr.mxu0 0.0
          %2053 = vmatpush1.xpose.msra.mxu0 0.0
          %2054 = vmatprep.subr.mxu0 0.0
          %2055 = vmatpush1.xpose.msra.mxu0 0.0
          %2056 = vmatprep.subr.mxu0 0.0
          %2057 = vmatpush1.xpose.msra.mxu0 0.0
          %2058 = vmatprep.subr.mxu0 0.0
          %2059 = vmatpush1.xpose.msra.mxu0 0.0
          %2060 = vmatprep.subr.mxu0 0.0
          %2061 = vmatpush1.xpose.msra.mxu0 0.0
          %2062 = vmatprep.subr.mxu0 0.0
          %2063 = vmatpush1.xpose.msra.mxu0 0.0
          %2064 = vmatprep.subr.mxu0 0.0
          %2065 = vmatpush1.xpose.msra.mxu0 0.0
          %2066 = vmatprep.subr.mxu0 0.0
          %2067 = vmatpush1.xpose.msra.mxu0 0.0
          %2068 = vmatprep.subr.mxu0 0.0
          %2069 = vmatpush1.xpose.msra.mxu0 0.0
          %2070 = vmatprep.subr.mxu0 0.0
          %2071 = vmatpush1.xpose.msra.mxu0 0.0
          %2072 = vmatprep.subr.mxu0 0.0
          %2073 = vmatpush1.xpose.msra.mxu0 0.0
          %2074 = vmatprep.subr.mxu0 0.0
          %2075 = vmatpush1.xpose.msra.mxu0 0.0
          %2076 = vmatprep.subr.mxu0 0.0
          %2077 = vmatpush1.xpose.msra.mxu0 0.0
          %2078 = vmatprep.subr.mxu0 0.0
          %2079 = vmatpush1.xpose.msra.mxu0 0.0
          %2080 = vmatprep.subr.mxu0 0.0
          %2081 = vmatpush1.xpose.msra.mxu0 0.0
          %2082 = vmatprep.subr.mxu0 0.0
          %2083 = vmatpush1.xpose.msra.mxu0 0.0
          %2084 = vmatprep.mubr.f32.mxu0 0.0
          %2085 = vmatmul.mubr.f32.gmra.mrb[0].mxu0 %v1988
          %v2086 = vpop.f32.mrb[0].mxu0
          %v2087 = vadd.f32 0.0, %v2086
          %v2088 = vpop.f32.mrb[0].mxu0
          %2089 = vmatprep.mubr.f32.mxu0 0.0
          %2090 = vmatmul.mubr.f32.gmra.mrb[0].mxu0 %v1990
          %v2091 = vpop.f32.mrb[0].mxu0
          %v2092 = vadd.f32 0.0, %v2091
          %v2093 = vpop.f32.mrb[0].mxu0
          %2094 = vmatprep.mubr.f32.mxu0 0.0
          %2095 = vmatmul.mubr.f32.gmra.mrb[0].mxu0 %v1992
          %v2096 = vpop.f32.mrb[0].mxu0
          %v2097 = vadd.f32 0.0, %v2096
          %v2098 = vpop.f32.mrb[0].mxu0
          %2099 = vmatprep.mubr.f32.mxu0 0.0
          %2100 = vmatmul.mubr.f32.gmra.mrb[0].mxu0 %v1994
          %v2101 = vpop.f32.mrb[0].mxu0
          %v2102 = vadd.f32 0.0, %v2101
          %v2103 = vpop.f32.mrb[0].mxu0
          %2104 = vmatprep.mubr.f32.mxu0 0.0
          %2105 = vmatmul.mubr.f32.gmra.mrb[0].mxu0 %v1996
          %v2106 = vpop.f32.mrb[0].mxu0
          %v2107 = vadd.f32 0.0, %v2106
          %v2108 = vpop.f32.mrb[0].mxu0
          %2109 = vmatprep.mubr.f32.mxu0 0.0
          %2110 = vmatmul.mubr.f32.gmra.mrb[0].mxu0 %v1998
          %v2111 = vpop.f32.mrb[0].mxu0
          %v2112 = vadd.f32 0.0, %v2111
          %v2113 = vpop.f32.mrb[0].mxu0
          %2114 = vmatprep.mubr.f32.mxu0 0.0
          %2115 = vmatmul.mubr.f32.gmra.mrb[0].mxu0 %v2000
          %v2116 = vpop.f32.mrb[0].mxu0
          %v2117 = vadd.f32 0.0, %v2116
          %v2118 = vpop.f32.mrb[0].mxu0
          %2119 = vmatprep.mubr.f32.mxu0 0.0
          %2120 = vmatmul.mubr.f32.gmra.mrb[0].mxu0 %v2002
          %v2121 = vpop.f32.mrb[0].mxu0
          %v2122 = vadd.f32 0.0, %v2121
          %v2123 = vpop.f32.mrb[0].mxu0
          %2124 = vdwg.mxu0
          %v2125 = vsel %vm401, %v1918, -inf
          %2126 = vmax.xlane.f32.xlu0 %v2125
          %v2127 = vpop.xlane.xlu0 %2126
          %v2128 = vsel %vm401, %v1923, -inf
          %2129 = vmax.xlane.f32.xlu0 %v2128
          %v2130 = vpop.xlane.xlu0 %2129
          %v2131 = vsel %vm401, %v1928, -inf
          %2132 = vmax.xlane.f32.xlu0 %v2131
          %v2133 = vpop.xlane.xlu0 %2132
          %v2134 = vsel %vm401, %v1933, -inf
          %2135 = vmax.xlane.f32.xlu0 %v2134
          %v2136 = vpop.xlane.xlu0 %2135
          %v2137 = vsel %vm401, %v1938, -inf
          %2138 = vmax.xlane.f32.xlu0 %v2137
          %v2139 = vpop.xlane.xlu0 %2138
          %v2140 = vsel %vm401, %v1943, -inf
          %2141 = vmax.xlane.f32.xlu0 %v2140
          %v2142 = vpop.xlane.xlu0 %2141
          %v2143 = vsel %vm401, %v1948, -inf
          %2144 = vmax.xlane.f32.xlu0 %v2143
          %v2145 = vpop.xlane.xlu0 %2144
          %v2146 = vsel %vm401, %v1953, -inf
          %2147 = vmax.xlane.f32.xlu0 %v2146
          %v2148 = vpop.xlane.xlu0 %2147
          %v2149 = vsel %vm401, %v2087, -inf
          %2150 = vmax.xlane.f32.xlu0 %v2149
          %v2151 = vpop.xlane.xlu0 %2150
          %v2152 = vsel %vm401, %v2092, -inf
          %2153 = vmax.xlane.f32.xlu0 %v2152
          %v2154 = vpop.xlane.xlu0 %2153
          %v2155 = vsel %vm401, %v2097, -inf
          %2156 = vmax.xlane.f32.xlu0 %v2155
          %v2157 = vpop.xlane.xlu0 %2156
          %v2158 = vsel %vm401, %v2102, -inf
          %2159 = vmax.xlane.f32.xlu0 %v2158
          %v2160 = vpop.xlane.xlu0 %2159
          %v2161 = vsel %vm401, %v2107, -inf
          %2162 = vmax.xlane.f32.xlu0 %v2161
          %v2163 = vpop.xlane.xlu0 %2162
          %v2164 = vsel %vm401, %v2112, -inf
          %2165 = vmax.xlane.f32.xlu0 %v2164
          %v2166 = vpop.xlane.xlu0 %2165
          %v2167 = vsel %vm401, %v2117, -inf
          %2168 = vmax.xlane.f32.xlu0 %v2167
          %v2169 = vpop.xlane.xlu0 %2168
          %v2170 = vsel %vm401, %v2122, -inf
          %2171 = vmax.xlane.f32.xlu0 %v2170
          %v2172 = vpop.xlane.xlu0 %2171
          %v2173 = vsub.f32 %v1918, %v2127
          %v2174 = vsub.f32 %v1923, %v2130
          %v2175 = vsub.f32 %v1928, %v2133
          %v2176 = vsub.f32 %v1933, %v2136
          %v2177 = vsub.f32 %v1938, %v2139
          %v2178 = vsub.f32 %v1943, %v2142
          %v2179 = vsub.f32 %v1948, %v2145
          %v2180 = vsub.f32 %v1953, %v2148
          %v2181 = vsub.f32 %v2087, %v2151
          %v2182 = vsub.f32 %v2092, %v2154
          %v2183 = vsub.f32 %v2097, %v2157
          %v2184 = vsub.f32 %v2102, %v2160
          %v2185 = vsub.f32 %v2107, %v2163
          %v2186 = vsub.f32 %v2112, %v2166
          %v2187 = vsub.f32 %v2117, %v2169
          %v2188 = vsub.f32 %v2122, %v2172
          %v2189 = vmul.f32 %v2173, 1.442695
          %v2190 = vpow.pop %v2189
          %v2191 = vmul.f32 %v2174, 1.442695
          %v2192 = vpow.pop %v2191
          %v2193 = vmul.f32 %v2175, 1.442695
          %v2194 = vpow.pop %v2193
          %v2195 = vmul.f32 %v2176, 1.442695
          %v2196 = vpow.pop %v2195
          %v2197 = vmul.f32 %v2177, 1.442695
          %v2198 = vpow.pop %v2197
          %v2199 = vmul.f32 %v2178, 1.442695
          %v2200 = vpow.pop %v2199
          %v2201 = vmul.f32 %v2179, 1.442695
          %v2202 = vpow.pop %v2201
          %v2203 = vmul.f32 %v2180, 1.442695
          %v2204 = vpow.pop %v2203
          %v2205 = vmul.f32 %v2181, 1.442695
          %v2206 = vpow.pop %v2205
          %v2207 = vmul.f32 %v2182, 1.442695
          %v2208 = vpow.pop %v2207
          %v2209 = vmul.f32 %v2183, 1.442695
          %v2210 = vpow.pop %v2209
          %v2211 = vmul.f32 %v2184, 1.442695
          %v2212 = vpow.pop %v2211
          %v2213 = vmul.f32 %v2185, 1.442695
          %v2214 = vpow.pop %v2213
          %v2215 = vmul.f32 %v2186, 1.442695
          %v2216 = vpow.pop %v2215
          %v2217 = vmul.f32 %v2187, 1.442695
          %v2218 = vpow.pop %v2217
          %v2219 = vmul.f32 %v2188, 1.442695
          %v2220 = vpow.pop %v2219
          %v2221 = vmul.f32 %v2190, %v425
          %v2222 = vmul.f32 %v2192, %v425
          %v2223 = vmul.f32 %v2194, %v425
          %v2224 = vmul.f32 %v2196, %v425
          %v2225 = vmul.f32 %v2198, %v425
          %v2226 = vmul.f32 %v2200, %v425
          %v2227 = vmul.f32 %v2202, %v425
          %v2228 = vmul.f32 %v2204, %v425
          %v2229 = vmul.f32 %v2206, %v429
          %v2230 = vmul.f32 %v2208, %v429
          %v2231 = vmul.f32 %v2210, %v429
          %v2232 = vmul.f32 %v2212, %v429
          %v2233 = vmul.f32 %v2214, %v429
          %v2234 = vmul.f32 %v2216, %v429
          %v2235 = vmul.f32 %v2218, %v429
          %v2236 = vmul.f32 %v2220, %v429
          %v2237 = vsel %vm401, %v2221, 0.0
          %2238 = vadd.xlane.f32.xlu0 %v2237
          %v2239 = vpop.xlane.xlu0 %2238
          %v2240 = vsel %vm401, %v2222, 0.0
          %2241 = vadd.xlane.f32.xlu0 %v2240
          %v2242 = vpop.xlane.xlu0 %2241
          %v2243 = vsel %vm401, %v2223, 0.0
          %2244 = vadd.xlane.f32.xlu0 %v2243
          %v2245 = vpop.xlane.xlu0 %2244
          %v2246 = vsel %vm401, %v2224, 0.0
          %2247 = vadd.xlane.f32.xlu0 %v2246
          %v2248 = vpop.xlane.xlu0 %2247
          %v2249 = vsel %vm401, %v2225, 0.0
          %2250 = vadd.xlane.f32.xlu0 %v2249
          %v2251 = vpop.xlane.xlu0 %2250
          %v2252 = vsel %vm401, %v2226, 0.0
          %2253 = vadd.xlane.f32.xlu0 %v2252
          %v2254 = vpop.xlane.xlu0 %2253
          %v2255 = vsel %vm401, %v2227, 0.0
          %2256 = vadd.xlane.f32.xlu0 %v2255
          %v2257 = vpop.xlane.xlu0 %2256
          %v2258 = vsel %vm401, %v2228, 0.0
          %2259 = vadd.xlane.f32.xlu0 %v2258
          %v2260 = vpop.xlane.xlu0 %2259
          %v2261 = vsel %vm401, %v2229, 0.0
          %2262 = vadd.xlane.f32.xlu0 %v2261
          %v2263 = vpop.xlane.xlu0 %2262
          %v2264 = vsel %vm401, %v2230, 0.0
          %2265 = vadd.xlane.f32.xlu0 %v2264
          %v2266 = vpop.xlane.xlu0 %2265
          %v2267 = vsel %vm401, %v2231, 0.0
          %2268 = vadd.xlane.f32.xlu0 %v2267
          %v2269 = vpop.xlane.xlu0 %2268
          %v2270 = vsel %vm401, %v2232, 0.0
          %2271 = vadd.xlane.f32.xlu0 %v2270
          %v2272 = vpop.xlane.xlu0 %2271
          %v2273 = vsel %vm401, %v2233, 0.0
          %2274 = vadd.xlane.f32.xlu0 %v2273
          %v2275 = vpop.xlane.xlu0 %2274
          %v2276 = vsel %vm401, %v2234, 0.0
          %2277 = vadd.xlane.f32.xlu0 %v2276
          %v2278 = vpop.xlane.xlu0 %2277
          %v2279 = vsel %vm401, %v2235, 0.0
          %2280 = vadd.xlane.f32.xlu0 %v2279
          %v2281 = vpop.xlane.xlu0 %2280
          %v2282 = vsel %vm401, %v2236, 0.0
          %2283 = vadd.xlane.f32.xlu0 %v2282
          %v2284 = vpop.xlane.xlu0 %2283
          %v2285 = vmax.f32 %v2239, 1e-30
          %v2286 = vmax.f32 %v2242, 1e-30
          %v2287 = vmax.f32 %v2245, 1e-30
          %v2288 = vmax.f32 %v2248, 1e-30
          %v2289 = vmax.f32 %v2251, 1e-30
          %v2290 = vmax.f32 %v2254, 1e-30
          %v2291 = vmax.f32 %v2257, 1e-30
          %v2292 = vmax.f32 %v2260, 1e-30
          %v2293 = vmax.f32 %v2263, 1e-30
          %v2294 = vmax.f32 %v2266, 1e-30
          %v2295 = vmax.f32 %v2269, 1e-30
          %v2296 = vmax.f32 %v2272, 1e-30
          %v2297 = vmax.f32 %v2275, 1e-30
          %v2298 = vmax.f32 %v2278, 1e-30
          %v2299 = vmax.f32 %v2281, 1e-30
          %v2300 = vmax.f32 %v2284, 1e-30
          %v2301 = vrcp.pop %v2285
          %v2302 = vrcp.pop %v2286
          %v2303 = vrcp.pop %v2287
          %v2304 = vrcp.pop %v2288
          %v2305 = vrcp.pop %v2289
          %v2306 = vrcp.pop %v2290
          %v2307 = vrcp.pop %v2291
          %v2308 = vrcp.pop %v2292
          %v2309 = vrcp.pop %v2293
          %v2310 = vrcp.pop %v2294
          %v2311 = vrcp.pop %v2295
          %v2312 = vrcp.pop %v2296
          %v2313 = vrcp.pop %v2297
          %v2314 = vrcp.pop %v2298
          %v2315 = vrcp.pop %v2299
          %v2316 = vrcp.pop %v2300
          %v2317 = vmul.f32 %v2221, %v2301
          %v2318 = vmul.f32 %v2222, %v2302
          %v2319 = vmul.f32 %v2223, %v2303
          %v2320 = vmul.f32 %v2224, %v2304
          %v2321 = vmul.f32 %v2225, %v2305
          %v2322 = vmul.f32 %v2226, %v2306
          %v2323 = vmul.f32 %v2227, %v2307
          %v2324 = vmul.f32 %v2228, %v2308
          %v2325 = vmul.f32 %v2229, %v2309
          %v2326 = vmul.f32 %v2230, %v2310
          %v2327 = vmul.f32 %v2231, %v2311
          %v2328 = vmul.f32 %v2232, %v2312
          %v2329 = vmul.f32 %v2233, %v2313
          %v2330 = vmul.f32 %v2234, %v2314
          %v2331 = vmul.f32 %v2235, %v2315
          %v2332 = vmul.f32 %v2236, %v2316
          %2341 = vrot.lane.b32.xlu0 %v950, 120
          %v2342 = vpop.permute.xlu0 %2341
          %2343 = vrot.lane.b32.xlu0 %v951, 120
          %v2344 = vpop.permute.xlu0 %2343
          %2345 = vrot.lane.b32.xlu0 %v952, 120
          %v2346 = vpop.permute.xlu0 %2345
          %2347 = vrot.lane.b32.xlu0 %v953, 120
          %v2348 = vpop.permute.xlu0 %2347
          %2349 = vrot.lane.b32.xlu0 %v954, 120
          %v2350 = vpop.permute.xlu0 %2349
          %2351 = vrot.lane.b32.xlu0 %v955, 120
          %v2352 = vpop.permute.xlu0 %2351
          %2353 = vrot.lane.b32.xlu0 %v956, 120
          %v2354 = vpop.permute.xlu0 %2353
          %2355 = vrot.lane.b32.xlu0 %v957, 120
          %v2356 = vpop.permute.xlu0 %2355
          %v2366 = vsel %vm401, %v2317, 0
          %v2369 = vsel %vm401, %v2318, 0
          %v2372 = vsel %vm401, %v2319, 0
          %v2375 = vsel %vm401, %v2320, 0
          %v2378 = vsel %vm401, %v2321, 0
          %v2381 = vsel %vm401, %v2322, 0
          %v2384 = vsel %vm401, %v2323, 0
          %v2387 = vsel %vm401, %v2324, 0
          %2389 = vmatprep.subr.mxu0 0.0
          %2390 = vmatpush1.msra.mxu0 %v2342
          %2391 = vmatprep.subr.mxu0 0.0
          %2392 = vmatpush1.msra.mxu0 %v2344
          %2393 = vmatprep.subr.mxu0 0.0
          %2394 = vmatpush1.msra.mxu0 %v2346
          %2395 = vmatprep.subr.mxu0 0.0
          %2396 = vmatpush1.msra.mxu0 %v2348
          %2397 = vmatprep.subr.mxu0 0.0
          %2398 = vmatpush1.msra.mxu0 %v2350
          %2399 = vmatprep.subr.mxu0 0.0
          %2400 = vmatpush1.msra.mxu0 %v2352
          %2401 = vmatprep.subr.mxu0 0.0
          %2402 = vmatpush1.msra.mxu0 %v2354
          %2403 = vmatprep.subr.mxu0 0.0
          %2404 = vmatpush1.msra.mxu0 %v2356
          %2405 = vmatprep.subr.mxu0 0.0
          %2406 = vmatpush1.msra.mxu0 0.0
          %2407 = vmatprep.subr.mxu0 0.0
          %2408 = vmatpush1.msra.mxu0 0.0
          %2409 = vmatprep.subr.mxu0 0.0
          %2410 = vmatpush1.msra.mxu0 0.0
          %2411 = vmatprep.subr.mxu0 0.0
          %2412 = vmatpush1.msra.mxu0 0.0
          %2413 = vmatprep.subr.mxu0 0.0
          %2414 = vmatpush1.msra.mxu0 0.0
          %2415 = vmatprep.subr.mxu0 0.0
          %2416 = vmatpush1.msra.mxu0 0.0
          %2417 = vmatprep.subr.mxu0 0.0
          %2418 = vmatpush1.msra.mxu0 0.0
          %2419 = vmatprep.subr.mxu0 0.0
          %2420 = vmatpush1.msra.mxu0 0.0
          %2421 = vmatprep.subr.mxu0 0.0
          %2422 = vmatpush1.msra.mxu0 0.0
          %2423 = vmatprep.subr.mxu0 0.0
          %2424 = vmatpush1.msra.mxu0 0.0
          %2425 = vmatprep.subr.mxu0 0.0
          %2426 = vmatpush1.msra.mxu0 0.0
          %2427 = vmatprep.subr.mxu0 0.0
          %2428 = vmatpush1.msra.mxu0 0.0
          %2429 = vmatprep.subr.mxu0 0.0
          %2430 = vmatpush1.msra.mxu0 0.0
          %2431 = vmatprep.subr.mxu0 0.0
          %2432 = vmatpush1.msra.mxu0 0.0
          %2433 = vmatprep.subr.mxu0 0.0
          %2434 = vmatpush1.msra.mxu0 0.0
          %2435 = vmatprep.subr.mxu0 0.0
          %2436 = vmatpush1.msra.mxu0 0.0
          %2437 = vmatprep.subr.mxu0 0.0
          %2438 = vmatpush1.msra.mxu0 0.0
          %2439 = vmatprep.subr.mxu0 0.0
          %2440 = vmatpush1.msra.mxu0 0.0
          %2441 = vmatprep.subr.mxu0 0.0
          %2442 = vmatpush1.msra.mxu0 0.0
          %2443 = vmatprep.subr.mxu0 0.0
          %2444 = vmatpush1.msra.mxu0 0.0
          %2445 = vmatprep.subr.mxu0 0.0
          %2446 = vmatpush1.msra.mxu0 0.0
          %2447 = vmatprep.subr.mxu0 0.0
          %2448 = vmatpush1.msra.mxu0 0.0
          %2449 = vmatprep.subr.mxu0 0.0
          %2450 = vmatpush1.msra.mxu0 0.0
          %2451 = vmatprep.subr.mxu0 0.0
          %2452 = vmatpush1.msra.mxu0 0.0
          %2453 = vmatprep.mubr.f32.mxu0 0.0
          %2454 = vmatmul.mubr.f32.gmra.mrb[0].mxu0 %v2366
          %v2455 = vpop.f32.mrb[0].mxu0
          %v2456 = vadd.f32 0.0, %v2455
          %v2457 = vpop.f32.mrb[0].mxu0
          %2458 = vmatprep.mubr.f32.mxu0 0.0
          %2459 = vmatmul.mubr.f32.gmra.mrb[0].mxu0 %v2369
          %v2460 = vpop.f32.mrb[0].mxu0
          %v2461 = vadd.f32 0.0, %v2460
          %v2462 = vpop.f32.mrb[0].mxu0
          %2463 = vmatprep.mubr.f32.mxu0 0.0
          %2464 = vmatmul.mubr.f32.gmra.mrb[0].mxu0 %v2372
          %v2465 = vpop.f32.mrb[0].mxu0
          %v2466 = vadd.f32 0.0, %v2465
          %v2467 = vpop.f32.mrb[0].mxu0
          %2468 = vmatprep.mubr.f32.mxu0 0.0
          %2469 = vmatmul.mubr.f32.gmra.mrb[0].mxu0 %v2375
          %v2470 = vpop.f32.mrb[0].mxu0
          %v2471 = vadd.f32 0.0, %v2470
          %v2472 = vpop.f32.mrb[0].mxu0
          %2473 = vmatprep.mubr.f32.mxu0 0.0
          %2474 = vmatmul.mubr.f32.gmra.mrb[0].mxu0 %v2378
          %v2475 = vpop.f32.mrb[0].mxu0
          %v2476 = vadd.f32 0.0, %v2475
          %v2477 = vpop.f32.mrb[0].mxu0
          %2478 = vmatprep.mubr.f32.mxu0 0.0
          %2479 = vmatmul.mubr.f32.gmra.mrb[0].mxu0 %v2381
          %v2480 = vpop.f32.mrb[0].mxu0
          %v2481 = vadd.f32 0.0, %v2480
          %v2482 = vpop.f32.mrb[0].mxu0
          %2483 = vmatprep.mubr.f32.mxu0 0.0
          %2484 = vmatmul.mubr.f32.gmra.mrb[0].mxu0 %v2384
          %v2485 = vpop.f32.mrb[0].mxu0
          %v2486 = vadd.f32 0.0, %v2485
          %v2487 = vpop.f32.mrb[0].mxu0
          %2488 = vmatprep.mubr.f32.mxu0 0.0
          %2489 = vmatmul.mubr.f32.gmra.mrb[0].mxu0 %v2387
          %v2490 = vpop.f32.mrb[0].mxu0
          %v2491 = vadd.f32 0.0, %v2490
          %v2492 = vpop.f32.mrb[0].mxu0
          %2493 = vdwg.mxu0
          %2502 = vrot.lane.b32.xlu0 %v958, 120
          %v2503 = vpop.permute.xlu0 %2502
          %2504 = vrot.lane.b32.xlu0 %v959, 120
          %v2505 = vpop.permute.xlu0 %2504
          %2506 = vrot.lane.b32.xlu0 %v960, 120
          %v2507 = vpop.permute.xlu0 %2506
          %2508 = vrot.lane.b32.xlu0 %v961, 120
          %v2509 = vpop.permute.xlu0 %2508
          %2510 = vrot.lane.b32.xlu0 %v962, 120
          %v2511 = vpop.permute.xlu0 %2510
          %2512 = vrot.lane.b32.xlu0 %v963, 120
          %v2513 = vpop.permute.xlu0 %2512
          %2514 = vrot.lane.b32.xlu0 %v964, 120
          %v2515 = vpop.permute.xlu0 %2514
          %2516 = vrot.lane.b32.xlu0 %v965, 120
          %v2517 = vpop.permute.xlu0 %2516
          %v2527 = vsel %vm401, %v2325, 0
          %v2530 = vsel %vm401, %v2326, 0
          %v2533 = vsel %vm401, %v2327, 0
          %v2536 = vsel %vm401, %v2328, 0
          %v2539 = vsel %vm401, %v2329, 0
          %v2542 = vsel %vm401, %v2330, 0
          %v2545 = vsel %vm401, %v2331, 0
          %v2548 = vsel %vm401, %v2332, 0
          %2550 = vmatprep.subr.mxu0 0.0
          %2551 = vmatpush1.msra.mxu0 %v2503
          %2552 = vmatprep.subr.mxu0 0.0
          %2553 = vmatpush1.msra.mxu0 %v2505
          %2554 = vmatprep.subr.mxu0 0.0
          %2555 = vmatpush1.msra.mxu0 %v2507
          %2556 = vmatprep.subr.mxu0 0.0
          %2557 = vmatpush1.msra.mxu0 %v2509
          %2558 = vmatprep.subr.mxu0 0.0
          %2559 = vmatpush1.msra.mxu0 %v2511
          %2560 = vmatprep.subr.mxu0 0.0
          %2561 = vmatpush1.msra.mxu0 %v2513
          %2562 = vmatprep.subr.mxu0 0.0
          %2563 = vmatpush1.msra.mxu0 %v2515
          %2564 = vmatprep.subr.mxu0 0.0
          %2565 = vmatpush1.msra.mxu0 %v2517
          %2566 = vmatprep.subr.mxu0 0.0
          %2567 = vmatpush1.msra.mxu0 0.0
          %2568 = vmatprep.subr.mxu0 0.0
          %2569 = vmatpush1.msra.mxu0 0.0
          %2570 = vmatprep.subr.mxu0 0.0
          %2571 = vmatpush1.msra.mxu0 0.0
          %2572 = vmatprep.subr.mxu0 0.0
          %2573 = vmatpush1.msra.mxu0 0.0
          %2574 = vmatprep.subr.mxu0 0.0
          %2575 = vmatpush1.msra.mxu0 0.0
          %2576 = vmatprep.subr.mxu0 0.0
          %2577 = vmatpush1.msra.mxu0 0.0
          %2578 = vmatprep.subr.mxu0 0.0
          %2579 = vmatpush1.msra.mxu0 0.0
          %2580 = vmatprep.subr.mxu0 0.0
          %2581 = vmatpush1.msra.mxu0 0.0
          %2582 = vmatprep.subr.mxu0 0.0
          %2583 = vmatpush1.msra.mxu0 0.0
          %2584 = vmatprep.subr.mxu0 0.0
          %2585 = vmatpush1.msra.mxu0 0.0
          %2586 = vmatprep.subr.mxu0 0.0
          %2587 = vmatpush1.msra.mxu0 0.0
          %2588 = vmatprep.subr.mxu0 0.0
          %2589 = vmatpush1.msra.mxu0 0.0
          %2590 = vmatprep.subr.mxu0 0.0
          %2591 = vmatpush1.msra.mxu0 0.0
          %2592 = vmatprep.subr.mxu0 0.0
          %2593 = vmatpush1.msra.mxu0 0.0
          %2594 = vmatprep.subr.mxu0 0.0
          %2595 = vmatpush1.msra.mxu0 0.0
          %2596 = vmatprep.subr.mxu0 0.0
          %2597 = vmatpush1.msra.mxu0 0.0
          %2598 = vmatprep.subr.mxu0 0.0
          %2599 = vmatpush1.msra.mxu0 0.0
          %2600 = vmatprep.subr.mxu0 0.0
          %2601 = vmatpush1.msra.mxu0 0.0
          %2602 = vmatprep.subr.mxu0 0.0
          %2603 = vmatpush1.msra.mxu0 0.0
          %2604 = vmatprep.subr.mxu0 0.0
          %2605 = vmatpush1.msra.mxu0 0.0
          %2606 = vmatprep.subr.mxu0 0.0
          %2607 = vmatpush1.msra.mxu0 0.0
          %2608 = vmatprep.subr.mxu0 0.0
          %2609 = vmatpush1.msra.mxu0 0.0
          %2610 = vmatprep.subr.mxu0 0.0
          %2611 = vmatpush1.msra.mxu0 0.0
          %2612 = vmatprep.subr.mxu0 0.0
          %2613 = vmatpush1.msra.mxu0 0.0
          %2614 = vmatprep.mubr.f32.mxu0 0.0
          %2615 = vmatmul.mubr.f32.gmra.mrb[0].mxu0 %v2527
          %v2616 = vpop.f32.mrb[0].mxu0
          %v2617 = vadd.f32 0.0, %v2616
          %v2618 = vpop.f32.mrb[0].mxu0
          %2619 = vmatprep.mubr.f32.mxu0 0.0
          %2620 = vmatmul.mubr.f32.gmra.mrb[0].mxu0 %v2530
          %v2621 = vpop.f32.mrb[0].mxu0
          %v2622 = vadd.f32 0.0, %v2621
          %v2623 = vpop.f32.mrb[0].mxu0
          %2624 = vmatprep.mubr.f32.mxu0 0.0
          %2625 = vmatmul.mubr.f32.gmra.mrb[0].mxu0 %v2533
          %v2626 = vpop.f32.mrb[0].mxu0
          %v2627 = vadd.f32 0.0, %v2626
          %v2628 = vpop.f32.mrb[0].mxu0
          %2629 = vmatprep.mubr.f32.mxu0 0.0
          %2630 = vmatmul.mubr.f32.gmra.mrb[0].mxu0 %v2536
          %v2631 = vpop.f32.mrb[0].mxu0
          %v2632 = vadd.f32 0.0, %v2631
          %v2633 = vpop.f32.mrb[0].mxu0
          %2634 = vmatprep.mubr.f32.mxu0 0.0
          %2635 = vmatmul.mubr.f32.gmra.mrb[0].mxu0 %v2539
          %v2636 = vpop.f32.mrb[0].mxu0
          %v2637 = vadd.f32 0.0, %v2636
          %v2638 = vpop.f32.mrb[0].mxu0
          %2639 = vmatprep.mubr.f32.mxu0 0.0
          %2640 = vmatmul.mubr.f32.gmra.mrb[0].mxu0 %v2542
          %v2641 = vpop.f32.mrb[0].mxu0
          %v2642 = vadd.f32 0.0, %v2641
          %v2643 = vpop.f32.mrb[0].mxu0
          %2644 = vmatprep.mubr.f32.mxu0 0.0
          %2645 = vmatmul.mubr.f32.gmra.mrb[0].mxu0 %v2545
          %v2646 = vpop.f32.mrb[0].mxu0
          %v2647 = vadd.f32 0.0, %v2646
          %v2648 = vpop.f32.mrb[0].mxu0
          %2649 = vmatprep.mubr.f32.mxu0 0.0
          %2650 = vmatmul.mubr.f32.gmra.mrb[0].mxu0 %v2548
          %v2651 = vpop.f32.mrb[0].mxu0
          %v2652 = vadd.f32 0.0, %v2651
          %v2653 = vpop.f32.mrb[0].mxu0
          %2654 = vdwg.mxu0
          %2671 = vrot.lane.b32.xlu0 %v2456, 8
          %v2672 = vpop.permute.xlu0 %2671
          %2673 = vrot.lane.b32.xlu0 %v2461, 8
          %v2674 = vpop.permute.xlu0 %2673
          %2675 = vrot.lane.b32.xlu0 %v2466, 8
          %v2676 = vpop.permute.xlu0 %2675
          %2677 = vrot.lane.b32.xlu0 %v2471, 8
          %v2678 = vpop.permute.xlu0 %2677
          %2679 = vrot.lane.b32.xlu0 %v2476, 8
          %v2680 = vpop.permute.xlu0 %2679
          %2681 = vrot.lane.b32.xlu0 %v2481, 8
          %v2682 = vpop.permute.xlu0 %2681
          %2683 = vrot.lane.b32.xlu0 %v2486, 8
          %v2684 = vpop.permute.xlu0 %2683
          %2685 = vrot.lane.b32.xlu0 %v2491, 8
          %v2686 = vpop.permute.xlu0 %2685
          %2687 = vrot.lane.b32.xlu0 %v2617, 8
          %v2688 = vpop.permute.xlu0 %2687
          %2689 = vrot.lane.b32.xlu0 %v2622, 8
          %v2690 = vpop.permute.xlu0 %2689
          %2691 = vrot.lane.b32.xlu0 %v2627, 8
          %v2692 = vpop.permute.xlu0 %2691
          %2693 = vrot.lane.b32.xlu0 %v2632, 8
          %v2694 = vpop.permute.xlu0 %2693
          %2695 = vrot.lane.b32.xlu0 %v2637, 8
          %v2696 = vpop.permute.xlu0 %2695
          %2697 = vrot.lane.b32.xlu0 %v2642, 8
          %v2698 = vpop.permute.xlu0 %2697
          %2699 = vrot.lane.b32.xlu0 %v2647, 8
          %v2700 = vpop.permute.xlu0 %2699
          %2701 = vrot.lane.b32.xlu0 %v2652, 8
          %v2702 = vpop.permute.xlu0 %2701
          %vm2719 = vcmask 130112
          %2720 = vst.msk [vmem:[#allocation3] sm:$0xff] %vm2719, %v2672
          %2721 = vst.msk [vmem:[#allocation3 + $0x8] sm:$0xff] %vm2719, %v2674
          %2722 = vst.msk [vmem:[#allocation3 + $0x10] sm:$0xff] %vm2719, %v2676
          %2723 = vst.msk [vmem:[#allocation3 + $0x18] sm:$0xff] %vm2719, %v2678
          %2724 = vst.msk [vmem:[#allocation3 + $0x20] sm:$0xff] %vm2719, %v2680
          %2725 = vst.msk [vmem:[#allocation3 + $0x28] sm:$0xff] %vm2719, %v2682
          %2726 = vst.msk [vmem:[#allocation3 + $0x30] sm:$0xff] %vm2719, %v2684
          %2727 = vst.msk [vmem:[#allocation3 + $0x38] sm:$0xff] %vm2719, %v2686
          %2728 = vst.msk [vmem:[#allocation3 + $0x40] sm:$0xff] %vm2719, %v2688
          %2729 = vst.msk [vmem:[#allocation3 + $0x48] sm:$0xff] %vm2719, %v2690
          %2730 = vst.msk [vmem:[#allocation3 + $0x50] sm:$0xff] %vm2719, %v2692
          %2731 = vst.msk [vmem:[#allocation3 + $0x58] sm:$0xff] %vm2719, %v2694
          %2732 = vst.msk [vmem:[#allocation3 + $0x60] sm:$0xff] %vm2719, %v2696
          %2733 = vst.msk [vmem:[#allocation3 + $0x68] sm:$0xff] %vm2719, %v2698
          %2734 = vst.msk [vmem:[#allocation3 + $0x70] sm:$0xff] %vm2719, %v2700
          %2735 = vst.msk [vmem:[#allocation3 + $0x78] sm:$0xff] %vm2719, %v2702
          %2736 = vrot.lane.b32.xlu0 %v906, 112
          %v2737 = vpop.permute.xlu0 %2736
          %2738 = vrot.lane.b32.xlu0 %v907, 112
          %v2739 = vpop.permute.xlu0 %2738
          %2740 = vrot.lane.b32.xlu0 %v908, 112
          %v2741 = vpop.permute.xlu0 %2740
          %2742 = vrot.lane.b32.xlu0 %v909, 112
          %v2743 = vpop.permute.xlu0 %2742
          %2744 = vrot.lane.b32.xlu0 %v910, 112
          %v2745 = vpop.permute.xlu0 %2744
          %2746 = vrot.lane.b32.xlu0 %v911, 112
          %v2747 = vpop.permute.xlu0 %2746
          %2748 = vrot.lane.b32.xlu0 %v912, 112
          %v2749 = vpop.permute.xlu0 %2748
          %2750 = vrot.lane.b32.xlu0 %v913, 112
          %v2751 = vpop.permute.xlu0 %2750
          %2752 = vrot.lane.b32.xlu0 %v930, 48
          %v2753 = vpop.permute.xlu0 %2752
          %2754 = vrot.lane.b32.xlu0 %v931, 48
          %v2755 = vpop.permute.xlu0 %2754
          %2756 = vrot.lane.b32.xlu0 %v932, 48
          %v2757 = vpop.permute.xlu0 %2756
          %2758 = vrot.lane.b32.xlu0 %v933, 48
          %v2759 = vpop.permute.xlu0 %2758
          %2760 = vrot.lane.b32.xlu0 %v934, 48
          %v2761 = vpop.permute.xlu0 %2760
          %2762 = vrot.lane.b32.xlu0 %v935, 48
          %v2763 = vpop.permute.xlu0 %2762
          %2764 = vrot.lane.b32.xlu0 %v936, 48
          %v2765 = vpop.permute.xlu0 %2764
          %2766 = vrot.lane.b32.xlu0 %v937, 48
          %v2767 = vpop.permute.xlu0 %2766
          %v2768 = vsel %vm990, %v2737, 0
          %v2770 = vsel %vm990, %v2739, 0
          %v2772 = vsel %vm990, %v2741, 0
          %v2774 = vsel %vm990, %v2743, 0
          %v2776 = vsel %vm990, %v2745, 0
          %v2778 = vsel %vm990, %v2747, 0
          %v2780 = vsel %vm990, %v2749, 0
          %v2782 = vsel %vm990, %v2751, 0
          %v2784 = vsel %vm990, %v2753, 0
          %v2786 = vsel %vm990, %v2755, 0
          %v2788 = vsel %vm990, %v2757, 0
          %v2790 = vsel %vm990, %v2759, 0
          %v2792 = vsel %vm990, %v2761, 0
          %v2794 = vsel %vm990, %v2763, 0
          %v2796 = vsel %vm990, %v2765, 0
          %v2798 = vsel %vm990, %v2767, 0
          %2800 = vmatprep.subr.mxu0 0.0
          %2801 = vmatpush1.xpose.msra.mxu0 %v2784
          %2802 = vmatprep.subr.mxu0 0.0
          %2803 = vmatpush1.xpose.msra.mxu0 %v2786
          %2804 = vmatprep.subr.mxu0 0.0
          %2805 = vmatpush1.xpose.msra.mxu0 %v2788
          %2806 = vmatprep.subr.mxu0 0.0
          %2807 = vmatpush1.xpose.msra.mxu0 %v2790
          %2808 = vmatprep.subr.mxu0 0.0
          %2809 = vmatpush1.xpose.msra.mxu0 %v2792
          %2810 = vmatprep.subr.mxu0 0.0
          %2811 = vmatpush1.xpose.msra.mxu0 %v2794
          %2812 = vmatprep.subr.mxu0 0.0
          %2813 = vmatpush1.xpose.msra.mxu0 %v2796
          %2814 = vmatprep.subr.mxu0 0.0
          %2815 = vmatpush1.xpose.msra.mxu0 %v2798
          %2816 = vmatprep.subr.mxu0 0.0
          %2817 = vmatpush1.xpose.msra.mxu0 0.0
          %2818 = vmatprep.subr.mxu0 0.0
          %2819 = vmatpush1.xpose.msra.mxu0 0.0
          %2820 = vmatprep.subr.mxu0 0.0
          %2821 = vmatpush1.xpose.msra.mxu0 0.0
          %2822 = vmatprep.subr.mxu0 0.0
          %2823 = vmatpush1.xpose.msra.mxu0 0.0
          %2824 = vmatprep.subr.mxu0 0.0
          %2825 = vmatpush1.xpose.msra.mxu0 0.0
          %2826 = vmatprep.subr.mxu0 0.0
          %2827 = vmatpush1.xpose.msra.mxu0 0.0
          %2828 = vmatprep.subr.mxu0 0.0
          %2829 = vmatpush1.xpose.msra.mxu0 0.0
          %2830 = vmatprep.subr.mxu0 0.0
          %2831 = vmatpush1.xpose.msra.mxu0 0.0
          %2832 = vmatprep.subr.mxu0 0.0
          %2833 = vmatpush1.xpose.msra.mxu0 0.0
          %2834 = vmatprep.subr.mxu0 0.0
          %2835 = vmatpush1.xpose.msra.mxu0 0.0
          %2836 = vmatprep.subr.mxu0 0.0
          %2837 = vmatpush1.xpose.msra.mxu0 0.0
          %2838 = vmatprep.subr.mxu0 0.0
          %2839 = vmatpush1.xpose.msra.mxu0 0.0
          %2840 = vmatprep.subr.mxu0 0.0
          %2841 = vmatpush1.xpose.msra.mxu0 0.0
          %2842 = vmatprep.subr.mxu0 0.0
          %2843 = vmatpush1.xpose.msra.mxu0 0.0
          %2844 = vmatprep.subr.mxu0 0.0
          %2845 = vmatpush1.xpose.msra.mxu0 0.0
          %2846 = vmatprep.subr.mxu0 0.0
          %2847 = vmatpush1.xpose.msra.mxu0 0.0
          %2848 = vmatprep.subr.mxu0 0.0
          %2849 = vmatpush1.xpose.msra.mxu0 0.0
          %2850 = vmatprep.subr.mxu0 0.0
          %2851 = vmatpush1.xpose.msra.mxu0 0.0
          %2852 = vmatprep.subr.mxu0 0.0
          %2853 = vmatpush1.xpose.msra.mxu0 0.0
          %2854 = vmatprep.subr.mxu0 0.0
          %2855 = vmatpush1.xpose.msra.mxu0 0.0
          %2856 = vmatprep.subr.mxu0 0.0
          %2857 = vmatpush1.xpose.msra.mxu0 0.0
          %2858 = vmatprep.subr.mxu0 0.0
          %2859 = vmatpush1.xpose.msra.mxu0 0.0
          %2860 = vmatprep.subr.mxu0 0.0
          %2861 = vmatpush1.xpose.msra.mxu0 0.0
          %2862 = vmatprep.subr.mxu0 0.0
          %2863 = vmatpush1.xpose.msra.mxu0 0.0
          %2864 = vmatprep.mubr.f32.mxu0 0.0
          %2865 = vmatmul.mubr.f32.gmra.mrb[0].mxu0 %v2768
          %v2866 = vpop.f32.mrb[0].mxu0
          %v2867 = vadd.f32 0.0, %v2866
          %v2868 = vpop.f32.mrb[0].mxu0
          %2869 = vmatprep.mubr.f32.mxu0 0.0
          %2870 = vmatmul.mubr.f32.gmra.mrb[0].mxu0 %v2770
          %v2871 = vpop.f32.mrb[0].mxu0
          %v2872 = vadd.f32 0.0, %v2871
          %v2873 = vpop.f32.mrb[0].mxu0
          %2874 = vmatprep.mubr.f32.mxu0 0.0
          %2875 = vmatmul.mubr.f32.gmra.mrb[0].mxu0 %v2772
          %v2876 = vpop.f32.mrb[0].mxu0
          %v2877 = vadd.f32 0.0, %v2876
          %v2878 = vpop.f32.mrb[0].mxu0
          %2879 = vmatprep.mubr.f32.mxu0 0.0
          %2880 = vmatmul.mubr.f32.gmra.mrb[0].mxu0 %v2774
          %v2881 = vpop.f32.mrb[0].mxu0
          %v2882 = vadd.f32 0.0, %v2881
          %v2883 = vpop.f32.mrb[0].mxu0
          %2884 = vmatprep.mubr.f32.mxu0 0.0
          %2885 = vmatmul.mubr.f32.gmra.mrb[0].mxu0 %v2776
          %v2886 = vpop.f32.mrb[0].mxu0
          %v2887 = vadd.f32 0.0, %v2886
          %v2888 = vpop.f32.mrb[0].mxu0
          %2889 = vmatprep.mubr.f32.mxu0 0.0
          %2890 = vmatmul.mubr.f32.gmra.mrb[0].mxu0 %v2778
          %v2891 = vpop.f32.mrb[0].mxu0
          %v2892 = vadd.f32 0.0, %v2891
          %v2893 = vpop.f32.mrb[0].mxu0
          %2894 = vmatprep.mubr.f32.mxu0 0.0
          %2895 = vmatmul.mubr.f32.gmra.mrb[0].mxu0 %v2780
          %v2896 = vpop.f32.mrb[0].mxu0
          %v2897 = vadd.f32 0.0, %v2896
          %v2898 = vpop.f32.mrb[0].mxu0
          %2899 = vmatprep.mubr.f32.mxu0 0.0
          %2900 = vmatmul.mubr.f32.gmra.mrb[0].mxu0 %v2782
          %v2901 = vpop.f32.mrb[0].mxu0
          %v2902 = vadd.f32 0.0, %v2901
          %v2903 = vpop.f32.mrb[0].mxu0
          %2904 = vdwg.mxu0
          %2905 = vrot.lane.b32.xlu0 %v914, 112
          %v2906 = vpop.permute.xlu0 %2905
          %2907 = vrot.lane.b32.xlu0 %v915, 112
          %v2908 = vpop.permute.xlu0 %2907
          %2909 = vrot.lane.b32.xlu0 %v916, 112
          %v2910 = vpop.permute.xlu0 %2909
          %2911 = vrot.lane.b32.xlu0 %v917, 112
          %v2912 = vpop.permute.xlu0 %2911
          %2913 = vrot.lane.b32.xlu0 %v918, 112
          %v2914 = vpop.permute.xlu0 %2913
          %2915 = vrot.lane.b32.xlu0 %v919, 112
          %v2916 = vpop.permute.xlu0 %2915
          %2917 = vrot.lane.b32.xlu0 %v920, 112
          %v2918 = vpop.permute.xlu0 %2917
          %2919 = vrot.lane.b32.xlu0 %v921, 112
          %v2920 = vpop.permute.xlu0 %2919
          %2921 = vrot.lane.b32.xlu0 %v938, 48
          %v2922 = vpop.permute.xlu0 %2921
          %2923 = vrot.lane.b32.xlu0 %v939, 48
          %v2924 = vpop.permute.xlu0 %2923
          %2925 = vrot.lane.b32.xlu0 %v940, 48
          %v2926 = vpop.permute.xlu0 %2925
          %2927 = vrot.lane.b32.xlu0 %v941, 48
          %v2928 = vpop.permute.xlu0 %2927
          %2929 = vrot.lane.b32.xlu0 %v942, 48
          %v2930 = vpop.permute.xlu0 %2929
          %2931 = vrot.lane.b32.xlu0 %v943, 48
          %v2932 = vpop.permute.xlu0 %2931
          %2933 = vrot.lane.b32.xlu0 %v944, 48
          %v2934 = vpop.permute.xlu0 %2933
          %2935 = vrot.lane.b32.xlu0 %v945, 48
          %v2936 = vpop.permute.xlu0 %2935
          %v2937 = vsel %vm990, %v2906, 0
          %v2939 = vsel %vm990, %v2908, 0
          %v2941 = vsel %vm990, %v2910, 0
          %v2943 = vsel %vm990, %v2912, 0
          %v2945 = vsel %vm990, %v2914, 0
          %v2947 = vsel %vm990, %v2916, 0
          %v2949 = vsel %vm990, %v2918, 0
          %v2951 = vsel %vm990, %v2920, 0
          %v2953 = vsel %vm990, %v2922, 0
          %v2955 = vsel %vm990, %v2924, 0
          %v2957 = vsel %vm990, %v2926, 0
          %v2959 = vsel %vm990, %v2928, 0
          %v2961 = vsel %vm990, %v2930, 0
          %v2963 = vsel %vm990, %v2932, 0
          %v2965 = vsel %vm990, %v2934, 0
          %v2967 = vsel %vm990, %v2936, 0
          %2969 = vmatprep.subr.mxu0 0.0
          %2970 = vmatpush1.xpose.msra.mxu0 %v2953
          %2971 = vmatprep.subr.mxu0 0.0
          %2972 = vmatpush1.xpose.msra.mxu0 %v2955
          %2973 = vmatprep.subr.mxu0 0.0
          %2974 = vmatpush1.xpose.msra.mxu0 %v2957
          %2975 = vmatprep.subr.mxu0 0.0
          %2976 = vmatpush1.xpose.msra.mxu0 %v2959
          %2977 = vmatprep.subr.mxu0 0.0
          %2978 = vmatpush1.xpose.msra.mxu0 %v2961
          %2979 = vmatprep.subr.mxu0 0.0
          %2980 = vmatpush1.xpose.msra.mxu0 %v2963
          %2981 = vmatprep.subr.mxu0 0.0
          %2982 = vmatpush1.xpose.msra.mxu0 %v2965
          %2983 = vmatprep.subr.mxu0 0.0
          %2984 = vmatpush1.xpose.msra.mxu0 %v2967
          %2985 = vmatprep.subr.mxu0 0.0
          %2986 = vmatpush1.xpose.msra.mxu0 0.0
          %2987 = vmatprep.subr.mxu0 0.0
          %2988 = vmatpush1.xpose.msra.mxu0 0.0
          %2989 = vmatprep.subr.mxu0 0.0
          %2990 = vmatpush1.xpose.msra.mxu0 0.0
          %2991 = vmatprep.subr.mxu0 0.0
          %2992 = vmatpush1.xpose.msra.mxu0 0.0
          %2993 = vmatprep.subr.mxu0 0.0
          %2994 = vmatpush1.xpose.msra.mxu0 0.0
          %2995 = vmatprep.subr.mxu0 0.0
          %2996 = vmatpush1.xpose.msra.mxu0 0.0
          %2997 = vmatprep.subr.mxu0 0.0
          %2998 = vmatpush1.xpose.msra.mxu0 0.0
          %2999 = vmatprep.subr.mxu0 0.0
          %3000 = vmatpush1.xpose.msra.mxu0 0.0
          %3001 = vmatprep.subr.mxu0 0.0
          %3002 = vmatpush1.xpose.msra.mxu0 0.0
          %3003 = vmatprep.subr.mxu0 0.0
          %3004 = vmatpush1.xpose.msra.mxu0 0.0
          %3005 = vmatprep.subr.mxu0 0.0
          %3006 = vmatpush1.xpose.msra.mxu0 0.0
          %3007 = vmatprep.subr.mxu0 0.0
          %3008 = vmatpush1.xpose.msra.mxu0 0.0
          %3009 = vmatprep.subr.mxu0 0.0
          %3010 = vmatpush1.xpose.msra.mxu0 0.0
          %3011 = vmatprep.subr.mxu0 0.0
          %3012 = vmatpush1.xpose.msra.mxu0 0.0
          %3013 = vmatprep.subr.mxu0 0.0
          %3014 = vmatpush1.xpose.msra.mxu0 0.0
          %3015 = vmatprep.subr.mxu0 0.0
          %3016 = vmatpush1.xpose.msra.mxu0 0.0
          %3017 = vmatprep.subr.mxu0 0.0
          %3018 = vmatpush1.xpose.msra.mxu0 0.0
          %3019 = vmatprep.subr.mxu0 0.0
          %3020 = vmatpush1.xpose.msra.mxu0 0.0
          %3021 = vmatprep.subr.mxu0 0.0
          %3022 = vmatpush1.xpose.msra.mxu0 0.0
          %3023 = vmatprep.subr.mxu0 0.0
          %3024 = vmatpush1.xpose.msra.mxu0 0.0
          %3025 = vmatprep.subr.mxu0 0.0
          %3026 = vmatpush1.xpose.msra.mxu0 0.0
          %3027 = vmatprep.subr.mxu0 0.0
          %3028 = vmatpush1.xpose.msra.mxu0 0.0
          %3029 = vmatprep.subr.mxu0 0.0
          %3030 = vmatpush1.xpose.msra.mxu0 0.0
          %3031 = vmatprep.subr.mxu0 0.0
          %3032 = vmatpush1.xpose.msra.mxu0 0.0
          %3033 = vmatprep.mubr.f32.mxu0 0.0
          %3034 = vmatmul.mubr.f32.gmra.mrb[0].mxu0 %v2937
          %v3035 = vpop.f32.mrb[0].mxu0
          %v3036 = vadd.f32 0.0, %v3035
          %v3037 = vpop.f32.mrb[0].mxu0
          %3038 = vmatprep.mubr.f32.mxu0 0.0
          %3039 = vmatmul.mubr.f32.gmra.mrb[0].mxu0 %v2939
          %v3040 = vpop.f32.mrb[0].mxu0
          %v3041 = vadd.f32 0.0, %v3040
          %v3042 = vpop.f32.mrb[0].mxu0
          %3043 = vmatprep.mubr.f32.mxu0 0.0
          %3044 = vmatmul.mubr.f32.gmra.mrb[0].mxu0 %v2941
          %v3045 = vpop.f32.mrb[0].mxu0
          %v3046 = vadd.f32 0.0, %v3045
          %v3047 = vpop.f32.mrb[0].mxu0
          %3048 = vmatprep.mubr.f32.mxu0 0.0
          %3049 = vmatmul.mubr.f32.gmra.mrb[0].mxu0 %v2943
          %v3050 = vpop.f32.mrb[0].mxu0
          %v3051 = vadd.f32 0.0, %v3050
          %v3052 = vpop.f32.mrb[0].mxu0
          %3053 = vmatprep.mubr.f32.mxu0 0.0
          %3054 = vmatmul.mubr.f32.gmra.mrb[0].mxu0 %v2945
          %v3055 = vpop.f32.mrb[0].mxu0
          %v3056 = vadd.f32 0.0, %v3055
          %v3057 = vpop.f32.mrb[0].mxu0
          %3058 = vmatprep.mubr.f32.mxu0 0.0
          %3059 = vmatmul.mubr.f32.gmra.mrb[0].mxu0 %v2947
          %v3060 = vpop.f32.mrb[0].mxu0
          %v3061 = vadd.f32 0.0, %v3060
          %v3062 = vpop.f32.mrb[0].mxu0
          %3063 = vmatprep.mubr.f32.mxu0 0.0
          %3064 = vmatmul.mubr.f32.gmra.mrb[0].mxu0 %v2949
          %v3065 = vpop.f32.mrb[0].mxu0
          %v3066 = vadd.f32 0.0, %v3065
          %v3067 = vpop.f32.mrb[0].mxu0
          %3068 = vmatprep.mubr.f32.mxu0 0.0
          %3069 = vmatmul.mubr.f32.gmra.mrb[0].mxu0 %v2951
          %v3070 = vpop.f32.mrb[0].mxu0
          %v3071 = vadd.f32 0.0, %v3070
          %v3072 = vpop.f32.mrb[0].mxu0
          %3073 = vdwg.mxu0
          %v3074 = vsel %vm401, %v2867, -inf
          %3075 = vmax.xlane.f32.xlu0 %v3074
          %v3076 = vpop.xlane.xlu0 %3075
          %v3077 = vsel %vm401, %v2872, -inf
          %3078 = vmax.xlane.f32.xlu0 %v3077
          %v3079 = vpop.xlane.xlu0 %3078
          %v3080 = vsel %vm401, %v2877, -inf
          %3081 = vmax.xlane.f32.xlu0 %v3080
          %v3082 = vpop.xlane.xlu0 %3081
          %v3083 = vsel %vm401, %v2882, -inf
          %3084 = vmax.xlane.f32.xlu0 %v3083
          %v3085 = vpop.xlane.xlu0 %3084
          %v3086 = vsel %vm401, %v2887, -inf
          %3087 = vmax.xlane.f32.xlu0 %v3086
          %v3088 = vpop.xlane.xlu0 %3087
          %v3089 = vsel %vm401, %v2892, -inf
          %3090 = vmax.xlane.f32.xlu0 %v3089
          %v3091 = vpop.xlane.xlu0 %3090
          %v3092 = vsel %vm401, %v2897, -inf
          %3093 = vmax.xlane.f32.xlu0 %v3092
          %v3094 = vpop.xlane.xlu0 %3093
          %v3095 = vsel %vm401, %v2902, -inf
          %3096 = vmax.xlane.f32.xlu0 %v3095
          %v3097 = vpop.xlane.xlu0 %3096
          %v3098 = vsel %vm401, %v3036, -inf
          %3099 = vmax.xlane.f32.xlu0 %v3098
          %v3100 = vpop.xlane.xlu0 %3099
          %v3101 = vsel %vm401, %v3041, -inf
          %3102 = vmax.xlane.f32.xlu0 %v3101
          %v3103 = vpop.xlane.xlu0 %3102
          %v3104 = vsel %vm401, %v3046, -inf
          %3105 = vmax.xlane.f32.xlu0 %v3104
          %v3106 = vpop.xlane.xlu0 %3105
          %v3107 = vsel %vm401, %v3051, -inf
          %3108 = vmax.xlane.f32.xlu0 %v3107
          %v3109 = vpop.xlane.xlu0 %3108
          %v3110 = vsel %vm401, %v3056, -inf
          %3111 = vmax.xlane.f32.xlu0 %v3110
          %v3112 = vpop.xlane.xlu0 %3111
          %v3113 = vsel %vm401, %v3061, -inf
          %3114 = vmax.xlane.f32.xlu0 %v3113
          %v3115 = vpop.xlane.xlu0 %3114
          %v3116 = vsel %vm401, %v3066, -inf
          %3117 = vmax.xlane.f32.xlu0 %v3116
          %v3118 = vpop.xlane.xlu0 %3117
          %v3119 = vsel %vm401, %v3071, -inf
          %3120 = vmax.xlane.f32.xlu0 %v3119
          %v3121 = vpop.xlane.xlu0 %3120
          %v3122 = vsub.f32 %v2867, %v3076
          %v3123 = vsub.f32 %v2872, %v3079
          %v3124 = vsub.f32 %v2877, %v3082
          %v3125 = vsub.f32 %v2882, %v3085
          %v3126 = vsub.f32 %v2887, %v3088
          %v3127 = vsub.f32 %v2892, %v3091
          %v3128 = vsub.f32 %v2897, %v3094
          %v3129 = vsub.f32 %v2902, %v3097
          %v3130 = vsub.f32 %v3036, %v3100
          %v3131 = vsub.f32 %v3041, %v3103
          %v3132 = vsub.f32 %v3046, %v3106
          %v3133 = vsub.f32 %v3051, %v3109
          %v3134 = vsub.f32 %v3056, %v3112
          %v3135 = vsub.f32 %v3061, %v3115
          %v3136 = vsub.f32 %v3066, %v3118
          %v3137 = vsub.f32 %v3071, %v3121
          %v3138 = vmul.f32 %v3122, 1.442695
          %v3139 = vpow.pop %v3138
          %v3140 = vmul.f32 %v3123, 1.442695
          %v3141 = vpow.pop %v3140
          %v3142 = vmul.f32 %v3124, 1.442695
          %v3143 = vpow.pop %v3142
          %v3144 = vmul.f32 %v3125, 1.442695
          %v3145 = vpow.pop %v3144
          %v3146 = vmul.f32 %v3126, 1.442695
          %v3147 = vpow.pop %v3146
          %v3148 = vmul.f32 %v3127, 1.442695
          %v3149 = vpow.pop %v3148
          %v3150 = vmul.f32 %v3128, 1.442695
          %v3151 = vpow.pop %v3150
          %v3152 = vmul.f32 %v3129, 1.442695
          %v3153 = vpow.pop %v3152
          %v3154 = vmul.f32 %v3130, 1.442695
          %v3155 = vpow.pop %v3154
          %v3156 = vmul.f32 %v3131, 1.442695
          %v3157 = vpow.pop %v3156
          %v3158 = vmul.f32 %v3132, 1.442695
          %v3159 = vpow.pop %v3158
          %v3160 = vmul.f32 %v3133, 1.442695
          %v3161 = vpow.pop %v3160
          %v3162 = vmul.f32 %v3134, 1.442695
          %v3163 = vpow.pop %v3162
          %v3164 = vmul.f32 %v3135, 1.442695
          %v3165 = vpow.pop %v3164
          %v3166 = vmul.f32 %v3136, 1.442695
          %v3167 = vpow.pop %v3166
          %v3168 = vmul.f32 %v3137, 1.442695
          %v3169 = vpow.pop %v3168
          %v3170 = vmul.f32 %v3139, %v425
          %v3171 = vmul.f32 %v3141, %v425
          %v3172 = vmul.f32 %v3143, %v425
          %v3173 = vmul.f32 %v3145, %v425
          %v3174 = vmul.f32 %v3147, %v425
          %v3175 = vmul.f32 %v3149, %v425
          %v3176 = vmul.f32 %v3151, %v425
          %v3177 = vmul.f32 %v3153, %v425
          %v3178 = vmul.f32 %v3155, %v429
          %v3179 = vmul.f32 %v3157, %v429
          %v3180 = vmul.f32 %v3159, %v429
          %v3181 = vmul.f32 %v3161, %v429
          %v3182 = vmul.f32 %v3163, %v429
          %v3183 = vmul.f32 %v3165, %v429
          %v3184 = vmul.f32 %v3167, %v429
          %v3185 = vmul.f32 %v3169, %v429
          %v3186 = vsel %vm401, %v3170, 0.0
          %3187 = vadd.xlane.f32.xlu0 %v3186
          %v3188 = vpop.xlane.xlu0 %3187
          %v3189 = vsel %vm401, %v3171, 0.0
          %3190 = vadd.xlane.f32.xlu0 %v3189
          %v3191 = vpop.xlane.xlu0 %3190
          %v3192 = vsel %vm401, %v3172, 0.0
          %3193 = vadd.xlane.f32.xlu0 %v3192
          %v3194 = vpop.xlane.xlu0 %3193
          %v3195 = vsel %vm401, %v3173, 0.0
          %3196 = vadd.xlane.f32.xlu0 %v3195
          %v3197 = vpop.xlane.xlu0 %3196
          %v3198 = vsel %vm401, %v3174, 0.0
          %3199 = vadd.xlane.f32.xlu0 %v3198
          %v3200 = vpop.xlane.xlu0 %3199
          %v3201 = vsel %vm401, %v3175, 0.0
          %3202 = vadd.xlane.f32.xlu0 %v3201
          %v3203 = vpop.xlane.xlu0 %3202
          %v3204 = vsel %vm401, %v3176, 0.0
          %3205 = vadd.xlane.f32.xlu0 %v3204
          %v3206 = vpop.xlane.xlu0 %3205
          %v3207 = vsel %vm401, %v3177, 0.0
          %3208 = vadd.xlane.f32.xlu0 %v3207
          %v3209 = vpop.xlane.xlu0 %3208
          %v3210 = vsel %vm401, %v3178, 0.0
          %3211 = vadd.xlane.f32.xlu0 %v3210
          %v3212 = vpop.xlane.xlu0 %3211
          %v3213 = vsel %vm401, %v3179, 0.0
          %3214 = vadd.xlane.f32.xlu0 %v3213
          %v3215 = vpop.xlane.xlu0 %3214
          %v3216 = vsel %vm401, %v3180, 0.0
          %3217 = vadd.xlane.f32.xlu0 %v3216
          %v3218 = vpop.xlane.xlu0 %3217
          %v3219 = vsel %vm401, %v3181, 0.0
          %3220 = vadd.xlane.f32.xlu0 %v3219
          %v3221 = vpop.xlane.xlu0 %3220
          %v3222 = vsel %vm401, %v3182, 0.0
          %3223 = vadd.xlane.f32.xlu0 %v3222
          %v3224 = vpop.xlane.xlu0 %3223
          %v3225 = vsel %vm401, %v3183, 0.0
          %3226 = vadd.xlane.f32.xlu0 %v3225
          %v3227 = vpop.xlane.xlu0 %3226
          %v3228 = vsel %vm401, %v3184, 0.0
          %3229 = vadd.xlane.f32.xlu0 %v3228
          %v3230 = vpop.xlane.xlu0 %3229
          %v3231 = vsel %vm401, %v3185, 0.0
          %3232 = vadd.xlane.f32.xlu0 %v3231
          %v3233 = vpop.xlane.xlu0 %3232
          %v3234 = vmax.f32 %v3188, 1e-30
          %v3235 = vmax.f32 %v3191, 1e-30
          %v3236 = vmax.f32 %v3194, 1e-30
          %v3237 = vmax.f32 %v3197, 1e-30
          %v3238 = vmax.f32 %v3200, 1e-30
          %v3239 = vmax.f32 %v3203, 1e-30
          %v3240 = vmax.f32 %v3206, 1e-30
          %v3241 = vmax.f32 %v3209, 1e-30
          %v3242 = vmax.f32 %v3212, 1e-30
          %v3243 = vmax.f32 %v3215, 1e-30
          %v3244 = vmax.f32 %v3218, 1e-30
          %v3245 = vmax.f32 %v3221, 1e-30
          %v3246 = vmax.f32 %v3224, 1e-30
          %v3247 = vmax.f32 %v3227, 1e-30
          %v3248 = vmax.f32 %v3230, 1e-30
          %v3249 = vmax.f32 %v3233, 1e-30
          %v3250 = vrcp.pop %v3234
          %v3251 = vrcp.pop %v3235
          %v3252 = vrcp.pop %v3236
          %v3253 = vrcp.pop %v3237
          %v3254 = vrcp.pop %v3238
          %v3255 = vrcp.pop %v3239
          %v3256 = vrcp.pop %v3240
          %v3257 = vrcp.pop %v3241
          %v3258 = vrcp.pop %v3242
          %v3259 = vrcp.pop %v3243
          %v3260 = vrcp.pop %v3244
          %v3261 = vrcp.pop %v3245
          %v3262 = vrcp.pop %v3246
          %v3263 = vrcp.pop %v3247
          %v3264 = vrcp.pop %v3248
          %v3265 = vrcp.pop %v3249
          %v3266 = vmul.f32 %v3170, %v3250
          %v3267 = vmul.f32 %v3171, %v3251
          %v3268 = vmul.f32 %v3172, %v3252
          %v3269 = vmul.f32 %v3173, %v3253
          %v3270 = vmul.f32 %v3174, %v3254
          %v3271 = vmul.f32 %v3175, %v3255
          %v3272 = vmul.f32 %v3176, %v3256
          %v3273 = vmul.f32 %v3177, %v3257
          %v3274 = vmul.f32 %v3178, %v3258
          %v3275 = vmul.f32 %v3179, %v3259
          %v3276 = vmul.f32 %v3180, %v3260
          %v3277 = vmul.f32 %v3181, %v3261
          %v3278 = vmul.f32 %v3182, %v3262
          %v3279 = vmul.f32 %v3183, %v3263
          %v3280 = vmul.f32 %v3184, %v3264
          %v3281 = vmul.f32 %v3185, %v3265
          %3282 = vrot.lane.b32.xlu0 %v950, 112
          %v3283 = vpop.permute.xlu0 %3282
          %3284 = vrot.lane.b32.xlu0 %v951, 112
          %v3285 = vpop.permute.xlu0 %3284
          %3286 = vrot.lane.b32.xlu0 %v952, 112
          %v3287 = vpop.permute.xlu0 %3286
          %3288 = vrot.lane.b32.xlu0 %v953, 112
          %v3289 = vpop.permute.xlu0 %3288
          %3290 = vrot.lane.b32.xlu0 %v954, 112
          %v3291 = vpop.permute.xlu0 %3290
          %3292 = vrot.lane.b32.xlu0 %v955, 112
          %v3293 = vpop.permute.xlu0 %3292
          %3294 = vrot.lane.b32.xlu0 %v956, 112
          %v3295 = vpop.permute.xlu0 %3294
          %3296 = vrot.lane.b32.xlu0 %v957, 112
          %v3297 = vpop.permute.xlu0 %3296
          %v3307 = vsel %vm401, %v3266, 0
          %v3310 = vsel %vm401, %v3267, 0
          %v3313 = vsel %vm401, %v3268, 0
          %v3316 = vsel %vm401, %v3269, 0
          %v3319 = vsel %vm401, %v3270, 0
          %v3322 = vsel %vm401, %v3271, 0
          %v3325 = vsel %vm401, %v3272, 0
          %v3328 = vsel %vm401, %v3273, 0
          %3330 = vmatprep.subr.mxu0 0.0
          %3331 = vmatpush1.msra.mxu0 %v3283
          %3332 = vmatprep.subr.mxu0 0.0
          %3333 = vmatpush1.msra.mxu0 %v3285
          %3334 = vmatprep.subr.mxu0 0.0
          %3335 = vmatpush1.msra.mxu0 %v3287
          %3336 = vmatprep.subr.mxu0 0.0
          %3337 = vmatpush1.msra.mxu0 %v3289
          %3338 = vmatprep.subr.mxu0 0.0
          %3339 = vmatpush1.msra.mxu0 %v3291
          %3340 = vmatprep.subr.mxu0 0.0
          %3341 = vmatpush1.msra.mxu0 %v3293
          %3342 = vmatprep.subr.mxu0 0.0
          %3343 = vmatpush1.msra.mxu0 %v3295
          %3344 = vmatprep.subr.mxu0 0.0
          %3345 = vmatpush1.msra.mxu0 %v3297
          %3346 = vmatprep.subr.mxu0 0.0
          %3347 = vmatpush1.msra.mxu0 0.0
          %3348 = vmatprep.subr.mxu0 0.0
          %3349 = vmatpush1.msra.mxu0 0.0
          %3350 = vmatprep.subr.mxu0 0.0
          %3351 = vmatpush1.msra.mxu0 0.0
          %3352 = vmatprep.subr.mxu0 0.0
          %3353 = vmatpush1.msra.mxu0 0.0
          %3354 = vmatprep.subr.mxu0 0.0
          %3355 = vmatpush1.msra.mxu0 0.0
          %3356 = vmatprep.subr.mxu0 0.0
          %3357 = vmatpush1.msra.mxu0 0.0
          %3358 = vmatprep.subr.mxu0 0.0
          %3359 = vmatpush1.msra.mxu0 0.0
          %3360 = vmatprep.subr.mxu0 0.0
          %3361 = vmatpush1.msra.mxu0 0.0
          %3362 = vmatprep.subr.mxu0 0.0
          %3363 = vmatpush1.msra.mxu0 0.0
          %3364 = vmatprep.subr.mxu0 0.0
          %3365 = vmatpush1.msra.mxu0 0.0
          %3366 = vmatprep.subr.mxu0 0.0
          %3367 = vmatpush1.msra.mxu0 0.0
          %3368 = vmatprep.subr.mxu0 0.0
          %3369 = vmatpush1.msra.mxu0 0.0
          %3370 = vmatprep.subr.mxu0 0.0
          %3371 = vmatpush1.msra.mxu0 0.0
          %3372 = vmatprep.subr.mxu0 0.0
          %3373 = vmatpush1.msra.mxu0 0.0
          %3374 = vmatprep.subr.mxu0 0.0
          %3375 = vmatpush1.msra.mxu0 0.0
          %3376 = vmatprep.subr.mxu0 0.0
          %3377 = vmatpush1.msra.mxu0 0.0
          %3378 = vmatprep.subr.mxu0 0.0
          %3379 = vmatpush1.msra.mxu0 0.0
          %3380 = vmatprep.subr.mxu0 0.0
          %3381 = vmatpush1.msra.mxu0 0.0
          %3382 = vmatprep.subr.mxu0 0.0
          %3383 = vmatpush1.msra.mxu0 0.0
          %3384 = vmatprep.subr.mxu0 0.0
          %3385 = vmatpush1.msra.mxu0 0.0
          %3386 = vmatprep.subr.mxu0 0.0
          %3387 = vmatpush1.msra.mxu0 0.0
          %3388 = vmatprep.subr.mxu0 0.0
          %3389 = vmatpush1.msra.mxu0 0.0
          %3390 = vmatprep.subr.mxu0 0.0
          %3391 = vmatpush1.msra.mxu0 0.0
          %3392 = vmatprep.subr.mxu0 0.0
          %3393 = vmatpush1.msra.mxu0 0.0
          %3394 = vmatprep.mubr.f32.mxu0 0.0
          %3395 = vmatmul.mubr.f32.gmra.mrb[0].mxu0 %v3307
          %v3396 = vpop.f32.mrb[0].mxu0
          %v3397 = vadd.f32 0.0, %v3396
          %v3398 = vpop.f32.mrb[0].mxu0
          %3399 = vmatprep.mubr.f32.mxu0 0.0
          %3400 = vmatmul.mubr.f32.gmra.mrb[0].mxu0 %v3310
          %v3401 = vpop.f32.mrb[0].mxu0
          %v3402 = vadd.f32 0.0, %v3401
          %v3403 = vpop.f32.mrb[0].mxu0
          %3404 = vmatprep.mubr.f32.mxu0 0.0
          %3405 = vmatmul.mubr.f32.gmra.mrb[0].mxu0 %v3313
          %v3406 = vpop.f32.mrb[0].mxu0
          %v3407 = vadd.f32 0.0, %v3406
          %v3408 = vpop.f32.mrb[0].mxu0
          %3409 = vmatprep.mubr.f32.mxu0 0.0
          %3410 = vmatmul.mubr.f32.gmra.mrb[0].mxu0 %v3316
          %v3411 = vpop.f32.mrb[0].mxu0
          %v3412 = vadd.f32 0.0, %v3411
          %v3413 = vpop.f32.mrb[0].mxu0
          %3414 = vmatprep.mubr.f32.mxu0 0.0
          %3415 = vmatmul.mubr.f32.gmra.mrb[0].mxu0 %v3319
          %v3416 = vpop.f32.mrb[0].mxu0
          %v3417 = vadd.f32 0.0, %v3416
          %v3418 = vpop.f32.mrb[0].mxu0
          %3419 = vmatprep.mubr.f32.mxu0 0.0
          %3420 = vmatmul.mubr.f32.gmra.mrb[0].mxu0 %v3322
          %v3421 = vpop.f32.mrb[0].mxu0
          %v3422 = vadd.f32 0.0, %v3421
          %v3423 = vpop.f32.mrb[0].mxu0
          %3424 = vmatprep.mubr.f32.mxu0 0.0
          %3425 = vmatmul.mubr.f32.gmra.mrb[0].mxu0 %v3325
          %v3426 = vpop.f32.mrb[0].mxu0
          %v3427 = vadd.f32 0.0, %v3426
          %v3428 = vpop.f32.mrb[0].mxu0
          %3429 = vmatprep.mubr.f32.mxu0 0.0
          %3430 = vmatmul.mubr.f32.gmra.mrb[0].mxu0 %v3328
          %v3431 = vpop.f32.mrb[0].mxu0
          %v3432 = vadd.f32 0.0, %v3431
          %v3433 = vpop.f32.mrb[0].mxu0
          %3434 = vdwg.mxu0
          %3435 = vrot.lane.b32.xlu0 %v958, 112
          %v3436 = vpop.permute.xlu0 %3435
          %3437 = vrot.lane.b32.xlu0 %v959, 112
          %v3438 = vpop.permute.xlu0 %3437
          %3439 = vrot.lane.b32.xlu0 %v960, 112
          %v3440 = vpop.permute.xlu0 %3439
          %3441 = vrot.lane.b32.xlu0 %v961, 112
          %v3442 = vpop.permute.xlu0 %3441
          %3443 = vrot.lane.b32.xlu0 %v962, 112
          %v3444 = vpop.permute.xlu0 %3443
          %3445 = vrot.lane.b32.xlu0 %v963, 112
          %v3446 = vpop.permute.xlu0 %3445
          %3447 = vrot.lane.b32.xlu0 %v964, 112
          %v3448 = vpop.permute.xlu0 %3447
          %3449 = vrot.lane.b32.xlu0 %v965, 112
          %v3450 = vpop.permute.xlu0 %3449
          %v3460 = vsel %vm401, %v3274, 0
          %v3463 = vsel %vm401, %v3275, 0
          %v3466 = vsel %vm401, %v3276, 0
          %v3469 = vsel %vm401, %v3277, 0
          %v3472 = vsel %vm401, %v3278, 0
          %v3475 = vsel %vm401, %v3279, 0
          %v3478 = vsel %vm401, %v3280, 0
          %v3481 = vsel %vm401, %v3281, 0
          %3483 = vmatprep.subr.mxu0 0.0
          %3484 = vmatpush1.msra.mxu0 %v3436
          %3485 = vmatprep.subr.mxu0 0.0
          %3486 = vmatpush1.msra.mxu0 %v3438
          %3487 = vmatprep.subr.mxu0 0.0
          %3488 = vmatpush1.msra.mxu0 %v3440
          %3489 = vmatprep.subr.mxu0 0.0
          %3490 = vmatpush1.msra.mxu0 %v3442
          %3491 = vmatprep.subr.mxu0 0.0
          %3492 = vmatpush1.msra.mxu0 %v3444
          %3493 = vmatprep.subr.mxu0 0.0
          %3494 = vmatpush1.msra.mxu0 %v3446
          %3495 = vmatprep.subr.mxu0 0.0
          %3496 = vmatpush1.msra.mxu0 %v3448
          %3497 = vmatprep.subr.mxu0 0.0
          %3498 = vmatpush1.msra.mxu0 %v3450
          %3499 = vmatprep.subr.mxu0 0.0
          %3500 = vmatpush1.msra.mxu0 0.0
          %3501 = vmatprep.subr.mxu0 0.0
          %3502 = vmatpush1.msra.mxu0 0.0
          %3503 = vmatprep.subr.mxu0 0.0
          %3504 = vmatpush1.msra.mxu0 0.0
          %3505 = vmatprep.subr.mxu0 0.0
          %3506 = vmatpush1.msra.mxu0 0.0
          %3507 = vmatprep.subr.mxu0 0.0
          %3508 = vmatpush1.msra.mxu0 0.0
          %3509 = vmatprep.subr.mxu0 0.0
          %3510 = vmatpush1.msra.mxu0 0.0
          %3511 = vmatprep.subr.mxu0 0.0
          %3512 = vmatpush1.msra.mxu0 0.0
          %3513 = vmatprep.subr.mxu0 0.0
          %3514 = vmatpush1.msra.mxu0 0.0
          %3515 = vmatprep.subr.mxu0 0.0
          %3516 = vmatpush1.msra.mxu0 0.0
          %3517 = vmatprep.subr.mxu0 0.0
          %3518 = vmatpush1.msra.mxu0 0.0
          %3519 = vmatprep.subr.mxu0 0.0
          %3520 = vmatpush1.msra.mxu0 0.0
          %3521 = vmatprep.subr.mxu0 0.0
          %3522 = vmatpush1.msra.mxu0 0.0
          %3523 = vmatprep.subr.mxu0 0.0
          %3524 = vmatpush1.msra.mxu0 0.0
          %3525 = vmatprep.subr.mxu0 0.0
          %3526 = vmatpush1.msra.mxu0 0.0
          %3527 = vmatprep.subr.mxu0 0.0
          %3528 = vmatpush1.msra.mxu0 0.0
          %3529 = vmatprep.subr.mxu0 0.0
          %3530 = vmatpush1.msra.mxu0 0.0
          %3531 = vmatprep.subr.mxu0 0.0
          %3532 = vmatpush1.msra.mxu0 0.0
          %3533 = vmatprep.subr.mxu0 0.0
          %3534 = vmatpush1.msra.mxu0 0.0
          %3535 = vmatprep.subr.mxu0 0.0
          %3536 = vmatpush1.msra.mxu0 0.0
          %3537 = vmatprep.subr.mxu0 0.0
          %3538 = vmatpush1.msra.mxu0 0.0
          %3539 = vmatprep.subr.mxu0 0.0
          %3540 = vmatpush1.msra.mxu0 0.0
          %3541 = vmatprep.subr.mxu0 0.0
          %3542 = vmatpush1.msra.mxu0 0.0
          %3543 = vmatprep.subr.mxu0 0.0
          %3544 = vmatpush1.msra.mxu0 0.0
          %3545 = vmatprep.subr.mxu0 0.0
          %3546 = vmatpush1.msra.mxu0 0.0
          %3547 = vmatprep.mubr.f32.mxu0 0.0
          %3548 = vmatmul.mubr.f32.gmra.mrb[0].mxu0 %v3460
          %v3549 = vpop.f32.mrb[0].mxu0
          %v3550 = vadd.f32 0.0, %v3549
          %v3551 = vpop.f32.mrb[0].mxu0
          %3552 = vmatprep.mubr.f32.mxu0 0.0
          %3553 = vmatmul.mubr.f32.gmra.mrb[0].mxu0 %v3463
          %v3554 = vpop.f32.mrb[0].mxu0
          %v3555 = vadd.f32 0.0, %v3554
          %v3556 = vpop.f32.mrb[0].mxu0
          %3557 = vmatprep.mubr.f32.mxu0 0.0
          %3558 = vmatmul.mubr.f32.gmra.mrb[0].mxu0 %v3466
          %v3559 = vpop.f32.mrb[0].mxu0
          %v3560 = vadd.f32 0.0, %v3559
          %v3561 = vpop.f32.mrb[0].mxu0
          %3562 = vmatprep.mubr.f32.mxu0 0.0
          %3563 = vmatmul.mubr.f32.gmra.mrb[0].mxu0 %v3469
          %v3564 = vpop.f32.mrb[0].mxu0
          %v3565 = vadd.f32 0.0, %v3564
          %v3566 = vpop.f32.mrb[0].mxu0
          %3567 = vmatprep.mubr.f32.mxu0 0.0
          %3568 = vmatmul.mubr.f32.gmra.mrb[0].mxu0 %v3472
          %v3569 = vpop.f32.mrb[0].mxu0
          %v3570 = vadd.f32 0.0, %v3569
          %v3571 = vpop.f32.mrb[0].mxu0
          %3572 = vmatprep.mubr.f32.mxu0 0.0
          %3573 = vmatmul.mubr.f32.gmra.mrb[0].mxu0 %v3475
          %v3574 = vpop.f32.mrb[0].mxu0
          %v3575 = vadd.f32 0.0, %v3574
          %v3576 = vpop.f32.mrb[0].mxu0
          %3577 = vmatprep.mubr.f32.mxu0 0.0
          %3578 = vmatmul.mubr.f32.gmra.mrb[0].mxu0 %v3478
          %v3579 = vpop.f32.mrb[0].mxu0
          %v3580 = vadd.f32 0.0, %v3579
          %v3581 = vpop.f32.mrb[0].mxu0
          %3582 = vmatprep.mubr.f32.mxu0 0.0
          %3583 = vmatmul.mubr.f32.gmra.mrb[0].mxu0 %v3481
          %v3584 = vpop.f32.mrb[0].mxu0
          %v3585 = vadd.f32 0.0, %v3584
          %v3586 = vpop.f32.mrb[0].mxu0
          %3587 = vdwg.mxu0
          %3604 = vrot.lane.b32.xlu0 %v3397, 16
          %v3605 = vpop.permute.xlu0 %3604
          %3606 = vrot.lane.b32.xlu0 %v3402, 16
          %v3607 = vpop.permute.xlu0 %3606
          %3608 = vrot.lane.b32.xlu0 %v3407, 16
          %v3609 = vpop.permute.xlu0 %3608
          %3610 = vrot.lane.b32.xlu0 %v3412, 16
          %v3611 = vpop.permute.xlu0 %3610
          %3612 = vrot.lane.b32.xlu0 %v3417, 16
          %v3613 = vpop.permute.xlu0 %3612
          %3614 = vrot.lane.b32.xlu0 %v3422, 16
          %v3615 = vpop.permute.xlu0 %3614
          %3616 = vrot.lane.b32.xlu0 %v3427, 16
          %v3617 = vpop.permute.xlu0 %3616
          %3618 = vrot.lane.b32.xlu0 %v3432, 16
          %v3619 = vpop.permute.xlu0 %3618
          %3620 = vrot.lane.b32.xlu0 %v3550, 16
          %v3621 = vpop.permute.xlu0 %3620
          %3622 = vrot.lane.b32.xlu0 %v3555, 16
          %v3623 = vpop.permute.xlu0 %3622
          %3624 = vrot.lane.b32.xlu0 %v3560, 16
          %v3625 = vpop.permute.xlu0 %3624
          %3626 = vrot.lane.b32.xlu0 %v3565, 16
          %v3627 = vpop.permute.xlu0 %3626
          %3628 = vrot.lane.b32.xlu0 %v3570, 16
          %v3629 = vpop.permute.xlu0 %3628
          %3630 = vrot.lane.b32.xlu0 %v3575, 16
          %v3631 = vpop.permute.xlu0 %3630
          %3632 = vrot.lane.b32.xlu0 %v3580, 16
          %v3633 = vpop.permute.xlu0 %3632
          %3634 = vrot.lane.b32.xlu0 %v3585, 16
          %v3635 = vpop.permute.xlu0 %3634
          %vm3652 = vcmask 195712
          %3653 = vst.msk [vmem:[#allocation3] sm:$0xff] %vm3652, %v3605
          %3654 = vst.msk [vmem:[#allocation3 + $0x8] sm:$0xff] %vm3652, %v3607
          %3655 = vst.msk [vmem:[#allocation3 + $0x10] sm:$0xff] %vm3652, %v3609
          %3656 = vst.msk [vmem:[#allocation3 + $0x18] sm:$0xff] %vm3652, %v3611
          %3657 = vst.msk [vmem:[#allocation3 + $0x20] sm:$0xff] %vm3652, %v3613
          %3658 = vst.msk [vmem:[#allocation3 + $0x28] sm:$0xff] %vm3652, %v3615
          %3659 = vst.msk [vmem:[#allocation3 + $0x30] sm:$0xff] %vm3652, %v3617
          %3660 = vst.msk [vmem:[#allocation3 + $0x38] sm:$0xff] %vm3652, %v3619
          %3661 = vst.msk [vmem:[#allocation3 + $0x40] sm:$0xff] %vm3652, %v3621
          %3662 = vst.msk [vmem:[#allocation3 + $0x48] sm:$0xff] %vm3652, %v3623
          %3663 = vst.msk [vmem:[#allocation3 + $0x50] sm:$0xff] %vm3652, %v3625
          %3664 = vst.msk [vmem:[#allocation3 + $0x58] sm:$0xff] %vm3652, %v3627
          %3665 = vst.msk [vmem:[#allocation3 + $0x60] sm:$0xff] %vm3652, %v3629
          %3666 = vst.msk [vmem:[#allocation3 + $0x68] sm:$0xff] %vm3652, %v3631
          %3667 = vst.msk [vmem:[#allocation3 + $0x70] sm:$0xff] %vm3652, %v3633
          %3668 = vst.msk [vmem:[#allocation3 + $0x78] sm:$0xff] %vm3652, %v3635
          %3669 = vrot.lane.b32.xlu0 %v906, 104
          %v3670 = vpop.permute.xlu0 %3669
          %3671 = vrot.lane.b32.xlu0 %v907, 104
          %v3672 = vpop.permute.xlu0 %3671
          %3673 = vrot.lane.b32.xlu0 %v908, 104
          %v3674 = vpop.permute.xlu0 %3673
          %3675 = vrot.lane.b32.xlu0 %v909, 104
          %v3676 = vpop.permute.xlu0 %3675
          %3677 = vrot.lane.b32.xlu0 %v910, 104
          %v3678 = vpop.permute.xlu0 %3677
          %3679 = vrot.lane.b32.xlu0 %v911, 104
          %v3680 = vpop.permute.xlu0 %3679
          %3681 = vrot.lane.b32.xlu0 %v912, 104
          %v3682 = vpop.permute.xlu0 %3681
          %3683 = vrot.lane.b32.xlu0 %v913, 104
          %v3684 = vpop.permute.xlu0 %3683
          %3685 = vrot.lane.b32.xlu0 %v930, 40
          %v3686 = vpop.permute.xlu0 %3685
          %3687 = vrot.lane.b32.xlu0 %v931, 40
          %v3688 = vpop.permute.xlu0 %3687
          %3689 = vrot.lane.b32.xlu0 %v932, 40
          %v3690 = vpop.permute.xlu0 %3689
          %3691 = vrot.lane.b32.xlu0 %v933, 40
          %v3692 = vpop.permute.xlu0 %3691
          %3693 = vrot.lane.b32.xlu0 %v934, 40
          %v3694 = vpop.permute.xlu0 %3693
          %3695 = vrot.lane.b32.xlu0 %v935, 40
          %v3696 = vpop.permute.xlu0 %3695
          %3697 = vrot.lane.b32.xlu0 %v936, 40
          %v3698 = vpop.permute.xlu0 %3697
          %3699 = vrot.lane.b32.xlu0 %v937, 40
          %v3700 = vpop.permute.xlu0 %3699
          %v3701 = vsel %vm990, %v3670, 0
          %v3703 = vsel %vm990, %v3672, 0
          %v3705 = vsel %vm990, %v3674, 0
          %v3707 = vsel %vm990, %v3676, 0
          %v3709 = vsel %vm990, %v3678, 0
          %v3711 = vsel %vm990, %v3680, 0
          %v3713 = vsel %vm990, %v3682, 0
          %v3715 = vsel %vm990, %v3684, 0
          %v3717 = vsel %vm990, %v3686, 0
          %v3719 = vsel %vm990, %v3688, 0
          %v3721 = vsel %vm990, %v3690, 0
          %v3723 = vsel %vm990, %v3692, 0
          %v3725 = vsel %vm990, %v3694, 0
          %v3727 = vsel %vm990, %v3696, 0
          %v3729 = vsel %vm990, %v3698, 0
          %v3731 = vsel %vm990, %v3700, 0
          %3733 = vmatprep.subr.mxu0 0.0
          %3734 = vmatpush1.xpose.msra.mxu0 %v3717
          %3735 = vmatprep.subr.mxu0 0.0
          %3736 = vmatpush1.xpose.msra.mxu0 %v3719
          %3737 = vmatprep.subr.mxu0 0.0
          %3738 = vmatpush1.xpose.msra.mxu0 %v3721
          %3739 = vmatprep.subr.mxu0 0.0
          %3740 = vmatpush1.xpose.msra.mxu0 %v3723
          %3741 = vmatprep.subr.mxu0 0.0
          %3742 = vmatpush1.xpose.msra.mxu0 %v3725
          %3743 = vmatprep.subr.mxu0 0.0
          %3744 = vmatpush1.xpose.msra.mxu0 %v3727
          %3745 = vmatprep.subr.mxu0 0.0
          %3746 = vmatpush1.xpose.msra.mxu0 %v3729
          %3747 = vmatprep.subr.mxu0 0.0
          %3748 = vmatpush1.xpose.msra.mxu0 %v3731
          %3749 = vmatprep.subr.mxu0 0.0
          %3750 = vmatpush1.xpose.msra.mxu0 0.0
          %3751 = vmatprep.subr.mxu0 0.0
          %3752 = vmatpush1.xpose.msra.mxu0 0.0
          %3753 = vmatprep.subr.mxu0 0.0
          %3754 = vmatpush1.xpose.msra.mxu0 0.0
          %3755 = vmatprep.subr.mxu0 0.0
          %3756 = vmatpush1.xpose.msra.mxu0 0.0
          %3757 = vmatprep.subr.mxu0 0.0
          %3758 = vmatpush1.xpose.msra.mxu0 0.0
          %3759 = vmatprep.subr.mxu0 0.0
          %3760 = vmatpush1.xpose.msra.mxu0 0.0
          %3761 = vmatprep.subr.mxu0 0.0
          %3762 = vmatpush1.xpose.msra.mxu0 0.0
          %3763 = vmatprep.subr.mxu0 0.0
          %3764 = vmatpush1.xpose.msra.mxu0 0.0
          %3765 = vmatprep.subr.mxu0 0.0
          %3766 = vmatpush1.xpose.msra.mxu0 0.0
          %3767 = vmatprep.subr.mxu0 0.0
          %3768 = vmatpush1.xpose.msra.mxu0 0.0
          %3769 = vmatprep.subr.mxu0 0.0
          %3770 = vmatpush1.xpose.msra.mxu0 0.0
          %3771 = vmatprep.subr.mxu0 0.0
          %3772 = vmatpush1.xpose.msra.mxu0 0.0
          %3773 = vmatprep.subr.mxu0 0.0
          %3774 = vmatpush1.xpose.msra.mxu0 0.0
          %3775 = vmatprep.subr.mxu0 0.0
          %3776 = vmatpush1.xpose.msra.mxu0 0.0
          %3777 = vmatprep.subr.mxu0 0.0
          %3778 = vmatpush1.xpose.msra.mxu0 0.0
          %3779 = vmatprep.subr.mxu0 0.0
          %3780 = vmatpush1.xpose.msra.mxu0 0.0
          %3781 = vmatprep.subr.mxu0 0.0
          %3782 = vmatpush1.xpose.msra.mxu0 0.0
          %3783 = vmatprep.subr.mxu0 0.0
          %3784 = vmatpush1.xpose.msra.mxu0 0.0
          %3785 = vmatprep.subr.mxu0 0.0
          %3786 = vmatpush1.xpose.msra.mxu0 0.0
          %3787 = vmatprep.subr.mxu0 0.0
          %3788 = vmatpush1.xpose.msra.mxu0 0.0
          %3789 = vmatprep.subr.mxu0 0.0
          %3790 = vmatpush1.xpose.msra.mxu0 0.0
          %3791 = vmatprep.subr.mxu0 0.0
          %3792 = vmatpush1.xpose.msra.mxu0 0.0
          %3793 = vmatprep.subr.mxu0 0.0
          %3794 = vmatpush1.xpose.msra.mxu0 0.0
          %3795 = vmatprep.subr.mxu0 0.0
          %3796 = vmatpush1.xpose.msra.mxu0 0.0
          %3797 = vmatprep.mubr.f32.mxu0 0.0
          %3798 = vmatmul.mubr.f32.gmra.mrb[0].mxu0 %v3701
          %v3799 = vpop.f32.mrb[0].mxu0
          %v3800 = vadd.f32 0.0, %v3799
          %v3801 = vpop.f32.mrb[0].mxu0
          %3802 = vmatprep.mubr.f32.mxu0 0.0
          %3803 = vmatmul.mubr.f32.gmra.mrb[0].mxu0 %v3703
          %v3804 = vpop.f32.mrb[0].mxu0
          %v3805 = vadd.f32 0.0, %v3804
          %v3806 = vpop.f32.mrb[0].mxu0
          %3807 = vmatprep.mubr.f32.mxu0 0.0
          %3808 = vmatmul.mubr.f32.gmra.mrb[0].mxu0 %v3705
          %v3809 = vpop.f32.mrb[0].mxu0
          %v3810 = vadd.f32 0.0, %v3809
          %v3811 = vpop.f32.mrb[0].mxu0
          %3812 = vmatprep.mubr.f32.mxu0 0.0
          %3813 = vmatmul.mubr.f32.gmra.mrb[0].mxu0 %v3707
          %v3814 = vpop.f32.mrb[0].mxu0
          %v3815 = vadd.f32 0.0, %v3814
          %v3816 = vpop.f32.mrb[0].mxu0
          %3817 = vmatprep.mubr.f32.mxu0 0.0
          %3818 = vmatmul.mubr.f32.gmra.mrb[0].mxu0 %v3709
          %v3819 = vpop.f32.mrb[0].mxu0
          %v3820 = vadd.f32 0.0, %v3819
          %v3821 = vpop.f32.mrb[0].mxu0
          %3822 = vmatprep.mubr.f32.mxu0 0.0
          %3823 = vmatmul.mubr.f32.gmra.mrb[0].mxu0 %v3711
          %v3824 = vpop.f32.mrb[0].mxu0
          %v3825 = vadd.f32 0.0, %v3824
          %v3826 = vpop.f32.mrb[0].mxu0
          %3827 = vmatprep.mubr.f32.mxu0 0.0
          %3828 = vmatmul.mubr.f32.gmra.mrb[0].mxu0 %v3713
          %v3829 = vpop.f32.mrb[0].mxu0
          %v3830 = vadd.f32 0.0, %v3829
          %v3831 = vpop.f32.mrb[0].mxu0
          %3832 = vmatprep.mubr.f32.mxu0 0.0
          %3833 = vmatmul.mubr.f32.gmra.mrb[0].mxu0 %v3715
          %v3834 = vpop.f32.mrb[0].mxu0
          %v3835 = vadd.f32 0.0, %v3834
          %v3836 = vpop.f32.mrb[0].mxu0
          %3837 = vdwg.mxu0
          %3838 = vrot.lane.b32.xlu0 %v914, 104
          %v3839 = vpop.permute.xlu0 %3838
          %3840 = vrot.lane.b32.xlu0 %v915, 104
          %v3841 = vpop.permute.xlu0 %3840
          %3842 = vrot.lane.b32.xlu0 %v916, 104
          %v3843 = vpop.permute.xlu0 %3842
          %3844 = vrot.lane.b32.xlu0 %v917, 104
          %v3845 = vpop.permute.xlu0 %3844
          %3846 = vrot.lane.b32.xlu0 %v918, 104
          %v3847 = vpop.permute.xlu0 %3846
          %3848 = vrot.lane.b32.xlu0 %v919, 104
          %v3849 = vpop.permute.xlu0 %3848
          %3850 = vrot.lane.b32.xlu0 %v920, 104
          %v3851 = vpop.permute.xlu0 %3850
          %3852 = vrot.lane.b32.xlu0 %v921, 104
          %v3853 = vpop.permute.xlu0 %3852
          %3854 = vrot.lane.b32.xlu0 %v938, 40
          %v3855 = vpop.permute.xlu0 %3854
          %3856 = vrot.lane.b32.xlu0 %v939, 40
          %v3857 = vpop.permute.xlu0 %3856
          %3858 = vrot.lane.b32.xlu0 %v940, 40
          %v3859 = vpop.permute.xlu0 %3858
          %3860 = vrot.lane.b32.xlu0 %v941, 40
          %v3861 = vpop.permute.xlu0 %3860
          %3862 = vrot.lane.b32.xlu0 %v942, 40
          %v3863 = vpop.permute.xlu0 %3862
          %3864 = vrot.lane.b32.xlu0 %v943, 40
          %v3865 = vpop.permute.xlu0 %3864
          %3866 = vrot.lane.b32.xlu0 %v944, 40
          %v3867 = vpop.permute.xlu0 %3866
          %3868 = vrot.lane.b32.xlu0 %v945, 40
          %v3869 = vpop.permute.xlu0 %3868
          %v3870 = vsel %vm990, %v3839, 0
          %v3872 = vsel %vm990, %v3841, 0
          %v3874 = vsel %vm990, %v3843, 0
          %v3876 = vsel %vm990, %v3845, 0
          %v3878 = vsel %vm990, %v3847, 0
          %v3880 = vsel %vm990, %v3849, 0
          %v3882 = vsel %vm990, %v3851, 0
          %v3884 = vsel %vm990, %v3853, 0
          %v3886 = vsel %vm990, %v3855, 0
          %v3888 = vsel %vm990, %v3857, 0
          %v3890 = vsel %vm990, %v3859, 0
          %v3892 = vsel %vm990, %v3861, 0
          %v3894 = vsel %vm990, %v3863, 0
          %v3896 = vsel %vm990, %v3865, 0
          %v3898 = vsel %vm990, %v3867, 0
          %v3900 = vsel %vm990, %v3869, 0
          %3902 = vmatprep.subr.mxu0 0.0
          %3903 = vmatpush1.xpose.msra.mxu0 %v3886
          %3904 = vmatprep.subr.mxu0 0.0
          %3905 = vmatpush1.xpose.msra.mxu0 %v3888
          %3906 = vmatprep.subr.mxu0 0.0
          %3907 = vmatpush1.xpose.msra.mxu0 %v3890
          %3908 = vmatprep.subr.mxu0 0.0
          %3909 = vmatpush1.xpose.msra.mxu0 %v3892
          %3910 = vmatprep.subr.mxu0 0.0
          %3911 = vmatpush1.xpose.msra.mxu0 %v3894
          %3912 = vmatprep.subr.mxu0 0.0
          %3913 = vmatpush1.xpose.msra.mxu0 %v3896
          %3914 = vmatprep.subr.mxu0 0.0
          %3915 = vmatpush1.xpose.msra.mxu0 %v3898
          %3916 = vmatprep.subr.mxu0 0.0
          %3917 = vmatpush1.xpose.msra.mxu0 %v3900
          %3918 = vmatprep.subr.mxu0 0.0
          %3919 = vmatpush1.xpose.msra.mxu0 0.0
          %3920 = vmatprep.subr.mxu0 0.0
          %3921 = vmatpush1.xpose.msra.mxu0 0.0
          %3922 = vmatprep.subr.mxu0 0.0
          %3923 = vmatpush1.xpose.msra.mxu0 0.0
          %3924 = vmatprep.subr.mxu0 0.0
          %3925 = vmatpush1.xpose.msra.mxu0 0.0
          %3926 = vmatprep.subr.mxu0 0.0
          %3927 = vmatpush1.xpose.msra.mxu0 0.0
          %3928 = vmatprep.subr.mxu0 0.0
          %3929 = vmatpush1.xpose.msra.mxu0 0.0
          %3930 = vmatprep.subr.mxu0 0.0
          %3931 = vmatpush1.xpose.msra.mxu0 0.0
          %3932 = vmatprep.subr.mxu0 0.0
          %3933 = vmatpush1.xpose.msra.mxu0 0.0
          %3934 = vmatprep.subr.mxu0 0.0
          %3935 = vmatpush1.xpose.msra.mxu0 0.0
          %3936 = vmatprep.subr.mxu0 0.0
          %3937 = vmatpush1.xpose.msra.mxu0 0.0
          %3938 = vmatprep.subr.mxu0 0.0
          %3939 = vmatpush1.xpose.msra.mxu0 0.0
          %3940 = vmatprep.subr.mxu0 0.0
          %3941 = vmatpush1.xpose.msra.mxu0 0.0
          %3942 = vmatprep.subr.mxu0 0.0
          %3943 = vmatpush1.xpose.msra.mxu0 0.0
          %3944 = vmatprep.subr.mxu0 0.0
          %3945 = vmatpush1.xpose.msra.mxu0 0.0
          %3946 = vmatprep.subr.mxu0 0.0
          %3947 = vmatpush1.xpose.msra.mxu0 0.0
          %3948 = vmatprep.subr.mxu0 0.0
          %3949 = vmatpush1.xpose.msra.mxu0 0.0
          %3950 = vmatprep.subr.mxu0 0.0
          %3951 = vmatpush1.xpose.msra.mxu0 0.0
          %3952 = vmatprep.subr.mxu0 0.0
          %3953 = vmatpush1.xpose.msra.mxu0 0.0
          %3954 = vmatprep.subr.mxu0 0.0
          %3955 = vmatpush1.xpose.msra.mxu0 0.0
          %3956 = vmatprep.subr.mxu0 0.0
          %3957 = vmatpush1.xpose.msra.mxu0 0.0
          %3958 = vmatprep.subr.mxu0 0.0
          %3959 = vmatpush1.xpose.msra.mxu0 0.0
          %3960 = vmatprep.subr.mxu0 0.0
          %3961 = vmatpush1.xpose.msra.mxu0 0.0
          %3962 = vmatprep.subr.mxu0 0.0
          %3963 = vmatpush1.xpose.msra.mxu0 0.0
          %3964 = vmatprep.subr.mxu0 0.0
          %3965 = vmatpush1.xpose.msra.mxu0 0.0
          %3966 = vmatprep.mubr.f32.mxu0 0.0
          %3967 = vmatmul.mubr.f32.gmra.mrb[0].mxu0 %v3870
          %v3968 = vpop.f32.mrb[0].mxu0
          %v3969 = vadd.f32 0.0, %v3968
          %v3970 = vpop.f32.mrb[0].mxu0
          %3971 = vmatprep.mubr.f32.mxu0 0.0
          %3972 = vmatmul.mubr.f32.gmra.mrb[0].mxu0 %v3872
          %v3973 = vpop.f32.mrb[0].mxu0
          %v3974 = vadd.f32 0.0, %v3973
          %v3975 = vpop.f32.mrb[0].mxu0
          %3976 = vmatprep.mubr.f32.mxu0 0.0
          %3977 = vmatmul.mubr.f32.gmra.mrb[0].mxu0 %v3874
          %v3978 = vpop.f32.mrb[0].mxu0
          %v3979 = vadd.f32 0.0, %v3978
          %v3980 = vpop.f32.mrb[0].mxu0
          %3981 = vmatprep.mubr.f32.mxu0 0.0
          %3982 = vmatmul.mubr.f32.gmra.mrb[0].mxu0 %v3876
          %v3983 = vpop.f32.mrb[0].mxu0
          %v3984 = vadd.f32 0.0, %v3983
          %v3985 = vpop.f32.mrb[0].mxu0
          %3986 = vmatprep.mubr.f32.mxu0 0.0
          %3987 = vmatmul.mubr.f32.gmra.mrb[0].mxu0 %v3878
          %v3988 = vpop.f32.mrb[0].mxu0
          %v3989 = vadd.f32 0.0, %v3988
          %v3990 = vpop.f32.mrb[0].mxu0
          %3991 = vmatprep.mubr.f32.mxu0 0.0
          %3992 = vmatmul.mubr.f32.gmra.mrb[0].mxu0 %v3880
          %v3993 = vpop.f32.mrb[0].mxu0
          %v3994 = vadd.f32 0.0, %v3993
          %v3995 = vpop.f32.mrb[0].mxu0
          %3996 = vmatprep.mubr.f32.mxu0 0.0
          %3997 = vmatmul.mubr.f32.gmra.mrb[0].mxu0 %v3882
          %v3998 = vpop.f32.mrb[0].mxu0
          %v3999 = vadd.f32 0.0, %v3998
          %v4000 = vpop.f32.mrb[0].mxu0
          %4001 = vmatprep.mubr.f32.mxu0 0.0
          %4002 = vmatmul.mubr.f32.gmra.mrb[0].mxu0 %v3884
          %v4003 = vpop.f32.mrb[0].mxu0
          %v4004 = vadd.f32 0.0, %v4003
          %v4005 = vpop.f32.mrb[0].mxu0
          %4006 = vdwg.mxu0
          %v4007 = vsel %vm401, %v3800, -inf
          %4008 = vmax.xlane.f32.xlu0 %v4007
          %v4009 = vpop.xlane.xlu0 %4008
          %v4010 = vsel %vm401, %v3805, -inf
          %4011 = vmax.xlane.f32.xlu0 %v4010
          %v4012 = vpop.xlane.xlu0 %4011
          %v4013 = vsel %vm401, %v3810, -inf
          %4014 = vmax.xlane.f32.xlu0 %v4013
          %v4015 = vpop.xlane.xlu0 %4014
          %v4016 = vsel %vm401, %v3815, -inf
          %4017 = vmax.xlane.f32.xlu0 %v4016
          %v4018 = vpop.xlane.xlu0 %4017
          %v4019 = vsel %vm401, %v3820, -inf
          %4020 = vmax.xlane.f32.xlu0 %v4019
          %v4021 = vpop.xlane.xlu0 %4020
          %v4022 = vsel %vm401, %v3825, -inf
          %4023 = vmax.xlane.f32.xlu0 %v4022
          %v4024 = vpop.xlane.xlu0 %4023
          %v4025 = vsel %vm401, %v3830, -inf
          %4026 = vmax.xlane.f32.xlu0 %v4025
          %v4027 = vpop.xlane.xlu0 %4026
          %v4028 = vsel %vm401, %v3835, -inf
          %4029 = vmax.xlane.f32.xlu0 %v4028
          %v4030 = vpop.xlane.xlu0 %4029
          %v4031 = vsel %vm401, %v3969, -inf
          %4032 = vmax.xlane.f32.xlu0 %v4031
          %v4033 = vpop.xlane.xlu0 %4032
          %v4034 = vsel %vm401, %v3974, -inf
          %4035 = vmax.xlane.f32.xlu0 %v4034
          %v4036 = vpop.xlane.xlu0 %4035
          %v4037 = vsel %vm401, %v3979, -inf
          %4038 = vmax.xlane.f32.xlu0 %v4037
          %v4039 = vpop.xlane.xlu0 %4038
          %v4040 = vsel %vm401, %v3984, -inf
          %4041 = vmax.xlane.f32.xlu0 %v4040
          %v4042 = vpop.xlane.xlu0 %4041
          %v4043 = vsel %vm401, %v3989, -inf
          %4044 = vmax.xlane.f32.xlu0 %v4043
          %v4045 = vpop.xlane.xlu0 %4044
          %v4046 = vsel %vm401, %v3994, -inf
          %4047 = vmax.xlane.f32.xlu0 %v4046
          %v4048 = vpop.xlane.xlu0 %4047
          %v4049 = vsel %vm401, %v3999, -inf
          %4050 = vmax.xlane.f32.xlu0 %v4049
          %v4051 = vpop.xlane.xlu0 %4050
          %v4052 = vsel %vm401, %v4004, -inf
          %4053 = vmax.xlane.f32.xlu0 %v4052
          %v4054 = vpop.xlane.xlu0 %4053
          %v4055 = vsub.f32 %v3800, %v4009
          %v4056 = vsub.f32 %v3805, %v4012
          %v4057 = vsub.f32 %v3810, %v4015
          %v4058 = vsub.f32 %v3815, %v4018
          %v4059 = vsub.f32 %v3820, %v4021
          %v4060 = vsub.f32 %v3825, %v4024
          %v4061 = vsub.f32 %v3830, %v4027
          %v4062 = vsub.f32 %v3835, %v4030
          %v4063 = vsub.f32 %v3969, %v4033
          %v4064 = vsub.f32 %v3974, %v4036
          %v4065 = vsub.f32 %v3979, %v4039
          %v4066 = vsub.f32 %v3984, %v4042
          %v4067 = vsub.f32 %v3989, %v4045
          %v4068 = vsub.f32 %v3994, %v4048
          %v4069 = vsub.f32 %v3999, %v4051
          %v4070 = vsub.f32 %v4004, %v4054
          %v4071 = vmul.f32 %v4055, 1.442695
          %v4072 = vpow.pop %v4071
          %v4073 = vmul.f32 %v4056, 1.442695
          %v4074 = vpow.pop %v4073
          %v4075 = vmul.f32 %v4057, 1.442695
          %v4076 = vpow.pop %v4075
          %v4077 = vmul.f32 %v4058, 1.442695
          %v4078 = vpow.pop %v4077
          %v4079 = vmul.f32 %v4059, 1.442695
          %v4080 = vpow.pop %v4079
          %v4081 = vmul.f32 %v4060, 1.442695
          %v4082 = vpow.pop %v4081
          %v4083 = vmul.f32 %v4061, 1.442695
          %v4084 = vpow.pop %v4083
          %v4085 = vmul.f32 %v4062, 1.442695
          %v4086 = vpow.pop %v4085
          %v4087 = vmul.f32 %v4063, 1.442695
          %v4088 = vpow.pop %v4087
          %v4089 = vmul.f32 %v4064, 1.442695
          %v4090 = vpow.pop %v4089
          %v4091 = vmul.f32 %v4065, 1.442695
          %v4092 = vpow.pop %v4091
          %v4093 = vmul.f32 %v4066, 1.442695
          %v4094 = vpow.pop %v4093
          %v4095 = vmul.f32 %v4067, 1.442695
          %v4096 = vpow.pop %v4095
          %v4097 = vmul.f32 %v4068, 1.442695
          %v4098 = vpow.pop %v4097
          %v4099 = vmul.f32 %v4069, 1.442695
          %v4100 = vpow.pop %v4099
          %v4101 = vmul.f32 %v4070, 1.442695
          %v4102 = vpow.pop %v4101
          %v4103 = vmul.f32 %v4072, %v425
          %v4104 = vmul.f32 %v4074, %v425
          %v4105 = vmul.f32 %v4076, %v425
          %v4106 = vmul.f32 %v4078, %v425
          %v4107 = vmul.f32 %v4080, %v425
          %v4108 = vmul.f32 %v4082, %v425
          %v4109 = vmul.f32 %v4084, %v425
          %v4110 = vmul.f32 %v4086, %v425
          %v4111 = vmul.f32 %v4088, %v429
          %v4112 = vmul.f32 %v4090, %v429
          %v4113 = vmul.f32 %v4092, %v429
          %v4114 = vmul.f32 %v4094, %v429
          %v4115 = vmul.f32 %v4096, %v429
          %v4116 = vmul.f32 %v4098, %v429
          %v4117 = vmul.f32 %v4100, %v429
          %v4118 = vmul.f32 %v4102, %v429
          %v4119 = vsel %vm401, %v4103, 0.0
          %4120 = vadd.xlane.f32.xlu0 %v4119
          %v4121 = vpop.xlane.xlu0 %4120
          %v4122 = vsel %vm401, %v4104, 0.0
          %4123 = vadd.xlane.f32.xlu0 %v4122
          %v4124 = vpop.xlane.xlu0 %4123
          %v4125 = vsel %vm401, %v4105, 0.0
          %4126 = vadd.xlane.f32.xlu0 %v4125
          %v4127 = vpop.xlane.xlu0 %4126
          %v4128 = vsel %vm401, %v4106, 0.0
          %4129 = vadd.xlane.f32.xlu0 %v4128
          %v4130 = vpop.xlane.xlu0 %4129
          %v4131 = vsel %vm401, %v4107, 0.0
          %4132 = vadd.xlane.f32.xlu0 %v4131
          %v4133 = vpop.xlane.xlu0 %4132
          %v4134 = vsel %vm401, %v4108, 0.0
          %4135 = vadd.xlane.f32.xlu0 %v4134
          %v4136 = vpop.xlane.xlu0 %4135
          %v4137 = vsel %vm401, %v4109, 0.0
          %4138 = vadd.xlane.f32.xlu0 %v4137
          %v4139 = vpop.xlane.xlu0 %4138
          %v4140 = vsel %vm401, %v4110, 0.0
          %4141 = vadd.xlane.f32.xlu0 %v4140
          %v4142 = vpop.xlane.xlu0 %4141
          %v4143 = vsel %vm401, %v4111, 0.0
          %4144 = vadd.xlane.f32.xlu0 %v4143
          %v4145 = vpop.xlane.xlu0 %4144
          %v4146 = vsel %vm401, %v4112, 0.0
          %4147 = vadd.xlane.f32.xlu0 %v4146
          %v4148 = vpop.xlane.xlu0 %4147
          %v4149 = vsel %vm401, %v4113, 0.0
          %4150 = vadd.xlane.f32.xlu0 %v4149
          %v4151 = vpop.xlane.xlu0 %4150
          %v4152 = vsel %vm401, %v4114, 0.0
          %4153 = vadd.xlane.f32.xlu0 %v4152
          %v4154 = vpop.xlane.xlu0 %4153
          %v4155 = vsel %vm401, %v4115, 0.0
          %4156 = vadd.xlane.f32.xlu0 %v4155
          %v4157 = vpop.xlane.xlu0 %4156
          %v4158 = vsel %vm401, %v4116, 0.0
          %4159 = vadd.xlane.f32.xlu0 %v4158
          %v4160 = vpop.xlane.xlu0 %4159
          %v4161 = vsel %vm401, %v4117, 0.0
          %4162 = vadd.xlane.f32.xlu0 %v4161
          %v4163 = vpop.xlane.xlu0 %4162
          %v4164 = vsel %vm401, %v4118, 0.0
          %4165 = vadd.xlane.f32.xlu0 %v4164
          %v4166 = vpop.xlane.xlu0 %4165
          %v4167 = vmax.f32 %v4121, 1e-30
          %v4168 = vmax.f32 %v4124, 1e-30
          %v4169 = vmax.f32 %v4127, 1e-30
          %v4170 = vmax.f32 %v4130, 1e-30
          %v4171 = vmax.f32 %v4133, 1e-30
          %v4172 = vmax.f32 %v4136, 1e-30
          %v4173 = vmax.f32 %v4139, 1e-30
          %v4174 = vmax.f32 %v4142, 1e-30
          %v4175 = vmax.f32 %v4145, 1e-30
          %v4176 = vmax.f32 %v4148, 1e-30
          %v4177 = vmax.f32 %v4151, 1e-30
          %v4178 = vmax.f32 %v4154, 1e-30
          %v4179 = vmax.f32 %v4157, 1e-30
          %v4180 = vmax.f32 %v4160, 1e-30
          %v4181 = vmax.f32 %v4163, 1e-30
          %v4182 = vmax.f32 %v4166, 1e-30
          %v4183 = vrcp.pop %v4167
          %v4184 = vrcp.pop %v4168
          %v4185 = vrcp.pop %v4169
          %v4186 = vrcp.pop %v4170
          %v4187 = vrcp.pop %v4171
          %v4188 = vrcp.pop %v4172
          %v4189 = vrcp.pop %v4173
          %v4190 = vrcp.pop %v4174
          %v4191 = vrcp.pop %v4175
          %v4192 = vrcp.pop %v4176
          %v4193 = vrcp.pop %v4177
          %v4194 = vrcp.pop %v4178
          %v4195 = vrcp.pop %v4179
          %v4196 = vrcp.pop %v4180
          %v4197 = vrcp.pop %v4181
          %v4198 = vrcp.pop %v4182
          %v4199 = vmul.f32 %v4103, %v4183
          %v4200 = vmul.f32 %v4104, %v4184
          %v4201 = vmul.f32 %v4105, %v4185
          %v4202 = vmul.f32 %v4106, %v4186
          %v4203 = vmul.f32 %v4107, %v4187
          %v4204 = vmul.f32 %v4108, %v4188
          %v4205 = vmul.f32 %v4109, %v4189
          %v4206 = vmul.f32 %v4110, %v4190
          %v4207 = vmul.f32 %v4111, %v4191
          %v4208 = vmul.f32 %v4112, %v4192
          %v4209 = vmul.f32 %v4113, %v4193
          %v4210 = vmul.f32 %v4114, %v4194
          %v4211 = vmul.f32 %v4115, %v4195
          %v4212 = vmul.f32 %v4116, %v4196
          %v4213 = vmul.f32 %v4117, %v4197
          %v4214 = vmul.f32 %v4118, %v4198
          %4215 = vrot.lane.b32.xlu0 %v950, 104
          %v4216 = vpop.permute.xlu0 %4215
          %4217 = vrot.lane.b32.xlu0 %v951, 104
          %v4218 = vpop.permute.xlu0 %4217
          %4219 = vrot.lane.b32.xlu0 %v952, 104
          %v4220 = vpop.permute.xlu0 %4219
          %4221 = vrot.lane.b32.xlu0 %v953, 104
          %v4222 = vpop.permute.xlu0 %4221
          %4223 = vrot.lane.b32.xlu0 %v954, 104
          %v4224 = vpop.permute.xlu0 %4223
          %4225 = vrot.lane.b32.xlu0 %v955, 104
          %v4226 = vpop.permute.xlu0 %4225
          %4227 = vrot.lane.b32.xlu0 %v956, 104
          %v4228 = vpop.permute.xlu0 %4227
          %4229 = vrot.lane.b32.xlu0 %v957, 104
          %v4230 = vpop.permute.xlu0 %4229
          %v4240 = vsel %vm401, %v4199, 0
          %v4243 = vsel %vm401, %v4200, 0
          %v4246 = vsel %vm401, %v4201, 0
          %v4249 = vsel %vm401, %v4202, 0
          %v4252 = vsel %vm401, %v4203, 0
          %v4255 = vsel %vm401, %v4204, 0
          %v4258 = vsel %vm401, %v4205, 0
          %v4261 = vsel %vm401, %v4206, 0
          %4263 = vmatprep.subr.mxu0 0.0
          %4264 = vmatpush1.msra.mxu0 %v4216
          %4265 = vmatprep.subr.mxu0 0.0
          %4266 = vmatpush1.msra.mxu0 %v4218
          %4267 = vmatprep.subr.mxu0 0.0
          %4268 = vmatpush1.msra.mxu0 %v4220
          %4269 = vmatprep.subr.mxu0 0.0
          %4270 = vmatpush1.msra.mxu0 %v4222
          %4271 = vmatprep.subr.mxu0 0.0
          %4272 = vmatpush1.msra.mxu0 %v4224
          %4273 = vmatprep.subr.mxu0 0.0
          %4274 = vmatpush1.msra.mxu0 %v4226
          %4275 = vmatprep.subr.mxu0 0.0
          %4276 = vmatpush1.msra.mxu0 %v4228
          %4277 = vmatprep.subr.mxu0 0.0
          %4278 = vmatpush1.msra.mxu0 %v4230
          %4279 = vmatprep.subr.mxu0 0.0
          %4280 = vmatpush1.msra.mxu0 0.0
          %4281 = vmatprep.subr.mxu0 0.0
          %4282 = vmatpush1.msra.mxu0 0.0
          %4283 = vmatprep.subr.mxu0 0.0
          %4284 = vmatpush1.msra.mxu0 0.0
          %4285 = vmatprep.subr.mxu0 0.0
          %4286 = vmatpush1.msra.mxu0 0.0
          %4287 = vmatprep.subr.mxu0 0.0
          %4288 = vmatpush1.msra.mxu0 0.0
          %4289 = vmatprep.subr.mxu0 0.0
          %4290 = vmatpush1.msra.mxu0 0.0
          %4291 = vmatprep.subr.mxu0 0.0
          %4292 = vmatpush1.msra.mxu0 0.0
          %4293 = vmatprep.subr.mxu0 0.0
          %4294 = vmatpush1.msra.mxu0 0.0
          %4295 = vmatprep.subr.mxu0 0.0
          %4296 = vmatpush1.msra.mxu0 0.0
          %4297 = vmatprep.subr.mxu0 0.0
          %4298 = vmatpush1.msra.mxu0 0.0
          %4299 = vmatprep.subr.mxu0 0.0
          %4300 = vmatpush1.msra.mxu0 0.0
          %4301 = vmatprep.subr.mxu0 0.0
          %4302 = vmatpush1.msra.mxu0 0.0
          %4303 = vmatprep.subr.mxu0 0.0
          %4304 = vmatpush1.msra.mxu0 0.0
          %4305 = vmatprep.subr.mxu0 0.0
          %4306 = vmatpush1.msra.mxu0 0.0
          %4307 = vmatprep.subr.mxu0 0.0
          %4308 = vmatpush1.msra.mxu0 0.0
          %4309 = vmatprep.subr.mxu0 0.0
          %4310 = vmatpush1.msra.mxu0 0.0
          %4311 = vmatprep.subr.mxu0 0.0
          %4312 = vmatpush1.msra.mxu0 0.0
          %4313 = vmatprep.subr.mxu0 0.0
          %4314 = vmatpush1.msra.mxu0 0.0
          %4315 = vmatprep.subr.mxu0 0.0
          %4316 = vmatpush1.msra.mxu0 0.0
          %4317 = vmatprep.subr.mxu0 0.0
          %4318 = vmatpush1.msra.mxu0 0.0
          %4319 = vmatprep.subr.mxu0 0.0
          %4320 = vmatpush1.msra.mxu0 0.0
          %4321 = vmatprep.subr.mxu0 0.0
          %4322 = vmatpush1.msra.mxu0 0.0
          %4323 = vmatprep.subr.mxu0 0.0
          %4324 = vmatpush1.msra.mxu0 0.0
          %4325 = vmatprep.subr.mxu0 0.0
          %4326 = vmatpush1.msra.mxu0 0.0
          %4327 = vmatprep.mubr.f32.mxu0 0.0
          %4328 = vmatmul.mubr.f32.gmra.mrb[0].mxu0 %v4240
          %v4329 = vpop.f32.mrb[0].mxu0
          %v4330 = vadd.f32 0.0, %v4329
          %v4331 = vpop.f32.mrb[0].mxu0
          %4332 = vmatprep.mubr.f32.mxu0 0.0
          %4333 = vmatmul.mubr.f32.gmra.mrb[0].mxu0 %v4243
          %v4334 = vpop.f32.mrb[0].mxu0
          %v4335 = vadd.f32 0.0, %v4334
          %v4336 = vpop.f32.mrb[0].mxu0
          %4337 = vmatprep.mubr.f32.mxu0 0.0
          %4338 = vmatmul.mubr.f32.gmra.mrb[0].mxu0 %v4246
          %v4339 = vpop.f32.mrb[0].mxu0
          %v4340 = vadd.f32 0.0, %v4339
          %v4341 = vpop.f32.mrb[0].mxu0
          %4342 = vmatprep.mubr.f32.mxu0 0.0
          %4343 = vmatmul.mubr.f32.gmra.mrb[0].mxu0 %v4249
          %v4344 = vpop.f32.mrb[0].mxu0
          %v4345 = vadd.f32 0.0, %v4344
          %v4346 = vpop.f32.mrb[0].mxu0
          %4347 = vmatprep.mubr.f32.mxu0 0.0
          %4348 = vmatmul.mubr.f32.gmra.mrb[0].mxu0 %v4252
          %v4349 = vpop.f32.mrb[0].mxu0
          %v4350 = vadd.f32 0.0, %v4349
          %v4351 = vpop.f32.mrb[0].mxu0
          %4352 = vmatprep.mubr.f32.mxu0 0.0
          %4353 = vmatmul.mubr.f32.gmra.mrb[0].mxu0 %v4255
          %v4354 = vpop.f32.mrb[0].mxu0
          %v4355 = vadd.f32 0.0, %v4354
          %v4356 = vpop.f32.mrb[0].mxu0
          %4357 = vmatprep.mubr.f32.mxu0 0.0
          %4358 = vmatmul.mubr.f32.gmra.mrb[0].mxu0 %v4258
          %v4359 = vpop.f32.mrb[0].mxu0
          %v4360 = vadd.f32 0.0, %v4359
          %v4361 = vpop.f32.mrb[0].mxu0
          %4362 = vmatprep.mubr.f32.mxu0 0.0
          %4363 = vmatmul.mubr.f32.gmra.mrb[0].mxu0 %v4261
          %v4364 = vpop.f32.mrb[0].mxu0
          %v4365 = vadd.f32 0.0, %v4364
          %v4366 = vpop.f32.mrb[0].mxu0
          %4367 = vdwg.mxu0
          %4368 = vrot.lane.b32.xlu0 %v958, 104
          %v4369 = vpop.permute.xlu0 %4368
          %4370 = vrot.lane.b32.xlu0 %v959, 104
          %v4371 = vpop.permute.xlu0 %4370
          %4372 = vrot.lane.b32.xlu0 %v960, 104
          %v4373 = vpop.permute.xlu0 %4372
          %4374 = vrot.lane.b32.xlu0 %v961, 104
          %v4375 = vpop.permute.xlu0 %4374
          %4376 = vrot.lane.b32.xlu0 %v962, 104
          %v4377 = vpop.permute.xlu0 %4376
          %4378 = vrot.lane.b32.xlu0 %v963, 104
          %v4379 = vpop.permute.xlu0 %4378
          %4380 = vrot.lane.b32.xlu0 %v964, 104
          %v4381 = vpop.permute.xlu0 %4380
          %4382 = vrot.lane.b32.xlu0 %v965, 104
          %v4383 = vpop.permute.xlu0 %4382
          %v4393 = vsel %vm401, %v4207, 0
          %v4396 = vsel %vm401, %v4208, 0
          %v4399 = vsel %vm401, %v4209, 0
          %v4402 = vsel %vm401, %v4210, 0
          %v4405 = vsel %vm401, %v4211, 0
          %v4408 = vsel %vm401, %v4212, 0
          %v4411 = vsel %vm401, %v4213, 0
          %v4414 = vsel %vm401, %v4214, 0
          %4416 = vmatprep.subr.mxu0 0.0
          %4417 = vmatpush1.msra.mxu0 %v4369
          %4418 = vmatprep.subr.mxu0 0.0
          %4419 = vmatpush1.msra.mxu0 %v4371
          %4420 = vmatprep.subr.mxu0 0.0
          %4421 = vmatpush1.msra.mxu0 %v4373
          %4422 = vmatprep.subr.mxu0 0.0
          %4423 = vmatpush1.msra.mxu0 %v4375
          %4424 = vmatprep.subr.mxu0 0.0
          %4425 = vmatpush1.msra.mxu0 %v4377
          %4426 = vmatprep.subr.mxu0 0.0
          %4427 = vmatpush1.msra.mxu0 %v4379
          %4428 = vmatprep.subr.mxu0 0.0
          %4429 = vmatpush1.msra.mxu0 %v4381
          %4430 = vmatprep.subr.mxu0 0.0
          %4431 = vmatpush1.msra.mxu0 %v4383
          %4432 = vmatprep.subr.mxu0 0.0
          %4433 = vmatpush1.msra.mxu0 0.0
          %4434 = vmatprep.subr.mxu0 0.0
          %4435 = vmatpush1.msra.mxu0 0.0
          %4436 = vmatprep.subr.mxu0 0.0
          %4437 = vmatpush1.msra.mxu0 0.0
          %4438 = vmatprep.subr.mxu0 0.0
          %4439 = vmatpush1.msra.mxu0 0.0
          %4440 = vmatprep.subr.mxu0 0.0
          %4441 = vmatpush1.msra.mxu0 0.0
          %4442 = vmatprep.subr.mxu0 0.0
          %4443 = vmatpush1.msra.mxu0 0.0
          %4444 = vmatprep.subr.mxu0 0.0
          %4445 = vmatpush1.msra.mxu0 0.0
          %4446 = vmatprep.subr.mxu0 0.0
          %4447 = vmatpush1.msra.mxu0 0.0
          %4448 = vmatprep.subr.mxu0 0.0
          %4449 = vmatpush1.msra.mxu0 0.0
          %4450 = vmatprep.subr.mxu0 0.0
          %4451 = vmatpush1.msra.mxu0 0.0
          %4452 = vmatprep.subr.mxu0 0.0
          %4453 = vmatpush1.msra.mxu0 0.0
          %4454 = vmatprep.subr.mxu0 0.0
          %4455 = vmatpush1.msra.mxu0 0.0
          %4456 = vmatprep.subr.mxu0 0.0
          %4457 = vmatpush1.msra.mxu0 0.0
          %4458 = vmatprep.subr.mxu0 0.0
          %4459 = vmatpush1.msra.mxu0 0.0
          %4460 = vmatprep.subr.mxu0 0.0
          %4461 = vmatpush1.msra.mxu0 0.0
          %4462 = vmatprep.subr.mxu0 0.0
          %4463 = vmatpush1.msra.mxu0 0.0
          %4464 = vmatprep.subr.mxu0 0.0
          %4465 = vmatpush1.msra.mxu0 0.0
          %4466 = vmatprep.subr.mxu0 0.0
          %4467 = vmatpush1.msra.mxu0 0.0
          %4468 = vmatprep.subr.mxu0 0.0
          %4469 = vmatpush1.msra.mxu0 0.0
          %4470 = vmatprep.subr.mxu0 0.0
          %4471 = vmatpush1.msra.mxu0 0.0
          %4472 = vmatprep.subr.mxu0 0.0
          %4473 = vmatpush1.msra.mxu0 0.0
          %4474 = vmatprep.subr.mxu0 0.0
          %4475 = vmatpush1.msra.mxu0 0.0
          %4476 = vmatprep.subr.mxu0 0.0
          %4477 = vmatpush1.msra.mxu0 0.0
          %4478 = vmatprep.subr.mxu0 0.0
          %4479 = vmatpush1.msra.mxu0 0.0
          %4480 = vmatprep.mubr.f32.mxu0 0.0
          %4481 = vmatmul.mubr.f32.gmra.mrb[0].mxu0 %v4393
          %v4482 = vpop.f32.mrb[0].mxu0
          %v4483 = vadd.f32 0.0, %v4482
          %v4484 = vpop.f32.mrb[0].mxu0
          %4485 = vmatprep.mubr.f32.mxu0 0.0
          %4486 = vmatmul.mubr.f32.gmra.mrb[0].mxu0 %v4396
          %v4487 = vpop.f32.mrb[0].mxu0
          %v4488 = vadd.f32 0.0, %v4487
          %v4489 = vpop.f32.mrb[0].mxu0
          %4490 = vmatprep.mubr.f32.mxu0 0.0
          %4491 = vmatmul.mubr.f32.gmra.mrb[0].mxu0 %v4399
          %v4492 = vpop.f32.mrb[0].mxu0
          %v4493 = vadd.f32 0.0, %v4492
          %v4494 = vpop.f32.mrb[0].mxu0
          %4495 = vmatprep.mubr.f32.mxu0 0.0
          %4496 = vmatmul.mubr.f32.gmra.mrb[0].mxu0 %v4402
          %v4497 = vpop.f32.mrb[0].mxu0
          %v4498 = vadd.f32 0.0, %v4497
          %v4499 = vpop.f32.mrb[0].mxu0
          %4500 = vmatprep.mubr.f32.mxu0 0.0
          %4501 = vmatmul.mubr.f32.gmra.mrb[0].mxu0 %v4405
          %v4502 = vpop.f32.mrb[0].mxu0
          %v4503 = vadd.f32 0.0, %v4502
          %v4504 = vpop.f32.mrb[0].mxu0
          %4505 = vmatprep.mubr.f32.mxu0 0.0
          %4506 = vmatmul.mubr.f32.gmra.mrb[0].mxu0 %v4408
          %v4507 = vpop.f32.mrb[0].mxu0
          %v4508 = vadd.f32 0.0, %v4507
          %v4509 = vpop.f32.mrb[0].mxu0
          %4510 = vmatprep.mubr.f32.mxu0 0.0
          %4511 = vmatmul.mubr.f32.gmra.mrb[0].mxu0 %v4411
          %v4512 = vpop.f32.mrb[0].mxu0
          %v4513 = vadd.f32 0.0, %v4512
          %v4514 = vpop.f32.mrb[0].mxu0
          %4515 = vmatprep.mubr.f32.mxu0 0.0
          %4516 = vmatmul.mubr.f32.gmra.mrb[0].mxu0 %v4414
          %v4517 = vpop.f32.mrb[0].mxu0
          %v4518 = vadd.f32 0.0, %v4517
          %v4519 = vpop.f32.mrb[0].mxu0
          %4520 = vdwg.mxu0
          %4537 = vrot.lane.b32.xlu0 %v4330, 24
          %v4538 = vpop.permute.xlu0 %4537
          %4539 = vrot.lane.b32.xlu0 %v4335, 24
          %v4540 = vpop.permute.xlu0 %4539
          %4541 = vrot.lane.b32.xlu0 %v4340, 24
          %v4542 = vpop.permute.xlu0 %4541
          %4543 = vrot.lane.b32.xlu0 %v4345, 24
          %v4544 = vpop.permute.xlu0 %4543
          %4545 = vrot.lane.b32.xlu0 %v4350, 24
          %v4546 = vpop.permute.xlu0 %4545
          %4547 = vrot.lane.b32.xlu0 %v4355, 24
          %v4548 = vpop.permute.xlu0 %4547
          %4549 = vrot.lane.b32.xlu0 %v4360, 24
          %v4550 = vpop.permute.xlu0 %4549
          %4551 = vrot.lane.b32.xlu0 %v4365, 24
          %v4552 = vpop.permute.xlu0 %4551
          %4553 = vrot.lane.b32.xlu0 %v4483, 24
          %v4554 = vpop.permute.xlu0 %4553
          %4555 = vrot.lane.b32.xlu0 %v4488, 24
          %v4556 = vpop.permute.xlu0 %4555
          %4557 = vrot.lane.b32.xlu0 %v4493, 24
          %v4558 = vpop.permute.xlu0 %4557
          %4559 = vrot.lane.b32.xlu0 %v4498, 24
          %v4560 = vpop.permute.xlu0 %4559
          %4561 = vrot.lane.b32.xlu0 %v4503, 24
          %v4562 = vpop.permute.xlu0 %4561
          %4563 = vrot.lane.b32.xlu0 %v4508, 24
          %v4564 = vpop.permute.xlu0 %4563
          %4565 = vrot.lane.b32.xlu0 %v4513, 24
          %v4566 = vpop.permute.xlu0 %4565
          %4567 = vrot.lane.b32.xlu0 %v4518, 24
          %v4568 = vpop.permute.xlu0 %4567
          %vm4585 = vcmask 261312
          %4586 = vst.msk [vmem:[#allocation3] sm:$0xff] %vm4585, %v4538
          %4587 = vst.msk [vmem:[#allocation3 + $0x8] sm:$0xff] %vm4585, %v4540
          %4588 = vst.msk [vmem:[#allocation3 + $0x10] sm:$0xff] %vm4585, %v4542
          %4589 = vst.msk [vmem:[#allocation3 + $0x18] sm:$0xff] %vm4585, %v4544
          %4590 = vst.msk [vmem:[#allocation3 + $0x20] sm:$0xff] %vm4585, %v4546
          %4591 = vst.msk [vmem:[#allocation3 + $0x28] sm:$0xff] %vm4585, %v4548
          %4592 = vst.msk [vmem:[#allocation3 + $0x30] sm:$0xff] %vm4585, %v4550
          %4593 = vst.msk [vmem:[#allocation3 + $0x38] sm:$0xff] %vm4585, %v4552
          %4594 = vst.msk [vmem:[#allocation3 + $0x40] sm:$0xff] %vm4585, %v4554
          %4595 = vst.msk [vmem:[#allocation3 + $0x48] sm:$0xff] %vm4585, %v4556
          %4596 = vst.msk [vmem:[#allocation3 + $0x50] sm:$0xff] %vm4585, %v4558
          %4597 = vst.msk [vmem:[#allocation3 + $0x58] sm:$0xff] %vm4585, %v4560
          %4598 = vst.msk [vmem:[#allocation3 + $0x60] sm:$0xff] %vm4585, %v4562
          %4599 = vst.msk [vmem:[#allocation3 + $0x68] sm:$0xff] %vm4585, %v4564
          %4600 = vst.msk [vmem:[#allocation3 + $0x70] sm:$0xff] %vm4585, %v4566
          %4601 = vst.msk [vmem:[#allocation3 + $0x78] sm:$0xff] %vm4585, %v4568
          %4602 = vrot.lane.b32.xlu0 %v906, 96
          %v4603 = vpop.permute.xlu0 %4602
          %4604 = vrot.lane.b32.xlu0 %v907, 96
          %v4605 = vpop.permute.xlu0 %4604
          %4606 = vrot.lane.b32.xlu0 %v908, 96
          %v4607 = vpop.permute.xlu0 %4606
          %4608 = vrot.lane.b32.xlu0 %v909, 96
          %v4609 = vpop.permute.xlu0 %4608
          %4610 = vrot.lane.b32.xlu0 %v910, 96
          %v4611 = vpop.permute.xlu0 %4610
          %4612 = vrot.lane.b32.xlu0 %v911, 96
          %v4613 = vpop.permute.xlu0 %4612
          %4614 = vrot.lane.b32.xlu0 %v912, 96
          %v4615 = vpop.permute.xlu0 %4614
          %4616 = vrot.lane.b32.xlu0 %v913, 96
          %v4617 = vpop.permute.xlu0 %4616
          %4618 = vrot.lane.b32.xlu0 %v930, 32
          %v4619 = vpop.permute.xlu0 %4618
          %4620 = vrot.lane.b32.xlu0 %v931, 32
          %v4621 = vpop.permute.xlu0 %4620
          %4622 = vrot.lane.b32.xlu0 %v932, 32
          %v4623 = vpop.permute.xlu0 %4622
          %4624 = vrot.lane.b32.xlu0 %v933, 32
          %v4625 = vpop.permute.xlu0 %4624
          %4626 = vrot.lane.b32.xlu0 %v934, 32
          %v4627 = vpop.permute.xlu0 %4626
          %4628 = vrot.lane.b32.xlu0 %v935, 32
          %v4629 = vpop.permute.xlu0 %4628
          %4630 = vrot.lane.b32.xlu0 %v936, 32
          %v4631 = vpop.permute.xlu0 %4630
          %4632 = vrot.lane.b32.xlu0 %v937, 32
          %v4633 = vpop.permute.xlu0 %4632
          %v4634 = vsel %vm990, %v4603, 0
          %v4636 = vsel %vm990, %v4605, 0
          %v4638 = vsel %vm990, %v4607, 0
          %v4640 = vsel %vm990, %v4609, 0
          %v4642 = vsel %vm990, %v4611, 0
          %v4644 = vsel %vm990, %v4613, 0
          %v4646 = vsel %vm990, %v4615, 0
          %v4648 = vsel %vm990, %v4617, 0
          %v4650 = vsel %vm990, %v4619, 0
          %v4652 = vsel %vm990, %v4621, 0
          %v4654 = vsel %vm990, %v4623, 0
          %v4656 = vsel %vm990, %v4625, 0
          %v4658 = vsel %vm990, %v4627, 0
          %v4660 = vsel %vm990, %v4629, 0
          %v4662 = vsel %vm990, %v4631, 0
          %v4664 = vsel %vm990, %v4633, 0
          %4666 = vmatprep.subr.mxu0 0.0
          %4667 = vmatpush1.xpose.msra.mxu0 %v4650
          %4668 = vmatprep.subr.mxu0 0.0
          %4669 = vmatpush1.xpose.msra.mxu0 %v4652
          %4670 = vmatprep.subr.mxu0 0.0
          %4671 = vmatpush1.xpose.msra.mxu0 %v4654
          %4672 = vmatprep.subr.mxu0 0.0
          %4673 = vmatpush1.xpose.msra.mxu0 %v4656
          %4674 = vmatprep.subr.mxu0 0.0
          %4675 = vmatpush1.xpose.msra.mxu0 %v4658
          %4676 = vmatprep.subr.mxu0 0.0
          %4677 = vmatpush1.xpose.msra.mxu0 %v4660
          %4678 = vmatprep.subr.mxu0 0.0
          %4679 = vmatpush1.xpose.msra.mxu0 %v4662
          %4680 = vmatprep.subr.mxu0 0.0
          %4681 = vmatpush1.xpose.msra.mxu0 %v4664
          %4682 = vmatprep.subr.mxu0 0.0
          %4683 = vmatpush1.xpose.msra.mxu0 0.0
          %4684 = vmatprep.subr.mxu0 0.0
          %4685 = vmatpush1.xpose.msra.mxu0 0.0
          %4686 = vmatprep.subr.mxu0 0.0
          %4687 = vmatpush1.xpose.msra.mxu0 0.0
          %4688 = vmatprep.subr.mxu0 0.0
          %4689 = vmatpush1.xpose.msra.mxu0 0.0
          %4690 = vmatprep.subr.mxu0 0.0
          %4691 = vmatpush1.xpose.msra.mxu0 0.0
          %4692 = vmatprep.subr.mxu0 0.0
          %4693 = vmatpush1.xpose.msra.mxu0 0.0
          %4694 = vmatprep.subr.mxu0 0.0
          %4695 = vmatpush1.xpose.msra.mxu0 0.0
          %4696 = vmatprep.subr.mxu0 0.0
          %4697 = vmatpush1.xpose.msra.mxu0 0.0
          %4698 = vmatprep.subr.mxu0 0.0
          %4699 = vmatpush1.xpose.msra.mxu0 0.0
          %4700 = vmatprep.subr.mxu0 0.0
          %4701 = vmatpush1.xpose.msra.mxu0 0.0
          %4702 = vmatprep.subr.mxu0 0.0
          %4703 = vmatpush1.xpose.msra.mxu0 0.0
          %4704 = vmatprep.subr.mxu0 0.0
          %4705 = vmatpush1.xpose.msra.mxu0 0.0
          %4706 = vmatprep.subr.mxu0 0.0
          %4707 = vmatpush1.xpose.msra.mxu0 0.0
          %4708 = vmatprep.subr.mxu0 0.0
          %4709 = vmatpush1.xpose.msra.mxu0 0.0
          %4710 = vmatprep.subr.mxu0 0.0
          %4711 = vmatpush1.xpose.msra.mxu0 0.0
          %4712 = vmatprep.subr.mxu0 0.0
          %4713 = vmatpush1.xpose.msra.mxu0 0.0
          %4714 = vmatprep.subr.mxu0 0.0
          %4715 = vmatpush1.xpose.msra.mxu0 0.0
          %4716 = vmatprep.subr.mxu0 0.0
          %4717 = vmatpush1.xpose.msra.mxu0 0.0
          %4718 = vmatprep.subr.mxu0 0.0
          %4719 = vmatpush1.xpose.msra.mxu0 0.0
          %4720 = vmatprep.subr.mxu0 0.0
          %4721 = vmatpush1.xpose.msra.mxu0 0.0
          %4722 = vmatprep.subr.mxu0 0.0
          %4723 = vmatpush1.xpose.msra.mxu0 0.0
          %4724 = vmatprep.subr.mxu0 0.0
          %4725 = vmatpush1.xpose.msra.mxu0 0.0
          %4726 = vmatprep.subr.mxu0 0.0
          %4727 = vmatpush1.xpose.msra.mxu0 0.0
          %4728 = vmatprep.subr.mxu0 0.0
          %4729 = vmatpush1.xpose.msra.mxu0 0.0
          %4730 = vmatprep.mubr.f32.mxu0 0.0
          %4731 = vmatmul.mubr.f32.gmra.mrb[0].mxu0 %v4634
          %v4732 = vpop.f32.mrb[0].mxu0
          %v4733 = vadd.f32 0.0, %v4732
          %v4734 = vpop.f32.mrb[0].mxu0
          %4735 = vmatprep.mubr.f32.mxu0 0.0
          %4736 = vmatmul.mubr.f32.gmra.mrb[0].mxu0 %v4636
          %v4737 = vpop.f32.mrb[0].mxu0
          %v4738 = vadd.f32 0.0, %v4737
          %v4739 = vpop.f32.mrb[0].mxu0
          %4740 = vmatprep.mubr.f32.mxu0 0.0
          %4741 = vmatmul.mubr.f32.gmra.mrb[0].mxu0 %v4638
          %v4742 = vpop.f32.mrb[0].mxu0
          %v4743 = vadd.f32 0.0, %v4742
          %v4744 = vpop.f32.mrb[0].mxu0
          %4745 = vmatprep.mubr.f32.mxu0 0.0
          %4746 = vmatmul.mubr.f32.gmra.mrb[0].mxu0 %v4640
          %v4747 = vpop.f32.mrb[0].mxu0
          %v4748 = vadd.f32 0.0, %v4747
          %v4749 = vpop.f32.mrb[0].mxu0
          %4750 = vmatprep.mubr.f32.mxu0 0.0
          %4751 = vmatmul.mubr.f32.gmra.mrb[0].mxu0 %v4642
          %v4752 = vpop.f32.mrb[0].mxu0
          %v4753 = vadd.f32 0.0, %v4752
          %v4754 = vpop.f32.mrb[0].mxu0
          %4755 = vmatprep.mubr.f32.mxu0 0.0
          %4756 = vmatmul.mubr.f32.gmra.mrb[0].mxu0 %v4644
          %v4757 = vpop.f32.mrb[0].mxu0
          %v4758 = vadd.f32 0.0, %v4757
          %v4759 = vpop.f32.mrb[0].mxu0
          %4760 = vmatprep.mubr.f32.mxu0 0.0
          %4761 = vmatmul.mubr.f32.gmra.mrb[0].mxu0 %v4646
          %v4762 = vpop.f32.mrb[0].mxu0
          %v4763 = vadd.f32 0.0, %v4762
          %v4764 = vpop.f32.mrb[0].mxu0
          %4765 = vmatprep.mubr.f32.mxu0 0.0
          %4766 = vmatmul.mubr.f32.gmra.mrb[0].mxu0 %v4648
          %v4767 = vpop.f32.mrb[0].mxu0
          %v4768 = vadd.f32 0.0, %v4767
          %v4769 = vpop.f32.mrb[0].mxu0
          %4770 = vdwg.mxu0
          %4771 = vrot.lane.b32.xlu0 %v914, 96
          %v4772 = vpop.permute.xlu0 %4771
          %4773 = vrot.lane.b32.xlu0 %v915, 96
          %v4774 = vpop.permute.xlu0 %4773
          %4775 = vrot.lane.b32.xlu0 %v916, 96
          %v4776 = vpop.permute.xlu0 %4775
          %4777 = vrot.lane.b32.xlu0 %v917, 96
          %v4778 = vpop.permute.xlu0 %4777
          %4779 = vrot.lane.b32.xlu0 %v918, 96
          %v4780 = vpop.permute.xlu0 %4779
          %4781 = vrot.lane.b32.xlu0 %v919, 96
          %v4782 = vpop.permute.xlu0 %4781
          %4783 = vrot.lane.b32.xlu0 %v920, 96
          %v4784 = vpop.permute.xlu0 %4783
          %4785 = vrot.lane.b32.xlu0 %v921, 96
          %v4786 = vpop.permute.xlu0 %4785
          %4787 = vrot.lane.b32.xlu0 %v938, 32
          %v4788 = vpop.permute.xlu0 %4787
          %4789 = vrot.lane.b32.xlu0 %v939, 32
          %v4790 = vpop.permute.xlu0 %4789
          %4791 = vrot.lane.b32.xlu0 %v940, 32
          %v4792 = vpop.permute.xlu0 %4791
          %4793 = vrot.lane.b32.xlu0 %v941, 32
          %v4794 = vpop.permute.xlu0 %4793
          %4795 = vrot.lane.b32.xlu0 %v942, 32
          %v4796 = vpop.permute.xlu0 %4795
          %4797 = vrot.lane.b32.xlu0 %v943, 32
          %v4798 = vpop.permute.xlu0 %4797
          %4799 = vrot.lane.b32.xlu0 %v944, 32
          %v4800 = vpop.permute.xlu0 %4799
          %4801 = vrot.lane.b32.xlu0 %v945, 32
          %v4802 = vpop.permute.xlu0 %4801
          %v4803 = vsel %vm990, %v4772, 0
          %v4805 = vsel %vm990, %v4774, 0
          %v4807 = vsel %vm990, %v4776, 0
          %v4809 = vsel %vm990, %v4778, 0
          %v4811 = vsel %vm990, %v4780, 0
          %v4813 = vsel %vm990, %v4782, 0
          %v4815 = vsel %vm990, %v4784, 0
          %v4817 = vsel %vm990, %v4786, 0
          %v4819 = vsel %vm990, %v4788, 0
          %v4821 = vsel %vm990, %v4790, 0
          %v4823 = vsel %vm990, %v4792, 0
          %v4825 = vsel %vm990, %v4794, 0
          %v4827 = vsel %vm990, %v4796, 0
          %v4829 = vsel %vm990, %v4798, 0
          %v4831 = vsel %vm990, %v4800, 0
          %v4833 = vsel %vm990, %v4802, 0
          %4835 = vmatprep.subr.mxu0 0.0
          %4836 = vmatpush1.xpose.msra.mxu0 %v4819
          %4837 = vmatprep.subr.mxu0 0.0
          %4838 = vmatpush1.xpose.msra.mxu0 %v4821
          %4839 = vmatprep.subr.mxu0 0.0
          %4840 = vmatpush1.xpose.msra.mxu0 %v4823
          %4841 = vmatprep.subr.mxu0 0.0
          %4842 = vmatpush1.xpose.msra.mxu0 %v4825
          %4843 = vmatprep.subr.mxu0 0.0
          %4844 = vmatpush1.xpose.msra.mxu0 %v4827
          %4845 = vmatprep.subr.mxu0 0.0
          %4846 = vmatpush1.xpose.msra.mxu0 %v4829
          %4847 = vmatprep.subr.mxu0 0.0
          %4848 = vmatpush1.xpose.msra.mxu0 %v4831
          %4849 = vmatprep.subr.mxu0 0.0
          %4850 = vmatpush1.xpose.msra.mxu0 %v4833
          %4851 = vmatprep.subr.mxu0 0.0
          %4852 = vmatpush1.xpose.msra.mxu0 0.0
          %4853 = vmatprep.subr.mxu0 0.0
          %4854 = vmatpush1.xpose.msra.mxu0 0.0
          %4855 = vmatprep.subr.mxu0 0.0
          %4856 = vmatpush1.xpose.msra.mxu0 0.0
          %4857 = vmatprep.subr.mxu0 0.0
          %4858 = vmatpush1.xpose.msra.mxu0 0.0
          %4859 = vmatprep.subr.mxu0 0.0
          %4860 = vmatpush1.xpose.msra.mxu0 0.0
          %4861 = vmatprep.subr.mxu0 0.0
          %4862 = vmatpush1.xpose.msra.mxu0 0.0
          %4863 = vmatprep.subr.mxu0 0.0
          %4864 = vmatpush1.xpose.msra.mxu0 0.0
          %4865 = vmatprep.subr.mxu0 0.0
          %4866 = vmatpush1.xpose.msra.mxu0 0.0
          %4867 = vmatprep.subr.mxu0 0.0
          %4868 = vmatpush1.xpose.msra.mxu0 0.0
          %4869 = vmatprep.subr.mxu0 0.0
          %4870 = vmatpush1.xpose.msra.mxu0 0.0
          %4871 = vmatprep.subr.mxu0 0.0
          %4872 = vmatpush1.xpose.msra.mxu0 0.0
          %4873 = vmatprep.subr.mxu0 0.0
          %4874 = vmatpush1.xpose.msra.mxu0 0.0
          %4875 = vmatprep.subr.mxu0 0.0
          %4876 = vmatpush1.xpose.msra.mxu0 0.0
          %4877 = vmatprep.subr.mxu0 0.0
          %4878 = vmatpush1.xpose.msra.mxu0 0.0
          %4879 = vmatprep.subr.mxu0 0.0
          %4880 = vmatpush1.xpose.msra.mxu0 0.0
          %4881 = vmatprep.subr.mxu0 0.0
          %4882 = vmatpush1.xpose.msra.mxu0 0.0
          %4883 = vmatprep.subr.mxu0 0.0
          %4884 = vmatpush1.xpose.msra.mxu0 0.0
          %4885 = vmatprep.subr.mxu0 0.0
          %4886 = vmatpush1.xpose.msra.mxu0 0.0
          %4887 = vmatprep.subr.mxu0 0.0
          %4888 = vmatpush1.xpose.msra.mxu0 0.0
          %4889 = vmatprep.subr.mxu0 0.0
          %4890 = vmatpush1.xpose.msra.mxu0 0.0
          %4891 = vmatprep.subr.mxu0 0.0
          %4892 = vmatpush1.xpose.msra.mxu0 0.0
          %4893 = vmatprep.subr.mxu0 0.0
          %4894 = vmatpush1.xpose.msra.mxu0 0.0
          %4895 = vmatprep.subr.mxu0 0.0
          %4896 = vmatpush1.xpose.msra.mxu0 0.0
          %4897 = vmatprep.subr.mxu0 0.0
          %4898 = vmatpush1.xpose.msra.mxu0 0.0
          %4899 = vmatprep.mubr.f32.mxu0 0.0
          %4900 = vmatmul.mubr.f32.gmra.mrb[0].mxu0 %v4803
          %v4901 = vpop.f32.mrb[0].mxu0
          %v4902 = vadd.f32 0.0, %v4901
          %v4903 = vpop.f32.mrb[0].mxu0
          %4904 = vmatprep.mubr.f32.mxu0 0.0
          %4905 = vmatmul.mubr.f32.gmra.mrb[0].mxu0 %v4805
          %v4906 = vpop.f32.mrb[0].mxu0
          %v4907 = vadd.f32 0.0, %v4906
          %v4908 = vpop.f32.mrb[0].mxu0
          %4909 = vmatprep.mubr.f32.mxu0 0.0
          %4910 = vmatmul.mubr.f32.gmra.mrb[0].mxu0 %v4807
          %v4911 = vpop.f32.mrb[0].mxu0
          %v4912 = vadd.f32 0.0, %v4911
          %v4913 = vpop.f32.mrb[0].mxu0
          %4914 = vmatprep.mubr.f32.mxu0 0.0
          %4915 = vmatmul.mubr.f32.gmra.mrb[0].mxu0 %v4809
          %v4916 = vpop.f32.mrb[0].mxu0
          %v4917 = vadd.f32 0.0, %v4916
          %v4918 = vpop.f32.mrb[0].mxu0
          %4919 = vmatprep.mubr.f32.mxu0 0.0
          %4920 = vmatmul.mubr.f32.gmra.mrb[0].mxu0 %v4811
          %v4921 = vpop.f32.mrb[0].mxu0
          %v4922 = vadd.f32 0.0, %v4921
          %v4923 = vpop.f32.mrb[0].mxu0
          %4924 = vmatprep.mubr.f32.mxu0 0.0
          %4925 = vmatmul.mubr.f32.gmra.mrb[0].mxu0 %v4813
          %v4926 = vpop.f32.mrb[0].mxu0
          %v4927 = vadd.f32 0.0, %v4926
          %v4928 = vpop.f32.mrb[0].mxu0
          %4929 = vmatprep.mubr.f32.mxu0 0.0
          %4930 = vmatmul.mubr.f32.gmra.mrb[0].mxu0 %v4815
          %v4931 = vpop.f32.mrb[0].mxu0
          %v4932 = vadd.f32 0.0, %v4931
          %v4933 = vpop.f32.mrb[0].mxu0
          %4934 = vmatprep.mubr.f32.mxu0 0.0
          %4935 = vmatmul.mubr.f32.gmra.mrb[0].mxu0 %v4817
          %v4936 = vpop.f32.mrb[0].mxu0
          %v4937 = vadd.f32 0.0, %v4936
          %v4938 = vpop.f32.mrb[0].mxu0
          %4939 = vdwg.mxu0
          %v4940 = vsel %vm401, %v4733, -inf
          %4941 = vmax.xlane.f32.xlu0 %v4940
          %v4942 = vpop.xlane.xlu0 %4941
          %v4943 = vsel %vm401, %v4738, -inf
          %4944 = vmax.xlane.f32.xlu0 %v4943
          %v4945 = vpop.xlane.xlu0 %4944
          %v4946 = vsel %vm401, %v4743, -inf
          %4947 = vmax.xlane.f32.xlu0 %v4946
          %v4948 = vpop.xlane.xlu0 %4947
          %v4949 = vsel %vm401, %v4748, -inf
          %4950 = vmax.xlane.f32.xlu0 %v4949
          %v4951 = vpop.xlane.xlu0 %4950
          %v4952 = vsel %vm401, %v4753, -inf
          %4953 = vmax.xlane.f32.xlu0 %v4952
          %v4954 = vpop.xlane.xlu0 %4953
          %v4955 = vsel %vm401, %v4758, -inf
          %4956 = vmax.xlane.f32.xlu0 %v4955
          %v4957 = vpop.xlane.xlu0 %4956
          %v4958 = vsel %vm401, %v4763, -inf
          %4959 = vmax.xlane.f32.xlu0 %v4958
          %v4960 = vpop.xlane.xlu0 %4959
          %v4961 = vsel %vm401, %v4768, -inf
          %4962 = vmax.xlane.f32.xlu0 %v4961
          %v4963 = vpop.xlane.xlu0 %4962
          %v4964 = vsel %vm401, %v4902, -inf
          %4965 = vmax.xlane.f32.xlu0 %v4964
          %v4966 = vpop.xlane.xlu0 %4965
          %v4967 = vsel %vm401, %v4907, -inf
          %4968 = vmax.xlane.f32.xlu0 %v4967
          %v4969 = vpop.xlane.xlu0 %4968
          %v4970 = vsel %vm401, %v4912, -inf
          %4971 = vmax.xlane.f32.xlu0 %v4970
          %v4972 = vpop.xlane.xlu0 %4971
          %v4973 = vsel %vm401, %v4917, -inf
          %4974 = vmax.xlane.f32.xlu0 %v4973
          %v4975 = vpop.xlane.xlu0 %4974
          %v4976 = vsel %vm401, %v4922, -inf
          %4977 = vmax.xlane.f32.xlu0 %v4976
          %v4978 = vpop.xlane.xlu0 %4977
          %v4979 = vsel %vm401, %v4927, -inf
          %4980 = vmax.xlane.f32.xlu0 %v4979
          %v4981 = vpop.xlane.xlu0 %4980
          %v4982 = vsel %vm401, %v4932, -inf
          %4983 = vmax.xlane.f32.xlu0 %v4982
          %v4984 = vpop.xlane.xlu0 %4983
          %v4985 = vsel %vm401, %v4937, -inf
          %4986 = vmax.xlane.f32.xlu0 %v4985
          %v4987 = vpop.xlane.xlu0 %4986
          %v4988 = vsub.f32 %v4733, %v4942
          %v4989 = vsub.f32 %v4738, %v4945
          %v4990 = vsub.f32 %v4743, %v4948
          %v4991 = vsub.f32 %v4748, %v4951
          %v4992 = vsub.f32 %v4753, %v4954
          %v4993 = vsub.f32 %v4758, %v4957
          %v4994 = vsub.f32 %v4763, %v4960
          %v4995 = vsub.f32 %v4768, %v4963
          %v4996 = vsub.f32 %v4902, %v4966
          %v4997 = vsub.f32 %v4907, %v4969
          %v4998 = vsub.f32 %v4912, %v4972
          %v4999 = vsub.f32 %v4917, %v4975
          %v5000 = vsub.f32 %v4922, %v4978
          %v5001 = vsub.f32 %v4927, %v4981
          %v5002 = vsub.f32 %v4932, %v4984
          %v5003 = vsub.f32 %v4937, %v4987
          %v5004 = vmul.f32 %v4988, 1.442695
          %v5005 = vpow.pop %v5004
          %v5006 = vmul.f32 %v4989, 1.442695
          %v5007 = vpow.pop %v5006
          %v5008 = vmul.f32 %v4990, 1.442695
          %v5009 = vpow.pop %v5008
          %v5010 = vmul.f32 %v4991, 1.442695
          %v5011 = vpow.pop %v5010
          %v5012 = vmul.f32 %v4992, 1.442695
          %v5013 = vpow.pop %v5012
          %v5014 = vmul.f32 %v4993, 1.442695
          %v5015 = vpow.pop %v5014
          %v5016 = vmul.f32 %v4994, 1.442695
          %v5017 = vpow.pop %v5016
          %v5018 = vmul.f32 %v4995, 1.442695
          %v5019 = vpow.pop %v5018
          %v5020 = vmul.f32 %v4996, 1.442695
          %v5021 = vpow.pop %v5020
          %v5022 = vmul.f32 %v4997, 1.442695
          %v5023 = vpow.pop %v5022
          %v5024 = vmul.f32 %v4998, 1.442695
          %v5025 = vpow.pop %v5024
          %v5026 = vmul.f32 %v4999, 1.442695
          %v5027 = vpow.pop %v5026
          %v5028 = vmul.f32 %v5000, 1.442695
          %v5029 = vpow.pop %v5028
          %v5030 = vmul.f32 %v5001, 1.442695
          %v5031 = vpow.pop %v5030
          %v5032 = vmul.f32 %v5002, 1.442695
          %v5033 = vpow.pop %v5032
          %v5034 = vmul.f32 %v5003, 1.442695
          %v5035 = vpow.pop %v5034
          %v5036 = vmul.f32 %v5005, %v425
          %v5037 = vmul.f32 %v5007, %v425
          %v5038 = vmul.f32 %v5009, %v425
          %v5039 = vmul.f32 %v5011, %v425
          %v5040 = vmul.f32 %v5013, %v425
          %v5041 = vmul.f32 %v5015, %v425
          %v5042 = vmul.f32 %v5017, %v425
          %v5043 = vmul.f32 %v5019, %v425
          %v5044 = vmul.f32 %v5021, %v429
          %v5045 = vmul.f32 %v5023, %v429
          %v5046 = vmul.f32 %v5025, %v429
          %v5047 = vmul.f32 %v5027, %v429
          %v5048 = vmul.f32 %v5029, %v429
          %v5049 = vmul.f32 %v5031, %v429
          %v5050 = vmul.f32 %v5033, %v429
          %v5051 = vmul.f32 %v5035, %v429
          %v5052 = vsel %vm401, %v5036, 0.0
          %5053 = vadd.xlane.f32.xlu0 %v5052
          %v5054 = vpop.xlane.xlu0 %5053
          %v5055 = vsel %vm401, %v5037, 0.0
          %5056 = vadd.xlane.f32.xlu0 %v5055
          %v5057 = vpop.xlane.xlu0 %5056
          %v5058 = vsel %vm401, %v5038, 0.0
          %5059 = vadd.xlane.f32.xlu0 %v5058
          %v5060 = vpop.xlane.xlu0 %5059
          %v5061 = vsel %vm401, %v5039, 0.0
          %5062 = vadd.xlane.f32.xlu0 %v5061
          %v5063 = vpop.xlane.xlu0 %5062
          %v5064 = vsel %vm401, %v5040, 0.0
          %5065 = vadd.xlane.f32.xlu0 %v5064
          %v5066 = vpop.xlane.xlu0 %5065
          %v5067 = vsel %vm401, %v5041, 0.0
          %5068 = vadd.xlane.f32.xlu0 %v5067
          %v5069 = vpop.xlane.xlu0 %5068
          %v5070 = vsel %vm401, %v5042, 0.0
          %5071 = vadd.xlane.f32.xlu0 %v5070
          %v5072 = vpop.xlane.xlu0 %5071
          %v5073 = vsel %vm401, %v5043, 0.0
          %5074 = vadd.xlane.f32.xlu0 %v5073
          %v5075 = vpop.xlane.xlu0 %5074
          %v5076 = vsel %vm401, %v5044, 0.0
          %5077 = vadd.xlane.f32.xlu0 %v5076
          %v5078 = vpop.xlane.xlu0 %5077
          %v5079 = vsel %vm401, %v5045, 0.0
          %5080 = vadd.xlane.f32.xlu0 %v5079
          %v5081 = vpop.xlane.xlu0 %5080
          %v5082 = vsel %vm401, %v5046, 0.0
          %5083 = vadd.xlane.f32.xlu0 %v5082
          %v5084 = vpop.xlane.xlu0 %5083
          %v5085 = vsel %vm401, %v5047, 0.0
          %5086 = vadd.xlane.f32.xlu0 %v5085
          %v5087 = vpop.xlane.xlu0 %5086
          %v5088 = vsel %vm401, %v5048, 0.0
          %5089 = vadd.xlane.f32.xlu0 %v5088
          %v5090 = vpop.xlane.xlu0 %5089
          %v5091 = vsel %vm401, %v5049, 0.0
          %5092 = vadd.xlane.f32.xlu0 %v5091
          %v5093 = vpop.xlane.xlu0 %5092
          %v5094 = vsel %vm401, %v5050, 0.0
          %5095 = vadd.xlane.f32.xlu0 %v5094
          %v5096 = vpop.xlane.xlu0 %5095
          %v5097 = vsel %vm401, %v5051, 0.0
          %5098 = vadd.xlane.f32.xlu0 %v5097
          %v5099 = vpop.xlane.xlu0 %5098
          %v5100 = vmax.f32 %v5054, 1e-30
          %v5101 = vmax.f32 %v5057, 1e-30
          %v5102 = vmax.f32 %v5060, 1e-30
          %v5103 = vmax.f32 %v5063, 1e-30
          %v5104 = vmax.f32 %v5066, 1e-30
          %v5105 = vmax.f32 %v5069, 1e-30
          %v5106 = vmax.f32 %v5072, 1e-30
          %v5107 = vmax.f32 %v5075, 1e-30
          %v5108 = vmax.f32 %v5078, 1e-30
          %v5109 = vmax.f32 %v5081, 1e-30
          %v5110 = vmax.f32 %v5084, 1e-30
          %v5111 = vmax.f32 %v5087, 1e-30
          %v5112 = vmax.f32 %v5090, 1e-30
          %v5113 = vmax.f32 %v5093, 1e-30
          %v5114 = vmax.f32 %v5096, 1e-30
          %v5115 = vmax.f32 %v5099, 1e-30
          %v5116 = vrcp.pop %v5100
          %v5117 = vrcp.pop %v5101
          %v5118 = vrcp.pop %v5102
          %v5119 = vrcp.pop %v5103
          %v5120 = vrcp.pop %v5104
          %v5121 = vrcp.pop %v5105
          %v5122 = vrcp.pop %v5106
          %v5123 = vrcp.pop %v5107
          %v5124 = vrcp.pop %v5108
          %v5125 = vrcp.pop %v5109
          %v5126 = vrcp.pop %v5110
          %v5127 = vrcp.pop %v5111
          %v5128 = vrcp.pop %v5112
          %v5129 = vrcp.pop %v5113
          %v5130 = vrcp.pop %v5114
          %v5131 = vrcp.pop %v5115
          %v5132 = vmul.f32 %v5036, %v5116
          %v5133 = vmul.f32 %v5037, %v5117
          %v5134 = vmul.f32 %v5038, %v5118
          %v5135 = vmul.f32 %v5039, %v5119
          %v5136 = vmul.f32 %v5040, %v5120
          %v5137 = vmul.f32 %v5041, %v5121
          %v5138 = vmul.f32 %v5042, %v5122
          %v5139 = vmul.f32 %v5043, %v5123
          %v5140 = vmul.f32 %v5044, %v5124
          %v5141 = vmul.f32 %v5045, %v5125
          %v5142 = vmul.f32 %v5046, %v5126
          %v5143 = vmul.f32 %v5047, %v5127
          %v5144 = vmul.f32 %v5048, %v5128
          %v5145 = vmul.f32 %v5049, %v5129
          %v5146 = vmul.f32 %v5050, %v5130
          %v5147 = vmul.f32 %v5051, %v5131
          %5148 = vrot.lane.b32.xlu0 %v950, 96
          %v5149 = vpop.permute.xlu0 %5148
          %5150 = vrot.lane.b32.xlu0 %v951, 96
          %v5151 = vpop.permute.xlu0 %5150
          %5152 = vrot.lane.b32.xlu0 %v952, 96
          %v5153 = vpop.permute.xlu0 %5152
          %5154 = vrot.lane.b32.xlu0 %v953, 96
          %v5155 = vpop.permute.xlu0 %5154
          %5156 = vrot.lane.b32.xlu0 %v954, 96
          %v5157 = vpop.permute.xlu0 %5156
          %5158 = vrot.lane.b32.xlu0 %v955, 96
          %v5159 = vpop.permute.xlu0 %5158
          %5160 = vrot.lane.b32.xlu0 %v956, 96
          %v5161 = vpop.permute.xlu0 %5160
          %5162 = vrot.lane.b32.xlu0 %v957, 96
          %v5163 = vpop.permute.xlu0 %5162
          %v5173 = vsel %vm401, %v5132, 0
          %v5176 = vsel %vm401, %v5133, 0
          %v5179 = vsel %vm401, %v5134, 0
          %v5182 = vsel %vm401, %v5135, 0
          %v5185 = vsel %vm401, %v5136, 0
          %v5188 = vsel %vm401, %v5137, 0
          %v5191 = vsel %vm401, %v5138, 0
          %v5194 = vsel %vm401, %v5139, 0
          %5196 = vmatprep.subr.mxu0 0.0
          %5197 = vmatpush1.msra.mxu0 %v5149
          %5198 = vmatprep.subr.mxu0 0.0
          %5199 = vmatpush1.msra.mxu0 %v5151
          %5200 = vmatprep.subr.mxu0 0.0
          %5201 = vmatpush1.msra.mxu0 %v5153
          %5202 = vmatprep.subr.mxu0 0.0
          %5203 = vmatpush1.msra.mxu0 %v5155
          %5204 = vmatprep.subr.mxu0 0.0
          %5205 = vmatpush1.msra.mxu0 %v5157
          %5206 = vmatprep.subr.mxu0 0.0
          %5207 = vmatpush1.msra.mxu0 %v5159
          %5208 = vmatprep.subr.mxu0 0.0
          %5209 = vmatpush1.msra.mxu0 %v5161
          %5210 = vmatprep.subr.mxu0 0.0
          %5211 = vmatpush1.msra.mxu0 %v5163
          %5212 = vmatprep.subr.mxu0 0.0
          %5213 = vmatpush1.msra.mxu0 0.0
          %5214 = vmatprep.subr.mxu0 0.0
          %5215 = vmatpush1.msra.mxu0 0.0
          %5216 = vmatprep.subr.mxu0 0.0
          %5217 = vmatpush1.msra.mxu0 0.0
          %5218 = vmatprep.subr.mxu0 0.0
          %5219 = vmatpush1.msra.mxu0 0.0
          %5220 = vmatprep.subr.mxu0 0.0
          %5221 = vmatpush1.msra.mxu0 0.0
          %5222 = vmatprep.subr.mxu0 0.0
          %5223 = vmatpush1.msra.mxu0 0.0
          %5224 = vmatprep.subr.mxu0 0.0
          %5225 = vmatpush1.msra.mxu0 0.0
          %5226 = vmatprep.subr.mxu0 0.0
          %5227 = vmatpush1.msra.mxu0 0.0
          %5228 = vmatprep.subr.mxu0 0.0
          %5229 = vmatpush1.msra.mxu0 0.0
          %5230 = vmatprep.subr.mxu0 0.0
          %5231 = vmatpush1.msra.mxu0 0.0
          %5232 = vmatprep.subr.mxu0 0.0
          %5233 = vmatpush1.msra.mxu0 0.0
          %5234 = vmatprep.subr.mxu0 0.0
          %5235 = vmatpush1.msra.mxu0 0.0
          %5236 = vmatprep.subr.mxu0 0.0
          %5237 = vmatpush1.msra.mxu0 0.0
          %5238 = vmatprep.subr.mxu0 0.0
          %5239 = vmatpush1.msra.mxu0 0.0
          %5240 = vmatprep.subr.mxu0 0.0
          %5241 = vmatpush1.msra.mxu0 0.0
          %5242 = vmatprep.subr.mxu0 0.0
          %5243 = vmatpush1.msra.mxu0 0.0
          %5244 = vmatprep.subr.mxu0 0.0
          %5245 = vmatpush1.msra.mxu0 0.0
          %5246 = vmatprep.subr.mxu0 0.0
          %5247 = vmatpush1.msra.mxu0 0.0
          %5248 = vmatprep.subr.mxu0 0.0
          %5249 = vmatpush1.msra.mxu0 0.0
          %5250 = vmatprep.subr.mxu0 0.0
          %5251 = vmatpush1.msra.mxu0 0.0
          %5252 = vmatprep.subr.mxu0 0.0
          %5253 = vmatpush1.msra.mxu0 0.0
          %5254 = vmatprep.subr.mxu0 0.0
          %5255 = vmatpush1.msra.mxu0 0.0
          %5256 = vmatprep.subr.mxu0 0.0
          %5257 = vmatpush1.msra.mxu0 0.0
          %5258 = vmatprep.subr.mxu0 0.0
          %5259 = vmatpush1.msra.mxu0 0.0
          %5260 = vmatprep.mubr.f32.mxu0 0.0
          %5261 = vmatmul.mubr.f32.gmra.mrb[0].mxu0 %v5173
          %v5262 = vpop.f32.mrb[0].mxu0
          %v5263 = vadd.f32 0.0, %v5262
          %v5264 = vpop.f32.mrb[0].mxu0
          %5265 = vmatprep.mubr.f32.mxu0 0.0
          %5266 = vmatmul.mubr.f32.gmra.mrb[0].mxu0 %v5176
          %v5267 = vpop.f32.mrb[0].mxu0
          %v5268 = vadd.f32 0.0, %v5267
          %v5269 = vpop.f32.mrb[0].mxu0
          %5270 = vmatprep.mubr.f32.mxu0 0.0
          %5271 = vmatmul.mubr.f32.gmra.mrb[0].mxu0 %v5179
          %v5272 = vpop.f32.mrb[0].mxu0
          %v5273 = vadd.f32 0.0, %v5272
          %v5274 = vpop.f32.mrb[0].mxu0
          %5275 = vmatprep.mubr.f32.mxu0 0.0
          %5276 = vmatmul.mubr.f32.gmra.mrb[0].mxu0 %v5182
          %v5277 = vpop.f32.mrb[0].mxu0
          %v5278 = vadd.f32 0.0, %v5277
          %v5279 = vpop.f32.mrb[0].mxu0
          %5280 = vmatprep.mubr.f32.mxu0 0.0
          %5281 = vmatmul.mubr.f32.gmra.mrb[0].mxu0 %v5185
          %v5282 = vpop.f32.mrb[0].mxu0
          %v5283 = vadd.f32 0.0, %v5282
          %v5284 = vpop.f32.mrb[0].mxu0
          %5285 = vmatprep.mubr.f32.mxu0 0.0
          %5286 = vmatmul.mubr.f32.gmra.mrb[0].mxu0 %v5188
          %v5287 = vpop.f32.mrb[0].mxu0
          %v5288 = vadd.f32 0.0, %v5287
          %v5289 = vpop.f32.mrb[0].mxu0
          %5290 = vmatprep.mubr.f32.mxu0 0.0
          %5291 = vmatmul.mubr.f32.gmra.mrb[0].mxu0 %v5191
          %v5292 = vpop.f32.mrb[0].mxu0
          %v5293 = vadd.f32 0.0, %v5292
          %v5294 = vpop.f32.mrb[0].mxu0
          %5295 = vmatprep.mubr.f32.mxu0 0.0
          %5296 = vmatmul.mubr.f32.gmra.mrb[0].mxu0 %v5194
          %v5297 = vpop.f32.mrb[0].mxu0
          %v5298 = vadd.f32 0.0, %v5297
          %v5299 = vpop.f32.mrb[0].mxu0
          %5300 = vdwg.mxu0
          %5301 = vrot.lane.b32.xlu0 %v958, 96
          %v5302 = vpop.permute.xlu0 %5301
          %5303 = vrot.lane.b32.xlu0 %v959, 96
          %v5304 = vpop.permute.xlu0 %5303
          %5305 = vrot.lane.b32.xlu0 %v960, 96
          %v5306 = vpop.permute.xlu0 %5305
          %5307 = vrot.lane.b32.xlu0 %v961, 96
          %v5308 = vpop.permute.xlu0 %5307
          %5309 = vrot.lane.b32.xlu0 %v962, 96
          %v5310 = vpop.permute.xlu0 %5309
          %5311 = vrot.lane.b32.xlu0 %v963, 96
          %v5312 = vpop.permute.xlu0 %5311
          %5313 = vrot.lane.b32.xlu0 %v964, 96
          %v5314 = vpop.permute.xlu0 %5313
          %5315 = vrot.lane.b32.xlu0 %v965, 96
          %v5316 = vpop.permute.xlu0 %5315
          %v5326 = vsel %vm401, %v5140, 0
          %v5329 = vsel %vm401, %v5141, 0
          %v5332 = vsel %vm401, %v5142, 0
          %v5335 = vsel %vm401, %v5143, 0
          %v5338 = vsel %vm401, %v5144, 0
          %v5341 = vsel %vm401, %v5145, 0
          %v5344 = vsel %vm401, %v5146, 0
          %v5347 = vsel %vm401, %v5147, 0
          %5349 = vmatprep.subr.mxu0 0.0
          %5350 = vmatpush1.msra.mxu0 %v5302
          %5351 = vmatprep.subr.mxu0 0.0
          %5352 = vmatpush1.msra.mxu0 %v5304
          %5353 = vmatprep.subr.mxu0 0.0
          %5354 = vmatpush1.msra.mxu0 %v5306
          %5355 = vmatprep.subr.mxu0 0.0
          %5356 = vmatpush1.msra.mxu0 %v5308
          %5357 = vmatprep.subr.mxu0 0.0
          %5358 = vmatpush1.msra.mxu0 %v5310
          %5359 = vmatprep.subr.mxu0 0.0
          %5360 = vmatpush1.msra.mxu0 %v5312
          %5361 = vmatprep.subr.mxu0 0.0
          %5362 = vmatpush1.msra.mxu0 %v5314
          %5363 = vmatprep.subr.mxu0 0.0
          %5364 = vmatpush1.msra.mxu0 %v5316
          %5365 = vmatprep.subr.mxu0 0.0
          %5366 = vmatpush1.msra.mxu0 0.0
          %5367 = vmatprep.subr.mxu0 0.0
          %5368 = vmatpush1.msra.mxu0 0.0
          %5369 = vmatprep.subr.mxu0 0.0
          %5370 = vmatpush1.msra.mxu0 0.0
          %5371 = vmatprep.subr.mxu0 0.0
          %5372 = vmatpush1.msra.mxu0 0.0
          %5373 = vmatprep.subr.mxu0 0.0
          %5374 = vmatpush1.msra.mxu0 0.0
          %5375 = vmatprep.subr.mxu0 0.0
          %5376 = vmatpush1.msra.mxu0 0.0
          %5377 = vmatprep.subr.mxu0 0.0
          %5378 = vmatpush1.msra.mxu0 0.0
          %5379 = vmatprep.subr.mxu0 0.0
          %5380 = vmatpush1.msra.mxu0 0.0
          %5381 = vmatprep.subr.mxu0 0.0
          %5382 = vmatpush1.msra.mxu0 0.0
          %5383 = vmatprep.subr.mxu0 0.0
          %5384 = vmatpush1.msra.mxu0 0.0
          %5385 = vmatprep.subr.mxu0 0.0
          %5386 = vmatpush1.msra.mxu0 0.0
          %5387 = vmatprep.subr.mxu0 0.0
          %5388 = vmatpush1.msra.mxu0 0.0
          %5389 = vmatprep.subr.mxu0 0.0
          %5390 = vmatpush1.msra.mxu0 0.0
          %5391 = vmatprep.subr.mxu0 0.0
          %5392 = vmatpush1.msra.mxu0 0.0
          %5393 = vmatprep.subr.mxu0 0.0
          %5394 = vmatpush1.msra.mxu0 0.0
          %5395 = vmatprep.subr.mxu0 0.0
          %5396 = vmatpush1.msra.mxu0 0.0
          %5397 = vmatprep.subr.mxu0 0.0
          %5398 = vmatpush1.msra.mxu0 0.0
          %5399 = vmatprep.subr.mxu0 0.0
          %5400 = vmatpush1.msra.mxu0 0.0
          %5401 = vmatprep.subr.mxu0 0.0
          %5402 = vmatpush1.msra.mxu0 0.0
          %5403 = vmatprep.subr.mxu0 0.0
          %5404 = vmatpush1.msra.mxu0 0.0
          %5405 = vmatprep.subr.mxu0 0.0
          %5406 = vmatpush1.msra.mxu0 0.0
          %5407 = vmatprep.subr.mxu0 0.0
          %5408 = vmatpush1.msra.mxu0 0.0
          %5409 = vmatprep.subr.mxu0 0.0
          %5410 = vmatpush1.msra.mxu0 0.0
          %5411 = vmatprep.subr.mxu0 0.0
          %5412 = vmatpush1.msra.mxu0 0.0
          %5413 = vmatprep.mubr.f32.mxu0 0.0
          %5414 = vmatmul.mubr.f32.gmra.mrb[0].mxu0 %v5326
          %v5415 = vpop.f32.mrb[0].mxu0
          %v5416 = vadd.f32 0.0, %v5415
          %v5417 = vpop.f32.mrb[0].mxu0
          %5418 = vmatprep.mubr.f32.mxu0 0.0
          %5419 = vmatmul.mubr.f32.gmra.mrb[0].mxu0 %v5329
          %v5420 = vpop.f32.mrb[0].mxu0
          %v5421 = vadd.f32 0.0, %v5420
          %v5422 = vpop.f32.mrb[0].mxu0
          %5423 = vmatprep.mubr.f32.mxu0 0.0
          %5424 = vmatmul.mubr.f32.gmra.mrb[0].mxu0 %v5332
          %v5425 = vpop.f32.mrb[0].mxu0
          %v5426 = vadd.f32 0.0, %v5425
          %v5427 = vpop.f32.mrb[0].mxu0
          %5428 = vmatprep.mubr.f32.mxu0 0.0
          %5429 = vmatmul.mubr.f32.gmra.mrb[0].mxu0 %v5335
          %v5430 = vpop.f32.mrb[0].mxu0
          %v5431 = vadd.f32 0.0, %v5430
          %v5432 = vpop.f32.mrb[0].mxu0
          %5433 = vmatprep.mubr.f32.mxu0 0.0
          %5434 = vmatmul.mubr.f32.gmra.mrb[0].mxu0 %v5338
          %v5435 = vpop.f32.mrb[0].mxu0
          %v5436 = vadd.f32 0.0, %v5435
          %v5437 = vpop.f32.mrb[0].mxu0
          %5438 = vmatprep.mubr.f32.mxu0 0.0
          %5439 = vmatmul.mubr.f32.gmra.mrb[0].mxu0 %v5341
          %v5440 = vpop.f32.mrb[0].mxu0
          %v5441 = vadd.f32 0.0, %v5440
          %v5442 = vpop.f32.mrb[0].mxu0
          %5443 = vmatprep.mubr.f32.mxu0 0.0
          %5444 = vmatmul.mubr.f32.gmra.mrb[0].mxu0 %v5344
          %v5445 = vpop.f32.mrb[0].mxu0
          %v5446 = vadd.f32 0.0, %v5445
          %v5447 = vpop.f32.mrb[0].mxu0
          %5448 = vmatprep.mubr.f32.mxu0 0.0
          %5449 = vmatmul.mubr.f32.gmra.mrb[0].mxu0 %v5347
          %v5450 = vpop.f32.mrb[0].mxu0
          %v5451 = vadd.f32 0.0, %v5450
          %v5452 = vpop.f32.mrb[0].mxu0
          %5453 = vdwg.mxu0
          %5470 = vrot.lane.b32.xlu0 %v5263, 32
          %v5471 = vpop.permute.xlu0 %5470
          %5472 = vrot.lane.b32.xlu0 %v5268, 32
          %v5473 = vpop.permute.xlu0 %5472
          %5474 = vrot.lane.b32.xlu0 %v5273, 32
          %v5475 = vpop.permute.xlu0 %5474
          %5476 = vrot.lane.b32.xlu0 %v5278, 32
          %v5477 = vpop.permute.xlu0 %5476
          %5478 = vrot.lane.b32.xlu0 %v5283, 32
          %v5479 = vpop.permute.xlu0 %5478
          %5480 = vrot.lane.b32.xlu0 %v5288, 32
          %v5481 = vpop.permute.xlu0 %5480
          %5482 = vrot.lane.b32.xlu0 %v5293, 32
          %v5483 = vpop.permute.xlu0 %5482
          %5484 = vrot.lane.b32.xlu0 %v5298, 32
          %v5485 = vpop.permute.xlu0 %5484
          %5486 = vrot.lane.b32.xlu0 %v5416, 32
          %v5487 = vpop.permute.xlu0 %5486
          %5488 = vrot.lane.b32.xlu0 %v5421, 32
          %v5489 = vpop.permute.xlu0 %5488
          %5490 = vrot.lane.b32.xlu0 %v5426, 32
          %v5491 = vpop.permute.xlu0 %5490
          %5492 = vrot.lane.b32.xlu0 %v5431, 32
          %v5493 = vpop.permute.xlu0 %5492
          %5494 = vrot.lane.b32.xlu0 %v5436, 32
          %v5495 = vpop.permute.xlu0 %5494
          %5496 = vrot.lane.b32.xlu0 %v5441, 32
          %v5497 = vpop.permute.xlu0 %5496
          %5498 = vrot.lane.b32.xlu0 %v5446, 32
          %v5499 = vpop.permute.xlu0 %5498
          %5500 = vrot.lane.b32.xlu0 %v5451, 32
          %v5501 = vpop.permute.xlu0 %5500
          %vm5518 = vcmask 326912
          %5519 = vst.msk [vmem:[#allocation3] sm:$0xff] %vm5518, %v5471
          %5520 = vst.msk [vmem:[#allocation3 + $0x8] sm:$0xff] %vm5518, %v5473
          %5521 = vst.msk [vmem:[#allocation3 + $0x10] sm:$0xff] %vm5518, %v5475
          %5522 = vst.msk [vmem:[#allocation3 + $0x18] sm:$0xff] %vm5518, %v5477
          %5523 = vst.msk [vmem:[#allocation3 + $0x20] sm:$0xff] %vm5518, %v5479
          %5524 = vst.msk [vmem:[#allocation3 + $0x28] sm:$0xff] %vm5518, %v5481
          %5525 = vst.msk [vmem:[#allocation3 + $0x30] sm:$0xff] %vm5518, %v5483
          %5526 = vst.msk [vmem:[#allocation3 + $0x38] sm:$0xff] %vm5518, %v5485
          %5527 = vst.msk [vmem:[#allocation3 + $0x40] sm:$0xff] %vm5518, %v5487
          %5528 = vst.msk [vmem:[#allocation3 + $0x48] sm:$0xff] %vm5518, %v5489
          %5529 = vst.msk [vmem:[#allocation3 + $0x50] sm:$0xff] %vm5518, %v5491
          %5530 = vst.msk [vmem:[#allocation3 + $0x58] sm:$0xff] %vm5518, %v5493
          %5531 = vst.msk [vmem:[#allocation3 + $0x60] sm:$0xff] %vm5518, %v5495
          %5532 = vst.msk [vmem:[#allocation3 + $0x68] sm:$0xff] %vm5518, %v5497
          %5533 = vst.msk [vmem:[#allocation3 + $0x70] sm:$0xff] %vm5518, %v5499
          %5534 = vst.msk [vmem:[#allocation3 + $0x78] sm:$0xff] %vm5518, %v5501
          %5535 = vrot.lane.b32.xlu0 %v906, 88
          %v5536 = vpop.permute.xlu0 %5535
          %5537 = vrot.lane.b32.xlu0 %v907, 88
          %v5538 = vpop.permute.xlu0 %5537
          %5539 = vrot.lane.b32.xlu0 %v908, 88
          %v5540 = vpop.permute.xlu0 %5539
          %5541 = vrot.lane.b32.xlu0 %v909, 88
          %v5542 = vpop.permute.xlu0 %5541
          %5543 = vrot.lane.b32.xlu0 %v910, 88
          %v5544 = vpop.permute.xlu0 %5543
          %5545 = vrot.lane.b32.xlu0 %v911, 88
          %v5546 = vpop.permute.xlu0 %5545
          %5547 = vrot.lane.b32.xlu0 %v912, 88
          %v5548 = vpop.permute.xlu0 %5547
          %5549 = vrot.lane.b32.xlu0 %v913, 88
          %v5550 = vpop.permute.xlu0 %5549
          %5551 = vrot.lane.b32.xlu0 %v930, 24
          %v5552 = vpop.permute.xlu0 %5551
          %5553 = vrot.lane.b32.xlu0 %v931, 24
          %v5554 = vpop.permute.xlu0 %5553
          %5555 = vrot.lane.b32.xlu0 %v932, 24
          %v5556 = vpop.permute.xlu0 %5555
          %5557 = vrot.lane.b32.xlu0 %v933, 24
          %v5558 = vpop.permute.xlu0 %5557
          %5559 = vrot.lane.b32.xlu0 %v934, 24
          %v5560 = vpop.permute.xlu0 %5559
          %5561 = vrot.lane.b32.xlu0 %v935, 24
          %v5562 = vpop.permute.xlu0 %5561
          %5563 = vrot.lane.b32.xlu0 %v936, 24
          %v5564 = vpop.permute.xlu0 %5563
          %5565 = vrot.lane.b32.xlu0 %v937, 24
          %v5566 = vpop.permute.xlu0 %5565
          %v5567 = vsel %vm990, %v5536, 0
          %v5569 = vsel %vm990, %v5538, 0
          %v5571 = vsel %vm990, %v5540, 0
          %v5573 = vsel %vm990, %v5542, 0
          %v5575 = vsel %vm990, %v5544, 0
          %v5577 = vsel %vm990, %v5546, 0
          %v5579 = vsel %vm990, %v5548, 0
          %v5581 = vsel %vm990, %v5550, 0
          %v5583 = vsel %vm990, %v5552, 0
          %v5585 = vsel %vm990, %v5554, 0
          %v5587 = vsel %vm990, %v5556, 0
          %v5589 = vsel %vm990, %v5558, 0
          %v5591 = vsel %vm990, %v5560, 0
          %v5593 = vsel %vm990, %v5562, 0
          %v5595 = vsel %vm990, %v5564, 0
          %v5597 = vsel %vm990, %v5566, 0
          %5599 = vmatprep.subr.mxu0 0.0
          %5600 = vmatpush1.xpose.msra.mxu0 %v5583
          %5601 = vmatprep.subr.mxu0 0.0
          %5602 = vmatpush1.xpose.msra.mxu0 %v5585
          %5603 = vmatprep.subr.mxu0 0.0
          %5604 = vmatpush1.xpose.msra.mxu0 %v5587
          %5605 = vmatprep.subr.mxu0 0.0
          %5606 = vmatpush1.xpose.msra.mxu0 %v5589
          %5607 = vmatprep.subr.mxu0 0.0
          %5608 = vmatpush1.xpose.msra.mxu0 %v5591
          %5609 = vmatprep.subr.mxu0 0.0
          %5610 = vmatpush1.xpose.msra.mxu0 %v5593
          %5611 = vmatprep.subr.mxu0 0.0
          %5612 = vmatpush1.xpose.msra.mxu0 %v5595
          %5613 = vmatprep.subr.mxu0 0.0
          %5614 = vmatpush1.xpose.msra.mxu0 %v5597
          %5615 = vmatprep.subr.mxu0 0.0
          %5616 = vmatpush1.xpose.msra.mxu0 0.0
          %5617 = vmatprep.subr.mxu0 0.0
          %5618 = vmatpush1.xpose.msra.mxu0 0.0
          %5619 = vmatprep.subr.mxu0 0.0
          %5620 = vmatpush1.xpose.msra.mxu0 0.0
          %5621 = vmatprep.subr.mxu0 0.0
          %5622 = vmatpush1.xpose.msra.mxu0 0.0
          %5623 = vmatprep.subr.mxu0 0.0
          %5624 = vmatpush1.xpose.msra.mxu0 0.0
          %5625 = vmatprep.subr.mxu0 0.0
          %5626 = vmatpush1.xpose.msra.mxu0 0.0
          %5627 = vmatprep.subr.mxu0 0.0
          %5628 = vmatpush1.xpose.msra.mxu0 0.0
          %5629 = vmatprep.subr.mxu0 0.0
          %5630 = vmatpush1.xpose.msra.mxu0 0.0
          %5631 = vmatprep.subr.mxu0 0.0
          %5632 = vmatpush1.xpose.msra.mxu0 0.0
          %5633 = vmatprep.subr.mxu0 0.0
          %5634 = vmatpush1.xpose.msra.mxu0 0.0
          %5635 = vmatprep.subr.mxu0 0.0
          %5636 = vmatpush1.xpose.msra.mxu0 0.0
          %5637 = vmatprep.subr.mxu0 0.0
          %5638 = vmatpush1.xpose.msra.mxu0 0.0
          %5639 = vmatprep.subr.mxu0 0.0
          %5640 = vmatpush1.xpose.msra.mxu0 0.0
          %5641 = vmatprep.subr.mxu0 0.0
          %5642 = vmatpush1.xpose.msra.mxu0 0.0
          %5643 = vmatprep.subr.mxu0 0.0
          %5644 = vmatpush1.xpose.msra.mxu0 0.0
          %5645 = vmatprep.subr.mxu0 0.0
          %5646 = vmatpush1.xpose.msra.mxu0 0.0
          %5647 = vmatprep.subr.mxu0 0.0
          %5648 = vmatpush1.xpose.msra.mxu0 0.0
          %5649 = vmatprep.subr.mxu0 0.0
          %5650 = vmatpush1.xpose.msra.mxu0 0.0
          %5651 = vmatprep.subr.mxu0 0.0
          %5652 = vmatpush1.xpose.msra.mxu0 0.0
          %5653 = vmatprep.subr.mxu0 0.0
          %5654 = vmatpush1.xpose.msra.mxu0 0.0
          %5655 = vmatprep.subr.mxu0 0.0
          %5656 = vmatpush1.xpose.msra.mxu0 0.0
          %5657 = vmatprep.subr.mxu0 0.0
          %5658 = vmatpush1.xpose.msra.mxu0 0.0
          %5659 = vmatprep.subr.mxu0 0.0
          %5660 = vmatpush1.xpose.msra.mxu0 0.0
          %5661 = vmatprep.subr.mxu0 0.0
          %5662 = vmatpush1.xpose.msra.mxu0 0.0
          %5663 = vmatprep.mubr.f32.mxu0 0.0
          %5664 = vmatmul.mubr.f32.gmra.mrb[0].mxu0 %v5567
          %v5665 = vpop.f32.mrb[0].mxu0
          %v5666 = vadd.f32 0.0, %v5665
          %v5667 = vpop.f32.mrb[0].mxu0
          %5668 = vmatprep.mubr.f32.mxu0 0.0
          %5669 = vmatmul.mubr.f32.gmra.mrb[0].mxu0 %v5569
          %v5670 = vpop.f32.mrb[0].mxu0
          %v5671 = vadd.f32 0.0, %v5670
          %v5672 = vpop.f32.mrb[0].mxu0
          %5673 = vmatprep.mubr.f32.mxu0 0.0
          %5674 = vmatmul.mubr.f32.gmra.mrb[0].mxu0 %v5571
          %v5675 = vpop.f32.mrb[0].mxu0
          %v5676 = vadd.f32 0.0, %v5675
          %v5677 = vpop.f32.mrb[0].mxu0
          %5678 = vmatprep.mubr.f32.mxu0 0.0
          %5679 = vmatmul.mubr.f32.gmra.mrb[0].mxu0 %v5573
          %v5680 = vpop.f32.mrb[0].mxu0
          %v5681 = vadd.f32 0.0, %v5680
          %v5682 = vpop.f32.mrb[0].mxu0
          %5683 = vmatprep.mubr.f32.mxu0 0.0
          %5684 = vmatmul.mubr.f32.gmra.mrb[0].mxu0 %v5575
          %v5685 = vpop.f32.mrb[0].mxu0
          %v5686 = vadd.f32 0.0, %v5685
          %v5687 = vpop.f32.mrb[0].mxu0
          %5688 = vmatprep.mubr.f32.mxu0 0.0
          %5689 = vmatmul.mubr.f32.gmra.mrb[0].mxu0 %v5577
          %v5690 = vpop.f32.mrb[0].mxu0
          %v5691 = vadd.f32 0.0, %v5690
          %v5692 = vpop.f32.mrb[0].mxu0
          %5693 = vmatprep.mubr.f32.mxu0 0.0
          %5694 = vmatmul.mubr.f32.gmra.mrb[0].mxu0 %v5579
          %v5695 = vpop.f32.mrb[0].mxu0
          %v5696 = vadd.f32 0.0, %v5695
          %v5697 = vpop.f32.mrb[0].mxu0
          %5698 = vmatprep.mubr.f32.mxu0 0.0
          %5699 = vmatmul.mubr.f32.gmra.mrb[0].mxu0 %v5581
          %v5700 = vpop.f32.mrb[0].mxu0
          %v5701 = vadd.f32 0.0, %v5700
          %v5702 = vpop.f32.mrb[0].mxu0
          %5703 = vdwg.mxu0
          %5704 = vrot.lane.b32.xlu0 %v914, 88
          %v5705 = vpop.permute.xlu0 %5704
          %5706 = vrot.lane.b32.xlu0 %v915, 88
          %v5707 = vpop.permute.xlu0 %5706
          %5708 = vrot.lane.b32.xlu0 %v916, 88
          %v5709 = vpop.permute.xlu0 %5708
          %5710 = vrot.lane.b32.xlu0 %v917, 88
          %v5711 = vpop.permute.xlu0 %5710
          %5712 = vrot.lane.b32.xlu0 %v918, 88
          %v5713 = vpop.permute.xlu0 %5712
          %5714 = vrot.lane.b32.xlu0 %v919, 88
          %v5715 = vpop.permute.xlu0 %5714
          %5716 = vrot.lane.b32.xlu0 %v920, 88
          %v5717 = vpop.permute.xlu0 %5716
          %5718 = vrot.lane.b32.xlu0 %v921, 88
          %v5719 = vpop.permute.xlu0 %5718
          %5720 = vrot.lane.b32.xlu0 %v938, 24
          %v5721 = vpop.permute.xlu0 %5720
          %5722 = vrot.lane.b32.xlu0 %v939, 24
          %v5723 = vpop.permute.xlu0 %5722
          %5724 = vrot.lane.b32.xlu0 %v940, 24
          %v5725 = vpop.permute.xlu0 %5724
          %5726 = vrot.lane.b32.xlu0 %v941, 24
          %v5727 = vpop.permute.xlu0 %5726
          %5728 = vrot.lane.b32.xlu0 %v942, 24
          %v5729 = vpop.permute.xlu0 %5728
          %5730 = vrot.lane.b32.xlu0 %v943, 24
          %v5731 = vpop.permute.xlu0 %5730
          %5732 = vrot.lane.b32.xlu0 %v944, 24
          %v5733 = vpop.permute.xlu0 %5732
          %5734 = vrot.lane.b32.xlu0 %v945, 24
          %v5735 = vpop.permute.xlu0 %5734
          %v5736 = vsel %vm990, %v5705, 0
          %v5738 = vsel %vm990, %v5707, 0
          %v5740 = vsel %vm990, %v5709, 0
          %v5742 = vsel %vm990, %v5711, 0
          %v5744 = vsel %vm990, %v5713, 0
          %v5746 = vsel %vm990, %v5715, 0
          %v5748 = vsel %vm990, %v5717, 0
          %v5750 = vsel %vm990, %v5719, 0
          %v5752 = vsel %vm990, %v5721, 0
          %v5754 = vsel %vm990, %v5723, 0
          %v5756 = vsel %vm990, %v5725, 0
          %v5758 = vsel %vm990, %v5727, 0
          %v5760 = vsel %vm990, %v5729, 0
          %v5762 = vsel %vm990, %v5731, 0
          %v5764 = vsel %vm990, %v5733, 0
          %v5766 = vsel %vm990, %v5735, 0
          %5768 = vmatprep.subr.mxu0 0.0
          %5769 = vmatpush1.xpose.msra.mxu0 %v5752
          %5770 = vmatprep.subr.mxu0 0.0
          %5771 = vmatpush1.xpose.msra.mxu0 %v5754
          %5772 = vmatprep.subr.mxu0 0.0
          %5773 = vmatpush1.xpose.msra.mxu0 %v5756
          %5774 = vmatprep.subr.mxu0 0.0
          %5775 = vmatpush1.xpose.msra.mxu0 %v5758
          %5776 = vmatprep.subr.mxu0 0.0
          %5777 = vmatpush1.xpose.msra.mxu0 %v5760
          %5778 = vmatprep.subr.mxu0 0.0
          %5779 = vmatpush1.xpose.msra.mxu0 %v5762
          %5780 = vmatprep.subr.mxu0 0.0
          %5781 = vmatpush1.xpose.msra.mxu0 %v5764
          %5782 = vmatprep.subr.mxu0 0.0
          %5783 = vmatpush1.xpose.msra.mxu0 %v5766
          %5784 = vmatprep.subr.mxu0 0.0
          %5785 = vmatpush1.xpose.msra.mxu0 0.0
          %5786 = vmatprep.subr.mxu0 0.0
          %5787 = vmatpush1.xpose.msra.mxu0 0.0
          %5788 = vmatprep.subr.mxu0 0.0
          %5789 = vmatpush1.xpose.msra.mxu0 0.0
          %5790 = vmatprep.subr.mxu0 0.0
          %5791 = vmatpush1.xpose.msra.mxu0 0.0
          %5792 = vmatprep.subr.mxu0 0.0
          %5793 = vmatpush1.xpose.msra.mxu0 0.0
          %5794 = vmatprep.subr.mxu0 0.0
          %5795 = vmatpush1.xpose.msra.mxu0 0.0
          %5796 = vmatprep.subr.mxu0 0.0
          %5797 = vmatpush1.xpose.msra.mxu0 0.0
          %5798 = vmatprep.subr.mxu0 0.0
          %5799 = vmatpush1.xpose.msra.mxu0 0.0
          %5800 = vmatprep.subr.mxu0 0.0
          %5801 = vmatpush1.xpose.msra.mxu0 0.0
          %5802 = vmatprep.subr.mxu0 0.0
          %5803 = vmatpush1.xpose.msra.mxu0 0.0
          %5804 = vmatprep.subr.mxu0 0.0
          %5805 = vmatpush1.xpose.msra.mxu0 0.0
          %5806 = vmatprep.subr.mxu0 0.0
          %5807 = vmatpush1.xpose.msra.mxu0 0.0
          %5808 = vmatprep.subr.mxu0 0.0
          %5809 = vmatpush1.xpose.msra.mxu0 0.0
          %5810 = vmatprep.subr.mxu0 0.0
          %5811 = vmatpush1.xpose.msra.mxu0 0.0
          %5812 = vmatprep.subr.mxu0 0.0
          %5813 = vmatpush1.xpose.msra.mxu0 0.0
          %5814 = vmatprep.subr.mxu0 0.0
          %5815 = vmatpush1.xpose.msra.mxu0 0.0
          %5816 = vmatprep.subr.mxu0 0.0
          %5817 = vmatpush1.xpose.msra.mxu0 0.0
          %5818 = vmatprep.subr.mxu0 0.0
          %5819 = vmatpush1.xpose.msra.mxu0 0.0
          %5820 = vmatprep.subr.mxu0 0.0
          %5821 = vmatpush1.xpose.msra.mxu0 0.0
          %5822 = vmatprep.subr.mxu0 0.0
          %5823 = vmatpush1.xpose.msra.mxu0 0.0
          %5824 = vmatprep.subr.mxu0 0.0
          %5825 = vmatpush1.xpose.msra.mxu0 0.0
          %5826 = vmatprep.subr.mxu0 0.0
          %5827 = vmatpush1.xpose.msra.mxu0 0.0
          %5828 = vmatprep.subr.mxu0 0.0
          %5829 = vmatpush1.xpose.msra.mxu0 0.0
          %5830 = vmatprep.subr.mxu0 0.0
          %5831 = vmatpush1.xpose.msra.mxu0 0.0
          %5832 = vmatprep.mubr.f32.mxu0 0.0
          %5833 = vmatmul.mubr.f32.gmra.mrb[0].mxu0 %v5736
          %v5834 = vpop.f32.mrb[0].mxu0
          %v5835 = vadd.f32 0.0, %v5834
          %v5836 = vpop.f32.mrb[0].mxu0
          %5837 = vmatprep.mubr.f32.mxu0 0.0
          %5838 = vmatmul.mubr.f32.gmra.mrb[0].mxu0 %v5738
          %v5839 = vpop.f32.mrb[0].mxu0
          %v5840 = vadd.f32 0.0, %v5839
          %v5841 = vpop.f32.mrb[0].mxu0
          %5842 = vmatprep.mubr.f32.mxu0 0.0
          %5843 = vmatmul.mubr.f32.gmra.mrb[0].mxu0 %v5740
          %v5844 = vpop.f32.mrb[0].mxu0
          %v5845 = vadd.f32 0.0, %v5844
          %v5846 = vpop.f32.mrb[0].mxu0
          %5847 = vmatprep.mubr.f32.mxu0 0.0
          %5848 = vmatmul.mubr.f32.gmra.mrb[0].mxu0 %v5742
          %v5849 = vpop.f32.mrb[0].mxu0
          %v5850 = vadd.f32 0.0, %v5849
          %v5851 = vpop.f32.mrb[0].mxu0
          %5852 = vmatprep.mubr.f32.mxu0 0.0
          %5853 = vmatmul.mubr.f32.gmra.mrb[0].mxu0 %v5744
          %v5854 = vpop.f32.mrb[0].mxu0
          %v5855 = vadd.f32 0.0, %v5854
          %v5856 = vpop.f32.mrb[0].mxu0
          %5857 = vmatprep.mubr.f32.mxu0 0.0
          %5858 = vmatmul.mubr.f32.gmra.mrb[0].mxu0 %v5746
          %v5859 = vpop.f32.mrb[0].mxu0
          %v5860 = vadd.f32 0.0, %v5859
          %v5861 = vpop.f32.mrb[0].mxu0
          %5862 = vmatprep.mubr.f32.mxu0 0.0
          %5863 = vmatmul.mubr.f32.gmra.mrb[0].mxu0 %v5748
          %v5864 = vpop.f32.mrb[0].mxu0
          %v5865 = vadd.f32 0.0, %v5864
          %v5866 = vpop.f32.mrb[0].mxu0
          %5867 = vmatprep.mubr.f32.mxu0 0.0
          %5868 = vmatmul.mubr.f32.gmra.mrb[0].mxu0 %v5750
          %v5869 = vpop.f32.mrb[0].mxu0
          %v5870 = vadd.f32 0.0, %v5869
          %v5871 = vpop.f32.mrb[0].mxu0
          %5872 = vdwg.mxu0
          %v5873 = vsel %vm401, %v5666, -inf
          %5874 = vmax.xlane.f32.xlu0 %v5873
          %v5875 = vpop.xlane.xlu0 %5874
          %v5876 = vsel %vm401, %v5671, -inf
          %5877 = vmax.xlane.f32.xlu0 %v5876
          %v5878 = vpop.xlane.xlu0 %5877
          %v5879 = vsel %vm401, %v5676, -inf
          %5880 = vmax.xlane.f32.xlu0 %v5879
          %v5881 = vpop.xlane.xlu0 %5880
          %v5882 = vsel %vm401, %v5681, -inf
          %5883 = vmax.xlane.f32.xlu0 %v5882
          %v5884 = vpop.xlane.xlu0 %5883
          %v5885 = vsel %vm401, %v5686, -inf
          %5886 = vmax.xlane.f32.xlu0 %v5885
          %v5887 = vpop.xlane.xlu0 %5886
          %v5888 = vsel %vm401, %v5691, -inf
          %5889 = vmax.xlane.f32.xlu0 %v5888
          %v5890 = vpop.xlane.xlu0 %5889
          %v5891 = vsel %vm401, %v5696, -inf
          %5892 = vmax.xlane.f32.xlu0 %v5891
          %v5893 = vpop.xlane.xlu0 %5892
          %v5894 = vsel %vm401, %v5701, -inf
          %5895 = vmax.xlane.f32.xlu0 %v5894
          %v5896 = vpop.xlane.xlu0 %5895
          %v5897 = vsel %vm401, %v5835, -inf
          %5898 = vmax.xlane.f32.xlu0 %v5897
          %v5899 = vpop.xlane.xlu0 %5898
          %v5900 = vsel %vm401, %v5840, -inf
          %5901 = vmax.xlane.f32.xlu0 %v5900
          %v5902 = vpop.xlane.xlu0 %5901
          %v5903 = vsel %vm401, %v5845, -inf
          %5904 = vmax.xlane.f32.xlu0 %v5903
          %v5905 = vpop.xlane.xlu0 %5904
          %v5906 = vsel %vm401, %v5850, -inf
          %5907 = vmax.xlane.f32.xlu0 %v5906
          %v5908 = vpop.xlane.xlu0 %5907
          %v5909 = vsel %vm401, %v5855, -inf
          %5910 = vmax.xlane.f32.xlu0 %v5909
          %v5911 = vpop.xlane.xlu0 %5910
          %v5912 = vsel %vm401, %v5860, -inf
          %5913 = vmax.xlane.f32.xlu0 %v5912
          %v5914 = vpop.xlane.xlu0 %5913
          %v5915 = vsel %vm401, %v5865, -inf
          %5916 = vmax.xlane.f32.xlu0 %v5915
          %v5917 = vpop.xlane.xlu0 %5916
          %v5918 = vsel %vm401, %v5870, -inf
          %5919 = vmax.xlane.f32.xlu0 %v5918
          %v5920 = vpop.xlane.xlu0 %5919
          %v5921 = vsub.f32 %v5666, %v5875
          %v5922 = vsub.f32 %v5671, %v5878
          %v5923 = vsub.f32 %v5676, %v5881
          %v5924 = vsub.f32 %v5681, %v5884
          %v5925 = vsub.f32 %v5686, %v5887
          %v5926 = vsub.f32 %v5691, %v5890
          %v5927 = vsub.f32 %v5696, %v5893
          %v5928 = vsub.f32 %v5701, %v5896
          %v5929 = vsub.f32 %v5835, %v5899
          %v5930 = vsub.f32 %v5840, %v5902
          %v5931 = vsub.f32 %v5845, %v5905
          %v5932 = vsub.f32 %v5850, %v5908
          %v5933 = vsub.f32 %v5855, %v5911
          %v5934 = vsub.f32 %v5860, %v5914
          %v5935 = vsub.f32 %v5865, %v5917
          %v5936 = vsub.f32 %v5870, %v5920
          %v5937 = vmul.f32 %v5921, 1.442695
          %v5938 = vpow.pop %v5937
          %v5939 = vmul.f32 %v5922, 1.442695
          %v5940 = vpow.pop %v5939
          %v5941 = vmul.f32 %v5923, 1.442695
          %v5942 = vpow.pop %v5941
          %v5943 = vmul.f32 %v5924, 1.442695
          %v5944 = vpow.pop %v5943
          %v5945 = vmul.f32 %v5925, 1.442695
          %v5946 = vpow.pop %v5945
          %v5947 = vmul.f32 %v5926, 1.442695
          %v5948 = vpow.pop %v5947
          %v5949 = vmul.f32 %v5927, 1.442695
          %v5950 = vpow.pop %v5949
          %v5951 = vmul.f32 %v5928, 1.442695
          %v5952 = vpow.pop %v5951
          %v5953 = vmul.f32 %v5929, 1.442695
          %v5954 = vpow.pop %v5953
          %v5955 = vmul.f32 %v5930, 1.442695
          %v5956 = vpow.pop %v5955
          %v5957 = vmul.f32 %v5931, 1.442695
          %v5958 = vpow.pop %v5957
          %v5959 = vmul.f32 %v5932, 1.442695
          %v5960 = vpow.pop %v5959
          %v5961 = vmul.f32 %v5933, 1.442695
          %v5962 = vpow.pop %v5961
          %v5963 = vmul.f32 %v5934, 1.442695
          %v5964 = vpow.pop %v5963
          %v5965 = vmul.f32 %v5935, 1.442695
          %v5966 = vpow.pop %v5965
          %v5967 = vmul.f32 %v5936, 1.442695
          %v5968 = vpow.pop %v5967
          %v5969 = vmul.f32 %v5938, %v425
          %v5970 = vmul.f32 %v5940, %v425
          %v5971 = vmul.f32 %v5942, %v425
          %v5972 = vmul.f32 %v5944, %v425
          %v5973 = vmul.f32 %v5946, %v425
          %v5974 = vmul.f32 %v5948, %v425
          %v5975 = vmul.f32 %v5950, %v425
          %v5976 = vmul.f32 %v5952, %v425
          %v5977 = vmul.f32 %v5954, %v429
          %v5978 = vmul.f32 %v5956, %v429
          %v5979 = vmul.f32 %v5958, %v429
          %v5980 = vmul.f32 %v5960, %v429
          %v5981 = vmul.f32 %v5962, %v429
          %v5982 = vmul.f32 %v5964, %v429
          %v5983 = vmul.f32 %v5966, %v429
          %v5984 = vmul.f32 %v5968, %v429
          %v5985 = vsel %vm401, %v5969, 0.0
          %5986 = vadd.xlane.f32.xlu0 %v5985
          %v5987 = vpop.xlane.xlu0 %5986
          %v5988 = vsel %vm401, %v5970, 0.0
          %5989 = vadd.xlane.f32.xlu0 %v5988
          %v5990 = vpop.xlane.xlu0 %5989
          %v5991 = vsel %vm401, %v5971, 0.0
          %5992 = vadd.xlane.f32.xlu0 %v5991
          %v5993 = vpop.xlane.xlu0 %5992
          %v5994 = vsel %vm401, %v5972, 0.0
          %5995 = vadd.xlane.f32.xlu0 %v5994
          %v5996 = vpop.xlane.xlu0 %5995
          %v5997 = vsel %vm401, %v5973, 0.0
          %5998 = vadd.xlane.f32.xlu0 %v5997
          %v5999 = vpop.xlane.xlu0 %5998
          %v6000 = vsel %vm401, %v5974, 0.0
          %6001 = vadd.xlane.f32.xlu0 %v6000
          %v6002 = vpop.xlane.xlu0 %6001
          %v6003 = vsel %vm401, %v5975, 0.0
          %6004 = vadd.xlane.f32.xlu0 %v6003
          %v6005 = vpop.xlane.xlu0 %6004
          %v6006 = vsel %vm401, %v5976, 0.0
          %6007 = vadd.xlane.f32.xlu0 %v6006
          %v6008 = vpop.xlane.xlu0 %6007
          %v6009 = vsel %vm401, %v5977, 0.0
          %6010 = vadd.xlane.f32.xlu0 %v6009
          %v6011 = vpop.xlane.xlu0 %6010
          %v6012 = vsel %vm401, %v5978, 0.0
          %6013 = vadd.xlane.f32.xlu0 %v6012
          %v6014 = vpop.xlane.xlu0 %6013
          %v6015 = vsel %vm401, %v5979, 0.0
          %6016 = vadd.xlane.f32.xlu0 %v6015
          %v6017 = vpop.xlane.xlu0 %6016
          %v6018 = vsel %vm401, %v5980, 0.0
          %6019 = vadd.xlane.f32.xlu0 %v6018
          %v6020 = vpop.xlane.xlu0 %6019
          %v6021 = vsel %vm401, %v5981, 0.0
          %6022 = vadd.xlane.f32.xlu0 %v6021
          %v6023 = vpop.xlane.xlu0 %6022
          %v6024 = vsel %vm401, %v5982, 0.0
          %6025 = vadd.xlane.f32.xlu0 %v6024
          %v6026 = vpop.xlane.xlu0 %6025
          %v6027 = vsel %vm401, %v5983, 0.0
          %6028 = vadd.xlane.f32.xlu0 %v6027
          %v6029 = vpop.xlane.xlu0 %6028
          %v6030 = vsel %vm401, %v5984, 0.0
          %6031 = vadd.xlane.f32.xlu0 %v6030
          %v6032 = vpop.xlane.xlu0 %6031
          %v6033 = vmax.f32 %v5987, 1e-30
          %v6034 = vmax.f32 %v5990, 1e-30
          %v6035 = vmax.f32 %v5993, 1e-30
          %v6036 = vmax.f32 %v5996, 1e-30
          %v6037 = vmax.f32 %v5999, 1e-30
          %v6038 = vmax.f32 %v6002, 1e-30
          %v6039 = vmax.f32 %v6005, 1e-30
          %v6040 = vmax.f32 %v6008, 1e-30
          %v6041 = vmax.f32 %v6011, 1e-30
          %v6042 = vmax.f32 %v6014, 1e-30
          %v6043 = vmax.f32 %v6017, 1e-30
          %v6044 = vmax.f32 %v6020, 1e-30
          %v6045 = vmax.f32 %v6023, 1e-30
          %v6046 = vmax.f32 %v6026, 1e-30
          %v6047 = vmax.f32 %v6029, 1e-30
          %v6048 = vmax.f32 %v6032, 1e-30
          %v6049 = vrcp.pop %v6033
          %v6050 = vrcp.pop %v6034
          %v6051 = vrcp.pop %v6035
          %v6052 = vrcp.pop %v6036
          %v6053 = vrcp.pop %v6037
          %v6054 = vrcp.pop %v6038
          %v6055 = vrcp.pop %v6039
          %v6056 = vrcp.pop %v6040
          %v6057 = vrcp.pop %v6041
          %v6058 = vrcp.pop %v6042
          %v6059 = vrcp.pop %v6043
          %v6060 = vrcp.pop %v6044
          %v6061 = vrcp.pop %v6045
          %v6062 = vrcp.pop %v6046
          %v6063 = vrcp.pop %v6047
          %v6064 = vrcp.pop %v6048
          %v6065 = vmul.f32 %v5969, %v6049
          %v6066 = vmul.f32 %v5970, %v6050
          %v6067 = vmul.f32 %v5971, %v6051
          %v6068 = vmul.f32 %v5972, %v6052
          %v6069 = vmul.f32 %v5973, %v6053
          %v6070 = vmul.f32 %v5974, %v6054
          %v6071 = vmul.f32 %v5975, %v6055
          %v6072 = vmul.f32 %v5976, %v6056
          %v6073 = vmul.f32 %v5977, %v6057
          %v6074 = vmul.f32 %v5978, %v6058
          %v6075 = vmul.f32 %v5979, %v6059
          %v6076 = vmul.f32 %v5980, %v6060
          %v6077 = vmul.f32 %v5981, %v6061
          %v6078 = vmul.f32 %v5982, %v6062
          %v6079 = vmul.f32 %v5983, %v6063
          %v6080 = vmul.f32 %v5984, %v6064
          %6081 = vrot.lane.b32.xlu0 %v950, 88
          %v6082 = vpop.permute.xlu0 %6081
          %6083 = vrot.lane.b32.xlu0 %v951, 88
          %v6084 = vpop.permute.xlu0 %6083
          %6085 = vrot.lane.b32.xlu0 %v952, 88
          %v6086 = vpop.permute.xlu0 %6085
          %6087 = vrot.lane.b32.xlu0 %v953, 88
          %v6088 = vpop.permute.xlu0 %6087
          %6089 = vrot.lane.b32.xlu0 %v954, 88
          %v6090 = vpop.permute.xlu0 %6089
          %6091 = vrot.lane.b32.xlu0 %v955, 88
          %v6092 = vpop.permute.xlu0 %6091
          %6093 = vrot.lane.b32.xlu0 %v956, 88
          %v6094 = vpop.permute.xlu0 %6093
          %6095 = vrot.lane.b32.xlu0 %v957, 88
          %v6096 = vpop.permute.xlu0 %6095
          %v6106 = vsel %vm401, %v6065, 0
          %v6109 = vsel %vm401, %v6066, 0
          %v6112 = vsel %vm401, %v6067, 0
          %v6115 = vsel %vm401, %v6068, 0
          %v6118 = vsel %vm401, %v6069, 0
          %v6121 = vsel %vm401, %v6070, 0
          %v6124 = vsel %vm401, %v6071, 0
          %v6127 = vsel %vm401, %v6072, 0
          %6129 = vmatprep.subr.mxu0 0.0
          %6130 = vmatpush1.msra.mxu0 %v6082
          %6131 = vmatprep.subr.mxu0 0.0
          %6132 = vmatpush1.msra.mxu0 %v6084
          %6133 = vmatprep.subr.mxu0 0.0
          %6134 = vmatpush1.msra.mxu0 %v6086
          %6135 = vmatprep.subr.mxu0 0.0
          %6136 = vmatpush1.msra.mxu0 %v6088
          %6137 = vmatprep.subr.mxu0 0.0
          %6138 = vmatpush1.msra.mxu0 %v6090
          %6139 = vmatprep.subr.mxu0 0.0
          %6140 = vmatpush1.msra.mxu0 %v6092
          %6141 = vmatprep.subr.mxu0 0.0
          %6142 = vmatpush1.msra.mxu0 %v6094
          %6143 = vmatprep.subr.mxu0 0.0
          %6144 = vmatpush1.msra.mxu0 %v6096
          %6145 = vmatprep.subr.mxu0 0.0
          %6146 = vmatpush1.msra.mxu0 0.0
          %6147 = vmatprep.subr.mxu0 0.0
          %6148 = vmatpush1.msra.mxu0 0.0
          %6149 = vmatprep.subr.mxu0 0.0
          %6150 = vmatpush1.msra.mxu0 0.0
          %6151 = vmatprep.subr.mxu0 0.0
          %6152 = vmatpush1.msra.mxu0 0.0
          %6153 = vmatprep.subr.mxu0 0.0
          %6154 = vmatpush1.msra.mxu0 0.0
          %6155 = vmatprep.subr.mxu0 0.0
          %6156 = vmatpush1.msra.mxu0 0.0
          %6157 = vmatprep.subr.mxu0 0.0
          %6158 = vmatpush1.msra.mxu0 0.0
          %6159 = vmatprep.subr.mxu0 0.0
          %6160 = vmatpush1.msra.mxu0 0.0
          %6161 = vmatprep.subr.mxu0 0.0
          %6162 = vmatpush1.msra.mxu0 0.0
          %6163 = vmatprep.subr.mxu0 0.0
          %6164 = vmatpush1.msra.mxu0 0.0
          %6165 = vmatprep.subr.mxu0 0.0
          %6166 = vmatpush1.msra.mxu0 0.0
          %6167 = vmatprep.subr.mxu0 0.0
          %6168 = vmatpush1.msra.mxu0 0.0
          %6169 = vmatprep.subr.mxu0 0.0
          %6170 = vmatpush1.msra.mxu0 0.0
          %6171 = vmatprep.subr.mxu0 0.0
          %6172 = vmatpush1.msra.mxu0 0.0
          %6173 = vmatprep.subr.mxu0 0.0
          %6174 = vmatpush1.msra.mxu0 0.0
          %6175 = vmatprep.subr.mxu0 0.0
          %6176 = vmatpush1.msra.mxu0 0.0
          %6177 = vmatprep.subr.mxu0 0.0
          %6178 = vmatpush1.msra.mxu0 0.0
          %6179 = vmatprep.subr.mxu0 0.0
          %6180 = vmatpush1.msra.mxu0 0.0
          %6181 = vmatprep.subr.mxu0 0.0
          %6182 = vmatpush1.msra.mxu0 0.0
          %6183 = vmatprep.subr.mxu0 0.0
          %6184 = vmatpush1.msra.mxu0 0.0
          %6185 = vmatprep.subr.mxu0 0.0
          %6186 = vmatpush1.msra.mxu0 0.0
          %6187 = vmatprep.subr.mxu0 0.0
          %6188 = vmatpush1.msra.mxu0 0.0
          %6189 = vmatprep.subr.mxu0 0.0
          %6190 = vmatpush1.msra.mxu0 0.0
          %6191 = vmatprep.subr.mxu0 0.0
          %6192 = vmatpush1.msra.mxu0 0.0
          %6193 = vmatprep.mubr.f32.mxu0 0.0
          %6194 = vmatmul.mubr.f32.gmra.mrb[0].mxu0 %v6106
          %v6195 = vpop.f32.mrb[0].mxu0
          %v6196 = vadd.f32 0.0, %v6195
          %v6197 = vpop.f32.mrb[0].mxu0
          %6198 = vmatprep.mubr.f32.mxu0 0.0
          %6199 = vmatmul.mubr.f32.gmra.mrb[0].mxu0 %v6109
          %v6200 = vpop.f32.mrb[0].mxu0
          %v6201 = vadd.f32 0.0, %v6200
          %v6202 = vpop.f32.mrb[0].mxu0
          %6203 = vmatprep.mubr.f32.mxu0 0.0
          %6204 = vmatmul.mubr.f32.gmra.mrb[0].mxu0 %v6112
          %v6205 = vpop.f32.mrb[0].mxu0
          %v6206 = vadd.f32 0.0, %v6205
          %v6207 = vpop.f32.mrb[0].mxu0
          %6208 = vmatprep.mubr.f32.mxu0 0.0
          %6209 = vmatmul.mubr.f32.gmra.mrb[0].mxu0 %v6115
          %v6210 = vpop.f32.mrb[0].mxu0
          %v6211 = vadd.f32 0.0, %v6210
          %v6212 = vpop.f32.mrb[0].mxu0
          %6213 = vmatprep.mubr.f32.mxu0 0.0
          %6214 = vmatmul.mubr.f32.gmra.mrb[0].mxu0 %v6118
          %v6215 = vpop.f32.mrb[0].mxu0
          %v6216 = vadd.f32 0.0, %v6215
          %v6217 = vpop.f32.mrb[0].mxu0
          %6218 = vmatprep.mubr.f32.mxu0 0.0
          %6219 = vmatmul.mubr.f32.gmra.mrb[0].mxu0 %v6121
          %v6220 = vpop.f32.mrb[0].mxu0
          %v6221 = vadd.f32 0.0, %v6220
          %v6222 = vpop.f32.mrb[0].mxu0
          %6223 = vmatprep.mubr.f32.mxu0 0.0
          %6224 = vmatmul.mubr.f32.gmra.mrb[0].mxu0 %v6124
          %v6225 = vpop.f32.mrb[0].mxu0
          %v6226 = vadd.f32 0.0, %v6225
          %v6227 = vpop.f32.mrb[0].mxu0
          %6228 = vmatprep.mubr.f32.mxu0 0.0
          %6229 = vmatmul.mubr.f32.gmra.mrb[0].mxu0 %v6127
          %v6230 = vpop.f32.mrb[0].mxu0
          %v6231 = vadd.f32 0.0, %v6230
          %v6232 = vpop.f32.mrb[0].mxu0
          %6233 = vdwg.mxu0
          %6234 = vrot.lane.b32.xlu0 %v958, 88
          %v6235 = vpop.permute.xlu0 %6234
          %6236 = vrot.lane.b32.xlu0 %v959, 88
          %v6237 = vpop.permute.xlu0 %6236
          %6238 = vrot.lane.b32.xlu0 %v960, 88
          %v6239 = vpop.permute.xlu0 %6238
          %6240 = vrot.lane.b32.xlu0 %v961, 88
          %v6241 = vpop.permute.xlu0 %6240
          %6242 = vrot.lane.b32.xlu0 %v962, 88
          %v6243 = vpop.permute.xlu0 %6242
          %6244 = vrot.lane.b32.xlu0 %v963, 88
          %v6245 = vpop.permute.xlu0 %6244
          %6246 = vrot.lane.b32.xlu0 %v964, 88
          %v6247 = vpop.permute.xlu0 %6246
          %6248 = vrot.lane.b32.xlu0 %v965, 88
          %v6249 = vpop.permute.xlu0 %6248
          %v6259 = vsel %vm401, %v6073, 0
          %v6262 = vsel %vm401, %v6074, 0
          %v6265 = vsel %vm401, %v6075, 0
          %v6268 = vsel %vm401, %v6076, 0
          %v6271 = vsel %vm401, %v6077, 0
          %v6274 = vsel %vm401, %v6078, 0
          %v6277 = vsel %vm401, %v6079, 0
          %v6280 = vsel %vm401, %v6080, 0
          %6282 = vmatprep.subr.mxu0 0.0
          %6283 = vmatpush1.msra.mxu0 %v6235
          %6284 = vmatprep.subr.mxu0 0.0
          %6285 = vmatpush1.msra.mxu0 %v6237
          %6286 = vmatprep.subr.mxu0 0.0
          %6287 = vmatpush1.msra.mxu0 %v6239
          %6288 = vmatprep.subr.mxu0 0.0
          %6289 = vmatpush1.msra.mxu0 %v6241
          %6290 = vmatprep.subr.mxu0 0.0
          %6291 = vmatpush1.msra.mxu0 %v6243
          %6292 = vmatprep.subr.mxu0 0.0
          %6293 = vmatpush1.msra.mxu0 %v6245
          %6294 = vmatprep.subr.mxu0 0.0
          %6295 = vmatpush1.msra.mxu0 %v6247
          %6296 = vmatprep.subr.mxu0 0.0
          %6297 = vmatpush1.msra.mxu0 %v6249
          %6298 = vmatprep.subr.mxu0 0.0
          %6299 = vmatpush1.msra.mxu0 0.0
          %6300 = vmatprep.subr.mxu0 0.0
          %6301 = vmatpush1.msra.mxu0 0.0
          %6302 = vmatprep.subr.mxu0 0.0
          %6303 = vmatpush1.msra.mxu0 0.0
          %6304 = vmatprep.subr.mxu0 0.0
          %6305 = vmatpush1.msra.mxu0 0.0
          %6306 = vmatprep.subr.mxu0 0.0
          %6307 = vmatpush1.msra.mxu0 0.0
          %6308 = vmatprep.subr.mxu0 0.0
          %6309 = vmatpush1.msra.mxu0 0.0
          %6310 = vmatprep.subr.mxu0 0.0
          %6311 = vmatpush1.msra.mxu0 0.0
          %6312 = vmatprep.subr.mxu0 0.0
          %6313 = vmatpush1.msra.mxu0 0.0
          %6314 = vmatprep.subr.mxu0 0.0
          %6315 = vmatpush1.msra.mxu0 0.0
          %6316 = vmatprep.subr.mxu0 0.0
          %6317 = vmatpush1.msra.mxu0 0.0
          %6318 = vmatprep.subr.mxu0 0.0
          %6319 = vmatpush1.msra.mxu0 0.0
          %6320 = vmatprep.subr.mxu0 0.0
          %6321 = vmatpush1.msra.mxu0 0.0
          %6322 = vmatprep.subr.mxu0 0.0
          %6323 = vmatpush1.msra.mxu0 0.0
          %6324 = vmatprep.subr.mxu0 0.0
          %6325 = vmatpush1.msra.mxu0 0.0
          %6326 = vmatprep.subr.mxu0 0.0
          %6327 = vmatpush1.msra.mxu0 0.0
          %6328 = vmatprep.subr.mxu0 0.0
          %6329 = vmatpush1.msra.mxu0 0.0
          %6330 = vmatprep.subr.mxu0 0.0
          %6331 = vmatpush1.msra.mxu0 0.0
          %6332 = vmatprep.subr.mxu0 0.0
          %6333 = vmatpush1.msra.mxu0 0.0
          %6334 = vmatprep.subr.mxu0 0.0
          %6335 = vmatpush1.msra.mxu0 0.0
          %6336 = vmatprep.subr.mxu0 0.0
          %6337 = vmatpush1.msra.mxu0 0.0
          %6338 = vmatprep.subr.mxu0 0.0
          %6339 = vmatpush1.msra.mxu0 0.0
          %6340 = vmatprep.subr.mxu0 0.0
          %6341 = vmatpush1.msra.mxu0 0.0
          %6342 = vmatprep.subr.mxu0 0.0
          %6343 = vmatpush1.msra.mxu0 0.0
          %6344 = vmatprep.subr.mxu0 0.0
          %6345 = vmatpush1.msra.mxu0 0.0
          %6346 = vmatprep.mubr.f32.mxu0 0.0
          %6347 = vmatmul.mubr.f32.gmra.mrb[0].mxu0 %v6259
          %v6348 = vpop.f32.mrb[0].mxu0
          %v6349 = vadd.f32 0.0, %v6348
          %v6350 = vpop.f32.mrb[0].mxu0
          %6351 = vmatprep.mubr.f32.mxu0 0.0
          %6352 = vmatmul.mubr.f32.gmra.mrb[0].mxu0 %v6262
          %v6353 = vpop.f32.mrb[0].mxu0
          %v6354 = vadd.f32 0.0, %v6353
          %v6355 = vpop.f32.mrb[0].mxu0
          %6356 = vmatprep.mubr.f32.mxu0 0.0
          %6357 = vmatmul.mubr.f32.gmra.mrb[0].mxu0 %v6265
          %v6358 = vpop.f32.mrb[0].mxu0
          %v6359 = vadd.f32 0.0, %v6358
          %v6360 = vpop.f32.mrb[0].mxu0
          %6361 = vmatprep.mubr.f32.mxu0 0.0
          %6362 = vmatmul.mubr.f32.gmra.mrb[0].mxu0 %v6268
          %v6363 = vpop.f32.mrb[0].mxu0
          %v6364 = vadd.f32 0.0, %v6363
          %v6365 = vpop.f32.mrb[0].mxu0
          %6366 = vmatprep.mubr.f32.mxu0 0.0
          %6367 = vmatmul.mubr.f32.gmra.mrb[0].mxu0 %v6271
          %v6368 = vpop.f32.mrb[0].mxu0
          %v6369 = vadd.f32 0.0, %v6368
          %v6370 = vpop.f32.mrb[0].mxu0
          %6371 = vmatprep.mubr.f32.mxu0 0.0
          %6372 = vmatmul.mubr.f32.gmra.mrb[0].mxu0 %v6274
          %v6373 = vpop.f32.mrb[0].mxu0
          %v6374 = vadd.f32 0.0, %v6373
          %v6375 = vpop.f32.mrb[0].mxu0
          %6376 = vmatprep.mubr.f32.mxu0 0.0
          %6377 = vmatmul.mubr.f32.gmra.mrb[0].mxu0 %v6277
          %v6378 = vpop.f32.mrb[0].mxu0
          %v6379 = vadd.f32 0.0, %v6378
          %v6380 = vpop.f32.mrb[0].mxu0
          %6381 = vmatprep.mubr.f32.mxu0 0.0
          %6382 = vmatmul.mubr.f32.gmra.mrb[0].mxu0 %v6280
          %v6383 = vpop.f32.mrb[0].mxu0
          %v6384 = vadd.f32 0.0, %v6383
          %v6385 = vpop.f32.mrb[0].mxu0
          %6386 = vdwg.mxu0
          %6403 = vrot.lane.b32.xlu0 %v6196, 40
          %v6404 = vpop.permute.xlu0 %6403
          %6405 = vrot.lane.b32.xlu0 %v6201, 40
          %v6406 = vpop.permute.xlu0 %6405
          %6407 = vrot.lane.b32.xlu0 %v6206, 40
          %v6408 = vpop.permute.xlu0 %6407
          %6409 = vrot.lane.b32.xlu0 %v6211, 40
          %v6410 = vpop.permute.xlu0 %6409
          %6411 = vrot.lane.b32.xlu0 %v6216, 40
          %v6412 = vpop.permute.xlu0 %6411
          %6413 = vrot.lane.b32.xlu0 %v6221, 40
          %v6414 = vpop.permute.xlu0 %6413
          %6415 = vrot.lane.b32.xlu0 %v6226, 40
          %v6416 = vpop.permute.xlu0 %6415
          %6417 = vrot.lane.b32.xlu0 %v6231, 40
          %v6418 = vpop.permute.xlu0 %6417
          %6419 = vrot.lane.b32.xlu0 %v6349, 40
          %v6420 = vpop.permute.xlu0 %6419
          %6421 = vrot.lane.b32.xlu0 %v6354, 40
          %v6422 = vpop.permute.xlu0 %6421
          %6423 = vrot.lane.b32.xlu0 %v6359, 40
          %v6424 = vpop.permute.xlu0 %6423
          %6425 = vrot.lane.b32.xlu0 %v6364, 40
          %v6426 = vpop.permute.xlu0 %6425
          %6427 = vrot.lane.b32.xlu0 %v6369, 40
          %v6428 = vpop.permute.xlu0 %6427
          %6429 = vrot.lane.b32.xlu0 %v6374, 40
          %v6430 = vpop.permute.xlu0 %6429
          %6431 = vrot.lane.b32.xlu0 %v6379, 40
          %v6432 = vpop.permute.xlu0 %6431
          %6433 = vrot.lane.b32.xlu0 %v6384, 40
          %v6434 = vpop.permute.xlu0 %6433
          %vm6451 = vcmask 392512
          %6452 = vst.msk [vmem:[#allocation3] sm:$0xff] %vm6451, %v6404
          %6453 = vst.msk [vmem:[#allocation3 + $0x8] sm:$0xff] %vm6451, %v6406
          %6454 = vst.msk [vmem:[#allocation3 + $0x10] sm:$0xff] %vm6451, %v6408
          %6455 = vst.msk [vmem:[#allocation3 + $0x18] sm:$0xff] %vm6451, %v6410
          %6456 = vst.msk [vmem:[#allocation3 + $0x20] sm:$0xff] %vm6451, %v6412
          %6457 = vst.msk [vmem:[#allocation3 + $0x28] sm:$0xff] %vm6451, %v6414
          %6458 = vst.msk [vmem:[#allocation3 + $0x30] sm:$0xff] %vm6451, %v6416
          %6459 = vst.msk [vmem:[#allocation3 + $0x38] sm:$0xff] %vm6451, %v6418
          %6460 = vst.msk [vmem:[#allocation3 + $0x40] sm:$0xff] %vm6451, %v6420
          %6461 = vst.msk [vmem:[#allocation3 + $0x48] sm:$0xff] %vm6451, %v6422
          %6462 = vst.msk [vmem:[#allocation3 + $0x50] sm:$0xff] %vm6451, %v6424
          %6463 = vst.msk [vmem:[#allocation3 + $0x58] sm:$0xff] %vm6451, %v6426
          %6464 = vst.msk [vmem:[#allocation3 + $0x60] sm:$0xff] %vm6451, %v6428
          %6465 = vst.msk [vmem:[#allocation3 + $0x68] sm:$0xff] %vm6451, %v6430
          %6466 = vst.msk [vmem:[#allocation3 + $0x70] sm:$0xff] %vm6451, %v6432
          %6467 = vst.msk [vmem:[#allocation3 + $0x78] sm:$0xff] %vm6451, %v6434
          %6468 = vrot.lane.b32.xlu0 %v906, 80
          %v6469 = vpop.permute.xlu0 %6468
          %6470 = vrot.lane.b32.xlu0 %v907, 80
          %v6471 = vpop.permute.xlu0 %6470
          %6472 = vrot.lane.b32.xlu0 %v908, 80
          %v6473 = vpop.permute.xlu0 %6472
          %6474 = vrot.lane.b32.xlu0 %v909, 80
          %v6475 = vpop.permute.xlu0 %6474
          %6476 = vrot.lane.b32.xlu0 %v910, 80
          %v6477 = vpop.permute.xlu0 %6476
          %6478 = vrot.lane.b32.xlu0 %v911, 80
          %v6479 = vpop.permute.xlu0 %6478
          %6480 = vrot.lane.b32.xlu0 %v912, 80
          %v6481 = vpop.permute.xlu0 %6480
          %6482 = vrot.lane.b32.xlu0 %v913, 80
          %v6483 = vpop.permute.xlu0 %6482
          %6484 = vrot.lane.b32.xlu0 %v930, 16
          %v6485 = vpop.permute.xlu0 %6484
          %6486 = vrot.lane.b32.xlu0 %v931, 16
          %v6487 = vpop.permute.xlu0 %6486
          %6488 = vrot.lane.b32.xlu0 %v932, 16
          %v6489 = vpop.permute.xlu0 %6488
          %6490 = vrot.lane.b32.xlu0 %v933, 16
          %v6491 = vpop.permute.xlu0 %6490
          %6492 = vrot.lane.b32.xlu0 %v934, 16
          %v6493 = vpop.permute.xlu0 %6492
          %6494 = vrot.lane.b32.xlu0 %v935, 16
          %v6495 = vpop.permute.xlu0 %6494
          %6496 = vrot.lane.b32.xlu0 %v936, 16
          %v6497 = vpop.permute.xlu0 %6496
          %6498 = vrot.lane.b32.xlu0 %v937, 16
          %v6499 = vpop.permute.xlu0 %6498
          %v6500 = vsel %vm990, %v6469, 0
          %v6502 = vsel %vm990, %v6471, 0
          %v6504 = vsel %vm990, %v6473, 0
          %v6506 = vsel %vm990, %v6475, 0
          %v6508 = vsel %vm990, %v6477, 0
          %v6510 = vsel %vm990, %v6479, 0
          %v6512 = vsel %vm990, %v6481, 0
          %v6514 = vsel %vm990, %v6483, 0
          %v6516 = vsel %vm990, %v6485, 0
          %v6518 = vsel %vm990, %v6487, 0
          %v6520 = vsel %vm990, %v6489, 0
          %v6522 = vsel %vm990, %v6491, 0
          %v6524 = vsel %vm990, %v6493, 0
          %v6526 = vsel %vm990, %v6495, 0
          %v6528 = vsel %vm990, %v6497, 0
          %v6530 = vsel %vm990, %v6499, 0
          %6532 = vmatprep.subr.mxu0 0.0
          %6533 = vmatpush1.xpose.msra.mxu0 %v6516
          %6534 = vmatprep.subr.mxu0 0.0
          %6535 = vmatpush1.xpose.msra.mxu0 %v6518
          %6536 = vmatprep.subr.mxu0 0.0
          %6537 = vmatpush1.xpose.msra.mxu0 %v6520
          %6538 = vmatprep.subr.mxu0 0.0
          %6539 = vmatpush1.xpose.msra.mxu0 %v6522
          %6540 = vmatprep.subr.mxu0 0.0
          %6541 = vmatpush1.xpose.msra.mxu0 %v6524
          %6542 = vmatprep.subr.mxu0 0.0
          %6543 = vmatpush1.xpose.msra.mxu0 %v6526
          %6544 = vmatprep.subr.mxu0 0.0
          %6545 = vmatpush1.xpose.msra.mxu0 %v6528
          %6546 = vmatprep.subr.mxu0 0.0
          %6547 = vmatpush1.xpose.msra.mxu0 %v6530
          %6548 = vmatprep.subr.mxu0 0.0
          %6549 = vmatpush1.xpose.msra.mxu0 0.0
          %6550 = vmatprep.subr.mxu0 0.0
          %6551 = vmatpush1.xpose.msra.mxu0 0.0
          %6552 = vmatprep.subr.mxu0 0.0
          %6553 = vmatpush1.xpose.msra.mxu0 0.0
          %6554 = vmatprep.subr.mxu0 0.0
          %6555 = vmatpush1.xpose.msra.mxu0 0.0
          %6556 = vmatprep.subr.mxu0 0.0
          %6557 = vmatpush1.xpose.msra.mxu0 0.0
          %6558 = vmatprep.subr.mxu0 0.0
          %6559 = vmatpush1.xpose.msra.mxu0 0.0
          %6560 = vmatprep.subr.mxu0 0.0
          %6561 = vmatpush1.xpose.msra.mxu0 0.0
          %6562 = vmatprep.subr.mxu0 0.0
          %6563 = vmatpush1.xpose.msra.mxu0 0.0
          %6564 = vmatprep.subr.mxu0 0.0
          %6565 = vmatpush1.xpose.msra.mxu0 0.0
          %6566 = vmatprep.subr.mxu0 0.0
          %6567 = vmatpush1.xpose.msra.mxu0 0.0
          %6568 = vmatprep.subr.mxu0 0.0
          %6569 = vmatpush1.xpose.msra.mxu0 0.0
          %6570 = vmatprep.subr.mxu0 0.0
          %6571 = vmatpush1.xpose.msra.mxu0 0.0
          %6572 = vmatprep.subr.mxu0 0.0
          %6573 = vmatpush1.xpose.msra.mxu0 0.0
          %6574 = vmatprep.subr.mxu0 0.0
          %6575 = vmatpush1.xpose.msra.mxu0 0.0
          %6576 = vmatprep.subr.mxu0 0.0
          %6577 = vmatpush1.xpose.msra.mxu0 0.0
          %6578 = vmatprep.subr.mxu0 0.0
          %6579 = vmatpush1.xpose.msra.mxu0 0.0
          %6580 = vmatprep.subr.mxu0 0.0
          %6581 = vmatpush1.xpose.msra.mxu0 0.0
          %6582 = vmatprep.subr.mxu0 0.0
          %6583 = vmatpush1.xpose.msra.mxu0 0.0
          %6584 = vmatprep.subr.mxu0 0.0
          %6585 = vmatpush1.xpose.msra.mxu0 0.0
          %6586 = vmatprep.subr.mxu0 0.0
          %6587 = vmatpush1.xpose.msra.mxu0 0.0
          %6588 = vmatprep.subr.mxu0 0.0
          %6589 = vmatpush1.xpose.msra.mxu0 0.0
          %6590 = vmatprep.subr.mxu0 0.0
          %6591 = vmatpush1.xpose.msra.mxu0 0.0
          %6592 = vmatprep.subr.mxu0 0.0
          %6593 = vmatpush1.xpose.msra.mxu0 0.0
          %6594 = vmatprep.subr.mxu0 0.0
          %6595 = vmatpush1.xpose.msra.mxu0 0.0
          %6596 = vmatprep.mubr.f32.mxu0 0.0
          %6597 = vmatmul.mubr.f32.gmra.mrb[0].mxu0 %v6500
          %v6598 = vpop.f32.mrb[0].mxu0
          %v6599 = vadd.f32 0.0, %v6598
          %v6600 = vpop.f32.mrb[0].mxu0
          %6601 = vmatprep.mubr.f32.mxu0 0.0
          %6602 = vmatmul.mubr.f32.gmra.mrb[0].mxu0 %v6502
          %v6603 = vpop.f32.mrb[0].mxu0
          %v6604 = vadd.f32 0.0, %v6603
          %v6605 = vpop.f32.mrb[0].mxu0
          %6606 = vmatprep.mubr.f32.mxu0 0.0
          %6607 = vmatmul.mubr.f32.gmra.mrb[0].mxu0 %v6504
          %v6608 = vpop.f32.mrb[0].mxu0
          %v6609 = vadd.f32 0.0, %v6608
          %v6610 = vpop.f32.mrb[0].mxu0
          %6611 = vmatprep.mubr.f32.mxu0 0.0
          %6612 = vmatmul.mubr.f32.gmra.mrb[0].mxu0 %v6506
          %v6613 = vpop.f32.mrb[0].mxu0
          %v6614 = vadd.f32 0.0, %v6613
          %v6615 = vpop.f32.mrb[0].mxu0
          %6616 = vmatprep.mubr.f32.mxu0 0.0
          %6617 = vmatmul.mubr.f32.gmra.mrb[0].mxu0 %v6508
          %v6618 = vpop.f32.mrb[0].mxu0
          %v6619 = vadd.f32 0.0, %v6618
          %v6620 = vpop.f32.mrb[0].mxu0
          %6621 = vmatprep.mubr.f32.mxu0 0.0
          %6622 = vmatmul.mubr.f32.gmra.mrb[0].mxu0 %v6510
          %v6623 = vpop.f32.mrb[0].mxu0
          %v6624 = vadd.f32 0.0, %v6623
          %v6625 = vpop.f32.mrb[0].mxu0
          %6626 = vmatprep.mubr.f32.mxu0 0.0
          %6627 = vmatmul.mubr.f32.gmra.mrb[0].mxu0 %v6512
          %v6628 = vpop.f32.mrb[0].mxu0
          %v6629 = vadd.f32 0.0, %v6628
          %v6630 = vpop.f32.mrb[0].mxu0
          %6631 = vmatprep.mubr.f32.mxu0 0.0
          %6632 = vmatmul.mubr.f32.gmra.mrb[0].mxu0 %v6514
          %v6633 = vpop.f32.mrb[0].mxu0
          %v6634 = vadd.f32 0.0, %v6633
          %v6635 = vpop.f32.mrb[0].mxu0
          %6636 = vdwg.mxu0
          %6637 = vrot.lane.b32.xlu0 %v914, 80
          %v6638 = vpop.permute.xlu0 %6637
          %6639 = vrot.lane.b32.xlu0 %v915, 80
          %v6640 = vpop.permute.xlu0 %6639
          %6641 = vrot.lane.b32.xlu0 %v916, 80
          %v6642 = vpop.permute.xlu0 %6641
          %6643 = vrot.lane.b32.xlu0 %v917, 80
          %v6644 = vpop.permute.xlu0 %6643
          %6645 = vrot.lane.b32.xlu0 %v918, 80
          %v6646 = vpop.permute.xlu0 %6645
          %6647 = vrot.lane.b32.xlu0 %v919, 80
          %v6648 = vpop.permute.xlu0 %6647
          %6649 = vrot.lane.b32.xlu0 %v920, 80
          %v6650 = vpop.permute.xlu0 %6649
          %6651 = vrot.lane.b32.xlu0 %v921, 80
          %v6652 = vpop.permute.xlu0 %6651
          %6653 = vrot.lane.b32.xlu0 %v938, 16
          %v6654 = vpop.permute.xlu0 %6653
          %6655 = vrot.lane.b32.xlu0 %v939, 16
          %v6656 = vpop.permute.xlu0 %6655
          %6657 = vrot.lane.b32.xlu0 %v940, 16
          %v6658 = vpop.permute.xlu0 %6657
          %6659 = vrot.lane.b32.xlu0 %v941, 16
          %v6660 = vpop.permute.xlu0 %6659
          %6661 = vrot.lane.b32.xlu0 %v942, 16
          %v6662 = vpop.permute.xlu0 %6661
          %6663 = vrot.lane.b32.xlu0 %v943, 16
          %v6664 = vpop.permute.xlu0 %6663
          %6665 = vrot.lane.b32.xlu0 %v944, 16
          %v6666 = vpop.permute.xlu0 %6665
          %6667 = vrot.lane.b32.xlu0 %v945, 16
          %v6668 = vpop.permute.xlu0 %6667
          %v6669 = vsel %vm990, %v6638, 0
          %v6671 = vsel %vm990, %v6640, 0
          %v6673 = vsel %vm990, %v6642, 0
          %v6675 = vsel %vm990, %v6644, 0
          %v6677 = vsel %vm990, %v6646, 0
          %v6679 = vsel %vm990, %v6648, 0
          %v6681 = vsel %vm990, %v6650, 0
          %v6683 = vsel %vm990, %v6652, 0
          %v6685 = vsel %vm990, %v6654, 0
          %v6687 = vsel %vm990, %v6656, 0
          %v6689 = vsel %vm990, %v6658, 0
          %v6691 = vsel %vm990, %v6660, 0
          %v6693 = vsel %vm990, %v6662, 0
          %v6695 = vsel %vm990, %v6664, 0
          %v6697 = vsel %vm990, %v6666, 0
          %v6699 = vsel %vm990, %v6668, 0
          %6701 = vmatprep.subr.mxu0 0.0
          %6702 = vmatpush1.xpose.msra.mxu0 %v6685
          %6703 = vmatprep.subr.mxu0 0.0
          %6704 = vmatpush1.xpose.msra.mxu0 %v6687
          %6705 = vmatprep.subr.mxu0 0.0
          %6706 = vmatpush1.xpose.msra.mxu0 %v6689
          %6707 = vmatprep.subr.mxu0 0.0
          %6708 = vmatpush1.xpose.msra.mxu0 %v6691
          %6709 = vmatprep.subr.mxu0 0.0
          %6710 = vmatpush1.xpose.msra.mxu0 %v6693
          %6711 = vmatprep.subr.mxu0 0.0
          %6712 = vmatpush1.xpose.msra.mxu0 %v6695
          %6713 = vmatprep.subr.mxu0 0.0
          %6714 = vmatpush1.xpose.msra.mxu0 %v6697
          %6715 = vmatprep.subr.mxu0 0.0
          %6716 = vmatpush1.xpose.msra.mxu0 %v6699
          %6717 = vmatprep.subr.mxu0 0.0
          %6718 = vmatpush1.xpose.msra.mxu0 0.0
          %6719 = vmatprep.subr.mxu0 0.0
          %6720 = vmatpush1.xpose.msra.mxu0 0.0
          %6721 = vmatprep.subr.mxu0 0.0
          %6722 = vmatpush1.xpose.msra.mxu0 0.0
          %6723 = vmatprep.subr.mxu0 0.0
          %6724 = vmatpush1.xpose.msra.mxu0 0.0
          %6725 = vmatprep.subr.mxu0 0.0
          %6726 = vmatpush1.xpose.msra.mxu0 0.0
          %6727 = vmatprep.subr.mxu0 0.0
          %6728 = vmatpush1.xpose.msra.mxu0 0.0
          %6729 = vmatprep.subr.mxu0 0.0
          %6730 = vmatpush1.xpose.msra.mxu0 0.0
          %6731 = vmatprep.subr.mxu0 0.0
          %6732 = vmatpush1.xpose.msra.mxu0 0.0
          %6733 = vmatprep.subr.mxu0 0.0
          %6734 = vmatpush1.xpose.msra.mxu0 0.0
          %6735 = vmatprep.subr.mxu0 0.0
          %6736 = vmatpush1.xpose.msra.mxu0 0.0
          %6737 = vmatprep.subr.mxu0 0.0
          %6738 = vmatpush1.xpose.msra.mxu0 0.0
          %6739 = vmatprep.subr.mxu0 0.0
          %6740 = vmatpush1.xpose.msra.mxu0 0.0
          %6741 = vmatprep.subr.mxu0 0.0
          %6742 = vmatpush1.xpose.msra.mxu0 0.0
          %6743 = vmatprep.subr.mxu0 0.0
          %6744 = vmatpush1.xpose.msra.mxu0 0.0
          %6745 = vmatprep.subr.mxu0 0.0
          %6746 = vmatpush1.xpose.msra.mxu0 0.0
          %6747 = vmatprep.subr.mxu0 0.0
          %6748 = vmatpush1.xpose.msra.mxu0 0.0
          %6749 = vmatprep.subr.mxu0 0.0
          %6750 = vmatpush1.xpose.msra.mxu0 0.0
          %6751 = vmatprep.subr.mxu0 0.0
          %6752 = vmatpush1.xpose.msra.mxu0 0.0
          %6753 = vmatprep.subr.mxu0 0.0
          %6754 = vmatpush1.xpose.msra.mxu0 0.0
          %6755 = vmatprep.subr.mxu0 0.0
          %6756 = vmatpush1.xpose.msra.mxu0 0.0
          %6757 = vmatprep.subr.mxu0 0.0
          %6758 = vmatpush1.xpose.msra.mxu0 0.0
          %6759 = vmatprep.subr.mxu0 0.0
          %6760 = vmatpush1.xpose.msra.mxu0 0.0
          %6761 = vmatprep.subr.mxu0 0.0
          %6762 = vmatpush1.xpose.msra.mxu0 0.0
          %6763 = vmatprep.subr.mxu0 0.0
          %6764 = vmatpush1.xpose.msra.mxu0 0.0
          %6765 = vmatprep.mubr.f32.mxu0 0.0
          %6766 = vmatmul.mubr.f32.gmra.mrb[0].mxu0 %v6669
          %v6767 = vpop.f32.mrb[0].mxu0
          %v6768 = vadd.f32 0.0, %v6767
          %v6769 = vpop.f32.mrb[0].mxu0
          %6770 = vmatprep.mubr.f32.mxu0 0.0
          %6771 = vmatmul.mubr.f32.gmra.mrb[0].mxu0 %v6671
          %v6772 = vpop.f32.mrb[0].mxu0
          %v6773 = vadd.f32 0.0, %v6772
          %v6774 = vpop.f32.mrb[0].mxu0
          %6775 = vmatprep.mubr.f32.mxu0 0.0
          %6776 = vmatmul.mubr.f32.gmra.mrb[0].mxu0 %v6673
          %v6777 = vpop.f32.mrb[0].mxu0
          %v6778 = vadd.f32 0.0, %v6777
          %v6779 = vpop.f32.mrb[0].mxu0
          %6780 = vmatprep.mubr.f32.mxu0 0.0
          %6781 = vmatmul.mubr.f32.gmra.mrb[0].mxu0 %v6675
          %v6782 = vpop.f32.mrb[0].mxu0
          %v6783 = vadd.f32 0.0, %v6782
          %v6784 = vpop.f32.mrb[0].mxu0
          %6785 = vmatprep.mubr.f32.mxu0 0.0
          %6786 = vmatmul.mubr.f32.gmra.mrb[0].mxu0 %v6677
          %v6787 = vpop.f32.mrb[0].mxu0
          %v6788 = vadd.f32 0.0, %v6787
          %v6789 = vpop.f32.mrb[0].mxu0
          %6790 = vmatprep.mubr.f32.mxu0 0.0
          %6791 = vmatmul.mubr.f32.gmra.mrb[0].mxu0 %v6679
          %v6792 = vpop.f32.mrb[0].mxu0
          %v6793 = vadd.f32 0.0, %v6792
          %v6794 = vpop.f32.mrb[0].mxu0
          %6795 = vmatprep.mubr.f32.mxu0 0.0
          %6796 = vmatmul.mubr.f32.gmra.mrb[0].mxu0 %v6681
          %v6797 = vpop.f32.mrb[0].mxu0
          %v6798 = vadd.f32 0.0, %v6797
          %v6799 = vpop.f32.mrb[0].mxu0
          %6800 = vmatprep.mubr.f32.mxu0 0.0
          %6801 = vmatmul.mubr.f32.gmra.mrb[0].mxu0 %v6683
          %v6802 = vpop.f32.mrb[0].mxu0
          %v6803 = vadd.f32 0.0, %v6802
          %v6804 = vpop.f32.mrb[0].mxu0
          %6805 = vdwg.mxu0
          %v6806 = vsel %vm401, %v6599, -inf
          %6807 = vmax.xlane.f32.xlu0 %v6806
          %v6808 = vpop.xlane.xlu0 %6807
          %v6809 = vsel %vm401, %v6604, -inf
          %6810 = vmax.xlane.f32.xlu0 %v6809
          %v6811 = vpop.xlane.xlu0 %6810
          %v6812 = vsel %vm401, %v6609, -inf
          %6813 = vmax.xlane.f32.xlu0 %v6812
          %v6814 = vpop.xlane.xlu0 %6813
          %v6815 = vsel %vm401, %v6614, -inf
          %6816 = vmax.xlane.f32.xlu0 %v6815
          %v6817 = vpop.xlane.xlu0 %6816
          %v6818 = vsel %vm401, %v6619, -inf
          %6819 = vmax.xlane.f32.xlu0 %v6818
          %v6820 = vpop.xlane.xlu0 %6819
          %v6821 = vsel %vm401, %v6624, -inf
          %6822 = vmax.xlane.f32.xlu0 %v6821
          %v6823 = vpop.xlane.xlu0 %6822
          %v6824 = vsel %vm401, %v6629, -inf
          %6825 = vmax.xlane.f32.xlu0 %v6824
          %v6826 = vpop.xlane.xlu0 %6825
          %v6827 = vsel %vm401, %v6634, -inf
          %6828 = vmax.xlane.f32.xlu0 %v6827
          %v6829 = vpop.xlane.xlu0 %6828
          %v6830 = vsel %vm401, %v6768, -inf
          %6831 = vmax.xlane.f32.xlu0 %v6830
          %v6832 = vpop.xlane.xlu0 %6831
          %v6833 = vsel %vm401, %v6773, -inf
          %6834 = vmax.xlane.f32.xlu0 %v6833
          %v6835 = vpop.xlane.xlu0 %6834
          %v6836 = vsel %vm401, %v6778, -inf
          %6837 = vmax.xlane.f32.xlu0 %v6836
          %v6838 = vpop.xlane.xlu0 %6837
          %v6839 = vsel %vm401, %v6783, -inf
          %6840 = vmax.xlane.f32.xlu0 %v6839
          %v6841 = vpop.xlane.xlu0 %6840
          %v6842 = vsel %vm401, %v6788, -inf
          %6843 = vmax.xlane.f32.xlu0 %v6842
          %v6844 = vpop.xlane.xlu0 %6843
          %v6845 = vsel %vm401, %v6793, -inf
          %6846 = vmax.xlane.f32.xlu0 %v6845
          %v6847 = vpop.xlane.xlu0 %6846
          %v6848 = vsel %vm401, %v6798, -inf
          %6849 = vmax.xlane.f32.xlu0 %v6848
          %v6850 = vpop.xlane.xlu0 %6849
          %v6851 = vsel %vm401, %v6803, -inf
          %6852 = vmax.xlane.f32.xlu0 %v6851
          %v6853 = vpop.xlane.xlu0 %6852
          %v6854 = vsub.f32 %v6599, %v6808
          %v6855 = vsub.f32 %v6604, %v6811
          %v6856 = vsub.f32 %v6609, %v6814
          %v6857 = vsub.f32 %v6614, %v6817
          %v6858 = vsub.f32 %v6619, %v6820
          %v6859 = vsub.f32 %v6624, %v6823
          %v6860 = vsub.f32 %v6629, %v6826
          %v6861 = vsub.f32 %v6634, %v6829
          %v6862 = vsub.f32 %v6768, %v6832
          %v6863 = vsub.f32 %v6773, %v6835
          %v6864 = vsub.f32 %v6778, %v6838
          %v6865 = vsub.f32 %v6783, %v6841
          %v6866 = vsub.f32 %v6788, %v6844
          %v6867 = vsub.f32 %v6793, %v6847
          %v6868 = vsub.f32 %v6798, %v6850
          %v6869 = vsub.f32 %v6803, %v6853
          %v6870 = vmul.f32 %v6854, 1.442695
          %v6871 = vpow.pop %v6870
          %v6872 = vmul.f32 %v6855, 1.442695
          %v6873 = vpow.pop %v6872
          %v6874 = vmul.f32 %v6856, 1.442695
          %v6875 = vpow.pop %v6874
          %v6876 = vmul.f32 %v6857, 1.442695
          %v6877 = vpow.pop %v6876
          %v6878 = vmul.f32 %v6858, 1.442695
          %v6879 = vpow.pop %v6878
          %v6880 = vmul.f32 %v6859, 1.442695
          %v6881 = vpow.pop %v6880
          %v6882 = vmul.f32 %v6860, 1.442695
          %v6883 = vpow.pop %v6882
          %v6884 = vmul.f32 %v6861, 1.442695
          %v6885 = vpow.pop %v6884
          %v6886 = vmul.f32 %v6862, 1.442695
          %v6887 = vpow.pop %v6886
          %v6888 = vmul.f32 %v6863, 1.442695
          %v6889 = vpow.pop %v6888
          %v6890 = vmul.f32 %v6864, 1.442695
          %v6891 = vpow.pop %v6890
          %v6892 = vmul.f32 %v6865, 1.442695
          %v6893 = vpow.pop %v6892
          %v6894 = vmul.f32 %v6866, 1.442695
          %v6895 = vpow.pop %v6894
          %v6896 = vmul.f32 %v6867, 1.442695
          %v6897 = vpow.pop %v6896
          %v6898 = vmul.f32 %v6868, 1.442695
          %v6899 = vpow.pop %v6898
          %v6900 = vmul.f32 %v6869, 1.442695
          %v6901 = vpow.pop %v6900
          %v6902 = vmul.f32 %v6871, %v425
          %v6903 = vmul.f32 %v6873, %v425
          %v6904 = vmul.f32 %v6875, %v425
          %v6905 = vmul.f32 %v6877, %v425
          %v6906 = vmul.f32 %v6879, %v425
          %v6907 = vmul.f32 %v6881, %v425
          %v6908 = vmul.f32 %v6883, %v425
          %v6909 = vmul.f32 %v6885, %v425
          %v6910 = vmul.f32 %v6887, %v429
          %v6911 = vmul.f32 %v6889, %v429
          %v6912 = vmul.f32 %v6891, %v429
          %v6913 = vmul.f32 %v6893, %v429
          %v6914 = vmul.f32 %v6895, %v429
          %v6915 = vmul.f32 %v6897, %v429
          %v6916 = vmul.f32 %v6899, %v429
          %v6917 = vmul.f32 %v6901, %v429
          %v6918 = vsel %vm401, %v6902, 0.0
          %6919 = vadd.xlane.f32.xlu0 %v6918
          %v6920 = vpop.xlane.xlu0 %6919
          %v6921 = vsel %vm401, %v6903, 0.0
          %6922 = vadd.xlane.f32.xlu0 %v6921
          %v6923 = vpop.xlane.xlu0 %6922
          %v6924 = vsel %vm401, %v6904, 0.0
          %6925 = vadd.xlane.f32.xlu0 %v6924
          %v6926 = vpop.xlane.xlu0 %6925
          %v6927 = vsel %vm401, %v6905, 0.0
          %6928 = vadd.xlane.f32.xlu0 %v6927
          %v6929 = vpop.xlane.xlu0 %6928
          %v6930 = vsel %vm401, %v6906, 0.0
          %6931 = vadd.xlane.f32.xlu0 %v6930
          %v6932 = vpop.xlane.xlu0 %6931
          %v6933 = vsel %vm401, %v6907, 0.0
          %6934 = vadd.xlane.f32.xlu0 %v6933
          %v6935 = vpop.xlane.xlu0 %6934
          %v6936 = vsel %vm401, %v6908, 0.0
          %6937 = vadd.xlane.f32.xlu0 %v6936
          %v6938 = vpop.xlane.xlu0 %6937
          %v6939 = vsel %vm401, %v6909, 0.0
          %6940 = vadd.xlane.f32.xlu0 %v6939
          %v6941 = vpop.xlane.xlu0 %6940
          %v6942 = vsel %vm401, %v6910, 0.0
          %6943 = vadd.xlane.f32.xlu0 %v6942
          %v6944 = vpop.xlane.xlu0 %6943
          %v6945 = vsel %vm401, %v6911, 0.0
          %6946 = vadd.xlane.f32.xlu0 %v6945
          %v6947 = vpop.xlane.xlu0 %6946
          %v6948 = vsel %vm401, %v6912, 0.0
          %6949 = vadd.xlane.f32.xlu0 %v6948
          %v6950 = vpop.xlane.xlu0 %6949
          %v6951 = vsel %vm401, %v6913, 0.0
          %6952 = vadd.xlane.f32.xlu0 %v6951
          %v6953 = vpop.xlane.xlu0 %6952
          %v6954 = vsel %vm401, %v6914, 0.0
          %6955 = vadd.xlane.f32.xlu0 %v6954
          %v6956 = vpop.xlane.xlu0 %6955
          %v6957 = vsel %vm401, %v6915, 0.0
          %6958 = vadd.xlane.f32.xlu0 %v6957
          %v6959 = vpop.xlane.xlu0 %6958
          %v6960 = vsel %vm401, %v6916, 0.0
          %6961 = vadd.xlane.f32.xlu0 %v6960
          %v6962 = vpop.xlane.xlu0 %6961
          %v6963 = vsel %vm401, %v6917, 0.0
          %6964 = vadd.xlane.f32.xlu0 %v6963
          %v6965 = vpop.xlane.xlu0 %6964
          %v6966 = vmax.f32 %v6920, 1e-30
          %v6967 = vmax.f32 %v6923, 1e-30
          %v6968 = vmax.f32 %v6926, 1e-30
          %v6969 = vmax.f32 %v6929, 1e-30
          %v6970 = vmax.f32 %v6932, 1e-30
          %v6971 = vmax.f32 %v6935, 1e-30
          %v6972 = vmax.f32 %v6938, 1e-30
          %v6973 = vmax.f32 %v6941, 1e-30
          %v6974 = vmax.f32 %v6944, 1e-30
          %v6975 = vmax.f32 %v6947, 1e-30
          %v6976 = vmax.f32 %v6950, 1e-30
          %v6977 = vmax.f32 %v6953, 1e-30
          %v6978 = vmax.f32 %v6956, 1e-30
          %v6979 = vmax.f32 %v6959, 1e-30
          %v6980 = vmax.f32 %v6962, 1e-30
          %v6981 = vmax.f32 %v6965, 1e-30
          %v6982 = vrcp.pop %v6966
          %v6983 = vrcp.pop %v6967
          %v6984 = vrcp.pop %v6968
          %v6985 = vrcp.pop %v6969
          %v6986 = vrcp.pop %v6970
          %v6987 = vrcp.pop %v6971
          %v6988 = vrcp.pop %v6972
          %v6989 = vrcp.pop %v6973
          %v6990 = vrcp.pop %v6974
          %v6991 = vrcp.pop %v6975
          %v6992 = vrcp.pop %v6976
          %v6993 = vrcp.pop %v6977
          %v6994 = vrcp.pop %v6978
          %v6995 = vrcp.pop %v6979
          %v6996 = vrcp.pop %v6980
          %v6997 = vrcp.pop %v6981
          %v6998 = vmul.f32 %v6902, %v6982
          %v6999 = vmul.f32 %v6903, %v6983
          %v7000 = vmul.f32 %v6904, %v6984
          %v7001 = vmul.f32 %v6905, %v6985
          %v7002 = vmul.f32 %v6906, %v6986
          %v7003 = vmul.f32 %v6907, %v6987
          %v7004 = vmul.f32 %v6908, %v6988
          %v7005 = vmul.f32 %v6909, %v6989
          %v7006 = vmul.f32 %v6910, %v6990
          %v7007 = vmul.f32 %v6911, %v6991
          %v7008 = vmul.f32 %v6912, %v6992
          %v7009 = vmul.f32 %v6913, %v6993
          %v7010 = vmul.f32 %v6914, %v6994
          %v7011 = vmul.f32 %v6915, %v6995
          %v7012 = vmul.f32 %v6916, %v6996
          %v7013 = vmul.f32 %v6917, %v6997
          %7014 = vrot.lane.b32.xlu0 %v950, 80
          %v7015 = vpop.permute.xlu0 %7014
          %7016 = vrot.lane.b32.xlu0 %v951, 80
          %v7017 = vpop.permute.xlu0 %7016
          %7018 = vrot.lane.b32.xlu0 %v952, 80
          %v7019 = vpop.permute.xlu0 %7018
          %7020 = vrot.lane.b32.xlu0 %v953, 80
          %v7021 = vpop.permute.xlu0 %7020
          %7022 = vrot.lane.b32.xlu0 %v954, 80
          %v7023 = vpop.permute.xlu0 %7022
          %7024 = vrot.lane.b32.xlu0 %v955, 80
          %v7025 = vpop.permute.xlu0 %7024
          %7026 = vrot.lane.b32.xlu0 %v956, 80
          %v7027 = vpop.permute.xlu0 %7026
          %7028 = vrot.lane.b32.xlu0 %v957, 80
          %v7029 = vpop.permute.xlu0 %7028
          %v7039 = vsel %vm401, %v6998, 0
          %v7042 = vsel %vm401, %v6999, 0
          %v7045 = vsel %vm401, %v7000, 0
          %v7048 = vsel %vm401, %v7001, 0
          %v7051 = vsel %vm401, %v7002, 0
          %v7054 = vsel %vm401, %v7003, 0
          %v7057 = vsel %vm401, %v7004, 0
          %v7060 = vsel %vm401, %v7005, 0
          %7062 = vmatprep.subr.mxu0 0.0
          %7063 = vmatpush1.msra.mxu0 %v7015
          %7064 = vmatprep.subr.mxu0 0.0
          %7065 = vmatpush1.msra.mxu0 %v7017
          %7066 = vmatprep.subr.mxu0 0.0
          %7067 = vmatpush1.msra.mxu0 %v7019
          %7068 = vmatprep.subr.mxu0 0.0
          %7069 = vmatpush1.msra.mxu0 %v7021
          %7070 = vmatprep.subr.mxu0 0.0
          %7071 = vmatpush1.msra.mxu0 %v7023
          %7072 = vmatprep.subr.mxu0 0.0
          %7073 = vmatpush1.msra.mxu0 %v7025
          %7074 = vmatprep.subr.mxu0 0.0
          %7075 = vmatpush1.msra.mxu0 %v7027
          %7076 = vmatprep.subr.mxu0 0.0
          %7077 = vmatpush1.msra.mxu0 %v7029
          %7078 = vmatprep.subr.mxu0 0.0
          %7079 = vmatpush1.msra.mxu0 0.0
          %7080 = vmatprep.subr.mxu0 0.0
          %7081 = vmatpush1.msra.mxu0 0.0
          %7082 = vmatprep.subr.mxu0 0.0
          %7083 = vmatpush1.msra.mxu0 0.0
          %7084 = vmatprep.subr.mxu0 0.0
          %7085 = vmatpush1.msra.mxu0 0.0
          %7086 = vmatprep.subr.mxu0 0.0
          %7087 = vmatpush1.msra.mxu0 0.0
          %7088 = vmatprep.subr.mxu0 0.0
          %7089 = vmatpush1.msra.mxu0 0.0
          %7090 = vmatprep.subr.mxu0 0.0
          %7091 = vmatpush1.msra.mxu0 0.0
          %7092 = vmatprep.subr.mxu0 0.0
          %7093 = vmatpush1.msra.mxu0 0.0
          %7094 = vmatprep.subr.mxu0 0.0
          %7095 = vmatpush1.msra.mxu0 0.0
          %7096 = vmatprep.subr.mxu0 0.0
          %7097 = vmatpush1.msra.mxu0 0.0
          %7098 = vmatprep.subr.mxu0 0.0
          %7099 = vmatpush1.msra.mxu0 0.0
          %7100 = vmatprep.subr.mxu0 0.0
          %7101 = vmatpush1.msra.mxu0 0.0
          %7102 = vmatprep.subr.mxu0 0.0
          %7103 = vmatpush1.msra.mxu0 0.0
          %7104 = vmatprep.subr.mxu0 0.0
          %7105 = vmatpush1.msra.mxu0 0.0
          %7106 = vmatprep.subr.mxu0 0.0
          %7107 = vmatpush1.msra.mxu0 0.0
          %7108 = vmatprep.subr.mxu0 0.0
          %7109 = vmatpush1.msra.mxu0 0.0
          %7110 = vmatprep.subr.mxu0 0.0
          %7111 = vmatpush1.msra.mxu0 0.0
          %7112 = vmatprep.subr.mxu0 0.0
          %7113 = vmatpush1.msra.mxu0 0.0
          %7114 = vmatprep.subr.mxu0 0.0
          %7115 = vmatpush1.msra.mxu0 0.0
          %7116 = vmatprep.subr.mxu0 0.0
          %7117 = vmatpush1.msra.mxu0 0.0
          %7118 = vmatprep.subr.mxu0 0.0
          %7119 = vmatpush1.msra.mxu0 0.0
          %7120 = vmatprep.subr.mxu0 0.0
          %7121 = vmatpush1.msra.mxu0 0.0
          %7122 = vmatprep.subr.mxu0 0.0
          %7123 = vmatpush1.msra.mxu0 0.0
          %7124 = vmatprep.subr.mxu0 0.0
          %7125 = vmatpush1.msra.mxu0 0.0
          %7126 = vmatprep.mubr.f32.mxu0 0.0
          %7127 = vmatmul.mubr.f32.gmra.mrb[0].mxu0 %v7039
          %v7128 = vpop.f32.mrb[0].mxu0
          %v7129 = vadd.f32 0.0, %v7128
          %v7130 = vpop.f32.mrb[0].mxu0
          %7131 = vmatprep.mubr.f32.mxu0 0.0
          %7132 = vmatmul.mubr.f32.gmra.mrb[0].mxu0 %v7042
          %v7133 = vpop.f32.mrb[0].mxu0
          %v7134 = vadd.f32 0.0, %v7133
          %v7135 = vpop.f32.mrb[0].mxu0
          %7136 = vmatprep.mubr.f32.mxu0 0.0
          %7137 = vmatmul.mubr.f32.gmra.mrb[0].mxu0 %v7045
          %v7138 = vpop.f32.mrb[0].mxu0
          %v7139 = vadd.f32 0.0, %v7138
          %v7140 = vpop.f32.mrb[0].mxu0
          %7141 = vmatprep.mubr.f32.mxu0 0.0
          %7142 = vmatmul.mubr.f32.gmra.mrb[0].mxu0 %v7048
          %v7143 = vpop.f32.mrb[0].mxu0
          %v7144 = vadd.f32 0.0, %v7143
          %v7145 = vpop.f32.mrb[0].mxu0
          %7146 = vmatprep.mubr.f32.mxu0 0.0
          %7147 = vmatmul.mubr.f32.gmra.mrb[0].mxu0 %v7051
          %v7148 = vpop.f32.mrb[0].mxu0
          %v7149 = vadd.f32 0.0, %v7148
          %v7150 = vpop.f32.mrb[0].mxu0
          %7151 = vmatprep.mubr.f32.mxu0 0.0
          %7152 = vmatmul.mubr.f32.gmra.mrb[0].mxu0 %v7054
          %v7153 = vpop.f32.mrb[0].mxu0
          %v7154 = vadd.f32 0.0, %v7153
          %v7155 = vpop.f32.mrb[0].mxu0
          %7156 = vmatprep.mubr.f32.mxu0 0.0
          %7157 = vmatmul.mubr.f32.gmra.mrb[0].mxu0 %v7057
          %v7158 = vpop.f32.mrb[0].mxu0
          %v7159 = vadd.f32 0.0, %v7158
          %v7160 = vpop.f32.mrb[0].mxu0
          %7161 = vmatprep.mubr.f32.mxu0 0.0
          %7162 = vmatmul.mubr.f32.gmra.mrb[0].mxu0 %v7060
          %v7163 = vpop.f32.mrb[0].mxu0
          %v7164 = vadd.f32 0.0, %v7163
          %v7165 = vpop.f32.mrb[0].mxu0
          %7166 = vdwg.mxu0
          %7167 = vrot.lane.b32.xlu0 %v958, 80
          %v7168 = vpop.permute.xlu0 %7167
          %7169 = vrot.lane.b32.xlu0 %v959, 80
          %v7170 = vpop.permute.xlu0 %7169
          %7171 = vrot.lane.b32.xlu0 %v960, 80
          %v7172 = vpop.permute.xlu0 %7171
          %7173 = vrot.lane.b32.xlu0 %v961, 80
          %v7174 = vpop.permute.xlu0 %7173
          %7175 = vrot.lane.b32.xlu0 %v962, 80
          %v7176 = vpop.permute.xlu0 %7175
          %7177 = vrot.lane.b32.xlu0 %v963, 80
          %v7178 = vpop.permute.xlu0 %7177
          %7179 = vrot.lane.b32.xlu0 %v964, 80
          %v7180 = vpop.permute.xlu0 %7179
          %7181 = vrot.lane.b32.xlu0 %v965, 80
          %v7182 = vpop.permute.xlu0 %7181
          %v7192 = vsel %vm401, %v7006, 0
          %v7195 = vsel %vm401, %v7007, 0
          %v7198 = vsel %vm401, %v7008, 0
          %v7201 = vsel %vm401, %v7009, 0
          %v7204 = vsel %vm401, %v7010, 0
          %v7207 = vsel %vm401, %v7011, 0
          %v7210 = vsel %vm401, %v7012, 0
          %v7213 = vsel %vm401, %v7013, 0
          %7215 = vmatprep.subr.mxu0 0.0
          %7216 = vmatpush1.msra.mxu0 %v7168
          %7217 = vmatprep.subr.mxu0 0.0
          %7218 = vmatpush1.msra.mxu0 %v7170
          %7219 = vmatprep.subr.mxu0 0.0
          %7220 = vmatpush1.msra.mxu0 %v7172
          %7221 = vmatprep.subr.mxu0 0.0
          %7222 = vmatpush1.msra.mxu0 %v7174
          %7223 = vmatprep.subr.mxu0 0.0
          %7224 = vmatpush1.msra.mxu0 %v7176
          %7225 = vmatprep.subr.mxu0 0.0
          %7226 = vmatpush1.msra.mxu0 %v7178
          %7227 = vmatprep.subr.mxu0 0.0
          %7228 = vmatpush1.msra.mxu0 %v7180
          %7229 = vmatprep.subr.mxu0 0.0
          %7230 = vmatpush1.msra.mxu0 %v7182
          %7231 = vmatprep.subr.mxu0 0.0
          %7232 = vmatpush1.msra.mxu0 0.0
          %7233 = vmatprep.subr.mxu0 0.0
          %7234 = vmatpush1.msra.mxu0 0.0
          %7235 = vmatprep.subr.mxu0 0.0
          %7236 = vmatpush1.msra.mxu0 0.0
          %7237 = vmatprep.subr.mxu0 0.0
          %7238 = vmatpush1.msra.mxu0 0.0
          %7239 = vmatprep.subr.mxu0 0.0
          %7240 = vmatpush1.msra.mxu0 0.0
          %7241 = vmatprep.subr.mxu0 0.0
          %7242 = vmatpush1.msra.mxu0 0.0
          %7243 = vmatprep.subr.mxu0 0.0
          %7244 = vmatpush1.msra.mxu0 0.0
          %7245 = vmatprep.subr.mxu0 0.0
          %7246 = vmatpush1.msra.mxu0 0.0
          %7247 = vmatprep.subr.mxu0 0.0
          %7248 = vmatpush1.msra.mxu0 0.0
          %7249 = vmatprep.subr.mxu0 0.0
          %7250 = vmatpush1.msra.mxu0 0.0
          %7251 = vmatprep.subr.mxu0 0.0
          %7252 = vmatpush1.msra.mxu0 0.0
          %7253 = vmatprep.subr.mxu0 0.0
          %7254 = vmatpush1.msra.mxu0 0.0
          %7255 = vmatprep.subr.mxu0 0.0
          %7256 = vmatpush1.msra.mxu0 0.0
          %7257 = vmatprep.subr.mxu0 0.0
          %7258 = vmatpush1.msra.mxu0 0.0
          %7259 = vmatprep.subr.mxu0 0.0
          %7260 = vmatpush1.msra.mxu0 0.0
          %7261 = vmatprep.subr.mxu0 0.0
          %7262 = vmatpush1.msra.mxu0 0.0
          %7263 = vmatprep.subr.mxu0 0.0
          %7264 = vmatpush1.msra.mxu0 0.0
          %7265 = vmatprep.subr.mxu0 0.0
          %7266 = vmatpush1.msra.mxu0 0.0
          %7267 = vmatprep.subr.mxu0 0.0
          %7268 = vmatpush1.msra.mxu0 0.0
          %7269 = vmatprep.subr.mxu0 0.0
          %7270 = vmatpush1.msra.mxu0 0.0
          %7271 = vmatprep.subr.mxu0 0.0
          %7272 = vmatpush1.msra.mxu0 0.0
          %7273 = vmatprep.subr.mxu0 0.0
          %7274 = vmatpush1.msra.mxu0 0.0
          %7275 = vmatprep.subr.mxu0 0.0
          %7276 = vmatpush1.msra.mxu0 0.0
          %7277 = vmatprep.subr.mxu0 0.0
          %7278 = vmatpush1.msra.mxu0 0.0
          %7279 = vmatprep.mubr.f32.mxu0 0.0
          %7280 = vmatmul.mubr.f32.gmra.mrb[0].mxu0 %v7192
          %v7281 = vpop.f32.mrb[0].mxu0
          %v7282 = vadd.f32 0.0, %v7281
          %v7283 = vpop.f32.mrb[0].mxu0
          %7284 = vmatprep.mubr.f32.mxu0 0.0
          %7285 = vmatmul.mubr.f32.gmra.mrb[0].mxu0 %v7195
          %v7286 = vpop.f32.mrb[0].mxu0
          %v7287 = vadd.f32 0.0, %v7286
          %v7288 = vpop.f32.mrb[0].mxu0
          %7289 = vmatprep.mubr.f32.mxu0 0.0
          %7290 = vmatmul.mubr.f32.gmra.mrb[0].mxu0 %v7198
          %v7291 = vpop.f32.mrb[0].mxu0
          %v7292 = vadd.f32 0.0, %v7291
          %v7293 = vpop.f32.mrb[0].mxu0
          %7294 = vmatprep.mubr.f32.mxu0 0.0
          %7295 = vmatmul.mubr.f32.gmra.mrb[0].mxu0 %v7201
          %v7296 = vpop.f32.mrb[0].mxu0
          %v7297 = vadd.f32 0.0, %v7296
          %v7298 = vpop.f32.mrb[0].mxu0
          %7299 = vmatprep.mubr.f32.mxu0 0.0
          %7300 = vmatmul.mubr.f32.gmra.mrb[0].mxu0 %v7204
          %v7301 = vpop.f32.mrb[0].mxu0
          %v7302 = vadd.f32 0.0, %v7301
          %v7303 = vpop.f32.mrb[0].mxu0
          %7304 = vmatprep.mubr.f32.mxu0 0.0
          %7305 = vmatmul.mubr.f32.gmra.mrb[0].mxu0 %v7207
          %v7306 = vpop.f32.mrb[0].mxu0
          %v7307 = vadd.f32 0.0, %v7306
          %v7308 = vpop.f32.mrb[0].mxu0
          %7309 = vmatprep.mubr.f32.mxu0 0.0
          %7310 = vmatmul.mubr.f32.gmra.mrb[0].mxu0 %v7210
          %v7311 = vpop.f32.mrb[0].mxu0
          %v7312 = vadd.f32 0.0, %v7311
          %v7313 = vpop.f32.mrb[0].mxu0
          %7314 = vmatprep.mubr.f32.mxu0 0.0
          %7315 = vmatmul.mubr.f32.gmra.mrb[0].mxu0 %v7213
          %v7316 = vpop.f32.mrb[0].mxu0
          %v7317 = vadd.f32 0.0, %v7316
          %v7318 = vpop.f32.mrb[0].mxu0
          %7319 = vdwg.mxu0
          %7336 = vrot.lane.b32.xlu0 %v7129, 48
          %v7337 = vpop.permute.xlu0 %7336
          %7338 = vrot.lane.b32.xlu0 %v7134, 48
          %v7339 = vpop.permute.xlu0 %7338
          %7340 = vrot.lane.b32.xlu0 %v7139, 48
          %v7341 = vpop.permute.xlu0 %7340
          %7342 = vrot.lane.b32.xlu0 %v7144, 48
          %v7343 = vpop.permute.xlu0 %7342
          %7344 = vrot.lane.b32.xlu0 %v7149, 48
          %v7345 = vpop.permute.xlu0 %7344
          %7346 = vrot.lane.b32.xlu0 %v7154, 48
          %v7347 = vpop.permute.xlu0 %7346
          %7348 = vrot.lane.b32.xlu0 %v7159, 48
          %v7349 = vpop.permute.xlu0 %7348
          %7350 = vrot.lane.b32.xlu0 %v7164, 48
          %v7351 = vpop.permute.xlu0 %7350
          %7352 = vrot.lane.b32.xlu0 %v7282, 48
          %v7353 = vpop.permute.xlu0 %7352
          %7354 = vrot.lane.b32.xlu0 %v7287, 48
          %v7355 = vpop.permute.xlu0 %7354
          %7356 = vrot.lane.b32.xlu0 %v7292, 48
          %v7357 = vpop.permute.xlu0 %7356
          %7358 = vrot.lane.b32.xlu0 %v7297, 48
          %v7359 = vpop.permute.xlu0 %7358
          %7360 = vrot.lane.b32.xlu0 %v7302, 48
          %v7361 = vpop.permute.xlu0 %7360
          %7362 = vrot.lane.b32.xlu0 %v7307, 48
          %v7363 = vpop.permute.xlu0 %7362
          %7364 = vrot.lane.b32.xlu0 %v7312, 48
          %v7365 = vpop.permute.xlu0 %7364
          %7366 = vrot.lane.b32.xlu0 %v7317, 48
          %v7367 = vpop.permute.xlu0 %7366
          %vm7384 = vcmask 458112
          %7385 = vst.msk [vmem:[#allocation3] sm:$0xff] %vm7384, %v7337
          %7386 = vst.msk [vmem:[#allocation3 + $0x8] sm:$0xff] %vm7384, %v7339
          %7387 = vst.msk [vmem:[#allocation3 + $0x10] sm:$0xff] %vm7384, %v7341
          %7388 = vst.msk [vmem:[#allocation3 + $0x18] sm:$0xff] %vm7384, %v7343
          %7389 = vst.msk [vmem:[#allocation3 + $0x20] sm:$0xff] %vm7384, %v7345
          %7390 = vst.msk [vmem:[#allocation3 + $0x28] sm:$0xff] %vm7384, %v7347
          %7391 = vst.msk [vmem:[#allocation3 + $0x30] sm:$0xff] %vm7384, %v7349
          %7392 = vst.msk [vmem:[#allocation3 + $0x38] sm:$0xff] %vm7384, %v7351
          %7393 = vst.msk [vmem:[#allocation3 + $0x40] sm:$0xff] %vm7384, %v7353
          %7394 = vst.msk [vmem:[#allocation3 + $0x48] sm:$0xff] %vm7384, %v7355
          %7395 = vst.msk [vmem:[#allocation3 + $0x50] sm:$0xff] %vm7384, %v7357
          %7396 = vst.msk [vmem:[#allocation3 + $0x58] sm:$0xff] %vm7384, %v7359
          %7397 = vst.msk [vmem:[#allocation3 + $0x60] sm:$0xff] %vm7384, %v7361
          %7398 = vst.msk [vmem:[#allocation3 + $0x68] sm:$0xff] %vm7384, %v7363
          %7399 = vst.msk [vmem:[#allocation3 + $0x70] sm:$0xff] %vm7384, %v7365
          %7400 = vst.msk [vmem:[#allocation3 + $0x78] sm:$0xff] %vm7384, %v7367
          %7401 = vrot.lane.b32.xlu0 %v906, 72
          %v7402 = vpop.permute.xlu0 %7401
          %7403 = vrot.lane.b32.xlu0 %v907, 72
          %v7404 = vpop.permute.xlu0 %7403
          %7405 = vrot.lane.b32.xlu0 %v908, 72
          %v7406 = vpop.permute.xlu0 %7405
          %7407 = vrot.lane.b32.xlu0 %v909, 72
          %v7408 = vpop.permute.xlu0 %7407
          %7409 = vrot.lane.b32.xlu0 %v910, 72
          %v7410 = vpop.permute.xlu0 %7409
          %7411 = vrot.lane.b32.xlu0 %v911, 72
          %v7412 = vpop.permute.xlu0 %7411
          %7413 = vrot.lane.b32.xlu0 %v912, 72
          %v7414 = vpop.permute.xlu0 %7413
          %7415 = vrot.lane.b32.xlu0 %v913, 72
          %v7416 = vpop.permute.xlu0 %7415
          %7417 = vrot.lane.b32.xlu0 %v930, 8
          %v7418 = vpop.permute.xlu0 %7417
          %7419 = vrot.lane.b32.xlu0 %v931, 8
          %v7420 = vpop.permute.xlu0 %7419
          %7421 = vrot.lane.b32.xlu0 %v932, 8
          %v7422 = vpop.permute.xlu0 %7421
          %7423 = vrot.lane.b32.xlu0 %v933, 8
          %v7424 = vpop.permute.xlu0 %7423
          %7425 = vrot.lane.b32.xlu0 %v934, 8
          %v7426 = vpop.permute.xlu0 %7425
          %7427 = vrot.lane.b32.xlu0 %v935, 8
          %v7428 = vpop.permute.xlu0 %7427
          %7429 = vrot.lane.b32.xlu0 %v936, 8
          %v7430 = vpop.permute.xlu0 %7429
          %7431 = vrot.lane.b32.xlu0 %v937, 8
          %v7432 = vpop.permute.xlu0 %7431
          %v7433 = vsel %vm990, %v7402, 0
          %v7435 = vsel %vm990, %v7404, 0
          %v7437 = vsel %vm990, %v7406, 0
          %v7439 = vsel %vm990, %v7408, 0
          %v7441 = vsel %vm990, %v7410, 0
          %v7443 = vsel %vm990, %v7412, 0
          %v7445 = vsel %vm990, %v7414, 0
          %v7447 = vsel %vm990, %v7416, 0
          %v7449 = vsel %vm990, %v7418, 0
          %v7451 = vsel %vm990, %v7420, 0
          %v7453 = vsel %vm990, %v7422, 0
          %v7455 = vsel %vm990, %v7424, 0
          %v7457 = vsel %vm990, %v7426, 0
          %v7459 = vsel %vm990, %v7428, 0
          %v7461 = vsel %vm990, %v7430, 0
          %v7463 = vsel %vm990, %v7432, 0
          %7465 = vmatprep.subr.mxu0 0.0
          %7466 = vmatpush1.xpose.msra.mxu0 %v7449
          %7467 = vmatprep.subr.mxu0 0.0
          %7468 = vmatpush1.xpose.msra.mxu0 %v7451
          %7469 = vmatprep.subr.mxu0 0.0
          %7470 = vmatpush1.xpose.msra.mxu0 %v7453
          %7471 = vmatprep.subr.mxu0 0.0
          %7472 = vmatpush1.xpose.msra.mxu0 %v7455
          %7473 = vmatprep.subr.mxu0 0.0
          %7474 = vmatpush1.xpose.msra.mxu0 %v7457
          %7475 = vmatprep.subr.mxu0 0.0
          %7476 = vmatpush1.xpose.msra.mxu0 %v7459
          %7477 = vmatprep.subr.mxu0 0.0
          %7478 = vmatpush1.xpose.msra.mxu0 %v7461
          %7479 = vmatprep.subr.mxu0 0.0
          %7480 = vmatpush1.xpose.msra.mxu0 %v7463
          %7481 = vmatprep.subr.mxu0 0.0
          %7482 = vmatpush1.xpose.msra.mxu0 0.0
          %7483 = vmatprep.subr.mxu0 0.0
          %7484 = vmatpush1.xpose.msra.mxu0 0.0
          %7485 = vmatprep.subr.mxu0 0.0
          %7486 = vmatpush1.xpose.msra.mxu0 0.0
          %7487 = vmatprep.subr.mxu0 0.0
          %7488 = vmatpush1.xpose.msra.mxu0 0.0
          %7489 = vmatprep.subr.mxu0 0.0
          %7490 = vmatpush1.xpose.msra.mxu0 0.0
          %7491 = vmatprep.subr.mxu0 0.0
          %7492 = vmatpush1.xpose.msra.mxu0 0.0
          %7493 = vmatprep.subr.mxu0 0.0
          %7494 = vmatpush1.xpose.msra.mxu0 0.0
          %7495 = vmatprep.subr.mxu0 0.0
          %7496 = vmatpush1.xpose.msra.mxu0 0.0
          %7497 = vmatprep.subr.mxu0 0.0
          %7498 = vmatpush1.xpose.msra.mxu0 0.0
          %7499 = vmatprep.subr.mxu0 0.0
          %7500 = vmatpush1.xpose.msra.mxu0 0.0
          %7501 = vmatprep.subr.mxu0 0.0
          %7502 = vmatpush1.xpose.msra.mxu0 0.0
          %7503 = vmatprep.subr.mxu0 0.0
          %7504 = vmatpush1.xpose.msra.mxu0 0.0
          %7505 = vmatprep.subr.mxu0 0.0
          %7506 = vmatpush1.xpose.msra.mxu0 0.0
          %7507 = vmatprep.subr.mxu0 0.0
          %7508 = vmatpush1.xpose.msra.mxu0 0.0
          %7509 = vmatprep.subr.mxu0 0.0
          %7510 = vmatpush1.xpose.msra.mxu0 0.0
          %7511 = vmatprep.subr.mxu0 0.0
          %7512 = vmatpush1.xpose.msra.mxu0 0.0
          %7513 = vmatprep.subr.mxu0 0.0
          %7514 = vmatpush1.xpose.msra.mxu0 0.0
          %7515 = vmatprep.subr.mxu0 0.0
          %7516 = vmatpush1.xpose.msra.mxu0 0.0
          %7517 = vmatprep.subr.mxu0 0.0
          %7518 = vmatpush1.xpose.msra.mxu0 0.0
          %7519 = vmatprep.subr.mxu0 0.0
          %7520 = vmatpush1.xpose.msra.mxu0 0.0
          %7521 = vmatprep.subr.mxu0 0.0
          %7522 = vmatpush1.xpose.msra.mxu0 0.0
          %7523 = vmatprep.subr.mxu0 0.0
          %7524 = vmatpush1.xpose.msra.mxu0 0.0
          %7525 = vmatprep.subr.mxu0 0.0
          %7526 = vmatpush1.xpose.msra.mxu0 0.0
          %7527 = vmatprep.subr.mxu0 0.0
          %7528 = vmatpush1.xpose.msra.mxu0 0.0
          %7529 = vmatprep.mubr.f32.mxu0 0.0
          %7530 = vmatmul.mubr.f32.gmra.mrb[0].mxu0 %v7433
          %v7531 = vpop.f32.mrb[0].mxu0
          %v7532 = vadd.f32 0.0, %v7531
          %v7533 = vpop.f32.mrb[0].mxu0
          %7534 = vmatprep.mubr.f32.mxu0 0.0
          %7535 = vmatmul.mubr.f32.gmra.mrb[0].mxu0 %v7435
          %v7536 = vpop.f32.mrb[0].mxu0
          %v7537 = vadd.f32 0.0, %v7536
          %v7538 = vpop.f32.mrb[0].mxu0
          %7539 = vmatprep.mubr.f32.mxu0 0.0
          %7540 = vmatmul.mubr.f32.gmra.mrb[0].mxu0 %v7437
          %v7541 = vpop.f32.mrb[0].mxu0
          %v7542 = vadd.f32 0.0, %v7541
          %v7543 = vpop.f32.mrb[0].mxu0
          %7544 = vmatprep.mubr.f32.mxu0 0.0
          %7545 = vmatmul.mubr.f32.gmra.mrb[0].mxu0 %v7439
          %v7546 = vpop.f32.mrb[0].mxu0
          %v7547 = vadd.f32 0.0, %v7546
          %v7548 = vpop.f32.mrb[0].mxu0
          %7549 = vmatprep.mubr.f32.mxu0 0.0
          %7550 = vmatmul.mubr.f32.gmra.mrb[0].mxu0 %v7441
          %v7551 = vpop.f32.mrb[0].mxu0
          %v7552 = vadd.f32 0.0, %v7551
          %v7553 = vpop.f32.mrb[0].mxu0
          %7554 = vmatprep.mubr.f32.mxu0 0.0
          %7555 = vmatmul.mubr.f32.gmra.mrb[0].mxu0 %v7443
          %v7556 = vpop.f32.mrb[0].mxu0
          %v7557 = vadd.f32 0.0, %v7556
          %v7558 = vpop.f32.mrb[0].mxu0
          %7559 = vmatprep.mubr.f32.mxu0 0.0
          %7560 = vmatmul.mubr.f32.gmra.mrb[0].mxu0 %v7445
          %v7561 = vpop.f32.mrb[0].mxu0
          %v7562 = vadd.f32 0.0, %v7561
          %v7563 = vpop.f32.mrb[0].mxu0
          %7564 = vmatprep.mubr.f32.mxu0 0.0
          %7565 = vmatmul.mubr.f32.gmra.mrb[0].mxu0 %v7447
          %v7566 = vpop.f32.mrb[0].mxu0
          %v7567 = vadd.f32 0.0, %v7566
          %v7568 = vpop.f32.mrb[0].mxu0
          %7569 = vdwg.mxu0
          %7570 = vrot.lane.b32.xlu0 %v914, 72
          %v7571 = vpop.permute.xlu0 %7570
          %7572 = vrot.lane.b32.xlu0 %v915, 72
          %v7573 = vpop.permute.xlu0 %7572
          %7574 = vrot.lane.b32.xlu0 %v916, 72
          %v7575 = vpop.permute.xlu0 %7574
          %7576 = vrot.lane.b32.xlu0 %v917, 72
          %v7577 = vpop.permute.xlu0 %7576
          %7578 = vrot.lane.b32.xlu0 %v918, 72
          %v7579 = vpop.permute.xlu0 %7578
          %7580 = vrot.lane.b32.xlu0 %v919, 72
          %v7581 = vpop.permute.xlu0 %7580
          %7582 = vrot.lane.b32.xlu0 %v920, 72
          %v7583 = vpop.permute.xlu0 %7582
          %7584 = vrot.lane.b32.xlu0 %v921, 72
          %v7585 = vpop.permute.xlu0 %7584
          %7586 = vrot.lane.b32.xlu0 %v938, 8
          %v7587 = vpop.permute.xlu0 %7586
          %7588 = vrot.lane.b32.xlu0 %v939, 8
          %v7589 = vpop.permute.xlu0 %7588
          %7590 = vrot.lane.b32.xlu0 %v940, 8
          %v7591 = vpop.permute.xlu0 %7590
          %7592 = vrot.lane.b32.xlu0 %v941, 8
          %v7593 = vpop.permute.xlu0 %7592
          %7594 = vrot.lane.b32.xlu0 %v942, 8
          %v7595 = vpop.permute.xlu0 %7594
          %7596 = vrot.lane.b32.xlu0 %v943, 8
          %v7597 = vpop.permute.xlu0 %7596
          %7598 = vrot.lane.b32.xlu0 %v944, 8
          %v7599 = vpop.permute.xlu0 %7598
          %7600 = vrot.lane.b32.xlu0 %v945, 8
          %v7601 = vpop.permute.xlu0 %7600
          %v7602 = vsel %vm990, %v7571, 0
          %v7604 = vsel %vm990, %v7573, 0
          %v7606 = vsel %vm990, %v7575, 0
          %v7608 = vsel %vm990, %v7577, 0
          %v7610 = vsel %vm990, %v7579, 0
          %v7612 = vsel %vm990, %v7581, 0
          %v7614 = vsel %vm990, %v7583, 0
          %v7616 = vsel %vm990, %v7585, 0
          %v7618 = vsel %vm990, %v7587, 0
          %v7620 = vsel %vm990, %v7589, 0
          %v7622 = vsel %vm990, %v7591, 0
          %v7624 = vsel %vm990, %v7593, 0
          %v7626 = vsel %vm990, %v7595, 0
          %v7628 = vsel %vm990, %v7597, 0
          %v7630 = vsel %vm990, %v7599, 0
          %v7632 = vsel %vm990, %v7601, 0
          %7634 = vmatprep.subr.mxu0 0.0
          %7635 = vmatpush1.xpose.msra.mxu0 %v7618
          %7636 = vmatprep.subr.mxu0 0.0
          %7637 = vmatpush1.xpose.msra.mxu0 %v7620
          %7638 = vmatprep.subr.mxu0 0.0
          %7639 = vmatpush1.xpose.msra.mxu0 %v7622
          %7640 = vmatprep.subr.mxu0 0.0
          %7641 = vmatpush1.xpose.msra.mxu0 %v7624
          %7642 = vmatprep.subr.mxu0 0.0
          %7643 = vmatpush1.xpose.msra.mxu0 %v7626
          %7644 = vmatprep.subr.mxu0 0.0
          %7645 = vmatpush1.xpose.msra.mxu0 %v7628
          %7646 = vmatprep.subr.mxu0 0.0
          %7647 = vmatpush1.xpose.msra.mxu0 %v7630
          %7648 = vmatprep.subr.mxu0 0.0
          %7649 = vmatpush1.xpose.msra.mxu0 %v7632
          %7650 = vmatprep.subr.mxu0 0.0
          %7651 = vmatpush1.xpose.msra.mxu0 0.0
          %7652 = vmatprep.subr.mxu0 0.0
          %7653 = vmatpush1.xpose.msra.mxu0 0.0
          %7654 = vmatprep.subr.mxu0 0.0
          %7655 = vmatpush1.xpose.msra.mxu0 0.0
          %7656 = vmatprep.subr.mxu0 0.0
          %7657 = vmatpush1.xpose.msra.mxu0 0.0
          %7658 = vmatprep.subr.mxu0 0.0
          %7659 = vmatpush1.xpose.msra.mxu0 0.0
          %7660 = vmatprep.subr.mxu0 0.0
          %7661 = vmatpush1.xpose.msra.mxu0 0.0
          %7662 = vmatprep.subr.mxu0 0.0
          %7663 = vmatpush1.xpose.msra.mxu0 0.0
          %7664 = vmatprep.subr.mxu0 0.0
          %7665 = vmatpush1.xpose.msra.mxu0 0.0
          %7666 = vmatprep.subr.mxu0 0.0
          %7667 = vmatpush1.xpose.msra.mxu0 0.0
          %7668 = vmatprep.subr.mxu0 0.0
          %7669 = vmatpush1.xpose.msra.mxu0 0.0
          %7670 = vmatprep.subr.mxu0 0.0
          %7671 = vmatpush1.xpose.msra.mxu0 0.0
          %7672 = vmatprep.subr.mxu0 0.0
          %7673 = vmatpush1.xpose.msra.mxu0 0.0
          %7674 = vmatprep.subr.mxu0 0.0
          %7675 = vmatpush1.xpose.msra.mxu0 0.0
          %7676 = vmatprep.subr.mxu0 0.0
          %7677 = vmatpush1.xpose.msra.mxu0 0.0
          %7678 = vmatprep.subr.mxu0 0.0
          %7679 = vmatpush1.xpose.msra.mxu0 0.0
          %7680 = vmatprep.subr.mxu0 0.0
          %7681 = vmatpush1.xpose.msra.mxu0 0.0
          %7682 = vmatprep.subr.mxu0 0.0
          %7683 = vmatpush1.xpose.msra.mxu0 0.0
          %7684 = vmatprep.subr.mxu0 0.0
          %7685 = vmatpush1.xpose.msra.mxu0 0.0
          %7686 = vmatprep.subr.mxu0 0.0
          %7687 = vmatpush1.xpose.msra.mxu0 0.0
          %7688 = vmatprep.subr.mxu0 0.0
          %7689 = vmatpush1.xpose.msra.mxu0 0.0
          %7690 = vmatprep.subr.mxu0 0.0
          %7691 = vmatpush1.xpose.msra.mxu0 0.0
          %7692 = vmatprep.subr.mxu0 0.0
          %7693 = vmatpush1.xpose.msra.mxu0 0.0
          %7694 = vmatprep.subr.mxu0 0.0
          %7695 = vmatpush1.xpose.msra.mxu0 0.0
          %7696 = vmatprep.subr.mxu0 0.0
          %7697 = vmatpush1.xpose.msra.mxu0 0.0
          %7698 = vmatprep.mubr.f32.mxu0 0.0
          %7699 = vmatmul.mubr.f32.gmra.mrb[0].mxu0 %v7602
          %v7700 = vpop.f32.mrb[0].mxu0
          %v7701 = vadd.f32 0.0, %v7700
          %v7702 = vpop.f32.mrb[0].mxu0
          %7703 = vmatprep.mubr.f32.mxu0 0.0
          %7704 = vmatmul.mubr.f32.gmra.mrb[0].mxu0 %v7604
          %v7705 = vpop.f32.mrb[0].mxu0
          %v7706 = vadd.f32 0.0, %v7705
          %v7707 = vpop.f32.mrb[0].mxu0
          %7708 = vmatprep.mubr.f32.mxu0 0.0
          %7709 = vmatmul.mubr.f32.gmra.mrb[0].mxu0 %v7606
          %v7710 = vpop.f32.mrb[0].mxu0
          %v7711 = vadd.f32 0.0, %v7710
          %v7712 = vpop.f32.mrb[0].mxu0
          %7713 = vmatprep.mubr.f32.mxu0 0.0
          %7714 = vmatmul.mubr.f32.gmra.mrb[0].mxu0 %v7608
          %v7715 = vpop.f32.mrb[0].mxu0
          %v7716 = vadd.f32 0.0, %v7715
          %v7717 = vpop.f32.mrb[0].mxu0
          %7718 = vmatprep.mubr.f32.mxu0 0.0
          %7719 = vmatmul.mubr.f32.gmra.mrb[0].mxu0 %v7610
          %v7720 = vpop.f32.mrb[0].mxu0
          %v7721 = vadd.f32 0.0, %v7720
          %v7722 = vpop.f32.mrb[0].mxu0
          %7723 = vmatprep.mubr.f32.mxu0 0.0
          %7724 = vmatmul.mubr.f32.gmra.mrb[0].mxu0 %v7612
          %v7725 = vpop.f32.mrb[0].mxu0
          %v7726 = vadd.f32 0.0, %v7725
          %v7727 = vpop.f32.mrb[0].mxu0
          %7728 = vmatprep.mubr.f32.mxu0 0.0
          %7729 = vmatmul.mubr.f32.gmra.mrb[0].mxu0 %v7614
          %v7730 = vpop.f32.mrb[0].mxu0
          %v7731 = vadd.f32 0.0, %v7730
          %v7732 = vpop.f32.mrb[0].mxu0
          %7733 = vmatprep.mubr.f32.mxu0 0.0
          %7734 = vmatmul.mubr.f32.gmra.mrb[0].mxu0 %v7616
          %v7735 = vpop.f32.mrb[0].mxu0
          %v7736 = vadd.f32 0.0, %v7735
          %v7737 = vpop.f32.mrb[0].mxu0
          %7738 = vdwg.mxu0
          %v7739 = vsel %vm401, %v7532, -inf
          %7740 = vmax.xlane.f32.xlu0 %v7739
          %v7741 = vpop.xlane.xlu0 %7740
          %v7742 = vsel %vm401, %v7537, -inf
          %7743 = vmax.xlane.f32.xlu0 %v7742
          %v7744 = vpop.xlane.xlu0 %7743
          %v7745 = vsel %vm401, %v7542, -inf
          %7746 = vmax.xlane.f32.xlu0 %v7745
          %v7747 = vpop.xlane.xlu0 %7746
          %v7748 = vsel %vm401, %v7547, -inf
          %7749 = vmax.xlane.f32.xlu0 %v7748
          %v7750 = vpop.xlane.xlu0 %7749
          %v7751 = vsel %vm401, %v7552, -inf
          %7752 = vmax.xlane.f32.xlu0 %v7751
          %v7753 = vpop.xlane.xlu0 %7752
          %v7754 = vsel %vm401, %v7557, -inf
          %7755 = vmax.xlane.f32.xlu0 %v7754
          %v7756 = vpop.xlane.xlu0 %7755
          %v7757 = vsel %vm401, %v7562, -inf
          %7758 = vmax.xlane.f32.xlu0 %v7757
          %v7759 = vpop.xlane.xlu0 %7758
          %v7760 = vsel %vm401, %v7567, -inf
          %7761 = vmax.xlane.f32.xlu0 %v7760
          %v7762 = vpop.xlane.xlu0 %7761
          %v7763 = vsel %vm401, %v7701, -inf
          %7764 = vmax.xlane.f32.xlu0 %v7763
          %v7765 = vpop.xlane.xlu0 %7764
          %v7766 = vsel %vm401, %v7706, -inf
          %7767 = vmax.xlane.f32.xlu0 %v7766
          %v7768 = vpop.xlane.xlu0 %7767
          %v7769 = vsel %vm401, %v7711, -inf
          %7770 = vmax.xlane.f32.xlu0 %v7769
          %v7771 = vpop.xlane.xlu0 %7770
          %v7772 = vsel %vm401, %v7716, -inf
          %7773 = vmax.xlane.f32.xlu0 %v7772
          %v7774 = vpop.xlane.xlu0 %7773
          %v7775 = vsel %vm401, %v7721, -inf
          %7776 = vmax.xlane.f32.xlu0 %v7775
          %v7777 = vpop.xlane.xlu0 %7776
          %v7778 = vsel %vm401, %v7726, -inf
          %7779 = vmax.xlane.f32.xlu0 %v7778
          %v7780 = vpop.xlane.xlu0 %7779
          %v7781 = vsel %vm401, %v7731, -inf
          %7782 = vmax.xlane.f32.xlu0 %v7781
          %v7783 = vpop.xlane.xlu0 %7782
          %v7784 = vsel %vm401, %v7736, -inf
          %7785 = vmax.xlane.f32.xlu0 %v7784
          %v7786 = vpop.xlane.xlu0 %7785
          %v7787 = vsub.f32 %v7532, %v7741
          %v7788 = vsub.f32 %v7537, %v7744
          %v7789 = vsub.f32 %v7542, %v7747
          %v7790 = vsub.f32 %v7547, %v7750
          %v7791 = vsub.f32 %v7552, %v7753
          %v7792 = vsub.f32 %v7557, %v7756
          %v7793 = vsub.f32 %v7562, %v7759
          %v7794 = vsub.f32 %v7567, %v7762
          %v7795 = vsub.f32 %v7701, %v7765
          %v7796 = vsub.f32 %v7706, %v7768
          %v7797 = vsub.f32 %v7711, %v7771
          %v7798 = vsub.f32 %v7716, %v7774
          %v7799 = vsub.f32 %v7721, %v7777
          %v7800 = vsub.f32 %v7726, %v7780
          %v7801 = vsub.f32 %v7731, %v7783
          %v7802 = vsub.f32 %v7736, %v7786
          %v7803 = vmul.f32 %v7787, 1.442695
          %v7804 = vpow.pop %v7803
          %v7805 = vmul.f32 %v7788, 1.442695
          %v7806 = vpow.pop %v7805
          %v7807 = vmul.f32 %v7789, 1.442695
          %v7808 = vpow.pop %v7807
          %v7809 = vmul.f32 %v7790, 1.442695
          %v7810 = vpow.pop %v7809
          %v7811 = vmul.f32 %v7791, 1.442695
          %v7812 = vpow.pop %v7811
          %v7813 = vmul.f32 %v7792, 1.442695
          %v7814 = vpow.pop %v7813
          %v7815 = vmul.f32 %v7793, 1.442695
          %v7816 = vpow.pop %v7815
          %v7817 = vmul.f32 %v7794, 1.442695
          %v7818 = vpow.pop %v7817
          %v7819 = vmul.f32 %v7795, 1.442695
          %v7820 = vpow.pop %v7819
          %v7821 = vmul.f32 %v7796, 1.442695
          %v7822 = vpow.pop %v7821
          %v7823 = vmul.f32 %v7797, 1.442695
          %v7824 = vpow.pop %v7823
          %v7825 = vmul.f32 %v7798, 1.442695
          %v7826 = vpow.pop %v7825
          %v7827 = vmul.f32 %v7799, 1.442695
          %v7828 = vpow.pop %v7827
          %v7829 = vmul.f32 %v7800, 1.442695
          %v7830 = vpow.pop %v7829
          %v7831 = vmul.f32 %v7801, 1.442695
          %v7832 = vpow.pop %v7831
          %v7833 = vmul.f32 %v7802, 1.442695
          %v7834 = vpow.pop %v7833
          %v7835 = vmul.f32 %v7804, %v425
          %v7836 = vmul.f32 %v7806, %v425
          %v7837 = vmul.f32 %v7808, %v425
          %v7838 = vmul.f32 %v7810, %v425
          %v7839 = vmul.f32 %v7812, %v425
          %v7840 = vmul.f32 %v7814, %v425
          %v7841 = vmul.f32 %v7816, %v425
          %v7842 = vmul.f32 %v7818, %v425
          %v7843 = vmul.f32 %v7820, %v429
          %v7844 = vmul.f32 %v7822, %v429
          %v7845 = vmul.f32 %v7824, %v429
          %v7846 = vmul.f32 %v7826, %v429
          %v7847 = vmul.f32 %v7828, %v429
          %v7848 = vmul.f32 %v7830, %v429
          %v7849 = vmul.f32 %v7832, %v429
          %v7850 = vmul.f32 %v7834, %v429
          %v7851 = vsel %vm401, %v7835, 0.0
          %7852 = vadd.xlane.f32.xlu0 %v7851
          %v7853 = vpop.xlane.xlu0 %7852
          %v7854 = vsel %vm401, %v7836, 0.0
          %7855 = vadd.xlane.f32.xlu0 %v7854
          %v7856 = vpop.xlane.xlu0 %7855
          %v7857 = vsel %vm401, %v7837, 0.0
          %7858 = vadd.xlane.f32.xlu0 %v7857
          %v7859 = vpop.xlane.xlu0 %7858
          %v7860 = vsel %vm401, %v7838, 0.0
          %7861 = vadd.xlane.f32.xlu0 %v7860
          %v7862 = vpop.xlane.xlu0 %7861
          %v7863 = vsel %vm401, %v7839, 0.0
          %7864 = vadd.xlane.f32.xlu0 %v7863
          %v7865 = vpop.xlane.xlu0 %7864
          %v7866 = vsel %vm401, %v7840, 0.0
          %7867 = vadd.xlane.f32.xlu0 %v7866
          %v7868 = vpop.xlane.xlu0 %7867
          %v7869 = vsel %vm401, %v7841, 0.0
          %7870 = vadd.xlane.f32.xlu0 %v7869
          %v7871 = vpop.xlane.xlu0 %7870
          %v7872 = vsel %vm401, %v7842, 0.0
          %7873 = vadd.xlane.f32.xlu0 %v7872
          %v7874 = vpop.xlane.xlu0 %7873
          %v7875 = vsel %vm401, %v7843, 0.0
          %7876 = vadd.xlane.f32.xlu0 %v7875
          %v7877 = vpop.xlane.xlu0 %7876
          %v7878 = vsel %vm401, %v7844, 0.0
          %7879 = vadd.xlane.f32.xlu0 %v7878
          %v7880 = vpop.xlane.xlu0 %7879
          %v7881 = vsel %vm401, %v7845, 0.0
          %7882 = vadd.xlane.f32.xlu0 %v7881
          %v7883 = vpop.xlane.xlu0 %7882
          %v7884 = vsel %vm401, %v7846, 0.0
          %7885 = vadd.xlane.f32.xlu0 %v7884
          %v7886 = vpop.xlane.xlu0 %7885
          %v7887 = vsel %vm401, %v7847, 0.0
          %7888 = vadd.xlane.f32.xlu0 %v7887
          %v7889 = vpop.xlane.xlu0 %7888
          %v7890 = vsel %vm401, %v7848, 0.0
          %7891 = vadd.xlane.f32.xlu0 %v7890
          %v7892 = vpop.xlane.xlu0 %7891
          %v7893 = vsel %vm401, %v7849, 0.0
          %7894 = vadd.xlane.f32.xlu0 %v7893
          %v7895 = vpop.xlane.xlu0 %7894
          %v7896 = vsel %vm401, %v7850, 0.0
          %7897 = vadd.xlane.f32.xlu0 %v7896
          %v7898 = vpop.xlane.xlu0 %7897
          %v7899 = vmax.f32 %v7853, 1e-30
          %v7900 = vmax.f32 %v7856, 1e-30
          %v7901 = vmax.f32 %v7859, 1e-30
          %v7902 = vmax.f32 %v7862, 1e-30
          %v7903 = vmax.f32 %v7865, 1e-30
          %v7904 = vmax.f32 %v7868, 1e-30
          %v7905 = vmax.f32 %v7871, 1e-30
          %v7906 = vmax.f32 %v7874, 1e-30
          %v7907 = vmax.f32 %v7877, 1e-30
          %v7908 = vmax.f32 %v7880, 1e-30
          %v7909 = vmax.f32 %v7883, 1e-30
          %v7910 = vmax.f32 %v7886, 1e-30
          %v7911 = vmax.f32 %v7889, 1e-30
          %v7912 = vmax.f32 %v7892, 1e-30
          %v7913 = vmax.f32 %v7895, 1e-30
          %v7914 = vmax.f32 %v7898, 1e-30
          %v7915 = vrcp.pop %v7899
          %v7916 = vrcp.pop %v7900
          %v7917 = vrcp.pop %v7901
          %v7918 = vrcp.pop %v7902
          %v7919 = vrcp.pop %v7903
          %v7920 = vrcp.pop %v7904
          %v7921 = vrcp.pop %v7905
          %v7922 = vrcp.pop %v7906
          %v7923 = vrcp.pop %v7907
          %v7924 = vrcp.pop %v7908
          %v7925 = vrcp.pop %v7909
          %v7926 = vrcp.pop %v7910
          %v7927 = vrcp.pop %v7911
          %v7928 = vrcp.pop %v7912
          %v7929 = vrcp.pop %v7913
          %v7930 = vrcp.pop %v7914
          %v7931 = vmul.f32 %v7835, %v7915
          %v7932 = vmul.f32 %v7836, %v7916
          %v7933 = vmul.f32 %v7837, %v7917
          %v7934 = vmul.f32 %v7838, %v7918
          %v7935 = vmul.f32 %v7839, %v7919
          %v7936 = vmul.f32 %v7840, %v7920
          %v7937 = vmul.f32 %v7841, %v7921
          %v7938 = vmul.f32 %v7842, %v7922
          %v7939 = vmul.f32 %v7843, %v7923
          %v7940 = vmul.f32 %v7844, %v7924
          %v7941 = vmul.f32 %v7845, %v7925
          %v7942 = vmul.f32 %v7846, %v7926
          %v7943 = vmul.f32 %v7847, %v7927
          %v7944 = vmul.f32 %v7848, %v7928
          %v7945 = vmul.f32 %v7849, %v7929
          %v7946 = vmul.f32 %v7850, %v7930
          %7947 = vrot.lane.b32.xlu0 %v950, 72
          %v7948 = vpop.permute.xlu0 %7947
          %7949 = vrot.lane.b32.xlu0 %v951, 72
          %v7950 = vpop.permute.xlu0 %7949
          %7951 = vrot.lane.b32.xlu0 %v952, 72
          %v7952 = vpop.permute.xlu0 %7951
          %7953 = vrot.lane.b32.xlu0 %v953, 72
          %v7954 = vpop.permute.xlu0 %7953
          %7955 = vrot.lane.b32.xlu0 %v954, 72
          %v7956 = vpop.permute.xlu0 %7955
          %7957 = vrot.lane.b32.xlu0 %v955, 72
          %v7958 = vpop.permute.xlu0 %7957
          %7959 = vrot.lane.b32.xlu0 %v956, 72
          %v7960 = vpop.permute.xlu0 %7959
          %7961 = vrot.lane.b32.xlu0 %v957, 72
          %v7962 = vpop.permute.xlu0 %7961
          %v7972 = vsel %vm401, %v7931, 0
          %v7975 = vsel %vm401, %v7932, 0
          %v7978 = vsel %vm401, %v7933, 0
          %v7981 = vsel %vm401, %v7934, 0
          %v7984 = vsel %vm401, %v7935, 0
          %v7987 = vsel %vm401, %v7936, 0
          %v7990 = vsel %vm401, %v7937, 0
          %v7993 = vsel %vm401, %v7938, 0
          %7995 = vmatprep.subr.mxu0 0.0
          %7996 = vmatpush1.msra.mxu0 %v7948
          %7997 = vmatprep.subr.mxu0 0.0
          %7998 = vmatpush1.msra.mxu0 %v7950
          %7999 = vmatprep.subr.mxu0 0.0
          %8000 = vmatpush1.msra.mxu0 %v7952
          %8001 = vmatprep.subr.mxu0 0.0
          %8002 = vmatpush1.msra.mxu0 %v7954
          %8003 = vmatprep.subr.mxu0 0.0
          %8004 = vmatpush1.msra.mxu0 %v7956
          %8005 = vmatprep.subr.mxu0 0.0
          %8006 = vmatpush1.msra.mxu0 %v7958
          %8007 = vmatprep.subr.mxu0 0.0
          %8008 = vmatpush1.msra.mxu0 %v7960
          %8009 = vmatprep.subr.mxu0 0.0
          %8010 = vmatpush1.msra.mxu0 %v7962
          %8011 = vmatprep.subr.mxu0 0.0
          %8012 = vmatpush1.msra.mxu0 0.0
          %8013 = vmatprep.subr.mxu0 0.0
          %8014 = vmatpush1.msra.mxu0 0.0
          %8015 = vmatprep.subr.mxu0 0.0
          %8016 = vmatpush1.msra.mxu0 0.0
          %8017 = vmatprep.subr.mxu0 0.0
          %8018 = vmatpush1.msra.mxu0 0.0
          %8019 = vmatprep.subr.mxu0 0.0
          %8020 = vmatpush1.msra.mxu0 0.0
          %8021 = vmatprep.subr.mxu0 0.0
          %8022 = vmatpush1.msra.mxu0 0.0
          %8023 = vmatprep.subr.mxu0 0.0
          %8024 = vmatpush1.msra.mxu0 0.0
          %8025 = vmatprep.subr.mxu0 0.0
          %8026 = vmatpush1.msra.mxu0 0.0
          %8027 = vmatprep.subr.mxu0 0.0
          %8028 = vmatpush1.msra.mxu0 0.0
          %8029 = vmatprep.subr.mxu0 0.0
          %8030 = vmatpush1.msra.mxu0 0.0
          %8031 = vmatprep.subr.mxu0 0.0
          %8032 = vmatpush1.msra.mxu0 0.0
          %8033 = vmatprep.subr.mxu0 0.0
          %8034 = vmatpush1.msra.mxu0 0.0
          %8035 = vmatprep.subr.mxu0 0.0
          %8036 = vmatpush1.msra.mxu0 0.0
          %8037 = vmatprep.subr.mxu0 0.0
          %8038 = vmatpush1.msra.mxu0 0.0
          %8039 = vmatprep.subr.mxu0 0.0
          %8040 = vmatpush1.msra.mxu0 0.0
          %8041 = vmatprep.subr.mxu0 0.0
          %8042 = vmatpush1.msra.mxu0 0.0
          %8043 = vmatprep.subr.mxu0 0.0
          %8044 = vmatpush1.msra.mxu0 0.0
          %8045 = vmatprep.subr.mxu0 0.0
          %8046 = vmatpush1.msra.mxu0 0.0
          %8047 = vmatprep.subr.mxu0 0.0
          %8048 = vmatpush1.msra.mxu0 0.0
          %8049 = vmatprep.subr.mxu0 0.0
          %8050 = vmatpush1.msra.mxu0 0.0
          %8051 = vmatprep.subr.mxu0 0.0
          %8052 = vmatpush1.msra.mxu0 0.0
          %8053 = vmatprep.subr.mxu0 0.0
          %8054 = vmatpush1.msra.mxu0 0.0
          %8055 = vmatprep.subr.mxu0 0.0
          %8056 = vmatpush1.msra.mxu0 0.0
          %8057 = vmatprep.subr.mxu0 0.0
          %8058 = vmatpush1.msra.mxu0 0.0
          %8059 = vmatprep.mubr.f32.mxu0 0.0
          %8060 = vmatmul.mubr.f32.gmra.mrb[0].mxu0 %v7972
          %v8061 = vpop.f32.mrb[0].mxu0
          %v8062 = vadd.f32 0.0, %v8061
          %v8063 = vpop.f32.mrb[0].mxu0
          %8064 = vmatprep.mubr.f32.mxu0 0.0
          %8065 = vmatmul.mubr.f32.gmra.mrb[0].mxu0 %v7975
          %v8066 = vpop.f32.mrb[0].mxu0
          %v8067 = vadd.f32 0.0, %v8066
          %v8068 = vpop.f32.mrb[0].mxu0
          %8069 = vmatprep.mubr.f32.mxu0 0.0
          %8070 = vmatmul.mubr.f32.gmra.mrb[0].mxu0 %v7978
          %v8071 = vpop.f32.mrb[0].mxu0
          %v8072 = vadd.f32 0.0, %v8071
          %v8073 = vpop.f32.mrb[0].mxu0
          %8074 = vmatprep.mubr.f32.mxu0 0.0
          %8075 = vmatmul.mubr.f32.gmra.mrb[0].mxu0 %v7981
          %v8076 = vpop.f32.mrb[0].mxu0
          %v8077 = vadd.f32 0.0, %v8076
          %v8078 = vpop.f32.mrb[0].mxu0
          %8079 = vmatprep.mubr.f32.mxu0 0.0
          %8080 = vmatmul.mubr.f32.gmra.mrb[0].mxu0 %v7984
          %v8081 = vpop.f32.mrb[0].mxu0
          %v8082 = vadd.f32 0.0, %v8081
          %v8083 = vpop.f32.mrb[0].mxu0
          %8084 = vmatprep.mubr.f32.mxu0 0.0
          %8085 = vmatmul.mubr.f32.gmra.mrb[0].mxu0 %v7987
          %v8086 = vpop.f32.mrb[0].mxu0
          %v8087 = vadd.f32 0.0, %v8086
          %v8088 = vpop.f32.mrb[0].mxu0
          %8089 = vmatprep.mubr.f32.mxu0 0.0
          %8090 = vmatmul.mubr.f32.gmra.mrb[0].mxu0 %v7990
          %v8091 = vpop.f32.mrb[0].mxu0
          %v8092 = vadd.f32 0.0, %v8091
          %v8093 = vpop.f32.mrb[0].mxu0
          %8094 = vmatprep.mubr.f32.mxu0 0.0
          %8095 = vmatmul.mubr.f32.gmra.mrb[0].mxu0 %v7993
          %v8096 = vpop.f32.mrb[0].mxu0
          %v8097 = vadd.f32 0.0, %v8096
          %v8098 = vpop.f32.mrb[0].mxu0
          %8099 = vdwg.mxu0
          %8100 = vrot.lane.b32.xlu0 %v958, 72
          %v8101 = vpop.permute.xlu0 %8100
          %8102 = vrot.lane.b32.xlu0 %v959, 72
          %v8103 = vpop.permute.xlu0 %8102
          %8104 = vrot.lane.b32.xlu0 %v960, 72
          %v8105 = vpop.permute.xlu0 %8104
          %8106 = vrot.lane.b32.xlu0 %v961, 72
          %v8107 = vpop.permute.xlu0 %8106
          %8108 = vrot.lane.b32.xlu0 %v962, 72
          %v8109 = vpop.permute.xlu0 %8108
          %8110 = vrot.lane.b32.xlu0 %v963, 72
          %v8111 = vpop.permute.xlu0 %8110
          %8112 = vrot.lane.b32.xlu0 %v964, 72
          %v8113 = vpop.permute.xlu0 %8112
          %8114 = vrot.lane.b32.xlu0 %v965, 72
          %v8115 = vpop.permute.xlu0 %8114
          %v8125 = vsel %vm401, %v7939, 0
          %v8128 = vsel %vm401, %v7940, 0
          %v8131 = vsel %vm401, %v7941, 0
          %v8134 = vsel %vm401, %v7942, 0
          %v8137 = vsel %vm401, %v7943, 0
          %v8140 = vsel %vm401, %v7944, 0
          %v8143 = vsel %vm401, %v7945, 0
          %v8146 = vsel %vm401, %v7946, 0
          %8148 = vmatprep.subr.mxu0 0.0
          %8149 = vmatpush1.msra.mxu0 %v8101
          %8150 = vmatprep.subr.mxu0 0.0
          %8151 = vmatpush1.msra.mxu0 %v8103
          %8152 = vmatprep.subr.mxu0 0.0
          %8153 = vmatpush1.msra.mxu0 %v8105
          %8154 = vmatprep.subr.mxu0 0.0
          %8155 = vmatpush1.msra.mxu0 %v8107
          %8156 = vmatprep.subr.mxu0 0.0
          %8157 = vmatpush1.msra.mxu0 %v8109
          %8158 = vmatprep.subr.mxu0 0.0
          %8159 = vmatpush1.msra.mxu0 %v8111
          %8160 = vmatprep.subr.mxu0 0.0
          %8161 = vmatpush1.msra.mxu0 %v8113
          %8162 = vmatprep.subr.mxu0 0.0
          %8163 = vmatpush1.msra.mxu0 %v8115
          %8164 = vmatprep.subr.mxu0 0.0
          %8165 = vmatpush1.msra.mxu0 0.0
          %8166 = vmatprep.subr.mxu0 0.0
          %8167 = vmatpush1.msra.mxu0 0.0
          %8168 = vmatprep.subr.mxu0 0.0
          %8169 = vmatpush1.msra.mxu0 0.0
          %8170 = vmatprep.subr.mxu0 0.0
          %8171 = vmatpush1.msra.mxu0 0.0
          %8172 = vmatprep.subr.mxu0 0.0
          %8173 = vmatpush1.msra.mxu0 0.0
          %8174 = vmatprep.subr.mxu0 0.0
          %8175 = vmatpush1.msra.mxu0 0.0
          %8176 = vmatprep.subr.mxu0 0.0
          %8177 = vmatpush1.msra.mxu0 0.0
          %8178 = vmatprep.subr.mxu0 0.0
          %8179 = vmatpush1.msra.mxu0 0.0
          %8180 = vmatprep.subr.mxu0 0.0
          %8181 = vmatpush1.msra.mxu0 0.0
          %8182 = vmatprep.subr.mxu0 0.0
          %8183 = vmatpush1.msra.mxu0 0.0
          %8184 = vmatprep.subr.mxu0 0.0
          %8185 = vmatpush1.msra.mxu0 0.0
          %8186 = vmatprep.subr.mxu0 0.0
          %8187 = vmatpush1.msra.mxu0 0.0
          %8188 = vmatprep.subr.mxu0 0.0
          %8189 = vmatpush1.msra.mxu0 0.0
          %8190 = vmatprep.subr.mxu0 0.0
          %8191 = vmatpush1.msra.mxu0 0.0
          %8192 = vmatprep.subr.mxu0 0.0
          %8193 = vmatpush1.msra.mxu0 0.0
          %8194 = vmatprep.subr.mxu0 0.0
          %8195 = vmatpush1.msra.mxu0 0.0
          %8196 = vmatprep.subr.mxu0 0.0
          %8197 = vmatpush1.msra.mxu0 0.0
          %8198 = vmatprep.subr.mxu0 0.0
          %8199 = vmatpush1.msra.mxu0 0.0
          %8200 = vmatprep.subr.mxu0 0.0
          %8201 = vmatpush1.msra.mxu0 0.0
          %8202 = vmatprep.subr.mxu0 0.0
          %8203 = vmatpush1.msra.mxu0 0.0
          %8204 = vmatprep.subr.mxu0 0.0
          %8205 = vmatpush1.msra.mxu0 0.0
          %8206 = vmatprep.subr.mxu0 0.0
          %8207 = vmatpush1.msra.mxu0 0.0
          %8208 = vmatprep.subr.mxu0 0.0
          %8209 = vmatpush1.msra.mxu0 0.0
          %8210 = vmatprep.subr.mxu0 0.0
          %8211 = vmatpush1.msra.mxu0 0.0
          %8212 = vmatprep.mubr.f32.mxu0 0.0
          %8213 = vmatmul.mubr.f32.gmra.mrb[0].mxu0 %v8125
          %v8214 = vpop.f32.mrb[0].mxu0
          %v8215 = vadd.f32 0.0, %v8214
          %v8216 = vpop.f32.mrb[0].mxu0
          %8217 = vmatprep.mubr.f32.mxu0 0.0
          %8218 = vmatmul.mubr.f32.gmra.mrb[0].mxu0 %v8128
          %v8219 = vpop.f32.mrb[0].mxu0
          %v8220 = vadd.f32 0.0, %v8219
          %v8221 = vpop.f32.mrb[0].mxu0
          %8222 = vmatprep.mubr.f32.mxu0 0.0
          %8223 = vmatmul.mubr.f32.gmra.mrb[0].mxu0 %v8131
          %v8224 = vpop.f32.mrb[0].mxu0
          %v8225 = vadd.f32 0.0, %v8224
          %v8226 = vpop.f32.mrb[0].mxu0
          %8227 = vmatprep.mubr.f32.mxu0 0.0
          %8228 = vmatmul.mubr.f32.gmra.mrb[0].mxu0 %v8134
          %v8229 = vpop.f32.mrb[0].mxu0
          %v8230 = vadd.f32 0.0, %v8229
          %v8231 = vpop.f32.mrb[0].mxu0
          %8232 = vmatprep.mubr.f32.mxu0 0.0
          %8233 = vmatmul.mubr.f32.gmra.mrb[0].mxu0 %v8137
          %v8234 = vpop.f32.mrb[0].mxu0
          %v8235 = vadd.f32 0.0, %v8234
          %v8236 = vpop.f32.mrb[0].mxu0
          %8237 = vmatprep.mubr.f32.mxu0 0.0
          %8238 = vmatmul.mubr.f32.gmra.mrb[0].mxu0 %v8140
          %v8239 = vpop.f32.mrb[0].mxu0
          %v8240 = vadd.f32 0.0, %v8239
          %v8241 = vpop.f32.mrb[0].mxu0
          %8242 = vmatprep.mubr.f32.mxu0 0.0
          %8243 = vmatmul.mubr.f32.gmra.mrb[0].mxu0 %v8143
          %v8244 = vpop.f32.mrb[0].mxu0
          %v8245 = vadd.f32 0.0, %v8244
          %v8246 = vpop.f32.mrb[0].mxu0
          %8247 = vmatprep.mubr.f32.mxu0 0.0
          %8248 = vmatmul.mubr.f32.gmra.mrb[0].mxu0 %v8146
          %v8249 = vpop.f32.mrb[0].mxu0
          %v8250 = vadd.f32 0.0, %v8249
          %v8251 = vpop.f32.mrb[0].mxu0
          %8252 = vdwg.mxu0
          %8269 = vrot.lane.b32.xlu0 %v8062, 56
          %v8270 = vpop.permute.xlu0 %8269
          %8271 = vrot.lane.b32.xlu0 %v8067, 56
          %v8272 = vpop.permute.xlu0 %8271
          %8273 = vrot.lane.b32.xlu0 %v8072, 56
          %v8274 = vpop.permute.xlu0 %8273
          %8275 = vrot.lane.b32.xlu0 %v8077, 56
          %v8276 = vpop.permute.xlu0 %8275
          %8277 = vrot.lane.b32.xlu0 %v8082, 56
          %v8278 = vpop.permute.xlu0 %8277
          %8279 = vrot.lane.b32.xlu0 %v8087, 56
          %v8280 = vpop.permute.xlu0 %8279
          %8281 = vrot.lane.b32.xlu0 %v8092, 56
          %v8282 = vpop.permute.xlu0 %8281
          %8283 = vrot.lane.b32.xlu0 %v8097, 56
          %v8284 = vpop.permute.xlu0 %8283
          %8285 = vrot.lane.b32.xlu0 %v8215, 56
          %v8286 = vpop.permute.xlu0 %8285
          %8287 = vrot.lane.b32.xlu0 %v8220, 56
          %v8288 = vpop.permute.xlu0 %8287
          %8289 = vrot.lane.b32.xlu0 %v8225, 56
          %v8290 = vpop.permute.xlu0 %8289
          %8291 = vrot.lane.b32.xlu0 %v8230, 56
          %v8292 = vpop.permute.xlu0 %8291
          %8293 = vrot.lane.b32.xlu0 %v8235, 56
          %v8294 = vpop.permute.xlu0 %8293
          %8295 = vrot.lane.b32.xlu0 %v8240, 56
          %v8296 = vpop.permute.xlu0 %8295
          %8297 = vrot.lane.b32.xlu0 %v8245, 56
          %v8298 = vpop.permute.xlu0 %8297
          %8299 = vrot.lane.b32.xlu0 %v8250, 56
          %v8300 = vpop.permute.xlu0 %8299
          %vm8317 = vcmask 523712
          %8318 = vst.msk [vmem:[#allocation3] sm:$0xff] %vm8317, %v8270
          %8319 = vst.msk [vmem:[#allocation3 + $0x8] sm:$0xff] %vm8317, %v8272
          %8320 = vst.msk [vmem:[#allocation3 + $0x10] sm:$0xff] %vm8317, %v8274
          %8321 = vst.msk [vmem:[#allocation3 + $0x18] sm:$0xff] %vm8317, %v8276
          %8322 = vst.msk [vmem:[#allocation3 + $0x20] sm:$0xff] %vm8317, %v8278
          %8323 = vst.msk [vmem:[#allocation3 + $0x28] sm:$0xff] %vm8317, %v8280
          %8324 = vst.msk [vmem:[#allocation3 + $0x30] sm:$0xff] %vm8317, %v8282
          %8325 = vst.msk [vmem:[#allocation3 + $0x38] sm:$0xff] %vm8317, %v8284
          %8326 = vst.msk [vmem:[#allocation3 + $0x40] sm:$0xff] %vm8317, %v8286
          %8327 = vst.msk [vmem:[#allocation3 + $0x48] sm:$0xff] %vm8317, %v8288
          %8328 = vst.msk [vmem:[#allocation3 + $0x50] sm:$0xff] %vm8317, %v8290
          %8329 = vst.msk [vmem:[#allocation3 + $0x58] sm:$0xff] %vm8317, %v8292
          %8330 = vst.msk [vmem:[#allocation3 + $0x60] sm:$0xff] %vm8317, %v8294
          %8331 = vst.msk [vmem:[#allocation3 + $0x68] sm:$0xff] %vm8317, %v8296
          %8332 = vst.msk [vmem:[#allocation3 + $0x70] sm:$0xff] %vm8317, %v8298
          %8333 = vst.msk [vmem:[#allocation3 + $0x78] sm:$0xff] %vm8317, %v8300
          %v8334 = vld [vmem:[#allocation3] sm:$0xff]
          %v8335 = vld [vmem:[#allocation3 + $0x8] sm:$0xff]
          %v8336 = vld [vmem:[#allocation3 + $0x10] sm:$0xff]
          %v8337 = vld [vmem:[#allocation3 + $0x18] sm:$0xff]
          %v8338 = vld [vmem:[#allocation3 + $0x20] sm:$0xff]
          %v8339 = vld [vmem:[#allocation3 + $0x28] sm:$0xff]
          %v8340 = vld [vmem:[#allocation3 + $0x30] sm:$0xff]
          %v8341 = vld [vmem:[#allocation3 + $0x38] sm:$0xff]
          %v8342 = vld [vmem:[#allocation3 + $0x40] sm:$0xff]
          %v8343 = vld [vmem:[#allocation3 + $0x48] sm:$0xff]
          %v8344 = vld [vmem:[#allocation3 + $0x50] sm:$0xff]
          %v8345 = vld [vmem:[#allocation3 + $0x58] sm:$0xff]
          %v8346 = vld [vmem:[#allocation3 + $0x60] sm:$0xff]
          %v8347 = vld [vmem:[#allocation3 + $0x68] sm:$0xff]
          %v8348 = vld [vmem:[#allocation3 + $0x70] sm:$0xff]
          %v8349 = vld [vmem:[#allocation3 + $0x78] sm:$0xff]
          %v8350 = vpack.c.bf16 %v8335, %v8334
          %v8351 = vpack.c.bf16 %v8337, %v8336
          %v8352 = vpack.c.bf16 %v8339, %v8338
          %v8353 = vpack.c.bf16 %v8341, %v8340
          %v8354 = vpack.c.bf16 %v8343, %v8342
          %v8355 = vpack.c.bf16 %v8345, %v8344
          %v8356 = vpack.c.bf16 %v8347, %v8346
          %v8357 = vpack.c.bf16 %v8349, %v8348
          %s8358 = smul.u32 %s433, 8
          %s8359 = smul.addr %s8358, 4
          %s8360 = scalar_lea.vmem [#allocation10], %s8359
          %v8361 = vld [vmem:[%s8360] sm:$0xf]
          %v8362 = vld [vmem:[%s8360 + $0x4] sm:$0xf]
          %v8363 = vld [vmem:[%s8360 + $0x8] sm:$0xf]
          %v8364 = vld [vmem:[%s8360 + $0xc] sm:$0xf]
          %v8365 = vld [vmem:[%s8360 + $0x10] sm:$0xf]
          %v8366 = vld [vmem:[%s8360 + $0x14] sm:$0xf]
          %v8367 = vld [vmem:[%s8360 + $0x18] sm:$0xf]
          %v8368 = vld [vmem:[%s8360 + $0x1c] sm:$0xf]
          %v8377 = vunpack.c.l.b16 %v8361
          %v8378 = vunpack.c.l.b16 %v8362
          %v8379 = vunpack.c.l.b16 %v8363
          %v8380 = vunpack.c.l.b16 %v8364
          %v8381 = vunpack.c.l.b16 %v8365
          %v8382 = vunpack.c.l.b16 %v8366
          %v8383 = vunpack.c.l.b16 %v8367
          %v8384 = vunpack.c.l.b16 %v8368
          %v8385 = vpack.c.b16 %v8378, %v8377
          %v8386 = vpack.c.b16 %v8380, %v8379
          %v8387 = vpack.c.b16 %v8382, %v8381
          %v8388 = vpack.c.b16 %v8384, %v8383
          %v8394 = vsel %vm401, %v8350, 0
          %v8397 = vsel %vm401, %v8351, 0
          %v8400 = vsel %vm401, %v8352, 0
          %v8403 = vsel %vm401, %v8353, 0
          %v8406 = vsel %vm401, %v8354, 0
          %v8409 = vsel %vm401, %v8355, 0
          %v8412 = vsel %vm401, %v8356, 0
          %v8415 = vsel %vm401, %v8357, 0
          %8417 = vmatprep.subr.bf16.mxu0 0
          %8418 = vmatpush1.bf16.msra.mxu0 %v8385
          %8419 = vmatprep.subr.bf16.mxu0 0
          %8420 = vmatpush1.bf16.msra.mxu0 %v8386
          %8421 = vmatprep.subr.bf16.mxu0 0
          %8422 = vmatpush1.bf16.msra.mxu0 %v8387
          %8423 = vmatprep.subr.bf16.mxu0 0
          %8424 = vmatpush1.bf16.msra.mxu0 %v8388
          %8425 = vmatprep.subr.bf16.mxu0 0
          %8426 = vmatpush1.bf16.msra.mxu0 0
          %8427 = vmatprep.subr.bf16.mxu0 0
          %8428 = vmatpush1.bf16.msra.mxu0 0
          %8429 = vmatprep.subr.bf16.mxu0 0
          %8430 = vmatpush1.bf16.msra.mxu0 0
          %8431 = vmatprep.subr.bf16.mxu0 0
          %8432 = vmatpush1.bf16.msra.mxu0 0
          %8433 = vmatprep.subr.bf16.mxu0 0
          %8434 = vmatpush1.bf16.msra.mxu0 0
          %8435 = vmatprep.subr.bf16.mxu0 0
          %8436 = vmatpush1.bf16.msra.mxu0 0
          %8437 = vmatprep.subr.bf16.mxu0 0
          %8438 = vmatpush1.bf16.msra.mxu0 0
          %8439 = vmatprep.subr.bf16.mxu0 0
          %8440 = vmatpush1.bf16.msra.mxu0 0
          %8441 = vmatprep.subr.bf16.mxu0 0
          %8442 = vmatpush1.bf16.msra.mxu0 0
          %8443 = vmatprep.subr.bf16.mxu0 0
          %8444 = vmatpush1.bf16.msra.mxu0 0
          %8445 = vmatprep.subr.bf16.mxu0 0
          %8446 = vmatpush1.bf16.msra.mxu0 0
          %8447 = vmatprep.subr.bf16.mxu0 0
          %8448 = vmatpush1.bf16.msra.mxu0 0
          %8449 = vmatprep.mubr.bf16.mxu0 0
          %8450 = vmatmul.mubr.bf16.gmra.mrb[0].mxu0 %v8394
          %v8451 = vpop.f32.mrb[0].mxu0
          %v8452 = vadd.f32 0.0, %v8451
          %v8453 = vpop.f32.mrb[0].mxu0
          %v8454 = vpop.f32.mrb[0].mxu0
          %v8455 = vadd.f32 0.0, %v8454
          %v8456 = vpop.f32.mrb[0].mxu0
          %8457 = vmatprep.mubr.bf16.mxu0 0
          %8458 = vmatmul.mubr.bf16.gmra.mrb[0].mxu0 %v8397
          %v8459 = vpop.f32.mrb[0].mxu0
          %v8460 = vadd.f32 0.0, %v8459
          %v8461 = vpop.f32.mrb[0].mxu0
          %v8462 = vpop.f32.mrb[0].mxu0
          %v8463 = vadd.f32 0.0, %v8462
          %v8464 = vpop.f32.mrb[0].mxu0
          %8465 = vmatprep.mubr.bf16.mxu0 0
          %8466 = vmatmul.mubr.bf16.gmra.mrb[0].mxu0 %v8400
          %v8467 = vpop.f32.mrb[0].mxu0
          %v8468 = vadd.f32 0.0, %v8467
          %v8469 = vpop.f32.mrb[0].mxu0
          %v8470 = vpop.f32.mrb[0].mxu0
          %v8471 = vadd.f32 0.0, %v8470
          %v8472 = vpop.f32.mrb[0].mxu0
          %8473 = vmatprep.mubr.bf16.mxu0 0
          %8474 = vmatmul.mubr.bf16.gmra.mrb[0].mxu0 %v8403
          %v8475 = vpop.f32.mrb[0].mxu0
          %v8476 = vadd.f32 0.0, %v8475
          %v8477 = vpop.f32.mrb[0].mxu0
          %v8478 = vpop.f32.mrb[0].mxu0
          %v8479 = vadd.f32 0.0, %v8478
          %v8480 = vpop.f32.mrb[0].mxu0
          %8481 = vmatprep.mubr.bf16.mxu0 0
          %8482 = vmatmul.mubr.bf16.gmra.mrb[0].mxu0 %v8406
          %v8483 = vpop.f32.mrb[0].mxu0
          %v8484 = vadd.f32 0.0, %v8483
          %v8485 = vpop.f32.mrb[0].mxu0
          %v8486 = vpop.f32.mrb[0].mxu0
          %v8487 = vadd.f32 0.0, %v8486
          %v8488 = vpop.f32.mrb[0].mxu0
          %8489 = vmatprep.mubr.bf16.mxu0 0
          %8490 = vmatmul.mubr.bf16.gmra.mrb[0].mxu0 %v8409
          %v8491 = vpop.f32.mrb[0].mxu0
          %v8492 = vadd.f32 0.0, %v8491
          %v8493 = vpop.f32.mrb[0].mxu0
          %v8494 = vpop.f32.mrb[0].mxu0
          %v8495 = vadd.f32 0.0, %v8494
          %v8496 = vpop.f32.mrb[0].mxu0
          %8497 = vmatprep.mubr.bf16.mxu0 0
          %8498 = vmatmul.mubr.bf16.gmra.mrb[0].mxu0 %v8412
          %v8499 = vpop.f32.mrb[0].mxu0
          %v8500 = vadd.f32 0.0, %v8499
          %v8501 = vpop.f32.mrb[0].mxu0
          %v8502 = vpop.f32.mrb[0].mxu0
          %v8503 = vadd.f32 0.0, %v8502
          %v8504 = vpop.f32.mrb[0].mxu0
          %8505 = vmatprep.mubr.bf16.mxu0 0
          %8506 = vmatmul.mubr.bf16.gmra.mrb[0].mxu0 %v8415
          %v8507 = vpop.f32.mrb[0].mxu0
          %v8508 = vadd.f32 0.0, %v8507
          %v8509 = vpop.f32.mrb[0].mxu0
          %v8510 = vpop.f32.mrb[0].mxu0
          %v8511 = vadd.f32 0.0, %v8510
          %v8512 = vpop.f32.mrb[0].mxu0
          %8513 = vdwg.mxu0
          %v8514 = vadd.f32 %v438, %v8452
          %v8515 = vadd.f32 %v439, %v8455
          %v8516 = vadd.f32 %v440, %v8460
          %v8517 = vadd.f32 %v441, %v8463
          %v8518 = vadd.f32 %v442, %v8468
          %v8519 = vadd.f32 %v443, %v8471
          %v8520 = vadd.f32 %v444, %v8476
          %v8521 = vadd.f32 %v445, %v8479
          %v8522 = vadd.f32 %v446, %v8484
          %v8523 = vadd.f32 %v447, %v8487
          %v8524 = vadd.f32 %v448, %v8492
          %v8525 = vadd.f32 %v449, %v8495
          %v8526 = vadd.f32 %v450, %v8500
          %v8527 = vadd.f32 %v451, %v8503
          %v8528 = vadd.f32 %v452, %v8508
          %v8529 = vadd.f32 %v453, %v8511
          %v8530 = vlaneseq
          %v8531 = vshrl.u32 %v8530, 7
          %v8532 = vsub.s32 5, %v8531
          %v8533 = vrot.slane %v456, %v8532
          %v8534 = vadd.f32 %v8514, %v8533
          %v8535 = vadd.f32 %v8515, %v8533
          %v8536 = vadd.f32 %v8516, %v8533
          %v8537 = vadd.f32 %v8517, %v8533
          %v8538 = vadd.f32 %v8518, %v8533
          %v8539 = vadd.f32 %v8519, %v8533
          %v8540 = vadd.f32 %v8520, %v8533
          %v8541 = vadd.f32 %v8521, %v8533
          %v8542 = vadd.f32 %v8522, %v8533
          %v8543 = vadd.f32 %v8523, %v8533
          %v8544 = vadd.f32 %v8524, %v8533
          %v8545 = vadd.f32 %v8525, %v8533
          %v8546 = vadd.f32 %v8526, %v8533
          %v8547 = vadd.f32 %v8527, %v8533
          %v8548 = vadd.f32 %v8528, %v8533
          %v8549 = vadd.f32 %v8529, %v8533
          %v8550 = vsel %vm401, %v8534, 0.0
          %8551 = vadd.xlane.f32.xlu0 %v8550
          %v8552 = vpop.xlane.xlu0 %8551
          %v8553 = vsel %vm401, %v8535, 0.0
          %8554 = vadd.xlane.f32.xlu0 %v8553
          %v8555 = vpop.xlane.xlu0 %8554
          %v8556 = vsel %vm401, %v8536, 0.0
          %8557 = vadd.xlane.f32.xlu0 %v8556
          %v8558 = vpop.xlane.xlu0 %8557
          %v8559 = vsel %vm401, %v8537, 0.0
          %8560 = vadd.xlane.f32.xlu0 %v8559
          %v8561 = vpop.xlane.xlu0 %8560
          %v8562 = vsel %vm401, %v8538, 0.0
          %8563 = vadd.xlane.f32.xlu0 %v8562
          %v8564 = vpop.xlane.xlu0 %8563
          %v8565 = vsel %vm401, %v8539, 0.0
          %8566 = vadd.xlane.f32.xlu0 %v8565
          %v8567 = vpop.xlane.xlu0 %8566
          %v8568 = vsel %vm401, %v8540, 0.0
          %8569 = vadd.xlane.f32.xlu0 %v8568
          %v8570 = vpop.xlane.xlu0 %8569
          %v8571 = vsel %vm401, %v8541, 0.0
          %8572 = vadd.xlane.f32.xlu0 %v8571
          %v8573 = vpop.xlane.xlu0 %8572
          %v8574 = vsel %vm401, %v8542, 0.0
          %8575 = vadd.xlane.f32.xlu0 %v8574
          %v8576 = vpop.xlane.xlu0 %8575
          %v8577 = vsel %vm401, %v8543, 0.0
          %8578 = vadd.xlane.f32.xlu0 %v8577
          %v8579 = vpop.xlane.xlu0 %8578
          %v8580 = vsel %vm401, %v8544, 0.0
          %8581 = vadd.xlane.f32.xlu0 %v8580
          %v8582 = vpop.xlane.xlu0 %8581
          %v8583 = vsel %vm401, %v8545, 0.0
          %8584 = vadd.xlane.f32.xlu0 %v8583
          %v8585 = vpop.xlane.xlu0 %8584
          %v8586 = vsel %vm401, %v8546, 0.0
          %8587 = vadd.xlane.f32.xlu0 %v8586
          %v8588 = vpop.xlane.xlu0 %8587
          %v8589 = vsel %vm401, %v8547, 0.0
          %8590 = vadd.xlane.f32.xlu0 %v8589
          %v8591 = vpop.xlane.xlu0 %8590
          %v8592 = vsel %vm401, %v8548, 0.0
          %8593 = vadd.xlane.f32.xlu0 %v8592
          %v8594 = vpop.xlane.xlu0 %8593
          %v8595 = vsel %vm401, %v8549, 0.0
          %8596 = vadd.xlane.f32.xlu0 %v8595
          %v8597 = vpop.xlane.xlu0 %8596
          %v8598 = vmul.f32 %v8552, %v506
          %v8599 = vmul.f32 %v8555, %v506
          %v8600 = vmul.f32 %v8558, %v506
          %v8601 = vmul.f32 %v8561, %v506
          %v8602 = vmul.f32 %v8564, %v506
          %v8603 = vmul.f32 %v8567, %v506
          %v8604 = vmul.f32 %v8570, %v506
          %v8605 = vmul.f32 %v8573, %v506
          %v8606 = vmul.f32 %v8576, %v506
          %v8607 = vmul.f32 %v8579, %v506
          %v8608 = vmul.f32 %v8582, %v506
          %v8609 = vmul.f32 %v8585, %v506
          %v8610 = vmul.f32 %v8588, %v506
          %v8611 = vmul.f32 %v8591, %v506
          %v8612 = vmul.f32 %v8594, %v506
          %v8613 = vmul.f32 %v8597, %v506
          %v8614 = vsub.f32 %v8534, %v8598
          %v8615 = vsub.f32 %v8535, %v8599
          %v8616 = vsub.f32 %v8536, %v8600
          %v8617 = vsub.f32 %v8537, %v8601
          %v8618 = vsub.f32 %v8538, %v8602
          %v8619 = vsub.f32 %v8539, %v8603
          %v8620 = vsub.f32 %v8540, %v8604
          %v8621 = vsub.f32 %v8541, %v8605
          %v8622 = vsub.f32 %v8542, %v8606
          %v8623 = vsub.f32 %v8543, %v8607
          %v8624 = vsub.f32 %v8544, %v8608
          %v8625 = vsub.f32 %v8545, %v8609
          %v8626 = vsub.f32 %v8546, %v8610
          %v8627 = vsub.f32 %v8547, %v8611
          %v8628 = vsub.f32 %v8548, %v8612
          %v8629 = vsub.f32 %v8549, %v8613
          %v8630 = vmul.f32 %v8614, %v8614
          %v8631 = vmul.f32 %v8615, %v8615
          %v8632 = vmul.f32 %v8616, %v8616
          %v8633 = vmul.f32 %v8617, %v8617
          %v8634 = vmul.f32 %v8618, %v8618
          %v8635 = vmul.f32 %v8619, %v8619
          %v8636 = vmul.f32 %v8620, %v8620
          %v8637 = vmul.f32 %v8621, %v8621
          %v8638 = vmul.f32 %v8622, %v8622
          %v8639 = vmul.f32 %v8623, %v8623
          %v8640 = vmul.f32 %v8624, %v8624
          %v8641 = vmul.f32 %v8625, %v8625
          %v8642 = vmul.f32 %v8626, %v8626
          %v8643 = vmul.f32 %v8627, %v8627
          %v8644 = vmul.f32 %v8628, %v8628
          %v8645 = vmul.f32 %v8629, %v8629
          %v8646 = vsel %vm401, %v8630, 0.0
          %8647 = vadd.xlane.f32.xlu0 %v8646
          %v8648 = vpop.xlane.xlu0 %8647
          %v8649 = vsel %vm401, %v8631, 0.0
          %8650 = vadd.xlane.f32.xlu0 %v8649
          %v8651 = vpop.xlane.xlu0 %8650
          %v8652 = vsel %vm401, %v8632, 0.0
          %8653 = vadd.xlane.f32.xlu0 %v8652
          %v8654 = vpop.xlane.xlu0 %8653
          %v8655 = vsel %vm401, %v8633, 0.0
          %8656 = vadd.xlane.f32.xlu0 %v8655
          %v8657 = vpop.xlane.xlu0 %8656
          %v8658 = vsel %vm401, %v8634, 0.0
          %8659 = vadd.xlane.f32.xlu0 %v8658
          %v8660 = vpop.xlane.xlu0 %8659
          %v8661 = vsel %vm401, %v8635, 0.0
          %8662 = vadd.xlane.f32.xlu0 %v8661
          %v8663 = vpop.xlane.xlu0 %8662
          %v8664 = vsel %vm401, %v8636, 0.0
          %8665 = vadd.xlane.f32.xlu0 %v8664
          %v8666 = vpop.xlane.xlu0 %8665
          %v8667 = vsel %vm401, %v8637, 0.0
          %8668 = vadd.xlane.f32.xlu0 %v8667
          %v8669 = vpop.xlane.xlu0 %8668
          %v8670 = vsel %vm401, %v8638, 0.0
          %8671 = vadd.xlane.f32.xlu0 %v8670
          %v8672 = vpop.xlane.xlu0 %8671
          %v8673 = vsel %vm401, %v8639, 0.0
          %8674 = vadd.xlane.f32.xlu0 %v8673
          %v8675 = vpop.xlane.xlu0 %8674
          %v8676 = vsel %vm401, %v8640, 0.0
          %8677 = vadd.xlane.f32.xlu0 %v8676
          %v8678 = vpop.xlane.xlu0 %8677
          %v8679 = vsel %vm401, %v8641, 0.0
          %8680 = vadd.xlane.f32.xlu0 %v8679
          %v8681 = vpop.xlane.xlu0 %8680
          %v8682 = vsel %vm401, %v8642, 0.0
          %8683 = vadd.xlane.f32.xlu0 %v8682
          %v8684 = vpop.xlane.xlu0 %8683
          %v8685 = vsel %vm401, %v8643, 0.0
          %8686 = vadd.xlane.f32.xlu0 %v8685
          %v8687 = vpop.xlane.xlu0 %8686
          %v8688 = vsel %vm401, %v8644, 0.0
          %8689 = vadd.xlane.f32.xlu0 %v8688
          %v8690 = vpop.xlane.xlu0 %8689
          %v8691 = vsel %vm401, %v8645, 0.0
          %8692 = vadd.xlane.f32.xlu0 %v8691
          %v8693 = vpop.xlane.xlu0 %8692
          %v8694 = vmul.f32 %v8648, %v506
          %v8695 = vmul.f32 %v8651, %v506
          %v8696 = vmul.f32 %v8654, %v506
          %v8697 = vmul.f32 %v8657, %v506
          %v8698 = vmul.f32 %v8660, %v506
          %v8699 = vmul.f32 %v8663, %v506
          %v8700 = vmul.f32 %v8666, %v506
          %v8701 = vmul.f32 %v8669, %v506
          %v8702 = vmul.f32 %v8672, %v506
          %v8703 = vmul.f32 %v8675, %v506
          %v8704 = vmul.f32 %v8678, %v506
          %v8705 = vmul.f32 %v8681, %v506
          %v8706 = vmul.f32 %v8684, %v506
          %v8707 = vmul.f32 %v8687, %v506
          %v8708 = vmul.f32 %v8690, %v506
          %v8709 = vmul.f32 %v8693, %v506
          %v8710 = vadd.f32 %v8694, 1e-05
          %v8711 = vadd.f32 %v8695, 1e-05
          %v8712 = vadd.f32 %v8696, 1e-05
          %v8713 = vadd.f32 %v8697, 1e-05
          %v8714 = vadd.f32 %v8698, 1e-05
          %v8715 = vadd.f32 %v8699, 1e-05
          %v8716 = vadd.f32 %v8700, 1e-05
          %v8717 = vadd.f32 %v8701, 1e-05
          %v8718 = vadd.f32 %v8702, 1e-05
          %v8719 = vadd.f32 %v8703, 1e-05
          %v8720 = vadd.f32 %v8704, 1e-05
          %v8721 = vadd.f32 %v8705, 1e-05
          %v8722 = vadd.f32 %v8706, 1e-05
          %v8723 = vadd.f32 %v8707, 1e-05
          %v8724 = vadd.f32 %v8708, 1e-05
          %v8725 = vadd.f32 %v8709, 1e-05
          %v8726 = vrsqrt.pop %v8710
          %v8727 = vrsqrt.pop %v8711
          %v8728 = vrsqrt.pop %v8712
          %v8729 = vrsqrt.pop %v8713
          %v8730 = vrsqrt.pop %v8714
          %v8731 = vrsqrt.pop %v8715
          %v8732 = vrsqrt.pop %v8716
          %v8733 = vrsqrt.pop %v8717
          %v8734 = vrsqrt.pop %v8718
          %v8735 = vrsqrt.pop %v8719
          %v8736 = vrsqrt.pop %v8720
          %v8737 = vrsqrt.pop %v8721
          %v8738 = vrsqrt.pop %v8722
          %v8739 = vrsqrt.pop %v8723
          %v8740 = vrsqrt.pop %v8724
          %v8741 = vrsqrt.pop %v8725
          %v8742 = vmul.f32 %v8614, %v8726
          %v8743 = vmul.f32 %v8615, %v8727
          %v8744 = vmul.f32 %v8616, %v8728
          %v8745 = vmul.f32 %v8617, %v8729
          %v8746 = vmul.f32 %v8618, %v8730
          %v8747 = vmul.f32 %v8619, %v8731
          %v8748 = vmul.f32 %v8620, %v8732
          %v8749 = vmul.f32 %v8621, %v8733
          %v8750 = vmul.f32 %v8622, %v8734
          %v8751 = vmul.f32 %v8623, %v8735
          %v8752 = vmul.f32 %v8624, %v8736
          %v8753 = vmul.f32 %v8625, %v8737
          %v8754 = vmul.f32 %v8626, %v8738
          %v8755 = vmul.f32 %v8627, %v8739
          %v8756 = vmul.f32 %v8628, %v8740
          %v8757 = vmul.f32 %v8629, %v8741
          %v8758 = vlaneseq
          %v8759 = vshrl.u32 %v8758, 7
          %v8760 = vsub.s32 6, %v8759
          %v8761 = vrot.slane %v456, %v8760
          %v8762 = vmul.f32 %v8742, %v8761
          %v8763 = vmul.f32 %v8743, %v8761
          %v8764 = vmul.f32 %v8744, %v8761
          %v8765 = vmul.f32 %v8745, %v8761
          %v8766 = vmul.f32 %v8746, %v8761
          %v8767 = vmul.f32 %v8747, %v8761
          %v8768 = vmul.f32 %v8748, %v8761
          %v8769 = vmul.f32 %v8749, %v8761
          %v8770 = vmul.f32 %v8750, %v8761
          %v8771 = vmul.f32 %v8751, %v8761
          %v8772 = vmul.f32 %v8752, %v8761
          %v8773 = vmul.f32 %v8753, %v8761
          %v8774 = vmul.f32 %v8754, %v8761
          %v8775 = vmul.f32 %v8755, %v8761
          %v8776 = vmul.f32 %v8756, %v8761
          %v8777 = vmul.f32 %v8757, %v8761
          %v8778 = vlaneseq
          %v8779 = vshrl.u32 %v8778, 7
          %v8780 = vsub.s32 7, %v8779
          %v8781 = vrot.slane %v456, %v8780
          %v8782 = vadd.f32 %v8762, %v8781
          %v8783 = vadd.f32 %v8763, %v8781
          %v8784 = vadd.f32 %v8764, %v8781
          %v8785 = vadd.f32 %v8765, %v8781
          %v8786 = vadd.f32 %v8766, %v8781
          %v8787 = vadd.f32 %v8767, %v8781
          %v8788 = vadd.f32 %v8768, %v8781
          %v8789 = vadd.f32 %v8769, %v8781
          %v8790 = vadd.f32 %v8770, %v8781
          %v8791 = vadd.f32 %v8771, %v8781
          %v8792 = vadd.f32 %v8772, %v8781
          %v8793 = vadd.f32 %v8773, %v8781
          %v8794 = vadd.f32 %v8774, %v8781
          %v8795 = vadd.f32 %v8775, %v8781
          %v8796 = vadd.f32 %v8776, %v8781
          %v8797 = vadd.f32 %v8777, %v8781
          %v8798 = vpack.c.bf16 %v8783, %v8782
          %v8799 = vpack.c.bf16 %v8785, %v8784
          %v8800 = vpack.c.bf16 %v8787, %v8786
          %v8801 = vpack.c.bf16 %v8789, %v8788
          %v8802 = vpack.c.bf16 %v8791, %v8790
          %v8803 = vpack.c.bf16 %v8793, %v8792
          %v8804 = vpack.c.bf16 %v8795, %v8794
          %v8805 = vpack.c.bf16 %v8797, %v8796
          %s8806 = smul.addr %s8358, 4
          %s8807 = scalar_lea.vmem %s4, %s8806
          %v8808 = vld [vmem:[%s8807] sm:$0xf]
          %v8809 = vld [vmem:[%s8807 + $0x4] sm:$0xf]
          %v8810 = vld [vmem:[%s8807 + $0x8] sm:$0xf]
          %v8811 = vld [vmem:[%s8807 + $0xc] sm:$0xf]
          %v8812 = vld [vmem:[%s8807 + $0x10] sm:$0xf]
          %v8813 = vld [vmem:[%s8807 + $0x14] sm:$0xf]
          %v8814 = vld [vmem:[%s8807 + $0x18] sm:$0xf]
          %v8815 = vld [vmem:[%s8807 + $0x1c] sm:$0xf]
          %v8816 = vlaneseq
          %v8817 = vshrl.u32 %v8816, 7
          %v8818 = vsub.s32 0, %v8817
          %v8819 = vrot.slane %v457, %v8818
          %v8828 = vunpack.c.l.b16 %v8808
          %v8829 = vunpack.c.l.b16 %v8809
          %v8830 = vunpack.c.l.b16 %v8810
          %v8831 = vunpack.c.l.b16 %v8811
          %v8832 = vunpack.c.l.b16 %v8812
          %v8833 = vunpack.c.l.b16 %v8813
          %v8834 = vunpack.c.l.b16 %v8814
          %v8835 = vunpack.c.l.b16 %v8815
          %v8836 = vpack.c.b16 %v8829, %v8828
          %v8837 = vpack.c.b16 %v8831, %v8830
          %v8838 = vpack.c.b16 %v8833, %v8832
          %v8839 = vpack.c.b16 %v8835, %v8834
          %v8845 = vsel %vm401, %v8798, 0
          %v8848 = vsel %vm401, %v8799, 0
          %v8851 = vsel %vm401, %v8800, 0
          %v8854 = vsel %vm401, %v8801, 0
          %v8857 = vsel %vm401, %v8802, 0
          %v8860 = vsel %vm401, %v8803, 0
          %v8863 = vsel %vm401, %v8804, 0
          %v8866 = vsel %vm401, %v8805, 0
          %8868 = vmatprep.subr.bf16.mxu0 0
          %8869 = vmatpush1.bf16.msra.mxu0 %v8836
          %8870 = vmatprep.subr.bf16.mxu0 0
          %8871 = vmatpush1.bf16.msra.mxu0 %v8837
          %8872 = vmatprep.subr.bf16.mxu0 0
          %8873 = vmatpush1.bf16.msra.mxu0 %v8838
          %8874 = vmatprep.subr.bf16.mxu0 0
          %8875 = vmatpush1.bf16.msra.mxu0 %v8839
          %8876 = vmatprep.subr.bf16.mxu0 0
          %8877 = vmatpush1.bf16.msra.mxu0 0
          %8878 = vmatprep.subr.bf16.mxu0 0
          %8879 = vmatpush1.bf16.msra.mxu0 0
          %8880 = vmatprep.subr.bf16.mxu0 0
          %8881 = vmatpush1.bf16.msra.mxu0 0
          %8882 = vmatprep.subr.bf16.mxu0 0
          %8883 = vmatpush1.bf16.msra.mxu0 0
          %8884 = vmatprep.subr.bf16.mxu0 0
          %8885 = vmatpush1.bf16.msra.mxu0 0
          %8886 = vmatprep.subr.bf16.mxu0 0
          %8887 = vmatpush1.bf16.msra.mxu0 0
          %8888 = vmatprep.subr.bf16.mxu0 0
          %8889 = vmatpush1.bf16.msra.mxu0 0
          %8890 = vmatprep.subr.bf16.mxu0 0
          %8891 = vmatpush1.bf16.msra.mxu0 0
          %8892 = vmatprep.subr.bf16.mxu0 0
          %8893 = vmatpush1.bf16.msra.mxu0 0
          %8894 = vmatprep.subr.bf16.mxu0 0
          %8895 = vmatpush1.bf16.msra.mxu0 0
          %8896 = vmatprep.subr.bf16.mxu0 0
          %8897 = vmatpush1.bf16.msra.mxu0 0
          %8898 = vmatprep.subr.bf16.mxu0 0
          %8899 = vmatpush1.bf16.msra.mxu0 0
          %8900 = vmatprep.mubr.bf16.mxu0 0
          %8901 = vmatmul.mubr.bf16.gmra.mrb[0].mxu0 %v8845
          %v8902 = vpop.f32.mrb[0].mxu0
          %v8903 = vadd.f32 %v8819, %v8902
          %v8904 = vpop.f32.mrb[0].mxu0
          %v8905 = vpop.f32.mrb[0].mxu0
          %v8906 = vadd.f32 %v8819, %v8905
          %v8907 = vpop.f32.mrb[0].mxu0
          %8908 = vmatprep.mubr.bf16.mxu0 0
          %8909 = vmatmul.mubr.bf16.gmra.mrb[0].mxu0 %v8848
          %v8910 = vpop.f32.mrb[0].mxu0
          %v8911 = vadd.f32 %v8819, %v8910
          %v8912 = vpop.f32.mrb[0].mxu0
          %v8913 = vpop.f32.mrb[0].mxu0
          %v8914 = vadd.f32 %v8819, %v8913
          %v8915 = vpop.f32.mrb[0].mxu0
          %8916 = vmatprep.mubr.bf16.mxu0 0
          %8917 = vmatmul.mubr.bf16.gmra.mrb[0].mxu0 %v8851
          %v8918 = vpop.f32.mrb[0].mxu0
          %v8919 = vadd.f32 %v8819, %v8918
          %v8920 = vpop.f32.mrb[0].mxu0
          %v8921 = vpop.f32.mrb[0].mxu0
          %v8922 = vadd.f32 %v8819, %v8921
          %v8923 = vpop.f32.mrb[0].mxu0
          %8924 = vmatprep.mubr.bf16.mxu0 0
          %8925 = vmatmul.mubr.bf16.gmra.mrb[0].mxu0 %v8854
          %v8926 = vpop.f32.mrb[0].mxu0
          %v8927 = vadd.f32 %v8819, %v8926
          %v8928 = vpop.f32.mrb[0].mxu0
          %v8929 = vpop.f32.mrb[0].mxu0
          %v8930 = vadd.f32 %v8819, %v8929
          %v8931 = vpop.f32.mrb[0].mxu0
          %8932 = vmatprep.mubr.bf16.mxu0 0
          %8933 = vmatmul.mubr.bf16.gmra.mrb[0].mxu0 %v8857
          %v8934 = vpop.f32.mrb[0].mxu0
          %v8935 = vadd.f32 %v8819, %v8934
          %v8936 = vpop.f32.mrb[0].mxu0
          %v8937 = vpop.f32.mrb[0].mxu0
          %v8938 = vadd.f32 %v8819, %v8937
          %v8939 = vpop.f32.mrb[0].mxu0
          %8940 = vmatprep.mubr.bf16.mxu0 0
          %8941 = vmatmul.mubr.bf16.gmra.mrb[0].mxu0 %v8860
          %v8942 = vpop.f32.mrb[0].mxu0
          %v8943 = vadd.f32 %v8819, %v8942
          %v8944 = vpop.f32.mrb[0].mxu0
          %v8945 = vpop.f32.mrb[0].mxu0
          %v8946 = vadd.f32 %v8819, %v8945
          %v8947 = vpop.f32.mrb[0].mxu0
          %8948 = vmatprep.mubr.bf16.mxu0 0
          %8949 = vmatmul.mubr.bf16.gmra.mrb[0].mxu0 %v8863
          %v8950 = vpop.f32.mrb[0].mxu0
          %v8951 = vadd.f32 %v8819, %v8950
          %v8952 = vpop.f32.mrb[0].mxu0
          %v8953 = vpop.f32.mrb[0].mxu0
          %v8954 = vadd.f32 %v8819, %v8953
          %v8955 = vpop.f32.mrb[0].mxu0
          %8956 = vmatprep.mubr.bf16.mxu0 0
          %8957 = vmatmul.mubr.bf16.gmra.mrb[0].mxu0 %v8866
          %v8958 = vpop.f32.mrb[0].mxu0
          %v8959 = vadd.f32 %v8819, %v8958
          %v8960 = vpop.f32.mrb[0].mxu0
          %v8961 = vpop.f32.mrb[0].mxu0
          %v8962 = vadd.f32 %v8819, %v8961
          %v8963 = vpop.f32.mrb[0].mxu0
          %8964 = vdwg.mxu0
          %v8965 = vmul.f32 %v8903, %v8903
          %v8966 = vmul.f32 %v8906, %v8906
          %v8967 = vmul.f32 %v8911, %v8911
          %v8968 = vmul.f32 %v8914, %v8914
          %v8969 = vmul.f32 %v8919, %v8919
          %v8970 = vmul.f32 %v8922, %v8922
          %v8971 = vmul.f32 %v8927, %v8927
          %v8972 = vmul.f32 %v8930, %v8930
          %v8973 = vmul.f32 %v8935, %v8935
          %v8974 = vmul.f32 %v8938, %v8938
          %v8975 = vmul.f32 %v8943, %v8943
          %v8976 = vmul.f32 %v8946, %v8946
          %v8977 = vmul.f32 %v8951, %v8951
          %v8978 = vmul.f32 %v8954, %v8954
          %v8979 = vmul.f32 %v8959, %v8959
          %v8980 = vmul.f32 %v8962, %v8962
          %v8981 = vmul.f32 %v8903, %v8965
          %v8982 = vmul.f32 %v8906, %v8966
          %v8983 = vmul.f32 %v8911, %v8967
          %v8984 = vmul.f32 %v8914, %v8968
          %v8985 = vmul.f32 %v8919, %v8969
          %v8986 = vmul.f32 %v8922, %v8970
          %v8987 = vmul.f32 %v8927, %v8971
          %v8988 = vmul.f32 %v8930, %v8972
          %v8989 = vmul.f32 %v8935, %v8973
          %v8990 = vmul.f32 %v8938, %v8974
          %v8991 = vmul.f32 %v8943, %v8975
          %v8992 = vmul.f32 %v8946, %v8976
          %v8993 = vmul.f32 %v8951, %v8977
          %v8994 = vmul.f32 %v8954, %v8978
          %v8995 = vmul.f32 %v8959, %v8979
          %v8996 = vmul.f32 %v8962, %v8980
          %v8997 = vmul.f32 %v8981, 0.044715
          %v8998 = vmul.f32 %v8982, 0.044715
          %v8999 = vmul.f32 %v8983, 0.044715
          %v9000 = vmul.f32 %v8984, 0.044715
          %v9001 = vmul.f32 %v8985, 0.044715
          %v9002 = vmul.f32 %v8986, 0.044715
          %v9003 = vmul.f32 %v8987, 0.044715
          %v9004 = vmul.f32 %v8988, 0.044715
          %v9005 = vmul.f32 %v8989, 0.044715
          %v9006 = vmul.f32 %v8990, 0.044715
          %v9007 = vmul.f32 %v8991, 0.044715
          %v9008 = vmul.f32 %v8992, 0.044715
          %v9009 = vmul.f32 %v8993, 0.044715
          %v9010 = vmul.f32 %v8994, 0.044715
          %v9011 = vmul.f32 %v8995, 0.044715
          %v9012 = vmul.f32 %v8996, 0.044715
          %v9013 = vadd.f32 %v8903, %v8997
          %v9014 = vadd.f32 %v8906, %v8998
          %v9015 = vadd.f32 %v8911, %v8999
          %v9016 = vadd.f32 %v8914, %v9000
          %v9017 = vadd.f32 %v8919, %v9001
          %v9018 = vadd.f32 %v8922, %v9002
          %v9019 = vadd.f32 %v8927, %v9003
          %v9020 = vadd.f32 %v8930, %v9004
          %v9021 = vadd.f32 %v8935, %v9005
          %v9022 = vadd.f32 %v8938, %v9006
          %v9023 = vadd.f32 %v8943, %v9007
          %v9024 = vadd.f32 %v8946, %v9008
          %v9025 = vadd.f32 %v8951, %v9009
          %v9026 = vadd.f32 %v8954, %v9010
          %v9027 = vadd.f32 %v8959, %v9011
          %v9028 = vadd.f32 %v8962, %v9012
          %v9029 = vmul.f32 %v9013, 0.7978846
          %v9030 = vmul.f32 %v9014, 0.7978846
          %v9031 = vmul.f32 %v9015, 0.7978846
          %v9032 = vmul.f32 %v9016, 0.7978846
          %v9033 = vmul.f32 %v9017, 0.7978846
          %v9034 = vmul.f32 %v9018, 0.7978846
          %v9035 = vmul.f32 %v9019, 0.7978846
          %v9036 = vmul.f32 %v9020, 0.7978846
          %v9037 = vmul.f32 %v9021, 0.7978846
          %v9038 = vmul.f32 %v9022, 0.7978846
          %v9039 = vmul.f32 %v9023, 0.7978846
          %v9040 = vmul.f32 %v9024, 0.7978846
          %v9041 = vmul.f32 %v9025, 0.7978846
          %v9042 = vmul.f32 %v9026, 0.7978846
          %v9043 = vmul.f32 %v9027, 0.7978846
          %v9044 = vmul.f32 %v9028, 0.7978846
          %v9045 = vtanh.pop %v9029
          %v9046 = vtanh.pop %v9030
          %v9047 = vtanh.pop %v9031
          %v9048 = vtanh.pop %v9032
          %v9049 = vtanh.pop %v9033
          %v9050 = vtanh.pop %v9034
          %v9051 = vtanh.pop %v9035
          %v9052 = vtanh.pop %v9036
          %v9053 = vtanh.pop %v9037
          %v9054 = vtanh.pop %v9038
          %v9055 = vtanh.pop %v9039
          %v9056 = vtanh.pop %v9040
          %v9057 = vtanh.pop %v9041
          %v9058 = vtanh.pop %v9042
          %v9059 = vtanh.pop %v9043
          %v9060 = vtanh.pop %v9044
          %v9061 = vadd.f32 %v9045, 1.0
          %v9062 = vadd.f32 %v9046, 1.0
          %v9063 = vadd.f32 %v9047, 1.0
          %v9064 = vadd.f32 %v9048, 1.0
          %v9065 = vadd.f32 %v9049, 1.0
          %v9066 = vadd.f32 %v9050, 1.0
          %v9067 = vadd.f32 %v9051, 1.0
          %v9068 = vadd.f32 %v9052, 1.0
          %v9069 = vadd.f32 %v9053, 1.0
          %v9070 = vadd.f32 %v9054, 1.0
          %v9071 = vadd.f32 %v9055, 1.0
          %v9072 = vadd.f32 %v9056, 1.0
          %v9073 = vadd.f32 %v9057, 1.0
          %v9074 = vadd.f32 %v9058, 1.0
          %v9075 = vadd.f32 %v9059, 1.0
          %v9076 = vadd.f32 %v9060, 1.0
          %v9077 = vmul.f32 %v9061, 0.5
          %v9078 = vmul.f32 %v9062, 0.5
          %v9079 = vmul.f32 %v9063, 0.5
          %v9080 = vmul.f32 %v9064, 0.5
          %v9081 = vmul.f32 %v9065, 0.5
          %v9082 = vmul.f32 %v9066, 0.5
          %v9083 = vmul.f32 %v9067, 0.5
          %v9084 = vmul.f32 %v9068, 0.5
          %v9085 = vmul.f32 %v9069, 0.5
          %v9086 = vmul.f32 %v9070, 0.5
          %v9087 = vmul.f32 %v9071, 0.5
          %v9088 = vmul.f32 %v9072, 0.5
          %v9089 = vmul.f32 %v9073, 0.5
          %v9090 = vmul.f32 %v9074, 0.5
          %v9091 = vmul.f32 %v9075, 0.5
          %v9092 = vmul.f32 %v9076, 0.5
          %v9093 = vmul.f32 %v8903, %v9077
          %v9094 = vmul.f32 %v8906, %v9078
          %v9095 = vmul.f32 %v8911, %v9079
          %v9096 = vmul.f32 %v8914, %v9080
          %v9097 = vmul.f32 %v8919, %v9081
          %v9098 = vmul.f32 %v8922, %v9082
          %v9099 = vmul.f32 %v8927, %v9083
          %v9100 = vmul.f32 %v8930, %v9084
          %v9101 = vmul.f32 %v8935, %v9085
          %v9102 = vmul.f32 %v8938, %v9086
          %v9103 = vmul.f32 %v8943, %v9087
          %v9104 = vmul.f32 %v8946, %v9088
          %v9105 = vmul.f32 %v8951, %v9089
          %v9106 = vmul.f32 %v8954, %v9090
          %v9107 = vmul.f32 %v8959, %v9091
          %v9108 = vmul.f32 %v8962, %v9092
          %v9109 = vpack.c.bf16 %v9094, %v9093
          %v9110 = vpack.c.bf16 %v9096, %v9095
          %v9111 = vpack.c.bf16 %v9098, %v9097
          %v9112 = vpack.c.bf16 %v9100, %v9099
          %v9113 = vpack.c.bf16 %v9102, %v9101
          %v9114 = vpack.c.bf16 %v9104, %v9103
          %v9115 = vpack.c.bf16 %v9106, %v9105
          %v9116 = vpack.c.bf16 %v9108, %v9107
          %s9117 = smul.addr %s8358, 4
          %s9118 = scalar_lea.vmem [#allocation12], %s9117
          %v9119 = vld [vmem:[%s9118] sm:$0xf]
          %v9120 = vld [vmem:[%s9118 + $0x4] sm:$0xf]
          %v9121 = vld [vmem:[%s9118 + $0x8] sm:$0xf]
          %v9122 = vld [vmem:[%s9118 + $0xc] sm:$0xf]
          %v9123 = vld [vmem:[%s9118 + $0x10] sm:$0xf]
          %v9124 = vld [vmem:[%s9118 + $0x14] sm:$0xf]
          %v9125 = vld [vmem:[%s9118 + $0x18] sm:$0xf]
          %v9126 = vld [vmem:[%s9118 + $0x1c] sm:$0xf]
          %v9127 = vlaneseq
          %v9128 = vshrl.u32 %v9127, 7
          %v9129 = vsub.s32 1, %v9128
          %v9130 = vrot.slane %v457, %v9129
          %v9139 = vunpack.c.l.b16 %v9119
          %v9140 = vunpack.c.l.b16 %v9120
          %v9141 = vunpack.c.l.b16 %v9121
          %v9142 = vunpack.c.l.b16 %v9122
          %v9143 = vunpack.c.l.b16 %v9123
          %v9144 = vunpack.c.l.b16 %v9124
          %v9145 = vunpack.c.l.b16 %v9125
          %v9146 = vunpack.c.l.b16 %v9126
          %v9147 = vpack.c.b16 %v9140, %v9139
          %v9148 = vpack.c.b16 %v9142, %v9141
          %v9149 = vpack.c.b16 %v9144, %v9143
          %v9150 = vpack.c.b16 %v9146, %v9145
          %v9156 = vsel %vm401, %v9109, 0
          %v9159 = vsel %vm401, %v9110, 0
          %v9162 = vsel %vm401, %v9111, 0
          %v9165 = vsel %vm401, %v9112, 0
          %v9168 = vsel %vm401, %v9113, 0
          %v9171 = vsel %vm401, %v9114, 0
          %v9174 = vsel %vm401, %v9115, 0
          %v9177 = vsel %vm401, %v9116, 0
          %9179 = vmatprep.subr.bf16.mxu0 0
          %9180 = vmatpush1.bf16.msra.mxu0 %v9147
          %9181 = vmatprep.subr.bf16.mxu0 0
          %9182 = vmatpush1.bf16.msra.mxu0 %v9148
          %9183 = vmatprep.subr.bf16.mxu0 0
          %9184 = vmatpush1.bf16.msra.mxu0 %v9149
          %9185 = vmatprep.subr.bf16.mxu0 0
          %9186 = vmatpush1.bf16.msra.mxu0 %v9150
          %9187 = vmatprep.subr.bf16.mxu0 0
          %9188 = vmatpush1.bf16.msra.mxu0 0
          %9189 = vmatprep.subr.bf16.mxu0 0
          %9190 = vmatpush1.bf16.msra.mxu0 0
          %9191 = vmatprep.subr.bf16.mxu0 0
          %9192 = vmatpush1.bf16.msra.mxu0 0
          %9193 = vmatprep.subr.bf16.mxu0 0
          %9194 = vmatpush1.bf16.msra.mxu0 0
          %9195 = vmatprep.subr.bf16.mxu0 0
          %9196 = vmatpush1.bf16.msra.mxu0 0
          %9197 = vmatprep.subr.bf16.mxu0 0
          %9198 = vmatpush1.bf16.msra.mxu0 0
          %9199 = vmatprep.subr.bf16.mxu0 0
          %9200 = vmatpush1.bf16.msra.mxu0 0
          %9201 = vmatprep.subr.bf16.mxu0 0
          %9202 = vmatpush1.bf16.msra.mxu0 0
          %9203 = vmatprep.subr.bf16.mxu0 0
          %9204 = vmatpush1.bf16.msra.mxu0 0
          %9205 = vmatprep.subr.bf16.mxu0 0
          %9206 = vmatpush1.bf16.msra.mxu0 0
          %9207 = vmatprep.subr.bf16.mxu0 0
          %9208 = vmatpush1.bf16.msra.mxu0 0
          %9209 = vmatprep.subr.bf16.mxu0 0
          %9210 = vmatpush1.bf16.msra.mxu0 0
          %9211 = vmatprep.mubr.bf16.mxu0 0
          %9212 = vmatmul.mubr.bf16.gmra.mrb[0].mxu0 %v9156
          %v9213 = vpop.f32.mrb[0].mxu0
          %v9214 = vadd.f32 %v9130, %v9213
          %v9215 = vpop.f32.mrb[0].mxu0
          %v9216 = vpop.f32.mrb[0].mxu0
          %v9217 = vadd.f32 %v9130, %v9216
          %v9218 = vpop.f32.mrb[0].mxu0
          %9219 = vmatprep.mubr.bf16.mxu0 0
          %9220 = vmatmul.mubr.bf16.gmra.mrb[0].mxu0 %v9159
          %v9221 = vpop.f32.mrb[0].mxu0
          %v9222 = vadd.f32 %v9130, %v9221
          %v9223 = vpop.f32.mrb[0].mxu0
          %v9224 = vpop.f32.mrb[0].mxu0
          %v9225 = vadd.f32 %v9130, %v9224
          %v9226 = vpop.f32.mrb[0].mxu0
          %9227 = vmatprep.mubr.bf16.mxu0 0
          %9228 = vmatmul.mubr.bf16.gmra.mrb[0].mxu0 %v9162
          %v9229 = vpop.f32.mrb[0].mxu0
          %v9230 = vadd.f32 %v9130, %v9229
          %v9231 = vpop.f32.mrb[0].mxu0
          %v9232 = vpop.f32.mrb[0].mxu0
          %v9233 = vadd.f32 %v9130, %v9232
          %v9234 = vpop.f32.mrb[0].mxu0
          %9235 = vmatprep.mubr.bf16.mxu0 0
          %9236 = vmatmul.mubr.bf16.gmra.mrb[0].mxu0 %v9165
          %v9237 = vpop.f32.mrb[0].mxu0
          %v9238 = vadd.f32 %v9130, %v9237
          %v9239 = vpop.f32.mrb[0].mxu0
          %v9240 = vpop.f32.mrb[0].mxu0
          %v9241 = vadd.f32 %v9130, %v9240
          %v9242 = vpop.f32.mrb[0].mxu0
          %9243 = vmatprep.mubr.bf16.mxu0 0
          %9244 = vmatmul.mubr.bf16.gmra.mrb[0].mxu0 %v9168
          %v9245 = vpop.f32.mrb[0].mxu0
          %v9246 = vadd.f32 %v9130, %v9245
          %v9247 = vpop.f32.mrb[0].mxu0
          %v9248 = vpop.f32.mrb[0].mxu0
          %v9249 = vadd.f32 %v9130, %v9248
          %v9250 = vpop.f32.mrb[0].mxu0
          %9251 = vmatprep.mubr.bf16.mxu0 0
          %9252 = vmatmul.mubr.bf16.gmra.mrb[0].mxu0 %v9171
          %v9253 = vpop.f32.mrb[0].mxu0
          %v9254 = vadd.f32 %v9130, %v9253
          %v9255 = vpop.f32.mrb[0].mxu0
          %v9256 = vpop.f32.mrb[0].mxu0
          %v9257 = vadd.f32 %v9130, %v9256
          %v9258 = vpop.f32.mrb[0].mxu0
          %9259 = vmatprep.mubr.bf16.mxu0 0
          %9260 = vmatmul.mubr.bf16.gmra.mrb[0].mxu0 %v9174
          %v9261 = vpop.f32.mrb[0].mxu0
          %v9262 = vadd.f32 %v9130, %v9261
          %v9263 = vpop.f32.mrb[0].mxu0
          %v9264 = vpop.f32.mrb[0].mxu0
          %v9265 = vadd.f32 %v9130, %v9264
          %v9266 = vpop.f32.mrb[0].mxu0
          %9267 = vmatprep.mubr.bf16.mxu0 0
          %9268 = vmatmul.mubr.bf16.gmra.mrb[0].mxu0 %v9177
          %v9269 = vpop.f32.mrb[0].mxu0
          %v9270 = vadd.f32 %v9130, %v9269
          %v9271 = vpop.f32.mrb[0].mxu0
          %v9272 = vpop.f32.mrb[0].mxu0
          %v9273 = vadd.f32 %v9130, %v9272
          %v9274 = vpop.f32.mrb[0].mxu0
          %9275 = vdwg.mxu0
          %v9276 = vadd.f32 %v8534, %v9214
          %v9277 = vadd.f32 %v8535, %v9217
          %v9278 = vadd.f32 %v8536, %v9222
          %v9279 = vadd.f32 %v8537, %v9225
          %v9280 = vadd.f32 %v8538, %v9230
          %v9281 = vadd.f32 %v8539, %v9233
          %v9282 = vadd.f32 %v8540, %v9238
          %v9283 = vadd.f32 %v8541, %v9241
          %v9284 = vadd.f32 %v8542, %v9246
          %v9285 = vadd.f32 %v8543, %v9249
          %v9286 = vadd.f32 %v8544, %v9254
          %v9287 = vadd.f32 %v8545, %v9257
          %v9288 = vadd.f32 %v8546, %v9262
          %v9289 = vadd.f32 %v8547, %v9265
          %v9290 = vadd.f32 %v8548, %v9270
          %v9291 = vadd.f32 %v8549, %v9273
          %9292 = vst.msk [vmem:[#allocation2] sm:$0xff] %vm401, %v9276
          %9293 = vst.msk [vmem:[#allocation2 + $0x8] sm:$0xff] %vm401, %v9277
          %9294 = vst.msk [vmem:[#allocation2 + $0x10] sm:$0xff] %vm401, %v9278
          %9295 = vst.msk [vmem:[#allocation2 + $0x18] sm:$0xff] %vm401, %v9279
          %9296 = vst.msk [vmem:[#allocation2 + $0x20] sm:$0xff] %vm401, %v9280
          %9297 = vst.msk [vmem:[#allocation2 + $0x28] sm:$0xff] %vm401, %v9281
          %9298 = vst.msk [vmem:[#allocation2 + $0x30] sm:$0xff] %vm401, %v9282
          %9299 = vst.msk [vmem:[#allocation2 + $0x38] sm:$0xff] %vm401, %v9283
          %9300 = vst.msk [vmem:[#allocation2 + $0x40] sm:$0xff] %vm401, %v9284
          %9301 = vst.msk [vmem:[#allocation2 + $0x48] sm:$0xff] %vm401, %v9285
          %9302 = vst.msk [vmem:[#allocation2 + $0x50] sm:$0xff] %vm401, %v9286
          %9303 = vst.msk [vmem:[#allocation2 + $0x58] sm:$0xff] %vm401, %v9287
          %9304 = vst.msk [vmem:[#allocation2 + $0x60] sm:$0xff] %vm401, %v9288
          %9305 = vst.msk [vmem:[#allocation2 + $0x68] sm:$0xff] %vm401, %v9289
          %9306 = vst.msk [vmem:[#allocation2 + $0x70] sm:$0xff] %vm401, %v9290
          %9307 = vst.msk [vmem:[#allocation2 + $0x78] sm:$0xff] %vm401, %v9291
        $region73: #{tpu_custom_call.1} parent=47 // loop_footer
          %s437 = sadd.s32 1, %s433
        $region74: #{tpu_custom_call.1} parent=47 // loop_footer_branch
          %432 = sbr.rel target = $region70
        $region75: #{tpu_custom_call.1} parent=47 // loop_exit
          _
        %v9308 = vld [vmem:[#allocation2] sm:$0xff]
        %v9309 = vld [vmem:[#allocation2 + $0x8] sm:$0xff]
        %v9310 = vld [vmem:[#allocation2 + $0x10] sm:$0xff]
        %v9311 = vld [vmem:[#allocation2 + $0x18] sm:$0xff]
        %v9312 = vld [vmem:[#allocation2 + $0x20] sm:$0xff]
        %v9313 = vld [vmem:[#allocation2 + $0x28] sm:$0xff]
        %v9314 = vld [vmem:[#allocation2 + $0x30] sm:$0xff]
        %v9315 = vld [vmem:[#allocation2 + $0x38] sm:$0xff]
        %v9316 = vld [vmem:[#allocation2 + $0x40] sm:$0xff]
        %v9317 = vld [vmem:[#allocation2 + $0x48] sm:$0xff]
        %v9318 = vld [vmem:[#allocation2 + $0x50] sm:$0xff]
        %v9319 = vld [vmem:[#allocation2 + $0x58] sm:$0xff]
        %v9320 = vld [vmem:[#allocation2 + $0x60] sm:$0xff]
        %v9321 = vld [vmem:[#allocation2 + $0x68] sm:$0xff]
        %v9322 = vld [vmem:[#allocation2 + $0x70] sm:$0xff]
        %v9323 = vld [vmem:[#allocation2 + $0x78] sm:$0xff]
        %v9324 = vsel %vm401, %v418, 0
        %9326 = vmatprep.subr.mxu0 0.0
        %9327 = vmatpush1.msra.mxu0 %v9308
        %9328 = vmatprep.subr.mxu0 0.0
        %9329 = vmatpush1.msra.mxu0 %v9309
        %9330 = vmatprep.subr.mxu0 0.0
        %9331 = vmatpush1.msra.mxu0 %v9310
        %9332 = vmatprep.subr.mxu0 0.0
        %9333 = vmatpush1.msra.mxu0 %v9311
        %9334 = vmatprep.subr.mxu0 0.0
        %9335 = vmatpush1.msra.mxu0 %v9312
        %9336 = vmatprep.subr.mxu0 0.0
        %9337 = vmatpush1.msra.mxu0 %v9313
        %9338 = vmatprep.subr.mxu0 0.0
        %9339 = vmatpush1.msra.mxu0 %v9314
        %9340 = vmatprep.subr.mxu0 0.0
        %9341 = vmatpush1.msra.mxu0 %v9315
        %9342 = vmatprep.subr.mxu0 0.0
        %9343 = vmatpush1.msra.mxu0 0.0
        %9344 = vmatprep.subr.mxu0 0.0
        %9345 = vmatpush1.msra.mxu0 0.0
        %9346 = vmatprep.subr.mxu0 0.0
        %9347 = vmatpush1.msra.mxu0 0.0
        %9348 = vmatprep.subr.mxu0 0.0
        %9349 = vmatpush1.msra.mxu0 0.0
        %9350 = vmatprep.subr.mxu0 0.0
        %9351 = vmatpush1.msra.mxu0 0.0
        %9352 = vmatprep.subr.mxu0 0.0
        %9353 = vmatpush1.msra.mxu0 0.0
        %9354 = vmatprep.subr.mxu0 0.0
        %9355 = vmatpush1.msra.mxu0 0.0
        %9356 = vmatprep.subr.mxu0 0.0
        %9357 = vmatpush1.msra.mxu0 0.0
        %9358 = vmatprep.subr.mxu0 0.0
        %9359 = vmatpush1.msra.mxu0 0.0
        %9360 = vmatprep.subr.mxu0 0.0
        %9361 = vmatpush1.msra.mxu0 0.0
        %9362 = vmatprep.subr.mxu0 0.0
        %9363 = vmatpush1.msra.mxu0 0.0
        %9364 = vmatprep.subr.mxu0 0.0
        %9365 = vmatpush1.msra.mxu0 0.0
        %9366 = vmatprep.subr.mxu0 0.0
        %9367 = vmatpush1.msra.mxu0 0.0
        %9368 = vmatprep.subr.mxu0 0.0
        %9369 = vmatpush1.msra.mxu0 0.0
        %9370 = vmatprep.subr.mxu0 0.0
        %9371 = vmatpush1.msra.mxu0 0.0
        %9372 = vmatprep.subr.mxu0 0.0
        %9373 = vmatpush1.msra.mxu0 0.0
        %9374 = vmatprep.subr.mxu0 0.0
        %9375 = vmatpush1.msra.mxu0 0.0
        %9376 = vmatprep.subr.mxu0 0.0
        %9377 = vmatpush1.msra.mxu0 0.0
        %9378 = vmatprep.subr.mxu0 0.0
        %9379 = vmatpush1.msra.mxu0 0.0
        %9380 = vmatprep.subr.mxu0 0.0
        %9381 = vmatpush1.msra.mxu0 0.0
        %9382 = vmatprep.subr.mxu0 0.0
        %9383 = vmatpush1.msra.mxu0 0.0
        %9384 = vmatprep.subr.mxu0 0.0
        %9385 = vmatpush1.msra.mxu0 0.0
        %9386 = vmatprep.subr.mxu0 0.0
        %9387 = vmatpush1.msra.mxu0 0.0
        %9388 = vmatprep.subr.mxu0 0.0
        %9389 = vmatpush1.msra.mxu0 0.0
        %9390 = vmatprep.mubr.f32.mxu0 0.0
        %9391 = vmatmul.mubr.f32.gmra.mrb[0].mxu0 %v9324
        %v9392 = vpop.f32.mrb[0].mxu0
        %v9393 = vadd.f32 0.0, %v9392
        %v9394 = vpop.f32.mrb[0].mxu0
        %9395 = vdwg.mxu0
        %v9396 = vsel %vm401, %v419, 0
        %9398 = vmatprep.subr.mxu0 0.0
        %9399 = vmatpush1.msra.mxu0 %v9316
        %9400 = vmatprep.subr.mxu0 0.0
        %9401 = vmatpush1.msra.mxu0 %v9317
        %9402 = vmatprep.subr.mxu0 0.0
        %9403 = vmatpush1.msra.mxu0 %v9318
        %9404 = vmatprep.subr.mxu0 0.0
        %9405 = vmatpush1.msra.mxu0 %v9319
        %9406 = vmatprep.subr.mxu0 0.0
        %9407 = vmatpush1.msra.mxu0 %v9320
        %9408 = vmatprep.subr.mxu0 0.0
        %9409 = vmatpush1.msra.mxu0 %v9321
        %9410 = vmatprep.subr.mxu0 0.0
        %9411 = vmatpush1.msra.mxu0 %v9322
        %9412 = vmatprep.subr.mxu0 0.0
        %9413 = vmatpush1.msra.mxu0 %v9323
        %9414 = vmatprep.subr.mxu0 0.0
        %9415 = vmatpush1.msra.mxu0 0.0
        %9416 = vmatprep.subr.mxu0 0.0
        %9417 = vmatpush1.msra.mxu0 0.0
        %9418 = vmatprep.subr.mxu0 0.0
        %9419 = vmatpush1.msra.mxu0 0.0
        %9420 = vmatprep.subr.mxu0 0.0
        %9421 = vmatpush1.msra.mxu0 0.0
        %9422 = vmatprep.subr.mxu0 0.0
        %9423 = vmatpush1.msra.mxu0 0.0
        %9424 = vmatprep.subr.mxu0 0.0
        %9425 = vmatpush1.msra.mxu0 0.0
        %9426 = vmatprep.subr.mxu0 0.0
        %9427 = vmatpush1.msra.mxu0 0.0
        %9428 = vmatprep.subr.mxu0 0.0
        %9429 = vmatpush1.msra.mxu0 0.0
        %9430 = vmatprep.subr.mxu0 0.0
        %9431 = vmatpush1.msra.mxu0 0.0
        %9432 = vmatprep.subr.mxu0 0.0
        %9433 = vmatpush1.msra.mxu0 0.0
        %9434 = vmatprep.subr.mxu0 0.0
        %9435 = vmatpush1.msra.mxu0 0.0
        %9436 = vmatprep.subr.mxu0 0.0
        %9437 = vmatpush1.msra.mxu0 0.0
        %9438 = vmatprep.subr.mxu0 0.0
        %9439 = vmatpush1.msra.mxu0 0.0
        %9440 = vmatprep.subr.mxu0 0.0
        %9441 = vmatpush1.msra.mxu0 0.0
        %9442 = vmatprep.subr.mxu0 0.0
        %9443 = vmatpush1.msra.mxu0 0.0
        %9444 = vmatprep.subr.mxu0 0.0
        %9445 = vmatpush1.msra.mxu0 0.0
        %9446 = vmatprep.subr.mxu0 0.0
        %9447 = vmatpush1.msra.mxu0 0.0
        %9448 = vmatprep.subr.mxu0 0.0
        %9449 = vmatpush1.msra.mxu0 0.0
        %9450 = vmatprep.subr.mxu0 0.0
        %9451 = vmatpush1.msra.mxu0 0.0
        %9452 = vmatprep.subr.mxu0 0.0
        %9453 = vmatpush1.msra.mxu0 0.0
        %9454 = vmatprep.subr.mxu0 0.0
        %9455 = vmatpush1.msra.mxu0 0.0
        %9456 = vmatprep.subr.mxu0 0.0
        %9457 = vmatpush1.msra.mxu0 0.0
        %9458 = vmatprep.subr.mxu0 0.0
        %9459 = vmatpush1.msra.mxu0 0.0
        %9460 = vmatprep.subr.mxu0 0.0
        %9461 = vmatpush1.msra.mxu0 0.0
        %9462 = vmatprep.mubr.f32.mxu0 0.0
        %9463 = vmatmul.mubr.f32.gmra.mrb[0].mxu0 %v9396
        %v9464 = vpop.f32.mrb[0].mxu0
        %v9465 = vadd.f32 0.0, %v9464
        %v9466 = vpop.f32.mrb[0].mxu0
        %9467 = vdwg.mxu0
        %vm9468 = vcmask 516096
        %v9469 = vsel %vm9468, %v418, 0.0
        %9470 = vadd.xlane.f32.xlu0 %v9469
        %v9471 = vpop.xlane.xlu0 %9470
        %v9472 = vsel %vm9468, %v419, 0.0
        %9473 = vadd.xlane.f32.xlu0 %v9472
        %v9474 = vpop.xlane.xlu0 %9473
        %v9475 = vmax.f32 %v9471, 1.0
        %v9476 = vmax.f32 %v9474, 1.0
        %v9477 = vrcp.pop %v9475
        %v9478 = vmul.f32 %v9393, %v9477
        %v9479 = vrcp.pop %v9476
        %v9480 = vmul.f32 %v9465, %v9479
        %9481 = vst.msk [vmem:[%s380] sm:$0x1] %vm9468, %v9478
        %9482 = vst.msk [vmem:[%s380 + $0x1] sm:$0x1] %vm9468, %v9480
        %s9483 = sand.u32 %s193, 1
        %s9484 = scalar_lea.sflag [#allocation6], %s9483
        %s9485 = sand.u32 %s193, 1
        %s9486 = smul.addr %s9485, 2
        %s9487 = scalar_lea.vmem [#allocation13], %s9486
        // Predicated region
        $region76: #{tpu_custom_call.1} parent=47 // pred_check
          %p9488 = pneg %p203
        $region77: #{tpu_custom_call.1} parent=47 // pred_check_branch
          %9490 = sbr.rel (%p9488) target = $region79
        $region78: #{tpu_custom_call.1} parent=47 // pred_region
          %s9491 = smul.u32 2, %s28
          %s9493 = ssub.s32 32, 32
          %9494 = vsyncadd %s9484, %s9493
          %s9495 = smul.addr %s9491, 16
          %s9496 = scalar_lea.hbm %s7, %s9495
          %s9497 = sshll.u32 %s9487, 4
          %s9498 = int_to_ptr.vmem [resolvable:$true] %s9497
          %9503 = dma.vmem_to_hbm [thread:$0]  %s9498, 32, %s9496, %s9484, 16, 16, 1
        $region79: #{tpu_custom_call.1} parent=47 // pred_fallthru
          _
      $region48: #{tpu_custom_call.1} parent=5 // pred_fallthru
        _
      %p9504 = scmp.le.s32.totalorder 2, %s23
      // Predicated region
      $region80: #{tpu_custom_call.1} parent=5 // pred_check
        %p9505 = pneg %p9504
      $region81: #{tpu_custom_call.1} parent=5 // pred_check_branch
        %9507 = sbr.rel (%p9505) target = $region83
      $region82: #{tpu_custom_call.1} parent=5 // pred_region
        %s9508 = ssub.s32 %s23, 2
        // Predicated region
        $region84: #{tpu_custom_call.1} parent=82 // pred_check
          %p9509 = pneg %p209
        $region85: #{tpu_custom_call.1} parent=82 // pred_check_branch
          %9511 = sbr.rel (%p9509) target = $region87
        $region86: #{tpu_custom_call.1} parent=82 // pred_region
          %s9512 = sand.u32 %s194, 1
          %s9513 = scalar_lea.sflag [#allocation6], %s9512
          %s9514 = sand.u32 %s194, 1
          %s9515 = smul.addr %s9514, 2
          %s9516 = scalar_lea.vmem [#allocation13], %s9515
          %9517 = dma.done %s9513, 32
        $region87: #{tpu_custom_call.1} parent=82 // pred_fallthru
          _
      $region83: #{tpu_custom_call.1} parent=5 // pred_fallthru
        _
    $region6: #{tpu_custom_call.1} parent=1 // loop_footer
      %s27 = sadd.s32 1, %s23
    $region7: #{tpu_custom_call.1} parent=1 // loop_footer_branch
      %22 = sbr.rel target = $region3
    $region8: #{tpu_custom_call.1} parent=1 // loop_exit
      _
    %9518 = vsyncpa [#allocation5], 1
    %s9519 = scalar_lea.sflag [#allocation5], 1
    %9520 = vsyncpa %s9519, 1
    %9521 = vsyncpa [#allocation8], 1
    %s9522 = scalar_lea.sflag [#allocation8], 1
    %9523 = vsyncpa %s9522, 1
    %9524 = vsyncpa [#allocation11], 1
    %9525 = vsyncpa [#allocation6], 1
    %s9526 = scalar_lea.sflag [#allocation6], 1
    %9527 = vsyncpa %s9526, 1

</llo_original>
